<compile_context>
chip_gen: v6e
topology: v6e:2x2x1
jax: 0.10.0
libtpu: 0.0.40
codegen_flags: <defaults>
</compile_context>

<pallas_src>
import functools

import jax
import jax.numpy as jnp
from jax.experimental import pallas as pl
from jax.experimental.pallas import tpu as pltpu

# ------------------------------------------------------------------ fused MXU matmul
TM_CAP = 256          # row tile when M is large
TN_CAP = 256          # col tile when N is very large
K_SINGLE_MAX = 1024   # largest contraction handled as a single block (no accumulator)
TK_TILE = 512         # contraction tile when K > K_SINGLE_MAX


def _round_up(x, m):
    return ((x + m - 1) // m) * m


def _apply_act(x, mode):
    if mode == "none":
        return x
    if mode == "relu":
        return jnp.maximum(x, 0)
    if mode == "leaky_relu":
        return jnp.where(x > 0, x, 0.2 * x)
    if mode == "tanh":
        return jnp.tanh(x)
    raise ValueError(mode)


def _mm_kernel_1k(a_ref, b_ref, o_ref, *, pre_act, post_act):
    a = _apply_act(a_ref[...], pre_act)
    acc = jnp.dot(a, b_ref[...], preferred_element_type=jnp.float32)
    o_ref[...] = _apply_act(acc, post_act).astype(o_ref.dtype)


def _mm_bias_kernel_1k(a_ref, b_ref, bias_ref, o_ref, *, pre_act, post_act):
    a = _apply_act(a_ref[...], pre_act)
    acc = jnp.dot(a, b_ref[...], preferred_element_type=jnp.float32)
    acc = acc + bias_ref[...]
    o_ref[...] = _apply_act(acc, post_act).astype(o_ref.dtype)


def _mm_kernel_nk(a_ref, b_ref, o_ref, acc_ref, *, pre_act, post_act):
    @pl.when(pl.program_id(2) == 0)
    def _():
        acc_ref[...] = jnp.zeros_like(acc_ref)

    a = _apply_act(a_ref[...], pre_act)
    acc_ref[...] += jnp.dot(a, b_ref[...], preferred_element_type=jnp.float32)

    @pl.when(pl.program_id(2) == pl.num_programs(2) - 1)
    def _():
        o_ref[...] = _apply_act(acc_ref[...], post_act).astype(o_ref.dtype)


def _mm_bias_kernel_nk(a_ref, b_ref, bias_ref, o_ref, acc_ref, *, pre_act, post_act):
    @pl.when(pl.program_id(2) == 0)
    def _():
        acc_ref[...] = jnp.zeros_like(acc_ref)

    a = _apply_act(a_ref[...], pre_act)
    acc_ref[...] += jnp.dot(a, b_ref[...], preferred_element_type=jnp.float32)

    @pl.when(pl.program_id(2) == pl.num_programs(2) - 1)
    def _():
        o_ref[...] = _apply_act(acc_ref[...] + bias_ref[...], post_act).astype(o_ref.dtype)


def pallas_matmul_fused(a, b, bias=None, pre_act="none", post_act="none"):
    """(M,K)@(K,N) on the MXU, bf16 operands / f32 accumulation.

    `pre_act` is applied elementwise to the `a` tile inside the kernel (valid for
    im2col patches because ReLU/LeakyReLU are elementwise with f(0)=0); bias and
    `post_act` are fused into the epilogue.  Small M/N use full-extent blocks (no
    padding to 128); K is only zero-padded when it is actually tiled.
    """
    M, K = a.shape
    K2, N = b.shape
    assert K == K2

    a = a.astype(jnp.bfloat16)
    b = b.astype(jnp.bfloat16)

    # M axis
    if M <= TM_CAP:
        TM_ = max(_round_up(M, 8), 8)
        Mp = TM_
    else:
        TM_ = TM_CAP
        Mp = _round_up(M, TM_)
    # N axis
    if N <= 512:
        TN_, Np = N, N
    else:
        TN_ = TN_CAP
        Np = _round_up(N, TN_)
    # K axis
    if K <= K_SINGLE_MAX:
        TK_, Kp, nk = K, K, 1
    else:
        TK_ = TK_TILE
        Kp = _round_up(K, TK_)
        nk = Kp // TK_

    if (Mp != M) or (Kp != K):
        a = jnp.pad(a, ((0, Mp - M), (0, Kp - K)))
    if (Kp != K) or (Np != N):
        b = jnp.pad(b, ((0, Kp - K), (0, Np - N)))

    has_bias = bias is not None
    if has_bias:
        bias_arr = bias.reshape(1, N).astype(jnp.float32)
        if Np != N:
            bias_arr = jnp.pad(bias_arr, ((0, 0), (0, Np - N)))

    nm, nn = Mp // TM_, Np // TN_

    if nk == 1:
        grid = (nm, nn)
        a_spec = pl.BlockSpec((TM_, Kp), lambda i, j: (i, 0))
        b_spec = pl.BlockSpec((Kp, TN_), lambda i, j: (0, j))
        bias_spec = pl.BlockSpec((1, TN_), lambda i, j: (0, j))
        o_spec = pl.BlockSpec((TM_, TN_), lambda i, j: (i, j))
        scratch = []
        kern = _mm_bias_kernel_1k if has_bias else _mm_kernel_1k
        dims = ("parallel", "parallel")
    else:
        grid = (nm, nn, nk)
        a_spec = pl.BlockSpec((TM_, TK_), lambda i, j, k: (i, k))
        b_spec = pl.BlockSpec((TK_, TN_), lambda i, j, k: (k, j))
        bias_spec = pl.BlockSpec((1, TN_), lambda i, j, k: (0, j))
        o_spec = pl.BlockSpec((TM_, TN_), lambda i, j, k: (i, j))
        scratch = [pltpu.VMEM((TM_, TN_), jnp.float32)]
        kern = _mm_bias_kernel_nk if has_bias else _mm_kernel_nk
        dims = ("parallel", "parallel", "arbitrary")

    in_specs = [a_spec, b_spec] + ([bias_spec] if has_bias else [])
    operands = (a, b) + ((bias_arr,) if has_bias else ())

    out = pl.pallas_call(
        functools.partial(kern, pre_act=pre_act, post_act=post_act),
        out_shape=jax.ShapeDtypeStruct((Mp, Np), jnp.float32),
        grid_spec=pltpu.PrefetchScalarGridSpec(
            num_scalar_prefetch=0,
            grid=grid,
            in_specs=in_specs,
            out_specs=o_spec,
            scratch_shapes=scratch,
        ),
        compiler_params=pltpu.CompilerParams(dimension_semantics=dims),
    )(*operands)

    if (Mp != M) or (Np != N):
        out = out[:M, :N]
    return out


# ---------------------------------------------------------------------- batch norm
def _row_tile(m, cap=256):
    if m <= cap:
        return m
    t = cap
    while t >= 8:
        if m % t == 0:
            return t
        t -= 8
    return m  # fallback: whole-array block


def _bn_stats_kernel(x_ref, s_ref, q_ref):
    @pl.when(pl.program_id(0) == 0)
    def _():
        s_ref[...] = jnp.zeros_like(s_ref)
        q_ref[...] = jnp.zeros_like(q_ref)

    x = x_ref[...]
    s_ref[...] += jnp.sum(x, axis=0, keepdims=True)
    q_ref[...] += jnp.sum(x * x, axis=0, keepdims=True)


def _bn_apply_kernel(x_ref, scale_ref, shift_ref, o_ref):
    o_ref[...] = x_ref[...] * scale_ref[...] + shift_ref[...]


def _bn_stats(x2, tr):
    m, c = x2.shape
    return pl.pallas_call(
        _bn_stats_kernel,
        out_shape=(jax.ShapeDtypeStruct((1, c), jnp.float32),
                   jax.ShapeDtypeStruct((1, c), jnp.float32)),
        grid_spec=pltpu.PrefetchScalarGridSpec(
            num_scalar_prefetch=0,
            grid=(m // tr,),
            in_specs=[pl.BlockSpec((tr, c), lambda i: (i, 0))],
            out_specs=[pl.BlockSpec((1, c), lambda i: (0, 0)),
                       pl.BlockSpec((1, c), lambda i: (0, 0))],
        ),
        compiler_params=pltpu.CompilerParams(dimension_semantics=("arbitrary",)),
    )(x2)


def _bn_apply(x2, scale, shift, tr):
    m, c = x2.shape
    return pl.pallas_call(
        _bn_apply_kernel,
        out_shape=jax.ShapeDtypeStruct((m, c), x2.dtype),
        grid_spec=pltpu.PrefetchScalarGridSpec(
            num_scalar_prefetch=0,
            grid=(m // tr,),
            in_specs=[pl.BlockSpec((tr, c), lambda i: (i, 0)),
                      pl.BlockSpec((1, c), lambda i: (0, 0)),
                      pl.BlockSpec((1, c), lambda i: (0, 0))],
            out_specs=pl.BlockSpec((tr, c), lambda i: (i, 0)),
        ),
        compiler_params=pltpu.CompilerParams(dimension_semantics=("parallel",)),
    )(x2, scale, shift)


def pallas_batchnorm(x, eps=1e-5):
    """Training-mode BatchNorm2d (biased batch stats, gamma=1, beta=0), NHWC input."""
    n, h, w, c = x.shape
    m = n * h * w
    x2 = x.reshape(m, c)

    if (128 % c == 0) and ((m * c) % 128 == 0):
        # Lane-dense view: channels repeat along the 128-lane axis with period c
        # (free row-major reshape, no transpose), so stores use all 128 lanes.
        reps = 128 // c
        xl = x2.reshape(m * c // 128, 128)
        tr = _row_tile(xl.shape[0])
        s, q = _bn_stats(xl, tr)
        s = s.reshape(reps, c).sum(axis=0)
        q = q.reshape(reps, c).sum(axis=0)
        mean = s / m
        var = jnp.maximum(q / m - mean * mean, 0.0)
        scale = jax.lax.rsqrt(var + eps)
        shift = -mean * scale
        out = _bn_apply(xl, jnp.tile(scale, reps).reshape(1, 128),
                        jnp.tile(shift, reps).reshape(1, 128), tr)
        return out.reshape(n, h, w, c)

    tr = _row_tile(m)
    s, q = _bn_stats(x2, tr)
    mean = s[0] / m
    var = jnp.maximum(q[0] / m - mean * mean, 0.0)
    scale = jax.lax.rsqrt(var + eps)
    shift = -mean * scale
    out = _bn_apply(x2, scale.reshape(1, c), shift.reshape(1, c), tr)
    return out.reshape(n, h, w, c)


# ---------------------------------------------------------------- conv / conv-transpose
def conv2d_k4s2p1(x, w, pre_act="none"):
    """x: (N,H,W,Cin) NHWC; w: (Cout,Cin,4,4) PyTorch layout; bias-free."""
    # TODO(synk): im2col is still plain-JAX glue; fusing the 16-tap gather into the
    # matmul DMA (strided index_map / manual copies) would remove the patches HBM pass.
    n, h, wd, cin = x.shape
    cout = w.shape[0]
    k, s, p = 4, 2, 1
    xp = jnp.pad(x, ((0, 0), (p, p), (p, p), (0, 0)))
    ho, wo = h // 2, wd // 2
    cols = []
    for kh in range(k):
        for kw in range(k):
            cols.append(xp[:, kh:kh + s * ho:s, kw:kw + s * wo:s, :])
    patches = jnp.stack(cols, axis=3)                       # (N,Ho,Wo,16,Cin)
    a = patches.reshape(n * ho * wo, k * k * cin)
    wm = jnp.transpose(w, (2, 3, 1, 0)).reshape(k * k * cin, cout)
    out = pallas_matmul_fused(a, wm, pre_act=pre_act)
    return out.reshape(n, ho, wo, cout)


# ConvTranspose2d(k=4,s=2,p=1) via parity decomposition: an output pixel with
# parity (oh%2, ow%2) only receives contributions from a 2x2 subset of the 4x4
# kernel applied over a 3x3 input neighbourhood, so we never materialize the 4x
# zero-dilated input and skip the 75% of MACs that would multiply zeros.
_CT_TAPS = {0: ((0, 1), (-1, 3)), 1: ((1, 0), (0, 2))}       # parity -> ((d, k), ...)


def conv_transpose2d_k4s2p1(x, w, bias=None, pre_act="none", post_act="none"):
    """x: (N,H,W,Cin); w: (Cin,Cout,4,4) PyTorch ConvTranspose2d layout."""
    n, h, wd, cin = x.shape
    cout = w.shape[1]
    xp = jnp.pad(x, ((0, 0), (1, 1), (1, 1), (0, 0)))
    cols = []
    for dh in (-1, 0, 1):
        for dw in (-1, 0, 1):
            cols.append(xp[:, 1 + dh:1 + dh + h, 1 + dw:1 + dw + wd, :])
    patches = jnp.stack(cols, axis=3)                        # (N,H,W,9,Cin)
    a = patches.reshape(n * h * wd, 9 * cin)

    # (9*Cin, 4*Cout) weight: only the taps each output parity actually uses.
    wm = jnp.zeros((9, cin, 4, cout), w.dtype)
    for pa in (0, 1):
        for dh, kh in _CT_TAPS[pa]:
            for pb in (0, 1):
                for dw, kw in _CT_TAPS[pb]:
                    t = (dh + 1) * 3 + (dw + 1)
                    wm = wm.at[t, :, pa * 2 + pb, :].set(w[:, :, kh, kw])
    wm = wm.reshape(9 * cin, 4 * cout)

    bias4 = None if bias is None else jnp.tile(bias, 4)
    out = pallas_matmul_fused(a, wm, bias=bias4, pre_act=pre_act, post_act=post_act)
    out = out.reshape(n, h, wd, 2, 2, cout)
    out = out.transpose(0, 1, 3, 2, 4, 5).reshape(n, 2 * h, 2 * wd, cout)
    return out


# ------------------------------------------------------------------------- parameters
def _init_conv(key, cout, cin, k=4):
    return jax.random.normal(key, (cout, cin, k, k), jnp.float32) * 0.02


def _init_convt(key, cin, cout, k=4):
    return jax.random.normal(key, (cin, cout, k, k), jnp.float32) * 0.02


def build_unet_params(key, input_nc, output_nc, num_downs, ngf):
    keys = iter(jax.random.split(key, 4 * num_downs + 8))

    def make_block(outer_nc, inner_nc, input_nc=None, submodule=None,
                   outermost=False, innermost=False):
        if input_nc is None:
            input_nc = outer_nc
        p = {"outermost": outermost, "innermost": innermost, "submodule": submodule}
        p["down_w"] = _init_conv(next(keys), inner_nc, input_nc)      # bias=False (BN)
        if outermost:
            p["up_w"] = _init_convt(next(keys), inner_nc * 2, outer_nc)
            p["up_b"] = jnp.zeros((outer_nc,), jnp.float32)           # bias=True
        elif innermost:
            p["up_w"] = _init_convt(next(keys), inner_nc, outer_nc)   # bias=False
        else:
            p["up_w"] = _init_convt(next(keys), inner_nc * 2, outer_nc)
        return p

    blk = make_block(ngf * 8, ngf * 8, innermost=True)
    for _ in range(num_downs - 5):
        blk = make_block(ngf * 8, ngf * 8, submodule=blk)
    blk = make_block(ngf * 4, ngf * 8, submodule=blk)
    blk = make_block(ngf * 2, ngf * 4, submodule=blk)
    blk = make_block(ngf, ngf * 2, submodule=blk)
    blk = make_block(output_nc, ngf, input_nc=input_nc, submodule=blk, outermost=True)
    return blk


# ---------------------------------------------------------------------------- forward
def unet_block_forward(x, p):
    """x: NHWC.  Mirrors UnetSkipConnectionBlock.forward (cat along channels).

    Activations are fused into the adjacent conv/convT matmul kernels:
      LeakyReLU -> prologue of the down conv; ReLU -> prologue of the up convT;
      bias + Tanh -> epilogue of the outermost up convT.
    """
    # TODO(synk): skip-connection concat still does an extra HBM copy; writing the
    # convT output directly into its slice of a preallocated buffer would avoid it.
    if p["outermost"]:
        h = conv2d_k4s2p1(x, p["down_w"], pre_act="none")
        h = unet_block_forward(h, p["submodule"])
        return conv_transpose2d_k4s2p1(h, p["up_w"], bias=p["up_b"],
                                       pre_act="relu", post_act="tanh")
    elif p["innermost"]:
        h = conv2d_k4s2p1(x, p["down_w"], pre_act="leaky_relu")
        h = conv_transpose2d_k4s2p1(h, p["up_w"], pre_act="relu")
        h = pallas_batchnorm(h)
        return jnp.concatenate([x, h], axis=-1)
    else:
        h = conv2d_k4s2p1(x, p["down_w"], pre_act="leaky_relu")
        h = pallas_batchnorm(h)
        h = unet_block_forward(h, p["submodule"])
        h = conv_transpose2d_k4s2p1(h, p["up_w"], pre_act="relu")
        h = pallas_batchnorm(h)
        return jnp.concatenate([x, h], axis=-1)


def unet_generator_forward(x_nchw, params):
    x = jnp.transpose(x_nchw, (0, 2, 3, 1))        # NCHW -> NHWC
    y = unet_block_forward(x, params)
    return jnp.transpose(y, (0, 3, 1, 2))          # NHWC -> NCHW

# TODO(synk): use_attention (CBAM) and use_dropout branches are not exercised
# (both default False in this configuration) and are not implemented.


if __name__ == "__main__":
    key = jax.random.PRNGKey(0)
    k_param, k_input = jax.random.split(key)

    input_nc, output_nc, num_downs, ngf = 3, 3, 5, 8
    n, h, w = 2, 32, 32                             # 32 -> 1 at the bottleneck (5 downs)

    params = build_unet_params(k_param, input_nc, output_nc, num_downs, ngf)
    x = jax.random.normal(k_input, (n, input_nc, h, w), jnp.float32)

    fwd = jax.jit(lambda inp: unet_generator_forward(inp, params))
    y = jax.block_until_ready(fwd(x))

    assert y.shape == (n, output_nc, h, w), y.shape
    assert bool(jnp.all(jnp.isfinite(y)))
    assert float(jnp.max(jnp.abs(y))) <= 1.0 + 1e-5   # tanh output range
    print("KERNEL_OK")
</pallas_src>

<mosaic_0001>
module attributes {stable_mosaic.version = 11 : i64} {
  func.func @_mm_kernel_1k(%arg0: i32, %arg1: i32, %arg2: memref<256x48xbf16, #tpu.memory_space<vmem>>, %arg3: memref<48x8xbf16, #tpu.memory_space<vmem>>, %arg4: memref<256x8xf32, #tpu.memory_space<vmem>>) attributes {dimension_semantics = [#tpu.dimension_semantics<parallel>, #tpu.dimension_semantics<parallel>], iteration_bounds = array<i64: 2, 1>, scalar_prefetch = 0 : i64, scratch_operands = 0 : i64, tpu.core_type = #tpu.core_type<tc>, window_params = [{transform_indices = @transform_0, window_bounds = array<i64: 256, 48>}, {transform_indices = @transform_1, window_bounds = array<i64: 48, 8>}, {transform_indices = @transform_2, window_bounds = array<i64: 256, 8>}]} {
    %c0 = arith.constant 0 : index
    %c0_0 = arith.constant 0 : index
    %0 = vector.load %arg2[%c0, %c0_0] : memref<256x48xbf16, #tpu.memory_space<vmem>>, vector<256x48xbf16>
    %c0_1 = arith.constant 0 : index
    %c0_2 = arith.constant 0 : index
    %1 = vector.load %arg3[%c0_1, %c0_2] : memref<48x8xbf16, #tpu.memory_space<vmem>>, vector<48x8xbf16>
    %cst = arith.constant dense<0.000000e+00> : vector<256x8xf32>
    %2 = tpu.matmul %0, %1, %cst {dimension_numbers = #tpu.dot_dimension_numbers<[1], [0], [0], [1], [0, 0, 1, 1], [], []>} : vector<256x48xbf16>, vector<48x8xbf16>, vector<256x8xf32> -> vector<256x8xf32>
    %c0_3 = arith.constant 0 : index
    %c0_4 = arith.constant 0 : index
    %3 = vector.load %arg4[%c0_3, %c0_4] : memref<256x8xf32, #tpu.memory_space<vmem>>, vector<256x8xf32>
    tpu.vector_store %arg4[%c0_3, %c0_4], %2 {strides = array<i32>} : memref<256x8xf32, #tpu.memory_space<vmem>>, vector<256x8xf32>,
    return
  }
  func.func @transform_0(%arg0: i32, %arg1: i32) -> (i32, i32) {
    %c0_i32 = arith.constant 0 : i32
    %c0_i32_0 = arith.constant 0 : i32
    return %arg0, %c0_i32 : i32, i32
  }
  func.func @transform_1(%arg0: i32, %arg1: i32) -> (i32, i32) {
    %c0_i32 = arith.constant 0 : i32
    %c0_i32_0 = arith.constant 0 : i32
    return %c0_i32, %arg1 : i32, i32
  }
  func.func @transform_2(%arg0: i32, %arg1: i32) -> (i32, i32) {
    %c0_i32 = arith.constant 0 : i32
    return %arg0, %arg1 : i32, i32
  }
}

module attributes {stable_mosaic.version = 11 : i64} {
  func.func @_mm_kernel_1k(%arg0: i32, %arg1: i32, %arg2: memref<128x128xbf16, #tpu.memory_space<vmem>>, %arg3: memref<128x16xbf16, #tpu.memory_space<vmem>>, %arg4: memref<128x16xf32, #tpu.memory_space<vmem>>) attributes {dimension_semantics = [#tpu.dimension_semantics<parallel>, #tpu.dimension_semantics<parallel>], iteration_bounds = array<i64: 1, 1>, scalar_prefetch = 0 : i64, scratch_operands = 0 : i64, tpu.core_type = #tpu.core_type<tc>, window_params = [{transform_indices = @transform_0, window_bounds = array<i64: 128, 128>}, {transform_indices = @transform_1, window_bounds = array<i64: 128, 16>}, {transform_indices = @transform_2, window_bounds = array<i64: 128, 16>}]} {
    %c0 = arith.constant 0 : index
    %c0_0 = arith.constant 0 : index
    %0 = vector.load %arg2[%c0, %c0_0] : memref<128x128xbf16, #tpu.memory_space<vmem>>, vector<128x128xbf16>
    %cst = arith.constant 0.000000e+00 : bf16
    %1 = vector.broadcast %cst : bf16 to vector<128x128xbf16>
    %2 = arith.cmpf ogt, %0, %1 : vector<128x128xbf16>
    %cst_1 = arith.constant 2.001950e-01 : bf16
    %3 = vector.broadcast %cst_1 : bf16 to vector<128x128xbf16>
    %4 = arith.mulf %3, %0 : vector<128x128xbf16>
    %5 = arith.select %2, %0, %4 : vector<128x128xi1>, vector<128x128xbf16>
    %c0_2 = arith.constant 0 : index
    %c0_3 = arith.constant 0 : index
    %6 = vector.load %arg3[%c0_2, %c0_3] : memref<128x16xbf16, #tpu.memory_space<vmem>>, vector<128x16xbf16>
    %cst_4 = arith.constant dense<0.000000e+00> : vector<128x16xf32>
    %7 = tpu.matmul %5, %6, %cst_4 {dimension_numbers = #tpu.dot_dimension_numbers<[1], [0], [0], [1], [0, 0, 1, 1], [], []>} : vector<128x128xbf16>, vector<128x16xbf16>, vector<128x16xf32> -> vector<128x16xf32>
    %c0_5 = arith.constant 0 : index
    %c0_6 = arith.constant 0 : index
    %8 = vector.load %arg4[%c0_5, %c0_6] : memref<128x16xf32, #tpu.memory_space<vmem>>, vector<128x16xf32>
    tpu.vector_store %arg4[%c0_5, %c0_6], %7 {strides = array<i32>} : memref<128x16xf32, #tpu.memory_space<vmem>>, vector<128x16xf32>,
    return
  }
  func.func @transform_0(%arg0: i32, %arg1: i32) -> (i32, i32) {
    %c0_i32 = arith.constant 0 : i32
    %c0_i32_0 = arith.constant 0 : i32
    return %arg0, %c0_i32 : i32, i32
  }
  func.func @transform_1(%arg0: i32, %arg1: i32) -> (i32, i32) {
    %c0_i32 = arith.constant 0 : i32
    %c0_i32_0 = arith.constant 0 : i32
    return %c0_i32, %arg1 : i32, i32
  }
  func.func @transform_2(%arg0: i32, %arg1: i32) -> (i32, i32) {
    %c0_i32 = arith.constant 0 : i32
    return %arg0, %arg1 : i32, i32
  }
}

module attributes {stable_mosaic.version = 11 : i64} {
  func.func @_bn_stats_kernel(%arg0: i32, %arg1: memref<16x128xf32, #tpu.memory_space<vmem>>, %arg2: memref<1x128xf32, #tpu.memory_space<vmem>>, %arg3: memref<1x128xf32, #tpu.memory_space<vmem>>) attributes {dimension_semantics = [#tpu.dimension_semantics<arbitrary>], iteration_bounds = array<i64: 1>, scalar_prefetch = 0 : i64, scratch_operands = 0 : i64, tpu.core_type = #tpu.core_type<tc>, window_params = [{transform_indices = @transform_0, window_bounds = array<i64: 16, 128>}, {pipeline_mode = #tpu.pipeline_mode<synchronous>, transform_indices = @transform_1, window_bounds = array<i64: 1, 128>}, {pipeline_mode = #tpu.pipeline_mode<synchronous>, transform_indices = @transform_2, window_bounds = array<i64: 1, 128>}]} {
    %c0_i32 = arith.constant 0 : i32
    %0 = arith.cmpi eq, %arg0, %c0_i32 : i32
    %1 = arith.extui %0 : i1 to i32
    %c0_i32_0 = arith.constant 0 : i32
    %2 = arith.cmpi ne, %1, %c0_i32_0 : i32
    scf.if %2 {
      %cst_11 = arith.constant 0.000000e+00 : f32
      %15 = vector.broadcast %cst_11 : f32 to vector<1x128xf32>
      %c0_12 = arith.constant 0 : index
      %c0_13 = arith.constant 0 : index
      %16 = vector.load %arg2[%c0_12, %c0_13] : memref<1x128xf32, #tpu.memory_space<vmem>>, vector<1x128xf32>
      tpu.vector_store %arg2[%c0_12, %c0_13], %15 {strides = array<i32>} : memref<1x128xf32, #tpu.memory_space<vmem>>, vector<1x128xf32>,
      %cst_14 = arith.constant 0.000000e+00 : f32
      %17 = vector.broadcast %cst_14 : f32 to vector<1x128xf32>
      %c0_15 = arith.constant 0 : index
      %c0_16 = arith.constant 0 : index
      %18 = vector.load %arg3[%c0_15, %c0_16] : memref<1x128xf32, #tpu.memory_space<vmem>>, vector<1x128xf32>
      tpu.vector_store %arg3[%c0_15, %c0_16], %17 {strides = array<i32>} : memref<1x128xf32, #tpu.memory_space<vmem>>, vector<1x128xf32>,
    } else {
    }
    %c0 = arith.constant 0 : index
    %c0_1 = arith.constant 0 : index
    %3 = vector.load %arg1[%c0, %c0_1] : memref<16x128xf32, #tpu.memory_space<vmem>>, vector<16x128xf32>
    %c0_2 = arith.constant 0 : index
    %c0_3 = arith.constant 0 : index
    %4 = vector.load %arg2[%c0_2, %c0_3] : memref<1x128xf32, #tpu.memory_space<vmem>>, vector<1x128xf32>
    %cst = arith.constant dense<0.000000e+00> : vector<128xf32>
    %5 = vector.multi_reduction <add>, %3, %cst [0] : vector<16x128xf32> to vector<128xf32>
    %6 = vector.shape_cast %5 : vector<128xf32> to vector<1x128xf32>
    %7 = arith.addf %4, %6 : vector<1x128xf32>
    %c0_4 = arith.constant 0 : index
    %c0_5 = arith.constant 0 : index
    %8 = vector.load %arg2[%c0_4, %c0_5] : memref<1x128xf32, #tpu.memory_space<vmem>>, vector<1x128xf32>
    tpu.vector_store %arg2[%c0_4, %c0_5], %7 {strides = array<i32>} : memref<1x128xf32, #tpu.memory_space<vmem>>, vector<1x128xf32>,
    %c0_6 = arith.constant 0 : index
    %c0_7 = arith.constant 0 : index
    %9 = vector.load %arg3[%c0_6, %c0_7] : memref<1x128xf32, #tpu.memory_space<vmem>>, vector<1x128xf32>
    %10 = arith.mulf %3, %3 : vector<16x128xf32>
    %cst_8 = arith.constant dense<0.000000e+00> : vector<128xf32>
    %11 = vector.multi_reduction <add>, %10, %cst_8 [0] : vector<16x128xf32> to vector<128xf32>
    %12 = vector.shape_cast %11 : vector<128xf32> to vector<1x128xf32>
    %13 = arith.addf %9, %12 : vector<1x128xf32>
    %c0_9 = arith.constant 0 : index
    %c0_10 = arith.constant 0 : index
    %14 = vector.load %arg3[%c0_9, %c0_10] : memref<1x128xf32, #tpu.memory_space<vmem>>, vector<1x128xf32>
    tpu.vector_store %arg3[%c0_9, %c0_10], %13 {strides = array<i32>} : memref<1x128xf32, #tpu.memory_space<vmem>>, vector<1x128xf32>,
    return
  }
  func.func @transform_0(%arg0: i32) -> (i32, i32) {
    %c0_i32 = arith.constant 0 : i32
    %c0_i32_0 = arith.constant 0 : i32
    return %arg0, %c0_i32 : i32, i32
  }
  func.func @transform_1(%arg0: i32) -> (i32, i32) {
    %c0_i32 = arith.constant 0 : i32
    %c0_i32_0 = arith.constant 0 : i32
    %c0_i32_1 = arith.constant 0 : i32
    return %c0_i32, %c0_i32_0 : i32, i32
  }
  func.func @transform_2(%arg0: i32) -> (i32, i32) {
    %c0_i32 = arith.constant 0 : i32
    %c0_i32_0 = arith.constant 0 : i32
    %c0_i32_1 = arith.constant 0 : i32
    return %c0_i32, %c0_i32_0 : i32, i32
  }
}

module attributes {stable_mosaic.version = 11 : i64} {
  func.func @_bn_apply_kernel(%arg0: i32, %arg1: memref<16x128xf32, #tpu.memory_space<vmem>>, %arg2: memref<1x128xf32, #tpu.memory_space<vmem>>, %arg3: memref<1x128xf32, #tpu.memory_space<vmem>>, %arg4: memref<16x128xf32, #tpu.memory_space<vmem>>) attributes {dimension_semantics = [#tpu.dimension_semantics<parallel>], iteration_bounds = array<i64: 1>, scalar_prefetch = 0 : i64, scratch_operands = 0 : i64, tpu.core_type = #tpu.core_type<tc>, window_params = [{transform_indices = @transform_0, window_bounds = array<i64: 16, 128>}, {pipeline_mode = #tpu.pipeline_mode<synchronous>, transform_indices = @transform_1, window_bounds = array<i64: 1, 128>}, {pipeline_mode = #tpu.pipeline_mode<synchronous>, transform_indices = @transform_2, window_bounds = array<i64: 1, 128>}, {transform_indices = @transform_3, window_bounds = array<i64: 16, 128>}]} {
    %c0 = arith.constant 0 : index
    %c0_0 = arith.constant 0 : index
    %0 = vector.load %arg1[%c0, %c0_0] : memref<16x128xf32, #tpu.memory_space<vmem>>, vector<16x128xf32>
    %c0_1 = arith.constant 0 : index
    %c0_2 = arith.constant 0 : index
    %1 = vector.load %arg2[%c0_1, %c0_2] : memref<1x128xf32, #tpu.memory_space<vmem>>, vector<1x128xf32>
    %2 = vector.broadcast %1 : vector<1x128xf32> to vector<16x128xf32>
    %3 = arith.mulf %0, %2 : vector<16x128xf32>
    %c0_3 = arith.constant 0 : index
    %c0_4 = arith.constant 0 : index
    %4 = vector.load %arg3[%c0_3, %c0_4] : memref<1x128xf32, #tpu.memory_space<vmem>>, vector<1x128xf32>
    %5 = vector.broadcast %4 : vector<1x128xf32> to vector<16x128xf32>
    %6 = arith.addf %3, %5 : vector<16x128xf32>
    %c0_5 = arith.constant 0 : index
    %c0_6 = arith.constant 0 : index
    %7 = vector.load %arg4[%c0_5, %c0_6] : memref<16x128xf32, #tpu.memory_space<vmem>>, vector<16x128xf32>
    tpu.vector_store %arg4[%c0_5, %c0_6], %6 {strides = array<i32>} : memref<16x128xf32, #tpu.memory_space<vmem>>, vector<16x128xf32>,
    return
  }
  func.func @transform_0(%arg0: i32) -> (i32, i32) {
    %c0_i32 = arith.constant 0 : i32
    %c0_i32_0 = arith.constant 0 : i32
    return %arg0, %c0_i32 : i32, i32
  }
  func.func @transform_1(%arg0: i32) -> (i32, i32) {
    %c0_i32 = arith.constant 0 : i32
    %c0_i32_0 = arith.constant 0 : i32
    %c0_i32_1 = arith.constant 0 : i32
    return %c0_i32, %c0_i32_0 : i32, i32
  }
  func.func @transform_2(%arg0: i32) -> (i32, i32) {
    %c0_i32 = arith.constant 0 : i32
    %c0_i32_0 = arith.constant 0 : i32
    %c0_i32_1 = arith.constant 0 : i32
    return %c0_i32, %c0_i32_0 : i32, i32
  }
  func.func @transform_3(%arg0: i32) -> (i32, i32) {
    %c0_i32 = arith.constant 0 : i32
    %c0_i32_0 = arith.constant 0 : i32
    return %arg0, %c0_i32 : i32, i32
  }
}

module attributes {stable_mosaic.version = 11 : i64} {
  func.func @_mm_kernel_1k(%arg0: i32, %arg1: i32, %arg2: memref<32x256xbf16, #tpu.memory_space<vmem>>, %arg3: memref<256x32xbf16, #tpu.memory_space<vmem>>, %arg4: memref<32x32xf32, #tpu.memory_space<vmem>>) attributes {dimension_semantics = [#tpu.dimension_semantics<parallel>, #tpu.dimension_semantics<parallel>], iteration_bounds = array<i64: 1, 1>, scalar_prefetch = 0 : i64, scratch_operands = 0 : i64, tpu.core_type = #tpu.core_type<tc>, window_params = [{transform_indices = @transform_0, window_bounds = array<i64: 32, 256>}, {transform_indices = @transform_1, window_bounds = array<i64: 256, 32>}, {transform_indices = @transform_2, window_bounds = array<i64: 32, 32>}]} {
    %c0 = arith.constant 0 : index
    %c0_0 = arith.constant 0 : index
    %0 = vector.load %arg2[%c0, %c0_0] : memref<32x256xbf16, #tpu.memory_space<vmem>>, vector<32x256xbf16>
    %cst = arith.constant 0.000000e+00 : bf16
    %1 = vector.broadcast %cst : bf16 to vector<32x256xbf16>
    %2 = arith.cmpf ogt, %0, %1 : vector<32x256xbf16>
    %cst_1 = arith.constant 2.001950e-01 : bf16
    %3 = vector.broadcast %cst_1 : bf16 to vector<32x256xbf16>
    %4 = arith.mulf %3, %0 : vector<32x256xbf16>
    %5 = arith.select %2, %0, %4 : vector<32x256xi1>, vector<32x256xbf16>
    %c0_2 = arith.constant 0 : index
    %c0_3 = arith.constant 0 : index
    %6 = vector.load %arg3[%c0_2, %c0_3] : memref<256x32xbf16, #tpu.memory_space<vmem>>, vector<256x32xbf16>
    %cst_4 = arith.constant dense<0.000000e+00> : vector<32x32xf32>
    %7 = tpu.matmul %5, %6, %cst_4 {dimension_numbers = #tpu.dot_dimension_numbers<[1], [0], [0], [1], [0, 0, 1, 1], [], []>} : vector<32x256xbf16>, vector<256x32xbf16>, vector<32x32xf32> -> vector<32x32xf32>
    %c0_5 = arith.constant 0 : index
    %c0_6 = arith.constant 0 : index
    %8 = vector.load %arg4[%c0_5, %c0_6] : memref<32x32xf32, #tpu.memory_space<vmem>>, vector<32x32xf32>
    tpu.vector_store %arg4[%c0_5, %c0_6], %7 {strides = array<i32>} : memref<32x32xf32, #tpu.memory_space<vmem>>, vector<32x32xf32>,
    return
  }
  func.func @transform_0(%arg0: i32, %arg1: i32) -> (i32, i32) {
    %c0_i32 = arith.constant 0 : i32
    %c0_i32_0 = arith.constant 0 : i32
    return %arg0, %c0_i32 : i32, i32
  }
  func.func @transform_1(%arg0: i32, %arg1: i32) -> (i32, i32) {
    %c0_i32 = arith.constant 0 : i32
    %c0_i32_0 = arith.constant 0 : i32
    return %c0_i32, %arg1 : i32, i32
  }
  func.func @transform_2(%arg0: i32, %arg1: i32) -> (i32, i32) {
    %c0_i32 = arith.constant 0 : i32
    return %arg0, %arg1 : i32, i32
  }
}

module attributes {stable_mosaic.version = 11 : i64} {
  func.func @_bn_stats_kernel(%arg0: i32, %arg1: memref<8x128xf32, #tpu.memory_space<vmem>>, %arg2: memref<1x128xf32, #tpu.memory_space<vmem>>, %arg3: memref<1x128xf32, #tpu.memory_space<vmem>>) attributes {dimension_semantics = [#tpu.dimension_semantics<arbitrary>], iteration_bounds = array<i64: 1>, scalar_prefetch = 0 : i64, scratch_operands = 0 : i64, tpu.core_type = #tpu.core_type<tc>, window_params = [{transform_indices = @transform_0, window_bounds = array<i64: 8, 128>}, {pipeline_mode = #tpu.pipeline_mode<synchronous>, transform_indices = @transform_1, window_bounds = array<i64: 1, 128>}, {pipeline_mode = #tpu.pipeline_mode<synchronous>, transform_indices = @transform_2, window_bounds = array<i64: 1, 128>}]} {
    %c0_i32 = arith.constant 0 : i32
    %0 = arith.cmpi eq, %arg0, %c0_i32 : i32
    %1 = arith.extui %0 : i1 to i32
    %c0_i32_0 = arith.constant 0 : i32
    %2 = arith.cmpi ne, %1, %c0_i32_0 : i32
    scf.if %2 {
      %cst_11 = arith.constant 0.000000e+00 : f32
      %15 = vector.broadcast %cst_11 : f32 to vector<1x128xf32>
      %c0_12 = arith.constant 0 : index
      %c0_13 = arith.constant 0 : index
      %16 = vector.load %arg2[%c0_12, %c0_13] : memref<1x128xf32, #tpu.memory_space<vmem>>, vector<1x128xf32>
      tpu.vector_store %arg2[%c0_12, %c0_13], %15 {strides = array<i32>} : memref<1x128xf32, #tpu.memory_space<vmem>>, vector<1x128xf32>,
      %cst_14 = arith.constant 0.000000e+00 : f32
      %17 = vector.broadcast %cst_14 : f32 to vector<1x128xf32>
      %c0_15 = arith.constant 0 : index
      %c0_16 = arith.constant 0 : index
      %18 = vector.load %arg3[%c0_15, %c0_16] : memref<1x128xf32, #tpu.memory_space<vmem>>, vector<1x128xf32>
      tpu.vector_store %arg3[%c0_15, %c0_16], %17 {strides = array<i32>} : memref<1x128xf32, #tpu.memory_space<vmem>>, vector<1x128xf32>,
    } else {
    }
    %c0 = arith.constant 0 : index
    %c0_1 = arith.constant 0 : index
    %3 = vector.load %arg1[%c0, %c0_1] : memref<8x128xf32, #tpu.memory_space<vmem>>, vector<8x128xf32>
    %c0_2 = arith.constant 0 : index
    %c0_3 = arith.constant 0 : index
    %4 = vector.load %arg2[%c0_2, %c0_3] : memref<1x128xf32, #tpu.memory_space<vmem>>, vector<1x128xf32>
    %cst = arith.constant dense<0.000000e+00> : vector<128xf32>
    %5 = vector.multi_reduction <add>, %3, %cst [0] : vector<8x128xf32> to vector<128xf32>
    %6 = vector.shape_cast %5 : vector<128xf32> to vector<1x128xf32>
    %7 = arith.addf %4, %6 : vector<1x128xf32>
    %c0_4 = arith.constant 0 : index
    %c0_5 = arith.constant 0 : index
    %8 = vector.load %arg2[%c0_4, %c0_5] : memref<1x128xf32, #tpu.memory_space<vmem>>, vector<1x128xf32>
    tpu.vector_store %arg2[%c0_4, %c0_5], %7 {strides = array<i32>} : memref<1x128xf32, #tpu.memory_space<vmem>>, vector<1x128xf32>,
    %c0_6 = arith.constant 0 : index
    %c0_7 = arith.constant 0 : index
    %9 = vector.load %arg3[%c0_6, %c0_7] : memref<1x128xf32, #tpu.memory_space<vmem>>, vector<1x128xf32>
    %10 = arith.mulf %3, %3 : vector<8x128xf32>
    %cst_8 = arith.constant dense<0.000000e+00> : vector<128xf32>
    %11 = vector.multi_reduction <add>, %10, %cst_8 [0] : vector<8x128xf32> to vector<128xf32>
    %12 = vector.shape_cast %11 : vector<128xf32> to vector<1x128xf32>
    %13 = arith.addf %9, %12 : vector<1x128xf32>
    %c0_9 = arith.constant 0 : index
    %c0_10 = arith.constant 0 : index
    %14 = vector.load %arg3[%c0_9, %c0_10] : memref<1x128xf32, #tpu.memory_space<vmem>>, vector<1x128xf32>
    tpu.vector_store %arg3[%c0_9, %c0_10], %13 {strides = array<i32>} : memref<1x128xf32, #tpu.memory_space<vmem>>, vector<1x128xf32>,
    return
  }
  func.func @transform_0(%arg0: i32) -> (i32, i32) {
    %c0_i32 = arith.constant 0 : i32
    %c0_i32_0 = arith.constant 0 : i32
    return %arg0, %c0_i32 : i32, i32
  }
  func.func @transform_1(%arg0: i32) -> (i32, i32) {
    %c0_i32 = arith.constant 0 : i32
    %c0_i32_0 = arith.constant 0 : i32
    %c0_i32_1 = arith.constant 0 : i32
    return %c0_i32, %c0_i32_0 : i32, i32
  }
  func.func @transform_2(%arg0: i32) -> (i32, i32) {
    %c0_i32 = arith.constant 0 : i32
    %c0_i32_0 = arith.constant 0 : i32
    %c0_i32_1 = arith.constant 0 : i32
    return %c0_i32, %c0_i32_0 : i32, i32
  }
}

module attributes {stable_mosaic.version = 11 : i64} {
  func.func @_bn_apply_kernel(%arg0: i32, %arg1: memref<8x128xf32, #tpu.memory_space<vmem>>, %arg2: memref<1x128xf32, #tpu.memory_space<vmem>>, %arg3: memref<1x128xf32, #tpu.memory_space<vmem>>, %arg4: memref<8x128xf32, #tpu.memory_space<vmem>>) attributes {dimension_semantics = [#tpu.dimension_semantics<parallel>], iteration_bounds = array<i64: 1>, scalar_prefetch = 0 : i64, scratch_operands = 0 : i64, tpu.core_type = #tpu.core_type<tc>, window_params = [{transform_indices = @transform_0, window_bounds = array<i64: 8, 128>}, {pipeline_mode = #tpu.pipeline_mode<synchronous>, transform_indices = @transform_1, window_bounds = array<i64: 1, 128>}, {pipeline_mode = #tpu.pipeline_mode<synchronous>, transform_indices = @transform_2, window_bounds = array<i64: 1, 128>}, {transform_indices = @transform_3, window_bounds = array<i64: 8, 128>}]} {
    %c0 = arith.constant 0 : index
    %c0_0 = arith.constant 0 : index
    %0 = vector.load %arg1[%c0, %c0_0] : memref<8x128xf32, #tpu.memory_space<vmem>>, vector<8x128xf32>
    %c0_1 = arith.constant 0 : index
    %c0_2 = arith.constant 0 : index
    %1 = vector.load %arg2[%c0_1, %c0_2] : memref<1x128xf32, #tpu.memory_space<vmem>>, vector<1x128xf32>
    %2 = vector.broadcast %1 : vector<1x128xf32> to vector<8x128xf32>
    %3 = arith.mulf %0, %2 : vector<8x128xf32>
    %c0_3 = arith.constant 0 : index
    %c0_4 = arith.constant 0 : index
    %4 = vector.load %arg3[%c0_3, %c0_4] : memref<1x128xf32, #tpu.memory_space<vmem>>, vector<1x128xf32>
    %5 = vector.broadcast %4 : vector<1x128xf32> to vector<8x128xf32>
    %6 = arith.addf %3, %5 : vector<8x128xf32>
    %c0_5 = arith.constant 0 : index
    %c0_6 = arith.constant 0 : index
    %7 = vector.load %arg4[%c0_5, %c0_6] : memref<8x128xf32, #tpu.memory_space<vmem>>, vector<8x128xf32>
    tpu.vector_store %arg4[%c0_5, %c0_6], %6 {strides = array<i32>} : memref<8x128xf32, #tpu.memory_space<vmem>>, vector<8x128xf32>,
    return
  }
  func.func @transform_0(%arg0: i32) -> (i32, i32) {
    %c0_i32 = arith.constant 0 : i32
    %c0_i32_0 = arith.constant 0 : i32
    return %arg0, %c0_i32 : i32, i32
  }
  func.func @transform_1(%arg0: i32) -> (i32, i32) {
    %c0_i32 = arith.constant 0 : i32
    %c0_i32_0 = arith.constant 0 : i32
    %c0_i32_1 = arith.constant 0 : i32
    return %c0_i32, %c0_i32_0 : i32, i32
  }
  func.func @transform_2(%arg0: i32) -> (i32, i32) {
    %c0_i32 = arith.constant 0 : i32
    %c0_i32_0 = arith.constant 0 : i32
    %c0_i32_1 = arith.constant 0 : i32
    return %c0_i32, %c0_i32_0 : i32, i32
  }
  func.func @transform_3(%arg0: i32) -> (i32, i32) {
    %c0_i32 = arith.constant 0 : i32
    %c0_i32_0 = arith.constant 0 : i32
    return %arg0, %c0_i32 : i32, i32
  }
}

module attributes {stable_mosaic.version = 11 : i64} {
  func.func @_mm_kernel_1k(%arg0: i32, %arg1: i32, %arg2: memref<8x512xbf16, #tpu.memory_space<vmem>>, %arg3: memref<512x64xbf16, #tpu.memory_space<vmem>>, %arg4: memref<8x64xf32, #tpu.memory_space<vmem>>) attributes {dimension_semantics = [#tpu.dimension_semantics<parallel>, #tpu.dimension_semantics<parallel>], iteration_bounds = array<i64: 1, 1>, scalar_prefetch = 0 : i64, scratch_operands = 0 : i64, tpu.core_type = #tpu.core_type<tc>, window_params = [{transform_indices = @transform_0, window_bounds = array<i64: 8, 512>}, {transform_indices = @transform_1, window_bounds = array<i64: 512, 64>}, {transform_indices = @transform_2, window_bounds = array<i64: 8, 64>}]} {
    %c0 = arith.constant 0 : index
    %c0_0 = arith.constant 0 : index
    %0 = vector.load %arg2[%c0, %c0_0] : memref<8x512xbf16, #tpu.memory_space<vmem>>, vector<8x512xbf16>
    %cst = arith.constant 0.000000e+00 : bf16
    %1 = vector.broadcast %cst : bf16 to vector<8x512xbf16>
    %2 = arith.cmpf ogt, %0, %1 : vector<8x512xbf16>
    %cst_1 = arith.constant 2.001950e-01 : bf16
    %3 = vector.broadcast %cst_1 : bf16 to vector<8x512xbf16>
    %4 = arith.mulf %3, %0 : vector<8x512xbf16>
    %5 = arith.select %2, %0, %4 : vector<8x512xi1>, vector<8x512xbf16>
    %c0_2 = arith.constant 0 : index
    %c0_3 = arith.constant 0 : index
    %6 = vector.load %arg3[%c0_2, %c0_3] : memref<512x64xbf16, #tpu.memory_space<vmem>>, vector<512x64xbf16>
    %cst_4 = arith.constant dense<0.000000e+00> : vector<8x64xf32>
    %7 = tpu.matmul %5, %6, %cst_4 {dimension_numbers = #tpu.dot_dimension_numbers<[1], [0], [0], [1], [0, 0, 1, 1], [], []>} : vector<8x512xbf16>, vector<512x64xbf16>, vector<8x64xf32> -> vector<8x64xf32>
    %c0_5 = arith.constant 0 : index
    %c0_6 = arith.constant 0 : index
    %8 = vector.load %arg4[%c0_5, %c0_6] : memref<8x64xf32, #tpu.memory_space<vmem>>, vector<8x64xf32>
    tpu.vector_store %arg4[%c0_5, %c0_6], %7 {strides = array<i32>} : memref<8x64xf32, #tpu.memory_space<vmem>>, vector<8x64xf32>,
    return
  }
  func.func @transform_0(%arg0: i32, %arg1: i32) -> (i32, i32) {
    %c0_i32 = arith.constant 0 : i32
    %c0_i32_0 = arith.constant 0 : i32
    return %arg0, %c0_i32 : i32, i32
  }
  func.func @transform_1(%arg0: i32, %arg1: i32) -> (i32, i32) {
    %c0_i32 = arith.constant 0 : i32
    %c0_i32_0 = arith.constant 0 : i32
    return %c0_i32, %arg1 : i32, i32
  }
  func.func @transform_2(%arg0: i32, %arg1: i32) -> (i32, i32) {
    %c0_i32 = arith.constant 0 : i32
    return %arg0, %arg1 : i32, i32
  }
}

module attributes {stable_mosaic.version = 11 : i64} {
  func.func @_bn_stats_kernel(%arg0: i32, %arg1: memref<4x128xf32, #tpu.memory_space<vmem>>, %arg2: memref<1x128xf32, #tpu.memory_space<vmem>>, %arg3: memref<1x128xf32, #tpu.memory_space<vmem>>) attributes {dimension_semantics = [#tpu.dimension_semantics<arbitrary>], iteration_bounds = array<i64: 1>, scalar_prefetch = 0 : i64, scratch_operands = 0 : i64, tpu.core_type = #tpu.core_type<tc>, window_params = [{transform_indices = @transform_0, window_bounds = array<i64: 4, 128>}, {pipeline_mode = #tpu.pipeline_mode<synchronous>, transform_indices = @transform_1, window_bounds = array<i64: 1, 128>}, {pipeline_mode = #tpu.pipeline_mode<synchronous>, transform_indices = @transform_2, window_bounds = array<i64: 1, 128>}]} {
    %c0_i32 = arith.constant 0 : i32
    %0 = arith.cmpi eq, %arg0, %c0_i32 : i32
    %1 = arith.extui %0 : i1 to i32
    %c0_i32_0 = arith.constant 0 : i32
    %2 = arith.cmpi ne, %1, %c0_i32_0 : i32
    scf.if %2 {
      %cst_11 = arith.constant 0.000000e+00 : f32
      %15 = vector.broadcast %cst_11 : f32 to vector<1x128xf32>
      %c0_12 = arith.constant 0 : index
      %c0_13 = arith.constant 0 : index
      %16 = vector.load %arg2[%c0_12, %c0_13] : memref<1x128xf32, #tpu.memory_space<vmem>>, vector<1x128xf32>
      tpu.vector_store %arg2[%c0_12, %c0_13], %15 {strides = array<i32>} : memref<1x128xf32, #tpu.memory_space<vmem>>, vector<1x128xf32>,
      %cst_14 = arith.constant 0.000000e+00 : f32
      %17 = vector.broadcast %cst_14 : f32 to vector<1x128xf32>
      %c0_15 = arith.constant 0 : index
      %c0_16 = arith.constant 0 : index
      %18 = vector.load %arg3[%c0_15, %c0_16] : memref<1x128xf32, #tpu.memory_space<vmem>>, vector<1x128xf32>
      tpu.vector_store %arg3[%c0_15, %c0_16], %17 {strides = array<i32>} : memref<1x128xf32, #tpu.memory_space<vmem>>, vector<1x128xf32>,
    } else {
    }
    %c0 = arith.constant 0 : index
    %c0_1 = arith.constant 0 : index
    %3 = vector.load %arg1[%c0, %c0_1] : memref<4x128xf32, #tpu.memory_space<vmem>>, vector<4x128xf32>
    %c0_2 = arith.constant 0 : index
    %c0_3 = arith.constant 0 : index
    %4 = vector.load %arg2[%c0_2, %c0_3] : memref<1x128xf32, #tpu.memory_space<vmem>>, vector<1x128xf32>
    %cst = arith.constant dense<0.000000e+00> : vector<128xf32>
    %5 = vector.multi_reduction <add>, %3, %cst [0] : vector<4x128xf32> to vector<128xf32>
    %6 = vector.shape_cast %5 : vector<128xf32> to vector<1x128xf32>
    %7 = arith.addf %4, %6 : vector<1x128xf32>
    %c0_4 = arith.constant 0 : index
    %c0_5 = arith.constant 0 : index
    %8 = vector.load %arg2[%c0_4, %c0_5] : memref<1x128xf32, #tpu.memory_space<vmem>>, vector<1x128xf32>
    tpu.vector_store %arg2[%c0_4, %c0_5], %7 {strides = array<i32>} : memref<1x128xf32, #tpu.memory_space<vmem>>, vector<1x128xf32>,
    %c0_6 = arith.constant 0 : index
    %c0_7 = arith.constant 0 : index
    %9 = vector.load %arg3[%c0_6, %c0_7] : memref<1x128xf32, #tpu.memory_space<vmem>>, vector<1x128xf32>
    %10 = arith.mulf %3, %3 : vector<4x128xf32>
    %cst_8 = arith.constant dense<0.000000e+00> : vector<128xf32>
    %11 = vector.multi_reduction <add>, %10, %cst_8 [0] : vector<4x128xf32> to vector<128xf32>
    %12 = vector.shape_cast %11 : vector<128xf32> to vector<1x128xf32>
    %13 = arith.addf %9, %12 : vector<1x128xf32>
    %c0_9 = arith.constant 0 : index
    %c0_10 = arith.constant 0 : index
    %14 = vector.load %arg3[%c0_9, %c0_10] : memref<1x128xf32, #tpu.memory_space<vmem>>, vector<1x128xf32>
    tpu.vector_store %arg3[%c0_9, %c0_10], %13 {strides = array<i32>} : memref<1x128xf32, #tpu.memory_space<vmem>>, vector<1x128xf32>,
    return
  }
  func.func @transform_0(%arg0: i32) -> (i32, i32) {
    %c0_i32 = arith.constant 0 : i32
    %c0_i32_0 = arith.constant 0 : i32
    return %arg0, %c0_i32 : i32, i32
  }
  func.func @transform_1(%arg0: i32) -> (i32, i32) {
    %c0_i32 = arith.constant 0 : i32
    %c0_i32_0 = arith.constant 0 : i32
    %c0_i32_1 = arith.constant 0 : i32
    return %c0_i32, %c0_i32_0 : i32, i32
  }
  func.func @transform_2(%arg0: i32) -> (i32, i32) {
    %c0_i32 = arith.constant 0 : i32
    %c0_i32_0 = arith.constant 0 : i32
    %c0_i32_1 = arith.constant 0 : i32
    return %c0_i32, %c0_i32_0 : i32, i32
  }
}

module attributes {stable_mosaic.version = 11 : i64} {
  func.func @_bn_apply_kernel(%arg0: i32, %arg1: memref<4x128xf32, #tpu.memory_space<vmem>>, %arg2: memref<1x128xf32, #tpu.memory_space<vmem>>, %arg3: memref<1x128xf32, #tpu.memory_space<vmem>>, %arg4: memref<4x128xf32, #tpu.memory_space<vmem>>) attributes {dimension_semantics = [#tpu.dimension_semantics<parallel>], iteration_bounds = array<i64: 1>, scalar_prefetch = 0 : i64, scratch_operands = 0 : i64, tpu.core_type = #tpu.core_type<tc>, window_params = [{transform_indices = @transform_0, window_bounds = array<i64: 4, 128>}, {pipeline_mode = #tpu.pipeline_mode<synchronous>, transform_indices = @transform_1, window_bounds = array<i64: 1, 128>}, {pipeline_mode = #tpu.pipeline_mode<synchronous>, transform_indices = @transform_2, window_bounds = array<i64: 1, 128>}, {transform_indices = @transform_3, window_bounds = array<i64: 4, 128>}]} {
    %c0 = arith.constant 0 : index
    %c0_0 = arith.constant 0 : index
    %0 = vector.load %arg1[%c0, %c0_0] : memref<4x128xf32, #tpu.memory_space<vmem>>, vector<4x128xf32>
    %c0_1 = arith.constant 0 : index
    %c0_2 = arith.constant 0 : index
    %1 = vector.load %arg2[%c0_1, %c0_2] : memref<1x128xf32, #tpu.memory_space<vmem>>, vector<1x128xf32>
    %2 = vector.broadcast %1 : vector<1x128xf32> to vector<4x128xf32>
    %3 = arith.mulf %0, %2 : vector<4x128xf32>
    %c0_3 = arith.constant 0 : index
    %c0_4 = arith.constant 0 : index
    %4 = vector.load %arg3[%c0_3, %c0_4] : memref<1x128xf32, #tpu.memory_space<vmem>>, vector<1x128xf32>
    %5 = vector.broadcast %4 : vector<1x128xf32> to vector<4x128xf32>
    %6 = arith.addf %3, %5 : vector<4x128xf32>
    %c0_5 = arith.constant 0 : index
    %c0_6 = arith.constant 0 : index
    %7 = vector.load %arg4[%c0_5, %c0_6] : memref<4x128xf32, #tpu.memory_space<vmem>>, vector<4x128xf32>
    tpu.vector_store %arg4[%c0_5, %c0_6], %6 {strides = array<i32>} : memref<4x128xf32, #tpu.memory_space<vmem>>, vector<4x128xf32>,
    return
  }
  func.func @transform_0(%arg0: i32) -> (i32, i32) {
    %c0_i32 = arith.constant 0 : i32
    %c0_i32_0 = arith.constant 0 : i32
    return %arg0, %c0_i32 : i32, i32
  }
  func.func @transform_1(%arg0: i32) -> (i32, i32) {
    %c0_i32 = arith.constant 0 : i32
    %c0_i32_0 = arith.constant 0 : i32
    %c0_i32_1 = arith.constant 0 : i32
    return %c0_i32, %c0_i32_0 : i32, i32
  }
  func.func @transform_2(%arg0: i32) -> (i32, i32) {
    %c0_i32 = arith.constant 0 : i32
    %c0_i32_0 = arith.constant 0 : i32
    %c0_i32_1 = arith.constant 0 : i32
    return %c0_i32, %c0_i32_0 : i32, i32
  }
  func.func @transform_3(%arg0: i32) -> (i32, i32) {
    %c0_i32 = arith.constant 0 : i32
    %c0_i32_0 = arith.constant 0 : i32
    return %arg0, %c0_i32 : i32, i32
  }
}

module attributes {stable_mosaic.version = 11 : i64} {
  func.func @_mm_kernel_1k(%arg0: i32, %arg1: i32, %arg2: memref<8x1024xbf16, #tpu.memory_space<vmem>>, %arg3: memref<1024x64xbf16, #tpu.memory_space<vmem>>, %arg4: memref<8x64xf32, #tpu.memory_space<vmem>>) attributes {dimension_semantics = [#tpu.dimension_semantics<parallel>, #tpu.dimension_semantics<parallel>], iteration_bounds = array<i64: 1, 1>, scalar_prefetch = 0 : i64, scratch_operands = 0 : i64, tpu.core_type = #tpu.core_type<tc>, window_params = [{transform_indices = @transform_0, window_bounds = array<i64: 8, 1024>}, {transform_indices = @transform_1, window_bounds = array<i64: 1024, 64>}, {transform_indices = @transform_2, window_bounds = array<i64: 8, 64>}]} {
    %c0 = arith.constant 0 : index
    %c0_0 = arith.constant 0 : index
    %0 = vector.load %arg2[%c0, %c0_0] : memref<8x1024xbf16, #tpu.memory_space<vmem>>, vector<8x1024xbf16>
    %cst = arith.constant 0.000000e+00 : bf16
    %1 = vector.broadcast %cst : bf16 to vector<8x1024xbf16>
    %2 = arith.cmpf ogt, %0, %1 : vector<8x1024xbf16>
    %cst_1 = arith.constant 2.001950e-01 : bf16
    %3 = vector.broadcast %cst_1 : bf16 to vector<8x1024xbf16>
    %4 = arith.mulf %3, %0 : vector<8x1024xbf16>
    %5 = arith.select %2, %0, %4 : vector<8x1024xi1>, vector<8x1024xbf16>
    %c0_2 = arith.constant 0 : index
    %c0_3 = arith.constant 0 : index
    %6 = vector.load %arg3[%c0_2, %c0_3] : memref<1024x64xbf16, #tpu.memory_space<vmem>>, vector<1024x64xbf16>
    %cst_4 = arith.constant dense<0.000000e+00> : vector<8x64xf32>
    %7 = tpu.matmul %5, %6, %cst_4 {dimension_numbers = #tpu.dot_dimension_numbers<[1], [0], [0], [1], [0, 0, 1, 1], [], []>} : vector<8x1024xbf16>, vector<1024x64xbf16>, vector<8x64xf32> -> vector<8x64xf32>
    %c0_5 = arith.constant 0 : index
    %c0_6 = arith.constant 0 : index
    %8 = vector.load %arg4[%c0_5, %c0_6] : memref<8x64xf32, #tpu.memory_space<vmem>>, vector<8x64xf32>
    tpu.vector_store %arg4[%c0_5, %c0_6], %7 {strides = array<i32>} : memref<8x64xf32, #tpu.memory_space<vmem>>, vector<8x64xf32>,
    return
  }
  func.func @transform_0(%arg0: i32, %arg1: i32) -> (i32, i32) {
    %c0_i32 = arith.constant 0 : i32
    %c0_i32_0 = arith.constant 0 : i32
    return %arg0, %c0_i32 : i32, i32
  }
  func.func @transform_1(%arg0: i32, %arg1: i32) -> (i32, i32) {
    %c0_i32 = arith.constant 0 : i32
    %c0_i32_0 = arith.constant 0 : i32
    return %c0_i32, %arg1 : i32, i32
  }
  func.func @transform_2(%arg0: i32, %arg1: i32) -> (i32, i32) {
    %c0_i32 = arith.constant 0 : i32
    return %arg0, %arg1 : i32, i32
  }
}

module attributes {stable_mosaic.version = 11 : i64} {
  func.func @_mm_kernel_1k(%arg0: i32, %arg1: i32, %arg2: memref<8x576xbf16, #tpu.memory_space<vmem>>, %arg3: memref<576x256xbf16, #tpu.memory_space<vmem>>, %arg4: memref<8x256xf32, #tpu.memory_space<vmem>>) attributes {dimension_semantics = [#tpu.dimension_semantics<parallel>, #tpu.dimension_semantics<parallel>], iteration_bounds = array<i64: 1, 1>, scalar_prefetch = 0 : i64, scratch_operands = 0 : i64, tpu.core_type = #tpu.core_type<tc>, window_params = [{transform_indices = @transform_0, window_bounds = array<i64: 8, 576>}, {transform_indices = @transform_1, window_bounds = array<i64: 576, 256>}, {transform_indices = @transform_2, window_bounds = array<i64: 8, 256>}]} {
    %c0 = arith.constant 0 : index
    %c0_0 = arith.constant 0 : index
    %0 = vector.load %arg2[%c0, %c0_0] : memref<8x576xbf16, #tpu.memory_space<vmem>>, vector<8x576xbf16>
    %cst = arith.constant 0.000000e+00 : bf16
    %1 = vector.broadcast %cst : bf16 to vector<8x576xbf16>
    %2 = arith.maximumf %0, %1 : vector<8x576xbf16>
    %c0_1 = arith.constant 0 : index
    %c0_2 = arith.constant 0 : index
    %3 = vector.load %arg3[%c0_1, %c0_2] : memref<576x256xbf16, #tpu.memory_space<vmem>>, vector<576x256xbf16>
    %cst_3 = arith.constant dense<0.000000e+00> : vector<8x256xf32>
    %4 = tpu.matmul %2, %3, %cst_3 {dimension_numbers = #tpu.dot_dimension_numbers<[1], [0], [0], [1], [0, 0, 1, 1], [], []>} : vector<8x576xbf16>, vector<576x256xbf16>, vector<8x256xf32> -> vector<8x256xf32>
    %c0_4 = arith.constant 0 : index
    %c0_5 = arith.constant 0 : index
    %5 = vector.load %arg4[%c0_4, %c0_5] : memref<8x256xf32, #tpu.memory_space<vmem>>, vector<8x256xf32>
    tpu.vector_store %arg4[%c0_4, %c0_5], %4 {strides = array<i32>} : memref<8x256xf32, #tpu.memory_space<vmem>>, vector<8x256xf32>,
    return
  }
  func.func @transform_0(%arg0: i32, %arg1: i32) -> (i32, i32) {
    %c0_i32 = arith.constant 0 : i32
    %c0_i32_0 = arith.constant 0 : i32
    return %arg0, %c0_i32 : i32, i32
  }
  func.func @transform_1(%arg0: i32, %arg1: i32) -> (i32, i32) {
    %c0_i32 = arith.constant 0 : i32
    %c0_i32_0 = arith.constant 0 : i32
    return %c0_i32, %arg1 : i32, i32
  }
  func.func @transform_2(%arg0: i32, %arg1: i32) -> (i32, i32) {
    %c0_i32 = arith.constant 0 : i32
    return %arg0, %arg1 : i32, i32
  }
}

module attributes {stable_mosaic.version = 11 : i64} {
  func.func @_mm_kernel_nk(%arg0: i32, %arg1: i32, %arg2: i32, %arg3: memref<8x512xbf16, #tpu.memory_space<vmem>>, %arg4: memref<512x128xbf16, #tpu.memory_space<vmem>>, %arg5: memref<8x128xf32, #tpu.memory_space<vmem>>, %arg6: memref<8x128xf32, #tpu.memory_space<vmem>>) attributes {dimension_semantics = [#tpu.dimension_semantics<parallel>, #tpu.dimension_semantics<parallel>, #tpu.dimension_semantics<arbitrary>], iteration_bounds = array<i64: 1, 1, 3>, scalar_prefetch = 0 : i64, scratch_operands = 1 : i64, tpu.core_type = #tpu.core_type<tc>, window_params = [{transform_indices = @transform_0, window_bounds = array<i64: 8, 512>}, {transform_indices = @transform_1, window_bounds = array<i64: 512, 128>}, {transform_indices = @transform_2, window_bounds = array<i64: 8, 128>}]} {
    %c0_i32 = arith.constant 0 : i32
    %0 = arith.cmpi eq, %arg2, %c0_i32 : i32
    %1 = arith.extui %0 : i1 to i32
    %c0_i32_0 = arith.constant 0 : i32
    %2 = arith.cmpi ne, %1, %c0_i32_0 : i32
    scf.if %2 {
      %cst_10 = arith.constant 0.000000e+00 : f32
      %14 = vector.broadcast %cst_10 : f32 to vector<8x128xf32>
      %c0_11 = arith.constant 0 : index
      %c0_12 = arith.constant 0 : index
      %15 = vector.load %arg6[%c0_11, %c0_12] : memref<8x128xf32, #tpu.memory_space<vmem>>, vector<8x128xf32>
      tpu.vector_store %arg6[%c0_11, %c0_12], %14 {strides = array<i32>} : memref<8x128xf32, #tpu.memory_space<vmem>>, vector<8x128xf32>,
    } else {
    }
    %c0 = arith.constant 0 : index
    %c0_1 = arith.constant 0 : index
    %3 = vector.load %arg3[%c0, %c0_1] : memref<8x512xbf16, #tpu.memory_space<vmem>>, vector<8x512xbf16>
    %cst = arith.constant 0.000000e+00 : bf16
    %4 = vector.broadcast %cst : bf16 to vector<8x512xbf16>
    %5 = arith.maximumf %3, %4 : vector<8x512xbf16>
    %c0_2 = arith.constant 0 : index
    %c0_3 = arith.constant 0 : index
    %6 = vector.load %arg6[%c0_2, %c0_3] : memref<8x128xf32, #tpu.memory_space<vmem>>, vector<8x128xf32>
    %c0_4 = arith.constant 0 : index
    %c0_5 = arith.constant 0 : index
    %7 = vector.load %arg4[%c0_4, %c0_5] : memref<512x128xbf16, #tpu.memory_space<vmem>>, vector<512x128xbf16>
    %cst_6 = arith.constant dense<0.000000e+00> : vector<8x128xf32>
    %8 = tpu.matmul %5, %7, %cst_6 {dimension_numbers = #tpu.dot_dimension_numbers<[1], [0], [0], [1], [0, 0, 1, 1], [], []>} : vector<8x512xbf16>, vector<512x128xbf16>, vector<8x128xf32> -> vector<8x128xf32>
    %9 = arith.addf %6, %8 : vector<8x128xf32>
    %c0_7 = arith.constant 0 : index
    %c0_8 = arith.constant 0 : index
    %10 = vector.load %arg6[%c0_7, %c0_8] : memref<8x128xf32, #tpu.memory_space<vmem>>, vector<8x128xf32>
    tpu.vector_store %arg6[%c0_7, %c0_8], %9 {strides = array<i32>} : memref<8x128xf32, #tpu.memory_space<vmem>>, vector<8x128xf32>,
    %c2_i32 = arith.constant 2 : i32
    %11 = arith.cmpi eq, %arg2, %c2_i32 : i32
    %12 = arith.extui %11 : i1 to i32
    %c0_i32_9 = arith.constant 0 : i32
    %13 = arith.cmpi ne, %12, %c0_i32_9 : i32
    scf.if %13 {
      %c0_10 = arith.constant 0 : index
      %c0_11 = arith.constant 0 : index
      %14 = vector.load %arg6[%c0_10, %c0_11] : memref<8x128xf32, #tpu.memory_space<vmem>>, vector<8x128xf32>
      %c0_12 = arith.constant 0 : index
      %c0_13 = arith.constant 0 : index
      %15 = vector.load %arg5[%c0_12, %c0_13] : memref<8x128xf32, #tpu.memory_space<vmem>>, vector<8x128xf32>
      tpu.vector_store %arg5[%c0_12, %c0_13], %14 {strides = array<i32>} : memref<8x128xf32, #tpu.memory_space<vmem>>, vector<8x128xf32>,
    } else {
    }
    return
  }
  func.func @transform_0(%arg0: i32, %arg1: i32, %arg2: i32) -> (i32, i32) {
    %c0_i32 = arith.constant 0 : i32
    return %arg0, %arg2 : i32, i32
  }
  func.func @transform_1(%arg0: i32, %arg1: i32, %arg2: i32) -> (i32, i32) {
    %c0_i32 = arith.constant 0 : i32
    return %arg2, %arg1 : i32, i32
  }
  func.func @transform_2(%arg0: i32, %arg1: i32, %arg2: i32) -> (i32, i32) {
    %c0_i32 = arith.constant 0 : i32
    return %arg0, %arg1 : i32, i32
  }
}

module attributes {stable_mosaic.version = 11 : i64} {
  func.func @_mm_kernel_1k(%arg0: i32, %arg1: i32, %arg2: memref<32x576xbf16, #tpu.memory_space<vmem>>, %arg3: memref<576x64xbf16, #tpu.memory_space<vmem>>, %arg4: memref<32x64xf32, #tpu.memory_space<vmem>>) attributes {dimension_semantics = [#tpu.dimension_semantics<parallel>, #tpu.dimension_semantics<parallel>], iteration_bounds = array<i64: 1, 1>, scalar_prefetch = 0 : i64, scratch_operands = 0 : i64, tpu.core_type = #tpu.core_type<tc>, window_params = [{transform_indices = @transform_0, window_bounds = array<i64: 32, 576>}, {transform_indices = @transform_1, window_bounds = array<i64: 576, 64>}, {transform_indices = @transform_2, window_bounds = array<i64: 32, 64>}]} {
    %c0 = arith.constant 0 : index
    %c0_0 = arith.constant 0 : index
    %0 = vector.load %arg2[%c0, %c0_0] : memref<32x576xbf16, #tpu.memory_space<vmem>>, vector<32x576xbf16>
    %cst = arith.constant 0.000000e+00 : bf16
    %1 = vector.broadcast %cst : bf16 to vector<32x576xbf16>
    %2 = arith.maximumf %0, %1 : vector<32x576xbf16>
    %c0_1 = arith.constant 0 : index
    %c0_2 = arith.constant 0 : index
    %3 = vector.load %arg3[%c0_1, %c0_2] : memref<576x64xbf16, #tpu.memory_space<vmem>>, vector<576x64xbf16>
    %cst_3 = arith.constant dense<0.000000e+00> : vector<32x64xf32>
    %4 = tpu.matmul %2, %3, %cst_3 {dimension_numbers = #tpu.dot_dimension_numbers<[1], [0], [0], [1], [0, 0, 1, 1], [], []>} : vector<32x576xbf16>, vector<576x64xbf16>, vector<32x64xf32> -> vector<32x64xf32>
    %c0_4 = arith.constant 0 : index
    %c0_5 = arith.constant 0 : index
    %5 = vector.load %arg4[%c0_4, %c0_5] : memref<32x64xf32, #tpu.memory_space<vmem>>, vector<32x64xf32>
    tpu.vector_store %arg4[%c0_4, %c0_5], %4 {strides = array<i32>} : memref<32x64xf32, #tpu.memory_space<vmem>>, vector<32x64xf32>,
    return
  }
  func.func @transform_0(%arg0: i32, %arg1: i32) -> (i32, i32) {
    %c0_i32 = arith.constant 0 : i32
    %c0_i32_0 = arith.constant 0 : i32
    return %arg0, %c0_i32 : i32, i32
  }
  func.func @transform_1(%arg0: i32, %arg1: i32) -> (i32, i32) {
    %c0_i32 = arith.constant 0 : i32
    %c0_i32_0 = arith.constant 0 : i32
    return %c0_i32, %arg1 : i32, i32
  }
  func.func @transform_2(%arg0: i32, %arg1: i32) -> (i32, i32) {
    %c0_i32 = arith.constant 0 : i32
    return %arg0, %arg1 : i32, i32
  }
}

module attributes {stable_mosaic.version = 11 : i64} {
  func.func @_mm_kernel_1k(%arg0: i32, %arg1: i32, %arg2: memref<128x288xbf16, #tpu.memory_space<vmem>>, %arg3: memref<288x32xbf16, #tpu.memory_space<vmem>>, %arg4: memref<128x32xf32, #tpu.memory_space<vmem>>) attributes {dimension_semantics = [#tpu.dimension_semantics<parallel>, #tpu.dimension_semantics<parallel>], iteration_bounds = array<i64: 1, 1>, scalar_prefetch = 0 : i64, scratch_operands = 0 : i64, tpu.core_type = #tpu.core_type<tc>, window_params = [{transform_indices = @transform_0, window_bounds = array<i64: 128, 288>}, {transform_indices = @transform_1, window_bounds = array<i64: 288, 32>}, {transform_indices = @transform_2, window_bounds = array<i64: 128, 32>}]} {
    %c0 = arith.constant 0 : index
    %c0_0 = arith.constant 0 : index
    %0 = vector.load %arg2[%c0, %c0_0] : memref<128x288xbf16, #tpu.memory_space<vmem>>, vector<128x288xbf16>
    %cst = arith.constant 0.000000e+00 : bf16
    %1 = vector.broadcast %cst : bf16 to vector<128x288xbf16>
    %2 = arith.maximumf %0, %1 : vector<128x288xbf16>
    %c0_1 = arith.constant 0 : index
    %c0_2 = arith.constant 0 : index
    %3 = vector.load %arg3[%c0_1, %c0_2] : memref<288x32xbf16, #tpu.memory_space<vmem>>, vector<288x32xbf16>
    %cst_3 = arith.constant dense<0.000000e+00> : vector<128x32xf32>
    %4 = tpu.matmul %2, %3, %cst_3 {dimension_numbers = #tpu.dot_dimension_numbers<[1], [0], [0], [1], [0, 0, 1, 1], [], []>} : vector<128x288xbf16>, vector<288x32xbf16>, vector<128x32xf32> -> vector<128x32xf32>
    %c0_4 = arith.constant 0 : index
    %c0_5 = arith.constant 0 : index
    %5 = vector.load %arg4[%c0_4, %c0_5] : memref<128x32xf32, #tpu.memory_space<vmem>>, vector<128x32xf32>
    tpu.vector_store %arg4[%c0_4, %c0_5], %4 {strides = array<i32>} : memref<128x32xf32, #tpu.memory_space<vmem>>, vector<128x32xf32>,
    return
  }
  func.func @transform_0(%arg0: i32, %arg1: i32) -> (i32, i32) {
    %c0_i32 = arith.constant 0 : i32
    %c0_i32_0 = arith.constant 0 : i32
    return %arg0, %c0_i32 : i32, i32
  }
  func.func @transform_1(%arg0: i32, %arg1: i32) -> (i32, i32) {
    %c0_i32 = arith.constant 0 : i32
    %c0_i32_0 = arith.constant 0 : i32
    return %c0_i32, %arg1 : i32, i32
  }
  func.func @transform_2(%arg0: i32, %arg1: i32) -> (i32, i32) {
    %c0_i32 = arith.constant 0 : i32
    return %arg0, %arg1 : i32, i32
  }
}

module attributes {stable_mosaic.version = 11 : i64} {
  func.func @_bn_stats_kernel(%arg0: i32, %arg1: memref<32x128xf32, #tpu.memory_space<vmem>>, %arg2: memref<1x128xf32, #tpu.memory_space<vmem>>, %arg3: memref<1x128xf32, #tpu.memory_space<vmem>>) attributes {dimension_semantics = [#tpu.dimension_semantics<arbitrary>], iteration_bounds = array<i64: 1>, scalar_prefetch = 0 : i64, scratch_operands = 0 : i64, tpu.core_type = #tpu.core_type<tc>, window_params = [{transform_indices = @transform_0, window_bounds = array<i64: 32, 128>}, {pipeline_mode = #tpu.pipeline_mode<synchronous>, transform_indices = @transform_1, window_bounds = array<i64: 1, 128>}, {pipeline_mode = #tpu.pipeline_mode<synchronous>, transform_indices = @transform_2, window_bounds = array<i64: 1, 128>}]} {
    %c0_i32 = arith.constant 0 : i32
    %0 = arith.cmpi eq, %arg0, %c0_i32 : i32
    %1 = arith.extui %0 : i1 to i32
    %c0_i32_0 = arith.constant 0 : i32
    %2 = arith.cmpi ne, %1, %c0_i32_0 : i32
    scf.if %2 {
      %cst_11 = arith.constant 0.000000e+00 : f32
      %15 = vector.broadcast %cst_11 : f32 to vector<1x128xf32>
      %c0_12 = arith.constant 0 : index
      %c0_13 = arith.constant 0 : index
      %16 = vector.load %arg2[%c0_12, %c0_13] : memref<1x128xf32, #tpu.memory_space<vmem>>, vector<1x128xf32>
      tpu.vector_store %arg2[%c0_12, %c0_13], %15 {strides = array<i32>} : memref<1x128xf32, #tpu.memory_space<vmem>>, vector<1x128xf32>,
      %cst_14 = arith.constant 0.000000e+00 : f32
      %17 = vector.broadcast %cst_14 : f32 to vector<1x128xf32>
      %c0_15 = arith.constant 0 : index
      %c0_16 = arith.constant 0 : index
      %18 = vector.load %arg3[%c0_15, %c0_16] : memref<1x128xf32, #tpu.memory_space<vmem>>, vector<1x128xf32>
      tpu.vector_store %arg3[%c0_15, %c0_16], %17 {strides = array<i32>} : memref<1x128xf32, #tpu.memory_space<vmem>>, vector<1x128xf32>,
    } else {
    }
    %c0 = arith.constant 0 : index
    %c0_1 = arith.constant 0 : index
    %3 = vector.load %arg1[%c0, %c0_1] : memref<32x128xf32, #tpu.memory_space<vmem>>, vector<32x128xf32>
    %c0_2 = arith.constant 0 : index
    %c0_3 = arith.constant 0 : index
    %4 = vector.load %arg2[%c0_2, %c0_3] : memref<1x128xf32, #tpu.memory_space<vmem>>, vector<1x128xf32>
    %cst = arith.constant dense<0.000000e+00> : vector<128xf32>
    %5 = vector.multi_reduction <add>, %3, %cst [0] : vector<32x128xf32> to vector<128xf32>
    %6 = vector.shape_cast %5 : vector<128xf32> to vector<1x128xf32>
    %7 = arith.addf %4, %6 : vector<1x128xf32>
    %c0_4 = arith.constant 0 : index
    %c0_5 = arith.constant 0 : index
    %8 = vector.load %arg2[%c0_4, %c0_5] : memref<1x128xf32, #tpu.memory_space<vmem>>, vector<1x128xf32>
    tpu.vector_store %arg2[%c0_4, %c0_5], %7 {strides = array<i32>} : memref<1x128xf32, #tpu.memory_space<vmem>>, vector<1x128xf32>,
    %c0_6 = arith.constant 0 : index
    %c0_7 = arith.constant 0 : index
    %9 = vector.load %arg3[%c0_6, %c0_7] : memref<1x128xf32, #tpu.memory_space<vmem>>, vector<1x128xf32>
    %10 = arith.mulf %3, %3 : vector<32x128xf32>
    %cst_8 = arith.constant dense<0.000000e+00> : vector<128xf32>
    %11 = vector.multi_reduction <add>, %10, %cst_8 [0] : vector<32x128xf32> to vector<128xf32>
    %12 = vector.shape_cast %11 : vector<128xf32> to vector<1x128xf32>
    %13 = arith.addf %9, %12 : vector<1x128xf32>
    %c0_9 = arith.constant 0 : index
    %c0_10 = arith.constant 0 : index
    %14 = vector.load %arg3[%c0_9, %c0_10] : memref<1x128xf32, #tpu.memory_space<vmem>>, vector<1x128xf32>
    tpu.vector_store %arg3[%c0_9, %c0_10], %13 {strides = array<i32>} : memref<1x128xf32, #tpu.memory_space<vmem>>, vector<1x128xf32>,
    return
  }
  func.func @transform_0(%arg0: i32) -> (i32, i32) {
    %c0_i32 = arith.constant 0 : i32
    %c0_i32_0 = arith.constant 0 : i32
    return %arg0, %c0_i32 : i32, i32
  }
  func.func @transform_1(%arg0: i32) -> (i32, i32) {
    %c0_i32 = arith.constant 0 : i32
    %c0_i32_0 = arith.constant 0 : i32
    %c0_i32_1 = arith.constant 0 : i32
    return %c0_i32, %c0_i32_0 : i32, i32
  }
  func.func @transform_2(%arg0: i32) -> (i32, i32) {
    %c0_i32 = arith.constant 0 : i32
    %c0_i32_0 = arith.constant 0 : i32
    %c0_i32_1 = arith.constant 0 : i32
    return %c0_i32, %c0_i32_0 : i32, i32
  }
}

module attributes {stable_mosaic.version = 11 : i64} {
  func.func @_bn_apply_kernel(%arg0: i32, %arg1: memref<32x128xf32, #tpu.memory_space<vmem>>, %arg2: memref<1x128xf32, #tpu.memory_space<vmem>>, %arg3: memref<1x128xf32, #tpu.memory_space<vmem>>, %arg4: memref<32x128xf32, #tpu.memory_space<vmem>>) attributes {dimension_semantics = [#tpu.dimension_semantics<parallel>], iteration_bounds = array<i64: 1>, scalar_prefetch = 0 : i64, scratch_operands = 0 : i64, tpu.core_type = #tpu.core_type<tc>, window_params = [{transform_indices = @transform_0, window_bounds = array<i64: 32, 128>}, {pipeline_mode = #tpu.pipeline_mode<synchronous>, transform_indices = @transform_1, window_bounds = array<i64: 1, 128>}, {pipeline_mode = #tpu.pipeline_mode<synchronous>, transform_indices = @transform_2, window_bounds = array<i64: 1, 128>}, {transform_indices = @transform_3, window_bounds = array<i64: 32, 128>}]} {
    %c0 = arith.constant 0 : index
    %c0_0 = arith.constant 0 : index
    %0 = vector.load %arg1[%c0, %c0_0] : memref<32x128xf32, #tpu.memory_space<vmem>>, vector<32x128xf32>
    %c0_1 = arith.constant 0 : index
    %c0_2 = arith.constant 0 : index
    %1 = vector.load %arg2[%c0_1, %c0_2] : memref<1x128xf32, #tpu.memory_space<vmem>>, vector<1x128xf32>
    %2 = vector.broadcast %1 : vector<1x128xf32> to vector<32x128xf32>
    %3 = arith.mulf %0, %2 : vector<32x128xf32>
    %c0_3 = arith.constant 0 : index
    %c0_4 = arith.constant 0 : index
    %4 = vector.load %arg3[%c0_3, %c0_4] : memref<1x128xf32, #tpu.memory_space<vmem>>, vector<1x128xf32>
    %5 = vector.broadcast %4 : vector<1x128xf32> to vector<32x128xf32>
    %6 = arith.addf %3, %5 : vector<32x128xf32>
    %c0_5 = arith.constant 0 : index
    %c0_6 = arith.constant 0 : index
    %7 = vector.load %arg4[%c0_5, %c0_6] : memref<32x128xf32, #tpu.memory_space<vmem>>, vector<32x128xf32>
    tpu.vector_store %arg4[%c0_5, %c0_6], %6 {strides = array<i32>} : memref<32x128xf32, #tpu.memory_space<vmem>>, vector<32x128xf32>,
    return
  }
  func.func @transform_0(%arg0: i32) -> (i32, i32) {
    %c0_i32 = arith.constant 0 : i32
    %c0_i32_0 = arith.constant 0 : i32
    return %arg0, %c0_i32 : i32, i32
  }
  func.func @transform_1(%arg0: i32) -> (i32, i32) {
    %c0_i32 = arith.constant 0 : i32
    %c0_i32_0 = arith.constant 0 : i32
    %c0_i32_1 = arith.constant 0 : i32
    return %c0_i32, %c0_i32_0 : i32, i32
  }
  func.func @transform_2(%arg0: i32) -> (i32, i32) {
    %c0_i32 = arith.constant 0 : i32
    %c0_i32_0 = arith.constant 0 : i32
    %c0_i32_1 = arith.constant 0 : i32
    return %c0_i32, %c0_i32_0 : i32, i32
  }
  func.func @transform_3(%arg0: i32) -> (i32, i32) {
    %c0_i32 = arith.constant 0 : i32
    %c0_i32_0 = arith.constant 0 : i32
    return %arg0, %c0_i32 : i32, i32
  }
}

module attributes {stable_mosaic.version = 11 : i64} {
  func.func @_mm_bias_kernel_1k(%arg0: i32, %arg1: i32, %arg2: memref<256x144xbf16, #tpu.memory_space<vmem>>, %arg3: memref<144x12xbf16, #tpu.memory_space<vmem>>, %arg4: memref<1x12xf32, #tpu.memory_space<vmem>>, %arg5: memref<256x12xf32, #tpu.memory_space<vmem>>) attributes {dimension_semantics = [#tpu.dimension_semantics<parallel>, #tpu.dimension_semantics<parallel>], iteration_bounds = array<i64: 2, 1>, scalar_prefetch = 0 : i64, scratch_operands = 0 : i64, tpu.core_type = #tpu.core_type<tc>, window_params = [{transform_indices = @transform_0, window_bounds = array<i64: 256, 144>}, {transform_indices = @transform_1, window_bounds = array<i64: 144, 12>}, {transform_indices = @transform_2, window_bounds = array<i64: 1, 12>}, {transform_indices = @transform_3, window_bounds = array<i64: 256, 12>}]} {
    %c0 = arith.constant 0 : index
    %c0_0 = arith.constant 0 : index
    %0 = vector.load %arg2[%c0, %c0_0] : memref<256x144xbf16, #tpu.memory_space<vmem>>, vector<256x144xbf16>
    %cst = arith.constant 0.000000e+00 : bf16
    %1 = vector.broadcast %cst : bf16 to vector<256x144xbf16>
    %2 = arith.maximumf %0, %1 : vector<256x144xbf16>
    %c0_1 = arith.constant 0 : index
    %c0_2 = arith.constant 0 : index
    %3 = vector.load %arg3[%c0_1, %c0_2] : memref<144x12xbf16, #tpu.memory_space<vmem>>, vector<144x12xbf16>
    %cst_3 = arith.constant dense<0.000000e+00> : vector<256x12xf32>
    %4 = tpu.matmul %2, %3, %cst_3 {dimension_numbers = #tpu.dot_dimension_numbers<[1], [0], [0], [1], [0, 0, 1, 1], [], []>} : vector<256x144xbf16>, vector<144x12xbf16>, vector<256x12xf32> -> vector<256x12xf32>
    %c0_4 = arith.constant 0 : index
    %c0_5 = arith.constant 0 : index
    %5 = vector.load %arg4[%c0_4, %c0_5] : memref<1x12xf32, #tpu.memory_space<vmem>>, vector<1x12xf32>
    %6 = vector.broadcast %5 : vector<1x12xf32> to vector<256x12xf32>
    %7 = arith.addf %4, %6 : vector<256x12xf32>
    %8 = math.tanh %7 : vector<256x12xf32>
    %c0_6 = arith.constant 0 : index
    %c0_7 = arith.constant 0 : index
    %9 = vector.load %arg5[%c0_6, %c0_7] : memref<256x12xf32, #tpu.memory_space<vmem>>, vector<256x12xf32>
    tpu.vector_store %arg5[%c0_6, %c0_7], %8 {strides = array<i32>} : memref<256x12xf32, #tpu.memory_space<vmem>>, vector<256x12xf32>,
    return
  }
  func.func @transform_0(%arg0: i32, %arg1: i32) -> (i32, i32) {
    %c0_i32 = arith.constant 0 : i32
    %c0_i32_0 = arith.constant 0 : i32
    return %arg0, %c0_i32 : i32, i32
  }
  func.func @transform_1(%arg0: i32, %arg1: i32) -> (i32, i32) {
    %c0_i32 = arith.constant 0 : i32
    %c0_i32_0 = arith.constant 0 : i32
    return %c0_i32, %arg1 : i32, i32
  }
  func.func @transform_2(%arg0: i32, %arg1: i32) -> (i32, i32) {
    %c0_i32 = arith.constant 0 : i32
    %c0_i32_0 = arith.constant 0 : i32
    return %c0_i32, %arg1 : i32, i32
  }
  func.func @transform_3(%arg0: i32, %arg1: i32) -> (i32, i32) {
    %c0_i32 = arith.constant 0 : i32
    return %arg0, %arg1 : i32, i32
  }
}

</mosaic_0001>

<llo_original>
// kernel: _lambda_.24
$region0: #{_lambda_.24}
  #allocation0 [shape = 'u32[]', space=smem, size = 0x4, offset = 0x4, fixed_abs, tag = 'smem constant byte address 0x4 - core index']
  #allocation1 [shape = 'u32[144,128]{1,0:T(1,128)}', space=vmem, size = 0x12000, scoped, tag = 'internal scratch']
  %s0 = inlined_call_operand.vmem [shape: bf16[512,48], index: 0, kind: input, shape index: {}]
  %s1 = inlined_call_operand.vmem [shape: bf16[48,8], index: 1, kind: input, shape index: {}]
  %s2 = inlined_call_operand.vmem [shape: f32[512,8], index: 2, kind: output, shape index: {}]
  %s3 = sld [smem:[#allocation0]]
  $region41: #{_lambda_.24} parent=0
    _
  %s5 = ssub.s32 1, %s3
  %s6 = scalar_select 0, %s5, %s3
  loop: start=0, step=1, limit=4
  $region2: #{_lambda_.24} parent=0 // loop_pre_header
    _
  $region3: #{_lambda_.24} parent=0 // loop_header
    %s8 = sphi 0, %s12
    %p9 = scmp.ge.s32.totalorder %s8, 4
    %s15 = sphi 0, %s27
    %s16 = sphi 0, %s23
    %s17 = sphi 0, %s15
    %s18 = sphi 0, %s16
    %s19 = sphi 0, %s17
    %s20 = sphi 0, %s18
    %s30 = sphi 0, %s32
    %s33 = sphi 0, %s30
    %s34 = sphi 0, %s33
    %s50 = sphi 0, %s34
    %s56 = sphi 0, %s58
    %s59 = sphi 0, %s56
    %s60 = sphi 0, %s59
    %s76 = sphi 0, %s60
    %s84 = sphi 0, %s86
    %s87 = sphi 0, %s84
    %s88 = sphi 0, %s87
    %s104 = sphi 0, %s88
  $region4: #{_lambda_.24} parent=0 // loop_header_branch
    %11 = sbr.rel (%p9) target = $region8
  $region5: #{_lambda_.24} parent=0 // loop_body
    %s13 = ssub.s32 %s8, 1
    %s14 = ssub.s32 %s8, 2
    %s21 = sadd.s32 1, %s16
    %p22 = scmp.ge.s32.totalorder %s21, 1
    %s23 = scalar_select %p22, 0, %s21
    %s24 = sadd.s32 1, %s15
    %s25 = scalar_select %p22, %s24, %s15
    %p26 = scmp.ge.s32.totalorder %s25, 2
    %s27 = scalar_select %p26, 0, %s25
    %s28 = ssub.s32 %s15, %s27
    %p29 = scmp.eq.s32.totalorder %s28, 0
    %s31 = sadd.s32 %s30, 1
    %s32 = scalar_select %p29, %s30, %s31
    %p35 = pneg %p29
    %p36 = scmp.eq.s32.totalorder %s8, 1
    %p37 = por %p35, %p36
    %p38 = scmp.ne.s32.totalorder %s30, %s33
    %p39 = scmp.eq.s32.totalorder %s8, 0
    %p40 = por %p38, %p39
    %p41 = scmp.ne.s32.totalorder %s30, %s33
    %p42 = scmp.eq.s32.totalorder %s13, 1
    %p43 = por %p41, %p42
    %p44 = scmp.ne.s32.totalorder %s33, %s34
    %p45 = scmp.eq.s32.totalorder %s13, 0
    %p46 = por %p44, %p45
    %p47 = scmp.ne.s32.totalorder %s33, %s34
    %p48 = scmp.eq.s32.totalorder %s14, 1
    %p49 = por %p47, %p48
    %p51 = scmp.ne.s32.totalorder %s34, %s50
    %p52 = scmp.eq.s32.totalorder %s14, 0
    %p53 = por %p51, %p52
    %s54 = ssub.s32 %s16, %s23
    %p55 = scmp.eq.s32.totalorder %s54, 0
    %s57 = sadd.s32 %s56, 1
    %s58 = scalar_select %p55, %s56, %s57
    %p61 = pneg %p55
    %p62 = scmp.eq.s32.totalorder %s8, 1
    %p63 = por %p61, %p62
    %p64 = scmp.ne.s32.totalorder %s56, %s59
    %p65 = scmp.eq.s32.totalorder %s8, 0
    %p66 = por %p64, %p65
    %p67 = scmp.ne.s32.totalorder %s56, %s59
    %p68 = scmp.eq.s32.totalorder %s13, 1
    %p69 = por %p67, %p68
    %p70 = scmp.ne.s32.totalorder %s59, %s60
    %p71 = scmp.eq.s32.totalorder %s13, 0
    %p72 = por %p70, %p71
    %p73 = scmp.ne.s32.totalorder %s59, %s60
    %p74 = scmp.eq.s32.totalorder %s14, 1
    %p75 = por %p73, %p74
    %p77 = scmp.ne.s32.totalorder %s60, %s76
    %p78 = scmp.eq.s32.totalorder %s14, 0
    %p79 = por %p77, %p78
    %s80 = ssub.s32 %s15, %s27
    %s81 = ssub.s32 %s16, %s23
    %s82 = sor.u32 %s80, %s81
    %p83 = scmp.eq.s32.totalorder %s82, 0
    %s85 = sadd.s32 %s84, 1
    %s86 = scalar_select %p83, %s84, %s85
    %p89 = pneg %p83
    %p90 = scmp.eq.s32.totalorder %s8, 1
    %p91 = por %p89, %p90
    %p92 = scmp.ne.s32.totalorder %s84, %s87
    %p93 = scmp.eq.s32.totalorder %s8, 0
    %p94 = por %p92, %p93
    %p95 = scmp.ne.s32.totalorder %s84, %s87
    %p96 = scmp.eq.s32.totalorder %s13, 1
    %p97 = por %p95, %p96
    %p98 = scmp.ne.s32.totalorder %s87, %s88
    %p99 = scmp.eq.s32.totalorder %s13, 0
    %p100 = por %p98, %p99
    %p101 = scmp.ne.s32.totalorder %s87, %s88
    %p102 = scmp.eq.s32.totalorder %s14, 1
    %p103 = por %p101, %p102
    %p105 = scmp.ne.s32.totalorder %s88, %s104
    %p106 = scmp.eq.s32.totalorder %s14, 0
    %p107 = por %p105, %p106
    %p108 = scmp.le.s32.totalorder 1, %s8
    %p109 = scmp.lt.s32.totalorder %s8, 3
    %p110 = pnand %p108, %p109
    %p111 = pneg %p110
    // Predicated region
    $region9: #{_lambda_.24} parent=5 // pred_check
      _
    $region10: #{_lambda_.24} parent=5 // pred_check_branch
      %113 = sbr.rel (%p110) target = $region12
    $region11: #{_lambda_.24} parent=5 // pred_region
      %s114 = ssub.s32 %s8, 1
      // Predicated region
      $region13: #{_lambda_.24} parent=11 // pred_check
        %p115 = pneg %p72
      $region14: #{_lambda_.24} parent=11 // pred_check_branch
        %117 = sbr.rel (%p115) target = $region16
      $region15: #{_lambda_.24} parent=11 // pred_region
        %p118 = scmp.lt.s32.totalorder %s18, 0
        %s119 = scalar_select %p118, %s18, 0
        %s120 = smul.addr %s119, 4
        %s121 = scalar_lea.vmem %s1, %s120
      $region16: #{_lambda_.24} parent=11 // pred_fallthru
        _
    $region12: #{_lambda_.24} parent=5 // pred_fallthru
      _
    %p122 = scmp.lt.s32.totalorder %s8, 2
    // Predicated region
    $region17: #{_lambda_.24} parent=5 // pred_check
      %p123 = pneg %p122
    $region18: #{_lambda_.24} parent=5 // pred_check_branch
      %125 = sbr.rel (%p123) target = $region20
    $region19: #{_lambda_.24} parent=5 // pred_region
      // Predicated region
      $region21: #{_lambda_.24} parent=19 // pred_check
        %p126 = pneg %p40
      $region22: #{_lambda_.24} parent=19 // pred_check_branch
        %128 = sbr.rel (%p126) target = $region24
      $region23: #{_lambda_.24} parent=19 // pred_region
        %s129 = smul.u32 32, %s15
        %p130 = scmp.lt.s32.totalorder %s129, 63
        %s131 = scalar_select %p130, %s129, 63
        %s132 = smul.addr %s131, 4
        %s133 = scalar_lea.vmem %s0, %s132
        %s134 = smul.u32 32, %s15
      $region24: #{_lambda_.24} parent=19 // pred_fallthru
        _
    $region20: #{_lambda_.24} parent=5 // pred_fallthru
      _
    %p135 = scmp.le.s32.totalorder 1, %s8
    %p136 = scmp.lt.s32.totalorder %s8, 3
    %p137 = pnand %p135, %p136
    %p138 = pneg %p137
    // Predicated region
    $region25: #{_lambda_.24} parent=5 // pred_check
      _
    $region26: #{_lambda_.24} parent=5 // pred_check_branch
      %140 = sbr.rel (%p137) target = $region28
    $region27: #{_lambda_.24} parent=5 // pred_region
      %s141 = ssub.s32 %s8, 1
      %s142 = smul.u32 32, %s17
      %p143 = scmp.lt.s32.totalorder %s142, 63
      %s144 = scalar_select %p143, %s142, 63
      %s145 = smul.addr %s144, 4
      %s146 = scalar_lea.vmem %s0, %s145
      %p147 = pneg %p46
      %p148 = pneg %p43
      %p149 = scmp.lt.s32.totalorder %s18, 0
      %s150 = scalar_select %p149, %s18, 0
      %s151 = smul.addr %s150, 4
      %s152 = scalar_lea.vmem %s1, %s151
      %p153 = pneg %p72
      %p154 = pneg %p69
      %p155 = pneg %p100
      %p156 = pneg %p97
      %s157 = smul.u32 32, %s17
      %p158 = scmp.lt.s32.totalorder %s157, 63
      %s159 = scalar_select %p158, %s157, 63
      %p160 = scmp.lt.s32.totalorder %s18, 0
      %s161 = scalar_select %p160, %s18, 0
      %s162 = sadd.s32 %s161, %s159
      %s163 = smul.addr %s162, 8
      %s164 = scalar_lea.vmem %s2, %s163
      %s165 = smul.u32 32, %s17
      %p166 = scmp.lt.s32.totalorder %s165, 63
      %s167 = scalar_select %p166, %s165, 63
      %s168 = smul.addr %s167, 4
      %s169 = scalar_lea.vmem %s0, %s168
      %s170 = smul.u32 32, %s17
      %p171 = scmp.lt.s32.totalorder %s18, 0
      %s172 = scalar_select %p171, %s18, 0
      %s173 = smul.addr %s172, 4
      %s174 = scalar_lea.vmem %s1, %s173
      %s175 = smul.u32 32, %s17
      %p176 = scmp.lt.s32.totalorder %s175, 63
      %s177 = scalar_select %p176, %s175, 63
      %p178 = scmp.lt.s32.totalorder %s18, 0
      %s179 = scalar_select %p178, %s18, 0
      %s180 = sadd.s32 %s179, %s177
      %s181 = smul.addr %s180, 8
      %s182 = scalar_lea.vmem %s2, %s181
      %s183 = smul.u32 32, %s17
      %v185 = vld [vmem:[%s169] sm:$0xf]
      %v186 = vld [vmem:[%s169 + $0x4] sm:$0xf]
      %v187 = vld [vmem:[%s169 + $0x8] sm:$0xf]
      %v188 = vld [vmem:[%s169 + $0xc] sm:$0xf]
      %v189 = vld [vmem:[%s169 + $0x10] sm:$0xf]
      %v190 = vld [vmem:[%s169 + $0x14] sm:$0xf]
      %v191 = vld [vmem:[%s169 + $0x18] sm:$0xf]
      %v192 = vld [vmem:[%s169 + $0x1c] sm:$0xf]
      %v193 = vld [vmem:[%s169 + $0x20] sm:$0xf]
      %v194 = vld [vmem:[%s169 + $0x24] sm:$0xf]
      %v195 = vld [vmem:[%s169 + $0x28] sm:$0xf]
      %v196 = vld [vmem:[%s169 + $0x2c] sm:$0xf]
      %v197 = vld [vmem:[%s169 + $0x30] sm:$0xf]
      %v198 = vld [vmem:[%s169 + $0x34] sm:$0xf]
      %v199 = vld [vmem:[%s169 + $0x38] sm:$0xf]
      %v200 = vld [vmem:[%s169 + $0x3c] sm:$0xf]
      %v201 = vld [vmem:[%s169 + $0x40] sm:$0xf]
      %v202 = vld [vmem:[%s169 + $0x44] sm:$0xf]
      %v203 = vld [vmem:[%s169 + $0x48] sm:$0xf]
      %v204 = vld [vmem:[%s169 + $0x4c] sm:$0xf]
      %v205 = vld [vmem:[%s169 + $0x50] sm:$0xf]
      %v206 = vld [vmem:[%s169 + $0x54] sm:$0xf]
      %v207 = vld [vmem:[%s169 + $0x58] sm:$0xf]
      %v208 = vld [vmem:[%s169 + $0x5c] sm:$0xf]
      %v209 = vld [vmem:[%s169 + $0x60] sm:$0xf]
      %v210 = vld [vmem:[%s169 + $0x64] sm:$0xf]
      %v211 = vld [vmem:[%s169 + $0x68] sm:$0xf]
      %v212 = vld [vmem:[%s169 + $0x6c] sm:$0xf]
      %v213 = vld [vmem:[%s169 + $0x70] sm:$0xf]
      %v214 = vld [vmem:[%s169 + $0x74] sm:$0xf]
      %v215 = vld [vmem:[%s169 + $0x78] sm:$0xf]
      %v216 = vld [vmem:[%s169 + $0x7c] sm:$0xf]
      %v217 = vld [vmem:[%s174] sm:$0xf]
      %v218 = vld [vmem:[%s174 + $0x4] sm:$0xf]
      %v219 = vld [vmem:[%s174 + $0x8] sm:$0xf]
      %v220 = vld [vmem:[%s174 + $0xc] sm:$0xf]
      %v221 = vld [vmem:[%s174 + $0x10] sm:$0xf]
      %v222 = vld [vmem:[%s174 + $0x14] sm:$0xf]
      %v255 = vunpack.c.l.b16 %v185
      %v256 = vunpack.c.l.b16 %v186
      %v257 = vunpack.c.l.b16 %v187
      %v258 = vunpack.c.l.b16 %v188
      %v259 = vunpack.c.l.b16 %v189
      %v260 = vunpack.c.l.b16 %v190
      %v261 = vunpack.c.l.b16 %v191
      %v262 = vunpack.c.l.b16 %v192
      %v263 = vunpack.c.l.b16 %v193
      %v264 = vunpack.c.l.b16 %v194
      %v265 = vunpack.c.l.b16 %v195
      %v266 = vunpack.c.l.b16 %v196
      %v267 = vunpack.c.l.b16 %v197
      %v268 = vunpack.c.l.b16 %v198
      %v269 = vunpack.c.l.b16 %v199
      %v270 = vunpack.c.l.b16 %v200
      %v271 = vunpack.c.l.b16 %v201
      %v272 = vunpack.c.l.b16 %v202
      %v273 = vunpack.c.l.b16 %v203
      %v274 = vunpack.c.l.b16 %v204
      %v275 = vunpack.c.l.b16 %v205
      %v276 = vunpack.c.l.b16 %v206
      %v277 = vunpack.c.l.b16 %v207
      %v278 = vunpack.c.l.b16 %v208
      %v279 = vunpack.c.l.b16 %v209
      %v280 = vunpack.c.l.b16 %v210
      %v281 = vunpack.c.l.b16 %v211
      %v282 = vunpack.c.l.b16 %v212
      %v283 = vunpack.c.l.b16 %v213
      %v284 = vunpack.c.l.b16 %v214
      %v285 = vunpack.c.l.b16 %v215
      %v286 = vunpack.c.l.b16 %v216
      %v287 = vpack.c.b16 %v256, %v255
      %v288 = vpack.c.b16 %v258, %v257
      %v289 = vpack.c.b16 %v260, %v259
      %v290 = vpack.c.b16 %v262, %v261
      %v291 = vpack.c.b16 %v264, %v263
      %v292 = vpack.c.b16 %v266, %v265
      %v293 = vpack.c.b16 %v268, %v267
      %v294 = vpack.c.b16 %v270, %v269
      %v295 = vpack.c.b16 %v272, %v271
      %v296 = vpack.c.b16 %v274, %v273
      %v297 = vpack.c.b16 %v276, %v275
      %v298 = vpack.c.b16 %v278, %v277
      %v299 = vpack.c.b16 %v280, %v279
      %v300 = vpack.c.b16 %v282, %v281
      %v301 = vpack.c.b16 %v284, %v283
      %v302 = vpack.c.b16 %v286, %v285
      %v309 = vunpack.c.l.b16 %v217
      %v310 = vunpack.c.l.b16 %v218
      %v311 = vunpack.c.l.b16 %v219
      %v312 = vunpack.c.l.b16 %v220
      %v313 = vunpack.c.l.b16 %v221
      %v314 = vunpack.c.l.b16 %v222
      %v315 = vpack.c.b16 %v310, %v309
      %v316 = vpack.c.b16 %v312, %v311
      %v317 = vpack.c.b16 %v314, %v313
      %vm321 = vcmask 392192
      %v323 = vsel %vm321, %v287, 0
      %v326 = vsel %vm321, %v288, 0
      %v329 = vsel %vm321, %v289, 0
      %v332 = vsel %vm321, %v290, 0
      %v335 = vsel %vm321, %v291, 0
      %v338 = vsel %vm321, %v292, 0
      %v341 = vsel %vm321, %v293, 0
      %v344 = vsel %vm321, %v294, 0
      %v347 = vsel %vm321, %v295, 0
      %v350 = vsel %vm321, %v296, 0
      %v353 = vsel %vm321, %v297, 0
      %v356 = vsel %vm321, %v298, 0
      %v359 = vsel %vm321, %v299, 0
      %v362 = vsel %vm321, %v300, 0
      %v365 = vsel %vm321, %v301, 0
      %v368 = vsel %vm321, %v302, 0
      %370 = vmatprep.subr.bf16.mxu0 0
      %371 = vmatpush1.bf16.msra.mxu0 0
      %372 = vmatprep.subr.bf16.mxu0 0
      %373 = vmatpush1.bf16.msra.mxu0 0
      %374 = vmatprep.subr.bf16.mxu0 0
      %375 = vmatpush1.bf16.msra.mxu0 0
      %376 = vmatprep.subr.bf16.mxu0 0
      %377 = vmatpush1.bf16.msra.mxu0 0
      %378 = vmatprep.subr.bf16.mxu0 0
      %379 = vmatpush1.bf16.msra.mxu0 0
      %380 = vmatprep.subr.bf16.mxu0 0
      %381 = vmatpush1.bf16.msra.mxu0 %v317
      %382 = vmatprep.subr.bf16.mxu0 0
      %383 = vmatpush1.bf16.msra.mxu0 %v316
      %384 = vmatprep.subr.bf16.mxu0 0
      %385 = vmatpush1.bf16.msra.mxu0 %v315
      %386 = vmatprep.subr.bf16.mxu0 0
      %387 = vmatpush2.bf16.msra.mxu0 0
      %388 = vmatprep.subr.bf16.mxu0 0
      %389 = vmatpush2.bf16.msra.mxu0 0
      %390 = vmatprep.subr.bf16.mxu0 0
      %391 = vmatpush2.bf16.msra.mxu0 0
      %392 = vmatprep.subr.bf16.mxu0 0
      %393 = vmatpush2.bf16.msra.mxu0 0
      %394 = vmatprep.subr.bf16.mxu0 0
      %395 = vmatpush2.bf16.msra.mxu0 0
      %396 = vmatprep.subr.bf16.mxu0 0
      %397 = vmatpush2.bf16.msra.mxu0 0
      %398 = vmatprep.subr.bf16.mxu0 0
      %399 = vmatpush2.bf16.msra.mxu0 0
      %400 = vmatprep.subr.bf16.mxu0 0
      %401 = vmatpush2.bf16.msra.mxu0 0
      %402 = vmatprep.mubr.bf16.mxu0 0
      %403 = vmatmul.mubr.bf16.gmra.mxu0 %v323
      %v404 = vpop.f32.mrf.mxu0
      %v405 = vadd.f32 0.0, %v404
      %v406 = vpop.f32.mrf.mxu0
      %v407 = vpop.f32.mrf.mxu0
      %v408 = vadd.f32 0.0, %v407
      %v409 = vpop.f32.mrf.mxu0
      %410 = vmatprep.mubr.bf16.mxu0 0
      %411 = vmatmul.mubr.bf16.gmra.mxu0 %v326
      %v412 = vpop.f32.mrf.mxu0
      %v413 = vadd.f32 0.0, %v412
      %v414 = vpop.f32.mrf.mxu0
      %v415 = vpop.f32.mrf.mxu0
      %v416 = vadd.f32 0.0, %v415
      %v417 = vpop.f32.mrf.mxu0
      %418 = vmatprep.mubr.bf16.mxu0 0
      %419 = vmatmul.mubr.bf16.gmra.mxu0 %v329
      %v420 = vpop.f32.mrf.mxu0
      %v421 = vadd.f32 0.0, %v420
      %v422 = vpop.f32.mrf.mxu0
      %v423 = vpop.f32.mrf.mxu0
      %v424 = vadd.f32 0.0, %v423
      %v425 = vpop.f32.mrf.mxu0
      %426 = vmatprep.mubr.bf16.mxu0 0
      %427 = vmatmul.mubr.bf16.gmra.mxu0 %v332
      %v428 = vpop.f32.mrf.mxu0
      %v429 = vadd.f32 0.0, %v428
      %v430 = vpop.f32.mrf.mxu0
      %v431 = vpop.f32.mrf.mxu0
      %v432 = vadd.f32 0.0, %v431
      %v433 = vpop.f32.mrf.mxu0
      %434 = vmatprep.mubr.bf16.mxu0 0
      %435 = vmatmul.mubr.bf16.gmra.mxu0 %v335
      %v436 = vpop.f32.mrf.mxu0
      %v437 = vadd.f32 0.0, %v436
      %v438 = vpop.f32.mrf.mxu0
      %v439 = vpop.f32.mrf.mxu0
      %v440 = vadd.f32 0.0, %v439
      %v441 = vpop.f32.mrf.mxu0
      %442 = vmatprep.mubr.bf16.mxu0 0
      %443 = vmatmul.mubr.bf16.gmra.mxu0 %v338
      %v444 = vpop.f32.mrf.mxu0
      %v445 = vadd.f32 0.0, %v444
      %v446 = vpop.f32.mrf.mxu0
      %v447 = vpop.f32.mrf.mxu0
      %v448 = vadd.f32 0.0, %v447
      %v449 = vpop.f32.mrf.mxu0
      %450 = vmatprep.mubr.bf16.mxu0 0
      %451 = vmatmul.mubr.bf16.gmra.mxu0 %v341
      %v452 = vpop.f32.mrf.mxu0
      %v453 = vadd.f32 0.0, %v452
      %v454 = vpop.f32.mrf.mxu0
      %v455 = vpop.f32.mrf.mxu0
      %v456 = vadd.f32 0.0, %v455
      %v457 = vpop.f32.mrf.mxu0
      %458 = vmatprep.mubr.bf16.mxu0 0
      %459 = vmatmul.mubr.bf16.gmra.mxu0 %v344
      %v460 = vpop.f32.mrf.mxu0
      %v461 = vadd.f32 0.0, %v460
      %v462 = vpop.f32.mrf.mxu0
      %v463 = vpop.f32.mrf.mxu0
      %v464 = vadd.f32 0.0, %v463
      %v465 = vpop.f32.mrf.mxu0
      %466 = vmatprep.mubr.bf16.mxu0 0
      %467 = vmatmul.mubr.bf16.gmra.mxu0 %v347
      %v468 = vpop.f32.mrf.mxu0
      %v469 = vadd.f32 0.0, %v468
      %v470 = vpop.f32.mrf.mxu0
      %v471 = vpop.f32.mrf.mxu0
      %v472 = vadd.f32 0.0, %v471
      %v473 = vpop.f32.mrf.mxu0
      %474 = vmatprep.mubr.bf16.mxu0 0
      %475 = vmatmul.mubr.bf16.gmra.mxu0 %v350
      %v476 = vpop.f32.mrf.mxu0
      %v477 = vadd.f32 0.0, %v476
      %v478 = vpop.f32.mrf.mxu0
      %v479 = vpop.f32.mrf.mxu0
      %v480 = vadd.f32 0.0, %v479
      %v481 = vpop.f32.mrf.mxu0
      %482 = vmatprep.mubr.bf16.mxu0 0
      %483 = vmatmul.mubr.bf16.gmra.mxu0 %v353
      %v484 = vpop.f32.mrf.mxu0
      %v485 = vadd.f32 0.0, %v484
      %v486 = vpop.f32.mrf.mxu0
      %v487 = vpop.f32.mrf.mxu0
      %v488 = vadd.f32 0.0, %v487
      %v489 = vpop.f32.mrf.mxu0
      %490 = vmatprep.mubr.bf16.mxu0 0
      %491 = vmatmul.mubr.bf16.gmra.mxu0 %v356
      %v492 = vpop.f32.mrf.mxu0
      %v493 = vadd.f32 0.0, %v492
      %v494 = vpop.f32.mrf.mxu0
      %v495 = vpop.f32.mrf.mxu0
      %v496 = vadd.f32 0.0, %v495
      %v497 = vpop.f32.mrf.mxu0
      %498 = vmatprep.mubr.bf16.mxu0 0
      %499 = vmatmul.mubr.bf16.gmra.mxu0 %v359
      %v500 = vpop.f32.mrf.mxu0
      %v501 = vadd.f32 0.0, %v500
      %v502 = vpop.f32.mrf.mxu0
      %v503 = vpop.f32.mrf.mxu0
      %v504 = vadd.f32 0.0, %v503
      %v505 = vpop.f32.mrf.mxu0
      %506 = vmatprep.mubr.bf16.mxu0 0
      %507 = vmatmul.mubr.bf16.gmra.mxu0 %v362
      %v508 = vpop.f32.mrf.mxu0
      %v509 = vadd.f32 0.0, %v508
      %v510 = vpop.f32.mrf.mxu0
      %v511 = vpop.f32.mrf.mxu0
      %v512 = vadd.f32 0.0, %v511
      %v513 = vpop.f32.mrf.mxu0
      %514 = vmatprep.mubr.bf16.mxu0 0
      %515 = vmatmul.mubr.bf16.gmra.mxu0 %v365
      %v516 = vpop.f32.mrf.mxu0
      %v517 = vadd.f32 0.0, %v516
      %v518 = vpop.f32.mrf.mxu0
      %v519 = vpop.f32.mrf.mxu0
      %v520 = vadd.f32 0.0, %v519
      %v521 = vpop.f32.mrf.mxu0
      %522 = vmatprep.mubr.bf16.mxu0 0
      %523 = vmatmul.mubr.bf16.gmra.mxu0 %v368
      %v524 = vpop.f32.mrf.mxu0
      %v525 = vadd.f32 0.0, %v524
      %v526 = vpop.f32.mrf.mxu0
      %v527 = vpop.f32.mrf.mxu0
      %v528 = vadd.f32 0.0, %v527
      %v529 = vpop.f32.mrf.mxu0
      %530 = vdwg.mxu0
      %vm531 = vcmask 64512
      %532 = vst.msk [vmem:[%s182] sm:$0xff] %vm531, %v405
      %533 = vst.msk [vmem:[%s182 + $0x8] sm:$0xff] %vm531, %v408
      %534 = vst.msk [vmem:[%s182 + $0x10] sm:$0xff] %vm531, %v413
      %535 = vst.msk [vmem:[%s182 + $0x18] sm:$0xff] %vm531, %v416
      %536 = vst.msk [vmem:[%s182 + $0x20] sm:$0xff] %vm531, %v421
      %537 = vst.msk [vmem:[%s182 + $0x28] sm:$0xff] %vm531, %v424
      %538 = vst.msk [vmem:[%s182 + $0x30] sm:$0xff] %vm531, %v429
      %539 = vst.msk [vmem:[%s182 + $0x38] sm:$0xff] %vm531, %v432
      %540 = vst.msk [vmem:[%s182 + $0x40] sm:$0xff] %vm531, %v437
      %541 = vst.msk [vmem:[%s182 + $0x48] sm:$0xff] %vm531, %v440
      %542 = vst.msk [vmem:[%s182 + $0x50] sm:$0xff] %vm531, %v445
      %543 = vst.msk [vmem:[%s182 + $0x58] sm:$0xff] %vm531, %v448
      %544 = vst.msk [vmem:[%s182 + $0x60] sm:$0xff] %vm531, %v453
      %545 = vst.msk [vmem:[%s182 + $0x68] sm:$0xff] %vm531, %v456
      %546 = vst.msk [vmem:[%s182 + $0x70] sm:$0xff] %vm531, %v461
      %547 = vst.msk [vmem:[%s182 + $0x78] sm:$0xff] %vm531, %v464
      %548 = vst.msk [vmem:[%s182 + $0x80] sm:$0xff] %vm531, %v469
      %549 = vst.msk [vmem:[%s182 + $0x88] sm:$0xff] %vm531, %v472
      %550 = vst.msk [vmem:[%s182 + $0x90] sm:$0xff] %vm531, %v477
      %551 = vst.msk [vmem:[%s182 + $0x98] sm:$0xff] %vm531, %v480
      %552 = vst.msk [vmem:[%s182 + $0xa0] sm:$0xff] %vm531, %v485
      %553 = vst.msk [vmem:[%s182 + $0xa8] sm:$0xff] %vm531, %v488
      %554 = vst.msk [vmem:[%s182 + $0xb0] sm:$0xff] %vm531, %v493
      %555 = vst.msk [vmem:[%s182 + $0xb8] sm:$0xff] %vm531, %v496
      %556 = vst.msk [vmem:[%s182 + $0xc0] sm:$0xff] %vm531, %v501
      %557 = vst.msk [vmem:[%s182 + $0xc8] sm:$0xff] %vm531, %v504
      %558 = vst.msk [vmem:[%s182 + $0xd0] sm:$0xff] %vm531, %v509
      %559 = vst.msk [vmem:[%s182 + $0xd8] sm:$0xff] %vm531, %v512
      %560 = vst.msk [vmem:[%s182 + $0xe0] sm:$0xff] %vm531, %v517
      %561 = vst.msk [vmem:[%s182 + $0xe8] sm:$0xff] %vm531, %v520
      %562 = vst.msk [vmem:[%s182 + $0xf0] sm:$0xff] %vm531, %v525
      %563 = vst.msk [vmem:[%s182 + $0xf8] sm:$0xff] %vm531, %v528
      %s564 = smul.u32 32, %s17
      %p565 = scmp.lt.s32.totalorder %s564, 63
      %s566 = scalar_select %p565, %s564, 63
      %p567 = scmp.lt.s32.totalorder %s18, 0
      %s568 = scalar_select %p567, %s18, 0
      %s569 = sadd.s32 %s568, %s566
      %s570 = smul.addr %s569, 8
      %s571 = scalar_lea.vmem %s2, %s570
      // Predicated region
      $region29: #{_lambda_.24} parent=27 // pred_check
        %p572 = pneg %p97
      $region30: #{_lambda_.24} parent=27 // pred_check_branch
        %574 = sbr.rel (%p572) target = $region32
      $region31: #{_lambda_.24} parent=27 // pred_region
        %s575 = smul.u32 32, %s17
      $region32: #{_lambda_.24} parent=27 // pred_fallthru
        _
    $region28: #{_lambda_.24} parent=5 // pred_fallthru
      _
    %p576 = scmp.le.s32.totalorder 2, %s8
    // Predicated region
    $region33: #{_lambda_.24} parent=5 // pred_check
      %p577 = pneg %p576
    $region34: #{_lambda_.24} parent=5 // pred_check_branch
      %579 = sbr.rel (%p577) target = $region36
    $region35: #{_lambda_.24} parent=5 // pred_region
      %s580 = ssub.s32 %s8, 2
      // Predicated region
      $region37: #{_lambda_.24} parent=35 // pred_check
        %p581 = pneg %p103
      $region38: #{_lambda_.24} parent=35 // pred_check_branch
        %583 = sbr.rel (%p581) target = $region40
      $region39: #{_lambda_.24} parent=35 // pred_region
        %s584 = smul.u32 32, %s19
        %p585 = scmp.lt.s32.totalorder %s584, 63
        %s586 = scalar_select %p585, %s584, 63
        %p587 = scmp.lt.s32.totalorder %s20, 0
        %s588 = scalar_select %p587, %s20, 0
        %s589 = sadd.s32 %s588, %s586
        %s590 = smul.addr %s589, 8
        %s591 = scalar_lea.vmem %s2, %s590
      $region40: #{_lambda_.24} parent=35 // pred_fallthru
        _
    $region36: #{_lambda_.24} parent=5 // pred_fallthru
      _
  $region6: #{_lambda_.24} parent=0 // loop_footer
    %s12 = sadd.s32 1, %s8
  $region7: #{_lambda_.24} parent=0 // loop_footer_branch
    %7 = sbr.rel target = $region3
  $region8: #{_lambda_.24} parent=0 // loop_exit
    _

// kernel: _lambda_.25
$region0: #{_lambda_.25}
  #allocation0 [shape = 'u32[]', space=smem, size = 0x4, offset = 0x4, fixed_abs, tag = 'smem constant byte address 0x4 - core index']
  #allocation1 [shape = 'u32[144,128]{1,0:T(1,128)}', space=vmem, size = 0x12000, scoped, tag = 'internal scratch']
  %s0 = inlined_call_operand.vmem [shape: bf16[128,128], index: 0, kind: input, shape index: {}]
  %s1 = inlined_call_operand.vmem [shape: bf16[128,16], index: 1, kind: input, shape index: {}]
  %s2 = inlined_call_operand.vmem [shape: f32[128,16], index: 2, kind: output, shape index: {}]
  %s3 = sld [smem:[#allocation0]]
  $region18: #{_lambda_.25} parent=0
    _
  %s5 = ssub.s32 1, %s3
  %s6 = scalar_select 0, %s5, %s3
  // Predicated region
  $region2: #{_lambda_.25} parent=0 // pred_check
    _
  $region3: #{_lambda_.25} parent=0 // pred_check_branch
    %8 = sbr.rel (0) target = $region5
  $region4: #{_lambda_.25} parent=0 // pred_region
    _
  $region5: #{_lambda_.25} parent=0 // pred_fallthru
    _
  // Predicated region
  $region6: #{_lambda_.25} parent=0 // pred_check
    _
  $region7: #{_lambda_.25} parent=0 // pred_check_branch
    %10 = sbr.rel (0) target = $region9
  $region8: #{_lambda_.25} parent=0 // pred_region
    _
  $region9: #{_lambda_.25} parent=0 // pred_fallthru
    _
  %v13 = vld [vmem:[%s0] sm:$0xf]
  %v14 = vld [vmem:[%s0 + $0x4] sm:$0xf]
  %v15 = vld [vmem:[%s0 + $0x8] sm:$0xf]
  %v16 = vld [vmem:[%s0 + $0xc] sm:$0xf]
  %v17 = vld [vmem:[%s0 + $0x10] sm:$0xf]
  %v18 = vld [vmem:[%s0 + $0x14] sm:$0xf]
  %v19 = vld [vmem:[%s0 + $0x18] sm:$0xf]
  %v20 = vld [vmem:[%s0 + $0x1c] sm:$0xf]
  %v21 = vld [vmem:[%s0 + $0x20] sm:$0xf]
  %v22 = vld [vmem:[%s0 + $0x24] sm:$0xf]
  %v23 = vld [vmem:[%s0 + $0x28] sm:$0xf]
  %v24 = vld [vmem:[%s0 + $0x2c] sm:$0xf]
  %v25 = vld [vmem:[%s0 + $0x30] sm:$0xf]
  %v26 = vld [vmem:[%s0 + $0x34] sm:$0xf]
  %v27 = vld [vmem:[%s0 + $0x38] sm:$0xf]
  %v28 = vld [vmem:[%s0 + $0x3c] sm:$0xf]
  %vm29 = vcmp.gt.bf16.partialorder %v13, 0
  %vm30 = vcmp.gt.bf16.partialorder %v14, 0
  %vm31 = vcmp.gt.bf16.partialorder %v15, 0
  %vm32 = vcmp.gt.bf16.partialorder %v16, 0
  %vm33 = vcmp.gt.bf16.partialorder %v17, 0
  %vm34 = vcmp.gt.bf16.partialorder %v18, 0
  %vm35 = vcmp.gt.bf16.partialorder %v19, 0
  %vm36 = vcmp.gt.bf16.partialorder %v20, 0
  %vm37 = vcmp.gt.bf16.partialorder %v21, 0
  %vm38 = vcmp.gt.bf16.partialorder %v22, 0
  %vm39 = vcmp.gt.bf16.partialorder %v23, 0
  %vm40 = vcmp.gt.bf16.partialorder %v24, 0
  %vm41 = vcmp.gt.bf16.partialorder %v25, 0
  %vm42 = vcmp.gt.bf16.partialorder %v26, 0
  %vm43 = vcmp.gt.bf16.partialorder %v27, 0
  %vm44 = vcmp.gt.bf16.partialorder %v28, 0
  %v45 = vmul.bf16 %v13, 1045249613
  %v46 = vmul.bf16 %v14, 1045249613
  %v47 = vmul.bf16 %v15, 1045249613
  %v48 = vmul.bf16 %v16, 1045249613
  %v49 = vmul.bf16 %v17, 1045249613
  %v50 = vmul.bf16 %v18, 1045249613
  %v51 = vmul.bf16 %v19, 1045249613
  %v52 = vmul.bf16 %v20, 1045249613
  %v53 = vmul.bf16 %v21, 1045249613
  %v54 = vmul.bf16 %v22, 1045249613
  %v55 = vmul.bf16 %v23, 1045249613
  %v56 = vmul.bf16 %v24, 1045249613
  %v57 = vmul.bf16 %v25, 1045249613
  %v58 = vmul.bf16 %v26, 1045249613
  %v59 = vmul.bf16 %v27, 1045249613
  %v60 = vmul.bf16 %v28, 1045249613
  %v61 = vsel %vm29, %v13, %v45
  %v62 = vsel %vm30, %v14, %v46
  %v63 = vsel %vm31, %v15, %v47
  %v64 = vsel %vm32, %v16, %v48
  %v65 = vsel %vm33, %v17, %v49
  %v66 = vsel %vm34, %v18, %v50
  %v67 = vsel %vm35, %v19, %v51
  %v68 = vsel %vm36, %v20, %v52
  %v69 = vsel %vm37, %v21, %v53
  %v70 = vsel %vm38, %v22, %v54
  %v71 = vsel %vm39, %v23, %v55
  %v72 = vsel %vm40, %v24, %v56
  %v73 = vsel %vm41, %v25, %v57
  %v74 = vsel %vm42, %v26, %v58
  %v75 = vsel %vm43, %v27, %v59
  %v76 = vsel %vm44, %v28, %v60
  %v77 = vld [vmem:[%s1] sm:$0xf]
  %v78 = vld [vmem:[%s1 + $0x4] sm:$0xf]
  %v79 = vld [vmem:[%s1 + $0x8] sm:$0xf]
  %v80 = vld [vmem:[%s1 + $0xc] sm:$0xf]
  %v81 = vld [vmem:[%s1 + $0x10] sm:$0xf]
  %v82 = vld [vmem:[%s1 + $0x14] sm:$0xf]
  %v83 = vld [vmem:[%s1 + $0x18] sm:$0xf]
  %v84 = vld [vmem:[%s1 + $0x1c] sm:$0xf]
  %v85 = vld [vmem:[%s1 + $0x20] sm:$0xf]
  %v86 = vld [vmem:[%s1 + $0x24] sm:$0xf]
  %v87 = vld [vmem:[%s1 + $0x28] sm:$0xf]
  %v88 = vld [vmem:[%s1 + $0x2c] sm:$0xf]
  %v89 = vld [vmem:[%s1 + $0x30] sm:$0xf]
  %v90 = vld [vmem:[%s1 + $0x34] sm:$0xf]
  %v91 = vld [vmem:[%s1 + $0x38] sm:$0xf]
  %v92 = vld [vmem:[%s1 + $0x3c] sm:$0xf]
  %v109 = vunpack.c.l.b16 %v61
  %v110 = vunpack.c.l.b16 %v62
  %v111 = vunpack.c.l.b16 %v63
  %v112 = vunpack.c.l.b16 %v64
  %v113 = vunpack.c.l.b16 %v65
  %v114 = vunpack.c.l.b16 %v66
  %v115 = vunpack.c.l.b16 %v67
  %v116 = vunpack.c.l.b16 %v68
  %v117 = vunpack.c.l.b16 %v69
  %v118 = vunpack.c.l.b16 %v70
  %v119 = vunpack.c.l.b16 %v71
  %v120 = vunpack.c.l.b16 %v72
  %v121 = vunpack.c.l.b16 %v73
  %v122 = vunpack.c.l.b16 %v74
  %v123 = vunpack.c.l.b16 %v75
  %v124 = vunpack.c.l.b16 %v76
  %v125 = vpack.c.b16 %v110, %v109
  %v126 = vpack.c.b16 %v112, %v111
  %v127 = vpack.c.b16 %v114, %v113
  %v128 = vpack.c.b16 %v116, %v115
  %v129 = vpack.c.b16 %v118, %v117
  %v130 = vpack.c.b16 %v120, %v119
  %v131 = vpack.c.b16 %v122, %v121
  %v132 = vpack.c.b16 %v124, %v123
  %v157 = vunpack.c.l.b16 %v77
  %v158 = vunpack.c.l.b16 %v78
  %v159 = vunpack.c.l.b16 %v79
  %v160 = vunpack.c.l.b16 %v80
  %v161 = vunpack.c.l.b16 %v81
  %v162 = vunpack.c.l.b16 %v82
  %v163 = vunpack.c.l.b16 %v83
  %v164 = vunpack.c.l.b16 %v84
  %v165 = vunpack.c.l.b16 %v85
  %v166 = vunpack.c.l.b16 %v86
  %v167 = vunpack.c.l.b16 %v87
  %v168 = vunpack.c.l.b16 %v88
  %v169 = vunpack.c.l.b16 %v89
  %v170 = vunpack.c.l.b16 %v90
  %v171 = vunpack.c.l.b16 %v91
  %v172 = vunpack.c.l.b16 %v92
  %v173 = vpack.c.b16 %v158, %v157
  %v174 = vpack.c.b16 %v160, %v159
  %v175 = vpack.c.b16 %v162, %v161
  %v176 = vpack.c.b16 %v164, %v163
  %v177 = vpack.c.b16 %v166, %v165
  %v178 = vpack.c.b16 %v168, %v167
  %v179 = vpack.c.b16 %v170, %v169
  %v180 = vpack.c.b16 %v172, %v171
  %189 = vmatprep.subr.bf16.mxu0 0
  %190 = vmatpush1.bf16.msra.mxu0 %v180
  %191 = vmatprep.subr.bf16.mxu0 0
  %192 = vmatpush1.bf16.msra.mxu0 %v179
  %193 = vmatprep.subr.bf16.mxu0 0
  %194 = vmatpush1.bf16.msra.mxu0 %v178
  %195 = vmatprep.subr.bf16.mxu0 0
  %196 = vmatpush1.bf16.msra.mxu0 %v177
  %197 = vmatprep.subr.bf16.mxu0 0
  %198 = vmatpush1.bf16.msra.mxu0 %v176
  %199 = vmatprep.subr.bf16.mxu0 0
  %200 = vmatpush1.bf16.msra.mxu0 %v175
  %201 = vmatprep.subr.bf16.mxu0 0
  %202 = vmatpush1.bf16.msra.mxu0 %v174
  %203 = vmatprep.subr.bf16.mxu0 0
  %204 = vmatpush1.bf16.msra.mxu0 %v173
  %205 = vmatprep.subr.bf16.mxu0 0
  %206 = vmatpush2.bf16.msra.mxu0 0
  %207 = vmatprep.subr.bf16.mxu0 0
  %208 = vmatpush2.bf16.msra.mxu0 0
  %209 = vmatprep.subr.bf16.mxu0 0
  %210 = vmatpush2.bf16.msra.mxu0 0
  %211 = vmatprep.subr.bf16.mxu0 0
  %212 = vmatpush2.bf16.msra.mxu0 0
  %213 = vmatprep.subr.bf16.mxu0 0
  %214 = vmatpush2.bf16.msra.mxu0 0
  %215 = vmatprep.subr.bf16.mxu0 0
  %216 = vmatpush2.bf16.msra.mxu0 0
  %217 = vmatprep.subr.bf16.mxu0 0
  %218 = vmatpush2.bf16.msra.mxu0 0
  %219 = vmatprep.subr.bf16.mxu0 0
  %220 = vmatpush2.bf16.msra.mxu0 0
  %221 = vmatprep.mubr.bf16.mxu0 0
  %222 = vmatmul.mubr.bf16.gmra.mxu0 %v125
  %v223 = vpop.f32.mrf.mxu0
  %v224 = vadd.f32 0.0, %v223
  %v225 = vpop.f32.mrf.mxu0
  %v226 = vpop.f32.mrf.mxu0
  %v227 = vadd.f32 0.0, %v226
  %v228 = vpop.f32.mrf.mxu0
  %229 = vmatprep.mubr.bf16.mxu0 0
  %230 = vmatmul.mubr.bf16.gmra.mxu0 %v126
  %v231 = vpop.f32.mrf.mxu0
  %v232 = vadd.f32 0.0, %v231
  %v233 = vpop.f32.mrf.mxu0
  %v234 = vpop.f32.mrf.mxu0
  %v235 = vadd.f32 0.0, %v234
  %v236 = vpop.f32.mrf.mxu0
  %237 = vmatprep.mubr.bf16.mxu0 0
  %238 = vmatmul.mubr.bf16.gmra.mxu0 %v127
  %v239 = vpop.f32.mrf.mxu0
  %v240 = vadd.f32 0.0, %v239
  %v241 = vpop.f32.mrf.mxu0
  %v242 = vpop.f32.mrf.mxu0
  %v243 = vadd.f32 0.0, %v242
  %v244 = vpop.f32.mrf.mxu0
  %245 = vmatprep.mubr.bf16.mxu0 0
  %246 = vmatmul.mubr.bf16.gmra.mxu0 %v128
  %v247 = vpop.f32.mrf.mxu0
  %v248 = vadd.f32 0.0, %v247
  %v249 = vpop.f32.mrf.mxu0
  %v250 = vpop.f32.mrf.mxu0
  %v251 = vadd.f32 0.0, %v250
  %v252 = vpop.f32.mrf.mxu0
  %253 = vmatprep.mubr.bf16.mxu0 0
  %254 = vmatmul.mubr.bf16.gmra.mxu0 %v129
  %v255 = vpop.f32.mrf.mxu0
  %v256 = vadd.f32 0.0, %v255
  %v257 = vpop.f32.mrf.mxu0
  %v258 = vpop.f32.mrf.mxu0
  %v259 = vadd.f32 0.0, %v258
  %v260 = vpop.f32.mrf.mxu0
  %261 = vmatprep.mubr.bf16.mxu0 0
  %262 = vmatmul.mubr.bf16.gmra.mxu0 %v130
  %v263 = vpop.f32.mrf.mxu0
  %v264 = vadd.f32 0.0, %v263
  %v265 = vpop.f32.mrf.mxu0
  %v266 = vpop.f32.mrf.mxu0
  %v267 = vadd.f32 0.0, %v266
  %v268 = vpop.f32.mrf.mxu0
  %269 = vmatprep.mubr.bf16.mxu0 0
  %270 = vmatmul.mubr.bf16.gmra.mxu0 %v131
  %v271 = vpop.f32.mrf.mxu0
  %v272 = vadd.f32 0.0, %v271
  %v273 = vpop.f32.mrf.mxu0
  %v274 = vpop.f32.mrf.mxu0
  %v275 = vadd.f32 0.0, %v274
  %v276 = vpop.f32.mrf.mxu0
  %277 = vmatprep.mubr.bf16.mxu0 0
  %278 = vmatmul.mubr.bf16.gmra.mxu0 %v132
  %v279 = vpop.f32.mrf.mxu0
  %v280 = vadd.f32 0.0, %v279
  %v281 = vpop.f32.mrf.mxu0
  %v282 = vpop.f32.mrf.mxu0
  %v283 = vadd.f32 0.0, %v282
  %v284 = vpop.f32.mrf.mxu0
  %285 = vdwg.mxu0
  %vm286 = vcmask 130048
  %287 = vst.msk [vmem:[%s2] sm:$0xff] %vm286, %v224
  %288 = vst.msk [vmem:[%s2 + $0x8] sm:$0xff] %vm286, %v227
  %289 = vst.msk [vmem:[%s2 + $0x10] sm:$0xff] %vm286, %v232
  %290 = vst.msk [vmem:[%s2 + $0x18] sm:$0xff] %vm286, %v235
  %291 = vst.msk [vmem:[%s2 + $0x20] sm:$0xff] %vm286, %v240
  %292 = vst.msk [vmem:[%s2 + $0x28] sm:$0xff] %vm286, %v243
  %293 = vst.msk [vmem:[%s2 + $0x30] sm:$0xff] %vm286, %v248
  %294 = vst.msk [vmem:[%s2 + $0x38] sm:$0xff] %vm286, %v251
  %295 = vst.msk [vmem:[%s2 + $0x40] sm:$0xff] %vm286, %v256
  %296 = vst.msk [vmem:[%s2 + $0x48] sm:$0xff] %vm286, %v259
  %297 = vst.msk [vmem:[%s2 + $0x50] sm:$0xff] %vm286, %v264
  %298 = vst.msk [vmem:[%s2 + $0x58] sm:$0xff] %vm286, %v267
  %299 = vst.msk [vmem:[%s2 + $0x60] sm:$0xff] %vm286, %v272
  %300 = vst.msk [vmem:[%s2 + $0x68] sm:$0xff] %vm286, %v275
  %301 = vst.msk [vmem:[%s2 + $0x70] sm:$0xff] %vm286, %v280
  %302 = vst.msk [vmem:[%s2 + $0x78] sm:$0xff] %vm286, %v283
  // Predicated region
  $region10: #{_lambda_.25} parent=0 // pred_check
    _
  $region11: #{_lambda_.25} parent=0 // pred_check_branch
    %304 = sbr.rel (0) target = $region13
  $region12: #{_lambda_.25} parent=0 // pred_region
    _
  $region13: #{_lambda_.25} parent=0 // pred_fallthru
    _
  // Predicated region
  $region14: #{_lambda_.25} parent=0 // pred_check
    _
  $region15: #{_lambda_.25} parent=0 // pred_check_branch
    %306 = sbr.rel (0) target = $region17
  $region16: #{_lambda_.25} parent=0 // pred_region
    _
  $region17: #{_lambda_.25} parent=0 // pred_fallthru
    _

// kernel: _lambda_.26
$region0: #{_lambda_.26}
  #allocation0 [shape = 'u32[]', space=smem, size = 0x4, offset = 0x4, fixed_abs, tag = 'smem constant byte address 0x4 - core index']
  #allocation1 [shape = 'u32[144,128]{1,0:T(1,128)}', space=vmem, size = 0x12000, scoped, tag = 'internal scratch']
  %s0 = inlined_call_operand.vmem [shape: f32[16,128], index: 0, kind: input, shape index: {}]
  %s1 = inlined_call_operand.vmem [shape: f32[1,128], index: 1, kind: output, shape index: {0}]
  %s2 = inlined_call_operand.vmem [shape: f32[1,128], index: 2, kind: output, shape index: {1}]
  %3 = xla_tuple %s1, %s2
  %s4 = sld [smem:[#allocation0]]
  $region26: #{_lambda_.26} parent=0
    _
  %s6 = ssub.s32 1, %s4
  %s7 = scalar_select 0, %s6, %s4
  // Predicated region
  $region2: #{_lambda_.26} parent=0 // pred_check
    _
  $region3: #{_lambda_.26} parent=0 // pred_check_branch
    %9 = sbr.rel (0) target = $region5
  $region4: #{_lambda_.26} parent=0 // pred_region
    _
  $region5: #{_lambda_.26} parent=0 // pred_fallthru
    _
  %p10 = scmp.eq.s32.totalorder 0, 0
  // Predicated region
  $region6: #{_lambda_.26} parent=0 // pred_check
    %p11 = pneg %p10
  $region7: #{_lambda_.26} parent=0 // pred_check_branch
    %13 = sbr.rel (%p11) target = $region9
  $region8: #{_lambda_.26} parent=0 // pred_region
    %14 = vst [vmem:[%s1] sm:$0x1] 0.0
    %15 = vst [vmem:[%s2] sm:$0x1] 0.0
  $region9: #{_lambda_.26} parent=0 // pred_fallthru
    _
  %v16 = vld [vmem:[%s0] sm:$0xff]
  %v17 = vld [vmem:[%s0 + $0x8] sm:$0xff]
  %v18 = vld [vmem:[%s1] sm:$0x1]
  %v19 = vadd.f32 %v16, %v17
  %v20 = vrot.slane %v19, 4
  %v21 = vadd.f32 %v19, %v20
  %v22 = vrot.slane %v21, 2
  %v23 = vadd.f32 %v21, %v22
  %v24 = vrot.slane %v23, 1
  %v25 = vadd.f32 %v23, %v24
  %v26 = vadd.f32 %v18, %v25
  %27 = vst [vmem:[%s1] sm:$0x1] %v26
  %v28 = vld [vmem:[%s2] sm:$0x1]
  %v29 = vmul.f32 %v16, %v16
  %v30 = vmul.f32 %v17, %v17
  %v31 = vadd.f32 %v29, %v30
  %v32 = vrot.slane %v31, 4
  %v33 = vadd.f32 %v31, %v32
  %v34 = vrot.slane %v33, 2
  %v35 = vadd.f32 %v33, %v34
  %v36 = vrot.slane %v35, 1
  %v37 = vadd.f32 %v35, %v36
  %v38 = vadd.f32 %v28, %v37
  %39 = vst [vmem:[%s2] sm:$0x1] %v38
  // Predicated region
  $region10: #{_lambda_.26} parent=0 // pred_check
    _
  $region11: #{_lambda_.26} parent=0 // pred_check_branch
    %41 = sbr.rel (0) target = $region13
  $region12: #{_lambda_.26} parent=0 // pred_region
    _
  $region13: #{_lambda_.26} parent=0 // pred_fallthru
    _
  // Predicated region
  $region14: #{_lambda_.26} parent=0 // pred_check
    _
  $region15: #{_lambda_.26} parent=0 // pred_check_branch
    %43 = sbr.rel (0) target = $region17
  $region16: #{_lambda_.26} parent=0 // pred_region
    _
  $region17: #{_lambda_.26} parent=0 // pred_fallthru
    _
  // Predicated region
  $region18: #{_lambda_.26} parent=0 // pred_check
    _
  $region19: #{_lambda_.26} parent=0 // pred_check_branch
    %45 = sbr.rel (0) target = $region21
  $region20: #{_lambda_.26} parent=0 // pred_region
    _
  $region21: #{_lambda_.26} parent=0 // pred_fallthru
    _
  // Predicated region
  $region22: #{_lambda_.26} parent=0 // pred_check
    _
  $region23: #{_lambda_.26} parent=0 // pred_check_branch
    %47 = sbr.rel (0) target = $region25
  $region24: #{_lambda_.26} parent=0 // pred_region
    _
  $region25: #{_lambda_.26} parent=0 // pred_fallthru
    _

// kernel: tile.73
$region0: #{tile.73}
  #allocation0 [shape = 's32[1]{0}', space=sflag, size = 0x4, scoped, tag = 'scoped memory for tile.73']
  %s0 = inlined_call_operand.vmem [shape: f32[16], index: 0, kind: input, shape index: {}]
  %s1 = inlined_call_operand.vmem [shape: f32[8,16], index: 1, kind: output, shape index: {}]
  // Predicated region
  $region2: #{tile.73} parent=0 // pred_check
    _
  $region3: #{tile.73} parent=0 // pred_check_branch
    %3 = sbr.rel (0) target = $region5
  $region4: #{tile.73} parent=0 // pred_region
    _
  $region5: #{tile.73} parent=0 // pred_fallthru
    _
  %v4 = vld [vmem:[%s0] ss:$0 sm:$0xff]
  %5 = vst [vmem:[%s1] sm:$0xff] %v4

// kernel: tile.74
$region0: #{tile.74}
  %s0 = inlined_call_operand.vmem [shape: f32[8,16], index: 0, kind: input, shape index: {}]
  %s1 = inlined_call_operand.vmem [shape: f32[1,128], index: 1, kind: output, shape index: {}]
  $region1: #{tile.74} parent=0
    #allocation0 [shape = 'u8[4096]{0}', space=vmem, size = 0x1000, scoped, tag = 'scoped mem for output reshape']
    %v2 = vld [vmem:[%s0] sm:$0x1]
    %vm3 = vcmask 130048
    %4 = vst.msk [vmem:[#allocation0] sm:$0x1] %vm3, %v2
    %s5 = scalar_lea.vmem %s0, 7
    %v6 = vld [vmem:[%s5] sm:$0x1]
    %7 = vrot.lane.b32.xlu0 %v6, 112
    %v8 = vpop.permute.xlu0 %7
    %vm9 = vcmask 1048448
    %10 = vst.msk [vmem:[#allocation0] sm:$0x1] %vm9, %v8
    %s11 = scalar_lea.vmem %s0, 6
    %v12 = vld [vmem:[%s11] sm:$0x1]
    %13 = vrot.lane.b32.xlu0 %v12, 96
    %v14 = vpop.permute.xlu0 %13
    %vm15 = vcmask 917248
    %16 = vst.msk [vmem:[#allocation0] sm:$0x1] %vm15, %v14
    %s17 = scalar_lea.vmem %s0, 5
    %v18 = vld [vmem:[%s17] sm:$0x1]
    %19 = vrot.lane.b32.xlu0 %v18, 80
    %v20 = vpop.permute.xlu0 %19
    %vm21 = vcmask 786048
    %22 = vst.msk [vmem:[#allocation0] sm:$0x1] %vm21, %v20
    %s23 = scalar_lea.vmem %s0, 4
    %v24 = vld [vmem:[%s23] sm:$0x1]
    %25 = vrot.lane.b32.xlu0 %v24, 64
    %v26 = vpop.permute.xlu0 %25
    %vm27 = vcmask 654848
    %28 = vst.msk [vmem:[#allocation0] sm:$0x1] %vm27, %v26
    %s29 = scalar_lea.vmem %s0, 3
    %v30 = vld [vmem:[%s29] sm:$0x1]
    %31 = vrot.lane.b32.xlu0 %v30, 48
    %v32 = vpop.permute.xlu0 %31
    %vm33 = vcmask 523648
    %34 = vst.msk [vmem:[#allocation0] sm:$0x1] %vm33, %v32
    %s35 = scalar_lea.vmem %s0, 2
    %v36 = vld [vmem:[%s35] sm:$0x1]
    %37 = vrot.lane.b32.xlu0 %v36, 32
    %v38 = vpop.permute.xlu0 %37
    %vm39 = vcmask 392448
    %40 = vst.msk [vmem:[#allocation0] sm:$0x1] %vm39, %v38
    %s41 = scalar_lea.vmem %s0, 1
    %v42 = vld [vmem:[%s41] sm:$0x1]
    %43 = vrot.lane.b32.xlu0 %v42, 16
    %v44 = vpop.permute.xlu0 %43
    %vm45 = vcmask 261248
    %46 = vst.msk [vmem:[#allocation0] sm:$0x1] %vm45, %v44
    %s48 = sshll.u32 1, 1
    %s49 = ssub.s32 %s48, 1
    %v51 = vld [vmem:[#allocation0] sm:%s49]
    %s52 = sshll.u32 1, 1
    %s53 = ssub.s32 %s52, 1
    %54 = vst [vmem:[%s1] sm:%s53] %v51

// kernel: _lambda_.27
$region0: #{_lambda_.27}
  #allocation0 [shape = 'u32[]', space=smem, size = 0x4, offset = 0x4, fixed_abs, tag = 'smem constant byte address 0x4 - core index']
  #allocation1 [shape = 'u32[144,128]{1,0:T(1,128)}', space=vmem, size = 0x12000, scoped, tag = 'internal scratch']
  %s0 = inlined_call_operand.vmem [shape: f32[16,128], index: 0, kind: input, shape index: {}]
  %s1 = inlined_call_operand.vmem [shape: f32[1,128], index: 1, kind: input, shape index: {}]
  %s2 = inlined_call_operand.vmem [shape: f32[1,128], index: 2, kind: input, shape index: {}]
  %s3 = inlined_call_operand.vmem [shape: f32[16,128], index: 3, kind: output, shape index: {}]
  %s4 = sld [smem:[#allocation0]]
  $region22: #{_lambda_.27} parent=0
    _
  %s6 = ssub.s32 1, %s4
  %s7 = scalar_select 0, %s6, %s4
  // Predicated region
  $region2: #{_lambda_.27} parent=0 // pred_check
    _
  $region3: #{_lambda_.27} parent=0 // pred_check_branch
    %9 = sbr.rel (0) target = $region5
  $region4: #{_lambda_.27} parent=0 // pred_region
    _
  $region5: #{_lambda_.27} parent=0 // pred_fallthru
    _
  // Predicated region
  $region6: #{_lambda_.27} parent=0 // pred_check
    _
  $region7: #{_lambda_.27} parent=0 // pred_check_branch
    %11 = sbr.rel (0) target = $region9
  $region8: #{_lambda_.27} parent=0 // pred_region
    _
  $region9: #{_lambda_.27} parent=0 // pred_fallthru
    _
  // Predicated region
  $region10: #{_lambda_.27} parent=0 // pred_check
    _
  $region11: #{_lambda_.27} parent=0 // pred_check_branch
    %13 = sbr.rel (0) target = $region13
  $region12: #{_lambda_.27} parent=0 // pred_region
    _
  $region13: #{_lambda_.27} parent=0 // pred_fallthru
    _
  %v14 = vld [vmem:[%s0] sm:$0xff]
  %v15 = vld [vmem:[%s0 + $0x8] sm:$0xff]
  %v16 = vld [vmem:[%s1] sm:$0x1]
  %v18 = vlaneseq
  %v19 = vshrl.u32 %v18, 7
  %v20 = vsub.s32 0, %v19
  %v21 = vrot.slane %v16, %v20
  %v23 = vmul.f32 %v14, %v21
  %v24 = vmul.f32 %v15, %v21
  %v25 = vld [vmem:[%s2] sm:$0x1]
  %v27 = vlaneseq
  %v28 = vshrl.u32 %v27, 7
  %v29 = vsub.s32 0, %v28
  %v30 = vrot.slane %v25, %v29
  %v32 = vadd.f32 %v23, %v30
  %v33 = vadd.f32 %v24, %v30
  %34 = vst [vmem:[%s3] sm:$0xff] %v32
  %35 = vst [vmem:[%s3 + $0x8] sm:$0xff] %v33
  // Predicated region
  $region14: #{_lambda_.27} parent=0 // pred_check
    _
  $region15: #{_lambda_.27} parent=0 // pred_check_branch
    %37 = sbr.rel (0) target = $region17
  $region16: #{_lambda_.27} parent=0 // pred_region
    _
  $region17: #{_lambda_.27} parent=0 // pred_fallthru
    _
  // Predicated region
  $region18: #{_lambda_.27} parent=0 // pred_check
    _
  $region19: #{_lambda_.27} parent=0 // pred_check_branch
    %39 = sbr.rel (0) target = $region21
  $region20: #{_lambda_.27} parent=0 // pred_region
    _
  $region21: #{_lambda_.27} parent=0 // pred_fallthru
    _

// kernel: _lambda_.28
$region0: #{_lambda_.28}
  #allocation0 [shape = 'u32[]', space=smem, size = 0x4, offset = 0x4, fixed_abs, tag = 'smem constant byte address 0x4 - core index']
  #allocation1 [shape = 'u32[144,128]{1,0:T(1,128)}', space=vmem, size = 0x12000, scoped, tag = 'internal scratch']
  %s0 = inlined_call_operand.vmem [shape: bf16[32,256], index: 0, kind: input, shape index: {}]
  %s1 = inlined_call_operand.vmem [shape: bf16[256,32], index: 1, kind: input, shape index: {}]
  %s2 = inlined_call_operand.vmem [shape: f32[32,32], index: 2, kind: output, shape index: {}]
  %s3 = sld [smem:[#allocation0]]
  $region18: #{_lambda_.28} parent=0
    _
  %s5 = ssub.s32 1, %s3
  %s6 = scalar_select 0, %s5, %s3
  // Predicated region
  $region2: #{_lambda_.28} parent=0 // pred_check
    _
  $region3: #{_lambda_.28} parent=0 // pred_check_branch
    %8 = sbr.rel (0) target = $region5
  $region4: #{_lambda_.28} parent=0 // pred_region
    _
  $region5: #{_lambda_.28} parent=0 // pred_fallthru
    _
  // Predicated region
  $region6: #{_lambda_.28} parent=0 // pred_check
    _
  $region7: #{_lambda_.28} parent=0 // pred_check_branch
    %10 = sbr.rel (0) target = $region9
  $region8: #{_lambda_.28} parent=0 // pred_region
    _
  $region9: #{_lambda_.28} parent=0 // pred_fallthru
    _
  %v13 = vld [vmem:[%s0] sm:$0xff]
  %v14 = vld [vmem:[%s0 + $0x8] sm:$0xff]
  %v15 = vld [vmem:[%s0 + $0x10] sm:$0xff]
  %v16 = vld [vmem:[%s0 + $0x18] sm:$0xff]
  %vm17 = vcmp.gt.bf16.partialorder %v13, 0
  %vm18 = vcmp.gt.bf16.partialorder %v14, 0
  %vm19 = vcmp.gt.bf16.partialorder %v15, 0
  %vm20 = vcmp.gt.bf16.partialorder %v16, 0
  %v21 = vmul.bf16 %v13, 1045249613
  %v22 = vmul.bf16 %v14, 1045249613
  %v23 = vmul.bf16 %v15, 1045249613
  %v24 = vmul.bf16 %v16, 1045249613
  %v25 = vsel %vm17, %v13, %v21
  %v26 = vsel %vm18, %v14, %v22
  %v27 = vsel %vm19, %v15, %v23
  %v28 = vsel %vm20, %v16, %v24
  %v29 = vld [vmem:[%s1] sm:$0xf]
  %v30 = vld [vmem:[%s1 + $0x4] sm:$0xf]
  %v31 = vld [vmem:[%s1 + $0x8] sm:$0xf]
  %v32 = vld [vmem:[%s1 + $0xc] sm:$0xf]
  %v33 = vld [vmem:[%s1 + $0x10] sm:$0xf]
  %v34 = vld [vmem:[%s1 + $0x14] sm:$0xf]
  %v35 = vld [vmem:[%s1 + $0x18] sm:$0xf]
  %v36 = vld [vmem:[%s1 + $0x1c] sm:$0xf]
  %v37 = vld [vmem:[%s1 + $0x20] sm:$0xf]
  %v38 = vld [vmem:[%s1 + $0x24] sm:$0xf]
  %v39 = vld [vmem:[%s1 + $0x28] sm:$0xf]
  %v40 = vld [vmem:[%s1 + $0x2c] sm:$0xf]
  %v41 = vld [vmem:[%s1 + $0x30] sm:$0xf]
  %v42 = vld [vmem:[%s1 + $0x34] sm:$0xf]
  %v43 = vld [vmem:[%s1 + $0x38] sm:$0xf]
  %v44 = vld [vmem:[%s1 + $0x3c] sm:$0xf]
  %v45 = vld [vmem:[%s1 + $0x40] sm:$0xf]
  %v46 = vld [vmem:[%s1 + $0x44] sm:$0xf]
  %v47 = vld [vmem:[%s1 + $0x48] sm:$0xf]
  %v48 = vld [vmem:[%s1 + $0x4c] sm:$0xf]
  %v49 = vld [vmem:[%s1 + $0x50] sm:$0xf]
  %v50 = vld [vmem:[%s1 + $0x54] sm:$0xf]
  %v51 = vld [vmem:[%s1 + $0x58] sm:$0xf]
  %v52 = vld [vmem:[%s1 + $0x5c] sm:$0xf]
  %v53 = vld [vmem:[%s1 + $0x60] sm:$0xf]
  %v54 = vld [vmem:[%s1 + $0x64] sm:$0xf]
  %v55 = vld [vmem:[%s1 + $0x68] sm:$0xf]
  %v56 = vld [vmem:[%s1 + $0x6c] sm:$0xf]
  %v57 = vld [vmem:[%s1 + $0x70] sm:$0xf]
  %v58 = vld [vmem:[%s1 + $0x74] sm:$0xf]
  %v59 = vld [vmem:[%s1 + $0x78] sm:$0xf]
  %v60 = vld [vmem:[%s1 + $0x7c] sm:$0xf]
  %v65 = vunpack.c.l.b16 %v25
  %v66 = vunpack.c.h.b16 %v25
  %v67 = vunpack.c.l.b16 %v26
  %v68 = vunpack.c.h.b16 %v26
  %v69 = vunpack.c.l.b16 %v27
  %v70 = vunpack.c.h.b16 %v27
  %v71 = vunpack.c.l.b16 %v28
  %v72 = vunpack.c.h.b16 %v28
  %v73 = vpack.c.b16 %v67, %v65
  %v74 = vpack.c.b16 %v68, %v66
  %v75 = vpack.c.b16 %v71, %v69
  %v76 = vpack.c.b16 %v72, %v70
  %v113 = vunpack.c.l.b16 %v29
  %v114 = vunpack.c.l.b16 %v30
  %v115 = vunpack.c.l.b16 %v31
  %v116 = vunpack.c.l.b16 %v32
  %v117 = vunpack.c.l.b16 %v33
  %v118 = vunpack.c.l.b16 %v34
  %v119 = vunpack.c.l.b16 %v35
  %v120 = vunpack.c.l.b16 %v36
  %v121 = vunpack.c.l.b16 %v37
  %v122 = vunpack.c.l.b16 %v38
  %v123 = vunpack.c.l.b16 %v39
  %v124 = vunpack.c.l.b16 %v40
  %v125 = vunpack.c.l.b16 %v41
  %v126 = vunpack.c.l.b16 %v42
  %v127 = vunpack.c.l.b16 %v43
  %v128 = vunpack.c.l.b16 %v44
  %v129 = vunpack.c.l.b16 %v45
  %v130 = vunpack.c.l.b16 %v46
  %v131 = vunpack.c.l.b16 %v47
  %v132 = vunpack.c.l.b16 %v48
  %v133 = vunpack.c.l.b16 %v49
  %v134 = vunpack.c.l.b16 %v50
  %v135 = vunpack.c.l.b16 %v51
  %v136 = vunpack.c.l.b16 %v52
  %v137 = vunpack.c.l.b16 %v53
  %v138 = vunpack.c.l.b16 %v54
  %v139 = vunpack.c.l.b16 %v55
  %v140 = vunpack.c.l.b16 %v56
  %v141 = vunpack.c.l.b16 %v57
  %v142 = vunpack.c.l.b16 %v58
  %v143 = vunpack.c.l.b16 %v59
  %v144 = vunpack.c.l.b16 %v60
  %v145 = vpack.c.b16 %v114, %v113
  %v146 = vpack.c.b16 %v116, %v115
  %v147 = vpack.c.b16 %v118, %v117
  %v148 = vpack.c.b16 %v120, %v119
  %v149 = vpack.c.b16 %v122, %v121
  %v150 = vpack.c.b16 %v124, %v123
  %v151 = vpack.c.b16 %v126, %v125
  %v152 = vpack.c.b16 %v128, %v127
  %v153 = vpack.c.b16 %v130, %v129
  %v154 = vpack.c.b16 %v132, %v131
  %v155 = vpack.c.b16 %v134, %v133
  %v156 = vpack.c.b16 %v136, %v135
  %v157 = vpack.c.b16 %v138, %v137
  %v158 = vpack.c.b16 %v140, %v139
  %v159 = vpack.c.b16 %v142, %v141
  %v160 = vpack.c.b16 %v144, %v143
  %177 = vmatprep.subr.bf16.mxu0 0
  %178 = vmatpush1.bf16.msra.mxu0 %v152
  %179 = vmatprep.subr.bf16.mxu0 0
  %180 = vmatpush1.bf16.msra.mxu0 %v151
  %181 = vmatprep.subr.bf16.mxu0 0
  %182 = vmatpush1.bf16.msra.mxu0 %v150
  %183 = vmatprep.subr.bf16.mxu0 0
  %184 = vmatpush1.bf16.msra.mxu0 %v149
  %185 = vmatprep.subr.bf16.mxu0 0
  %186 = vmatpush1.bf16.msra.mxu0 %v148
  %187 = vmatprep.subr.bf16.mxu0 0
  %188 = vmatpush1.bf16.msra.mxu0 %v147
  %189 = vmatprep.subr.bf16.mxu0 0
  %190 = vmatpush1.bf16.msra.mxu0 %v146
  %191 = vmatprep.subr.bf16.mxu0 0
  %192 = vmatpush1.bf16.msra.mxu0 %v145
  %193 = vmatprep.subr.bf16.mxu0 0
  %194 = vmatpush2.bf16.msra.mxu0 %v160
  %195 = vmatprep.subr.bf16.mxu0 0
  %196 = vmatpush2.bf16.msra.mxu0 %v159
  %197 = vmatprep.subr.bf16.mxu0 0
  %198 = vmatpush2.bf16.msra.mxu0 %v158
  %199 = vmatprep.subr.bf16.mxu0 0
  %200 = vmatpush2.bf16.msra.mxu0 %v157
  %201 = vmatprep.subr.bf16.mxu0 0
  %202 = vmatpush2.bf16.msra.mxu0 %v156
  %203 = vmatprep.subr.bf16.mxu0 0
  %204 = vmatpush2.bf16.msra.mxu0 %v155
  %205 = vmatprep.subr.bf16.mxu0 0
  %206 = vmatpush2.bf16.msra.mxu0 %v154
  %207 = vmatprep.subr.bf16.mxu0 0
  %208 = vmatpush2.bf16.msra.mxu0 %v153
  %209 = vmatprep.mubr.bf16.mxu0 %v74
  %210 = vmatmul.mubr.bf16.gmra.mxu0 %v73
  %v211 = vpop.f32.mrf.mxu0
  %v212 = vadd.f32 0.0, %v211
  %v213 = vpop.f32.mrf.mxu0
  %v214 = vpop.f32.mrf.mxu0
  %v215 = vadd.f32 0.0, %v214
  %v216 = vpop.f32.mrf.mxu0
  %217 = vmatprep.mubr.bf16.mxu0 %v76
  %218 = vmatmul.mubr.bf16.gmra.mxu0 %v75
  %v219 = vpop.f32.mrf.mxu0
  %v220 = vadd.f32 0.0, %v219
  %v221 = vpop.f32.mrf.mxu0
  %v222 = vpop.f32.mrf.mxu0
  %v223 = vadd.f32 0.0, %v222
  %v224 = vpop.f32.mrf.mxu0
  %225 = vdwg.mxu0
  %vm226 = vcmask 261120
  %227 = vst.msk [vmem:[%s2] sm:$0xff] %vm226, %v212
  %228 = vst.msk [vmem:[%s2 + $0x8] sm:$0xff] %vm226, %v215
  %229 = vst.msk [vmem:[%s2 + $0x10] sm:$0xff] %vm226, %v220
  %230 = vst.msk [vmem:[%s2 + $0x18] sm:$0xff] %vm226, %v223
  // Predicated region
  $region10: #{_lambda_.28} parent=0 // pred_check
    _
  $region11: #{_lambda_.28} parent=0 // pred_check_branch
    %232 = sbr.rel (0) target = $region13
  $region12: #{_lambda_.28} parent=0 // pred_region
    _
  $region13: #{_lambda_.28} parent=0 // pred_fallthru
    _
  // Predicated region
  $region14: #{_lambda_.28} parent=0 // pred_check
    _
  $region15: #{_lambda_.28} parent=0 // pred_check_branch
    %234 = sbr.rel (0) target = $region17
  $region16: #{_lambda_.28} parent=0 // pred_region
    _
  $region17: #{_lambda_.28} parent=0 // pred_fallthru
    _

// kernel: tile.83
$region0: #{tile.83}
  #allocation0 [shape = 's32[1]{0}', space=sflag, size = 0x4, scoped, tag = 'scoped memory for tile.83']
  %s0 = inlined_call_operand.vmem [shape: f32[32], index: 0, kind: input, shape index: {}]
  %s1 = inlined_call_operand.vmem [shape: f32[4,32], index: 1, kind: output, shape index: {}]
  // Predicated region
  $region2: #{tile.83} parent=0 // pred_check
    _
  $region3: #{tile.83} parent=0 // pred_check_branch
    %3 = sbr.rel (0) target = $region5
  $region4: #{tile.83} parent=0 // pred_region
    _
  $region5: #{tile.83} parent=0 // pred_fallthru
    _
  %v4 = vld [vmem:[%s0] ss:$0 sm:$0xff]
  %5 = vst [vmem:[%s1] sm:$0xf] %v4

// kernel: _lambda_.29
$region0: #{_lambda_.29}
  #allocation0 [shape = 'u32[]', space=smem, size = 0x4, offset = 0x4, fixed_abs, tag = 'smem constant byte address 0x4 - core index']
  #allocation1 [shape = 'u32[144,128]{1,0:T(1,128)}', space=vmem, size = 0x12000, scoped, tag = 'internal scratch']
  %s0 = inlined_call_operand.vmem [shape: f32[8,128], index: 0, kind: input, shape index: {}]
  %s1 = inlined_call_operand.vmem [shape: f32[1,128], index: 1, kind: output, shape index: {0}]
  %s2 = inlined_call_operand.vmem [shape: f32[1,128], index: 2, kind: output, shape index: {1}]
  %3 = xla_tuple %s1, %s2
  %s4 = sld [smem:[#allocation0]]
  $region26: #{_lambda_.29} parent=0
    _
  %s6 = ssub.s32 1, %s4
  %s7 = scalar_select 0, %s6, %s4
  // Predicated region
  $region2: #{_lambda_.29} parent=0 // pred_check
    _
  $region3: #{_lambda_.29} parent=0 // pred_check_branch
    %9 = sbr.rel (0) target = $region5
  $region4: #{_lambda_.29} parent=0 // pred_region
    _
  $region5: #{_lambda_.29} parent=0 // pred_fallthru
    _
  %p10 = scmp.eq.s32.totalorder 0, 0
  // Predicated region
  $region6: #{_lambda_.29} parent=0 // pred_check
    %p11 = pneg %p10
  $region7: #{_lambda_.29} parent=0 // pred_check_branch
    %13 = sbr.rel (%p11) target = $region9
  $region8: #{_lambda_.29} parent=0 // pred_region
    %14 = vst [vmem:[%s1] sm:$0x1] 0.0
    %15 = vst [vmem:[%s2] sm:$0x1] 0.0
  $region9: #{_lambda_.29} parent=0 // pred_fallthru
    _
  %v16 = vld [vmem:[%s0] sm:$0xff]
  %v17 = vld [vmem:[%s1] sm:$0x1]
  %v18 = vrot.slane %v16, 4
  %v19 = vadd.f32 %v16, %v18
  %v20 = vrot.slane %v19, 2
  %v21 = vadd.f32 %v19, %v20
  %v22 = vrot.slane %v21, 1
  %v23 = vadd.f32 %v21, %v22
  %v24 = vadd.f32 %v17, %v23
  %25 = vst [vmem:[%s1] sm:$0x1] %v24
  %v26 = vld [vmem:[%s2] sm:$0x1]
  %v27 = vmul.f32 %v16, %v16
  %v28 = vrot.slane %v27, 4
  %v29 = vadd.f32 %v27, %v28
  %v30 = vrot.slane %v29, 2
  %v31 = vadd.f32 %v29, %v30
  %v32 = vrot.slane %v31, 1
  %v33 = vadd.f32 %v31, %v32
  %v34 = vadd.f32 %v26, %v33
  %35 = vst [vmem:[%s2] sm:$0x1] %v34
  // Predicated region
  $region10: #{_lambda_.29} parent=0 // pred_check
    _
  $region11: #{_lambda_.29} parent=0 // pred_check_branch
    %37 = sbr.rel (0) target = $region13
  $region12: #{_lambda_.29} parent=0 // pred_region
    _
  $region13: #{_lambda_.29} parent=0 // pred_fallthru
    _
  // Predicated region
  $region14: #{_lambda_.29} parent=0 // pred_check
    _
  $region15: #{_lambda_.29} parent=0 // pred_check_branch
    %39 = sbr.rel (0) target = $region17
  $region16: #{_lambda_.29} parent=0 // pred_region
    _
  $region17: #{_lambda_.29} parent=0 // pred_fallthru
    _
  // Predicated region
  $region18: #{_lambda_.29} parent=0 // pred_check
    _
  $region19: #{_lambda_.29} parent=0 // pred_check_branch
    %41 = sbr.rel (0) target = $region21
  $region20: #{_lambda_.29} parent=0 // pred_region
    _
  $region21: #{_lambda_.29} parent=0 // pred_fallthru
    _
  // Predicated region
  $region22: #{_lambda_.29} parent=0 // pred_check
    _
  $region23: #{_lambda_.29} parent=0 // pred_check_branch
    %43 = sbr.rel (0) target = $region25
  $region24: #{_lambda_.29} parent=0 // pred_region
    _
  $region25: #{_lambda_.29} parent=0 // pred_fallthru
    _

// kernel: tile.84
$region0: #{tile.84}
  %s0 = inlined_call_operand.vmem [shape: f32[4,32], index: 0, kind: input, shape index: {}]
  %s1 = inlined_call_operand.vmem [shape: f32[1,128], index: 1, kind: output, shape index: {}]
  $region1: #{tile.84} parent=0
    #allocation0 [shape = 'u8[4096]{0}', space=vmem, size = 0x1000, scoped, tag = 'scoped mem for output reshape']
    #allocation1 [shape = 'u8[4096]{0}', space=vmem, size = 0x1000, scoped, tag = 'scoped mem for input reshape']
    %s3 = sshll.u32 1, 4
    %s4 = ssub.s32 %s3, 1
    %v5 = vld [vmem:[%s0] sm:%s4]
    %6 = vst [vmem:[#allocation1] sm:%s4] %v5
    %v7 = vld [vmem:[#allocation1] sm:$0x1]
    %vm8 = vcmask 261120
    %9 = vst.msk [vmem:[#allocation0] sm:$0x1] %vm8, %v7
    %s10 = scalar_lea.vmem [#allocation1], 3
    %v11 = vld [vmem:[%s10] sm:$0x1]
    %12 = vrot.lane.b32.xlu0 %v11, 96
    %v13 = vpop.permute.xlu0 %12
    %vm14 = vcmask 1048320
    %15 = vst.msk [vmem:[#allocation0] sm:$0x1] %vm14, %v13
    %s16 = scalar_lea.vmem [#allocation1], 2
    %v17 = vld [vmem:[%s16] sm:$0x1]
    %18 = vrot.lane.b32.xlu0 %v17, 64
    %v19 = vpop.permute.xlu0 %18
    %vm20 = vcmask 785920
    %21 = vst.msk [vmem:[#allocation0] sm:$0x1] %vm20, %v19
    %s22 = scalar_lea.vmem [#allocation1], 1
    %v23 = vld [vmem:[%s22] sm:$0x1]
    %24 = vrot.lane.b32.xlu0 %v23, 32
    %v25 = vpop.permute.xlu0 %24
    %vm26 = vcmask 523520
    %27 = vst.msk [vmem:[#allocation0] sm:$0x1] %vm26, %v25
    %s29 = sshll.u32 1, 1
    %s30 = ssub.s32 %s29, 1
    %v32 = vld [vmem:[#allocation0] sm:%s30]
    %s33 = sshll.u32 1, 1
    %s34 = ssub.s32 %s33, 1
    %35 = vst [vmem:[%s1] sm:%s34] %v32

// kernel: _lambda_.30
$region0: #{_lambda_.30}
  #allocation0 [shape = 'u32[]', space=smem, size = 0x4, offset = 0x4, fixed_abs, tag = 'smem constant byte address 0x4 - core index']
  #allocation1 [shape = 'u32[144,128]{1,0:T(1,128)}', space=vmem, size = 0x12000, scoped, tag = 'internal scratch']
  %s0 = inlined_call_operand.vmem [shape: f32[8,128], index: 0, kind: input, shape index: {}]
  %s1 = inlined_call_operand.vmem [shape: f32[1,128], index: 1, kind: input, shape index: {}]
  %s2 = inlined_call_operand.vmem [shape: f32[1,128], index: 2, kind: input, shape index: {}]
  %s3 = inlined_call_operand.vmem [shape: f32[8,128], index: 3, kind: output, shape index: {}]
  %s4 = sld [smem:[#allocation0]]
  $region22: #{_lambda_.30} parent=0
    _
  %s6 = ssub.s32 1, %s4
  %s7 = scalar_select 0, %s6, %s4
  // Predicated region
  $region2: #{_lambda_.30} parent=0 // pred_check
    _
  $region3: #{_lambda_.30} parent=0 // pred_check_branch
    %9 = sbr.rel (0) target = $region5
  $region4: #{_lambda_.30} parent=0 // pred_region
    _
  $region5: #{_lambda_.30} parent=0 // pred_fallthru
    _
  // Predicated region
  $region6: #{_lambda_.30} parent=0 // pred_check
    _
  $region7: #{_lambda_.30} parent=0 // pred_check_branch
    %11 = sbr.rel (0) target = $region9
  $region8: #{_lambda_.30} parent=0 // pred_region
    _
  $region9: #{_lambda_.30} parent=0 // pred_fallthru
    _
  // Predicated region
  $region10: #{_lambda_.30} parent=0 // pred_check
    _
  $region11: #{_lambda_.30} parent=0 // pred_check_branch
    %13 = sbr.rel (0) target = $region13
  $region12: #{_lambda_.30} parent=0 // pred_region
    _
  $region13: #{_lambda_.30} parent=0 // pred_fallthru
    _
  %v14 = vld [vmem:[%s0] sm:$0xff]
  %v15 = vld [vmem:[%s1] sm:$0x1]
  %v17 = vlaneseq
  %v18 = vshrl.u32 %v17, 7
  %v19 = vsub.s32 0, %v18
  %v20 = vrot.slane %v15, %v19
  %v22 = vmul.f32 %v14, %v20
  %v23 = vld [vmem:[%s2] sm:$0x1]
  %v25 = vlaneseq
  %v26 = vshrl.u32 %v25, 7
  %v27 = vsub.s32 0, %v26
  %v28 = vrot.slane %v23, %v27
  %v30 = vadd.f32 %v22, %v28
  %31 = vst [vmem:[%s3] sm:$0xff] %v30
  // Predicated region
  $region14: #{_lambda_.30} parent=0 // pred_check
    _
  $region15: #{_lambda_.30} parent=0 // pred_check_branch
    %33 = sbr.rel (0) target = $region17
  $region16: #{_lambda_.30} parent=0 // pred_region
    _
  $region17: #{_lambda_.30} parent=0 // pred_fallthru
    _
  // Predicated region
  $region18: #{_lambda_.30} parent=0 // pred_check
    _
  $region19: #{_lambda_.30} parent=0 // pred_check_branch
    %35 = sbr.rel (0) target = $region21
  $region20: #{_lambda_.30} parent=0 // pred_region
    _
  $region21: #{_lambda_.30} parent=0 // pred_fallthru
    _

// kernel: tile.93
$region0: #{tile.93}
  #allocation0 [shape = 's32[1]{0}', space=sflag, size = 0x4, scoped, tag = 'scoped memory for tile.93']
  %s0 = inlined_call_operand.vmem [shape: f32[64], index: 0, kind: input, shape index: {}]
  %s1 = inlined_call_operand.vmem [shape: f32[2,64], index: 1, kind: output, shape index: {}]
  // Predicated region
  $region2: #{tile.93} parent=0 // pred_check
    _
  $region3: #{tile.93} parent=0 // pred_check_branch
    %3 = sbr.rel (0) target = $region5
  $region4: #{tile.93} parent=0 // pred_region
    _
  $region5: #{tile.93} parent=0 // pred_fallthru
    _
  %v4 = vld [vmem:[%s0] ss:$0 sm:$0xff]
  %5 = vst [vmem:[%s1] sm:$0x3] %v4

// kernel: tile.94
$region0: #{tile.94}
  %s0 = inlined_call_operand.vmem [shape: f32[2,64], index: 0, kind: input, shape index: {}]
  %s1 = inlined_call_operand.vmem [shape: f32[1,128], index: 1, kind: output, shape index: {}]
  $region1: #{tile.94} parent=0
    #allocation0 [shape = 'u8[4096]{0}', space=vmem, size = 0x1000, scoped, tag = 'scoped mem for output reshape']
    #allocation1 [shape = 'u8[4096]{0}', space=vmem, size = 0x1000, scoped, tag = 'scoped mem for input reshape']
    %s3 = sshll.u32 1, 2
    %s4 = ssub.s32 %s3, 1
    %v5 = vld [vmem:[%s0] sm:%s4]
    %6 = vst [vmem:[#allocation1] sm:%s4] %v5
    %v7 = vld [vmem:[#allocation1] sm:$0x1]
    %vm8 = vcmask 523264
    %9 = vst.msk [vmem:[#allocation0] sm:$0x1] %vm8, %v7
    %s10 = scalar_lea.vmem [#allocation1], 1
    %v11 = vld [vmem:[%s10] sm:$0x1]
    %12 = vrot.lane.b32.xlu0 %v11, 64
    %v13 = vpop.permute.xlu0 %12
    %vm14 = vcmask 1048064
    %15 = vst.msk [vmem:[#allocation0] sm:$0x1] %vm14, %v13
    %s17 = sshll.u32 1, 1
    %s18 = ssub.s32 %s17, 1
    %v20 = vld [vmem:[#allocation0] sm:%s18]
    %s21 = sshll.u32 1, 1
    %s22 = ssub.s32 %s21, 1
    %23 = vst [vmem:[%s1] sm:%s22] %v20

// kernel: _lambda_.32
$region0: #{_lambda_.32}
  #allocation0 [shape = 'u32[]', space=smem, size = 0x4, offset = 0x4, fixed_abs, tag = 'smem constant byte address 0x4 - core index']
  #allocation1 [shape = 'u32[144,128]{1,0:T(1,128)}', space=vmem, size = 0x12000, scoped, tag = 'internal scratch']
  %s0 = inlined_call_operand.vmem [shape: f32[4,128], index: 0, kind: input, shape index: {}]
  %s1 = inlined_call_operand.vmem [shape: f32[1,128], index: 1, kind: output, shape index: {0}]
  %s2 = inlined_call_operand.vmem [shape: f32[1,128], index: 2, kind: output, shape index: {1}]
  %3 = xla_tuple %s1, %s2
  %s4 = sld [smem:[#allocation0]]
  $region26: #{_lambda_.32} parent=0
    _
  %s6 = ssub.s32 1, %s4
  %s7 = scalar_select 0, %s6, %s4
  // Predicated region
  $region2: #{_lambda_.32} parent=0 // pred_check
    _
  $region3: #{_lambda_.32} parent=0 // pred_check_branch
    %9 = sbr.rel (0) target = $region5
  $region4: #{_lambda_.32} parent=0 // pred_region
    _
  $region5: #{_lambda_.32} parent=0 // pred_fallthru
    _
  %p10 = scmp.eq.s32.totalorder 0, 0
  // Predicated region
  $region6: #{_lambda_.32} parent=0 // pred_check
    %p11 = pneg %p10
  $region7: #{_lambda_.32} parent=0 // pred_check_branch
    %13 = sbr.rel (%p11) target = $region9
  $region8: #{_lambda_.32} parent=0 // pred_region
    %14 = vst [vmem:[%s1] sm:$0x1] 0.0
    %15 = vst [vmem:[%s2] sm:$0x1] 0.0
  $region9: #{_lambda_.32} parent=0 // pred_fallthru
    _
  %v16 = vld [vmem:[%s0] sm:$0xf]
  %v17 = vld [vmem:[%s1] sm:$0x1]
  %vm18 = vcmask 1043456
  %v19 = vsel %vm18, %v16, 0.0
  %v20 = vrot.slane %v19, 4
  %v21 = vadd.f32 %v19, %v20
  %v22 = vrot.slane %v21, 2
  %v23 = vadd.f32 %v21, %v22
  %v24 = vrot.slane %v23, 1
  %v25 = vadd.f32 %v23, %v24
  %v26 = vadd.f32 %v17, %v25
  %27 = vst [vmem:[%s1] sm:$0x1] %v26
  %v28 = vld [vmem:[%s2] sm:$0x1]
  %v29 = vmul.f32 %v16, %v16
  %v30 = vsel %vm18, %v29, 0.0
  %v31 = vrot.slane %v30, 4
  %v32 = vadd.f32 %v30, %v31
  %v33 = vrot.slane %v32, 2
  %v34 = vadd.f32 %v32, %v33
  %v35 = vrot.slane %v34, 1
  %v36 = vadd.f32 %v34, %v35
  %v37 = vadd.f32 %v28, %v36
  %38 = vst [vmem:[%s2] sm:$0x1] %v37
  // Predicated region
  $region10: #{_lambda_.32} parent=0 // pred_check
    _
  $region11: #{_lambda_.32} parent=0 // pred_check_branch
    %40 = sbr.rel (0) target = $region13
  $region12: #{_lambda_.32} parent=0 // pred_region
    _
  $region13: #{_lambda_.32} parent=0 // pred_fallthru
    _
  // Predicated region
  $region14: #{_lambda_.32} parent=0 // pred_check
    _
  $region15: #{_lambda_.32} parent=0 // pred_check_branch
    %42 = sbr.rel (0) target = $region17
  $region16: #{_lambda_.32} parent=0 // pred_region
    _
  $region17: #{_lambda_.32} parent=0 // pred_fallthru
    _
  // Predicated region
  $region18: #{_lambda_.32} parent=0 // pred_check
    _
  $region19: #{_lambda_.32} parent=0 // pred_check_branch
    %44 = sbr.rel (0) target = $region21
  $region20: #{_lambda_.32} parent=0 // pred_region
    _
  $region21: #{_lambda_.32} parent=0 // pred_fallthru
    _
  // Predicated region
  $region22: #{_lambda_.32} parent=0 // pred_check
    _
  $region23: #{_lambda_.32} parent=0 // pred_check_branch
    %46 = sbr.rel (0) target = $region25
  $region24: #{_lambda_.32} parent=0 // pred_region
    _
  $region25: #{_lambda_.32} parent=0 // pred_fallthru
    _

// kernel: _lambda_.31
$region0: #{_lambda_.31}
  #allocation0 [shape = 'u32[]', space=smem, size = 0x4, offset = 0x4, fixed_abs, tag = 'smem constant byte address 0x4 - core index']
  #allocation1 [shape = 'u32[144,128]{1,0:T(1,128)}', space=vmem, size = 0x12000, scoped, tag = 'internal scratch']
  %s0 = inlined_call_operand.vmem [shape: bf16[8,512], index: 0, kind: input, shape index: {}]
  %s1 = inlined_call_operand.vmem [shape: bf16[512,64], index: 1, kind: input, shape index: {}]
  %s2 = inlined_call_operand.vmem [shape: f32[8,64], index: 2, kind: output, shape index: {}]
  %s3 = sld [smem:[#allocation0]]
  $region18: #{_lambda_.31} parent=0
    _
  %s5 = ssub.s32 1, %s3
  %s6 = scalar_select 0, %s5, %s3
  // Predicated region
  $region2: #{_lambda_.31} parent=0 // pred_check
    _
  $region3: #{_lambda_.31} parent=0 // pred_check_branch
    %8 = sbr.rel (0) target = $region5
  $region4: #{_lambda_.31} parent=0 // pred_region
    _
  $region5: #{_lambda_.31} parent=0 // pred_fallthru
    _
  // Predicated region
  $region6: #{_lambda_.31} parent=0 // pred_check
    _
  $region7: #{_lambda_.31} parent=0 // pred_check_branch
    %10 = sbr.rel (0) target = $region9
  $region8: #{_lambda_.31} parent=0 // pred_region
    _
  $region9: #{_lambda_.31} parent=0 // pred_fallthru
    _
  %v13 = vld [vmem:[%s0] sm:$0xff]
  %v14 = vld [vmem:[%s0 + $0x8] sm:$0xff]
  %vm15 = vcmp.gt.bf16.partialorder %v13, 0
  %vm16 = vcmp.gt.bf16.partialorder %v14, 0
  %v17 = vmul.bf16 %v13, 1045249613
  %v18 = vmul.bf16 %v14, 1045249613
  %v19 = vsel %vm15, %v13, %v17
  %v20 = vsel %vm16, %v14, %v18
  %v21 = vld [vmem:[%s1] sm:$0xf]
  %v22 = vld [vmem:[%s1 + $0x4] sm:$0xf]
  %v23 = vld [vmem:[%s1 + $0x8] sm:$0xf]
  %v24 = vld [vmem:[%s1 + $0xc] sm:$0xf]
  %v25 = vld [vmem:[%s1 + $0x10] sm:$0xf]
  %v26 = vld [vmem:[%s1 + $0x14] sm:$0xf]
  %v27 = vld [vmem:[%s1 + $0x18] sm:$0xf]
  %v28 = vld [vmem:[%s1 + $0x1c] sm:$0xf]
  %v29 = vld [vmem:[%s1 + $0x20] sm:$0xf]
  %v30 = vld [vmem:[%s1 + $0x24] sm:$0xf]
  %v31 = vld [vmem:[%s1 + $0x28] sm:$0xf]
  %v32 = vld [vmem:[%s1 + $0x2c] sm:$0xf]
  %v33 = vld [vmem:[%s1 + $0x30] sm:$0xf]
  %v34 = vld [vmem:[%s1 + $0x34] sm:$0xf]
  %v35 = vld [vmem:[%s1 + $0x38] sm:$0xf]
  %v36 = vld [vmem:[%s1 + $0x3c] sm:$0xf]
  %v37 = vld [vmem:[%s1 + $0x40] sm:$0xf]
  %v38 = vld [vmem:[%s1 + $0x44] sm:$0xf]
  %v39 = vld [vmem:[%s1 + $0x48] sm:$0xf]
  %v40 = vld [vmem:[%s1 + $0x4c] sm:$0xf]
  %v41 = vld [vmem:[%s1 + $0x50] sm:$0xf]
  %v42 = vld [vmem:[%s1 + $0x54] sm:$0xf]
  %v43 = vld [vmem:[%s1 + $0x58] sm:$0xf]
  %v44 = vld [vmem:[%s1 + $0x5c] sm:$0xf]
  %v45 = vld [vmem:[%s1 + $0x60] sm:$0xf]
  %v46 = vld [vmem:[%s1 + $0x64] sm:$0xf]
  %v47 = vld [vmem:[%s1 + $0x68] sm:$0xf]
  %v48 = vld [vmem:[%s1 + $0x6c] sm:$0xf]
  %v49 = vld [vmem:[%s1 + $0x70] sm:$0xf]
  %v50 = vld [vmem:[%s1 + $0x74] sm:$0xf]
  %v51 = vld [vmem:[%s1 + $0x78] sm:$0xf]
  %v52 = vld [vmem:[%s1 + $0x7c] sm:$0xf]
  %v53 = vld [vmem:[%s1 + $0x80] sm:$0xf]
  %v54 = vld [vmem:[%s1 + $0x84] sm:$0xf]
  %v55 = vld [vmem:[%s1 + $0x88] sm:$0xf]
  %v56 = vld [vmem:[%s1 + $0x8c] sm:$0xf]
  %v57 = vld [vmem:[%s1 + $0x90] sm:$0xf]
  %v58 = vld [vmem:[%s1 + $0x94] sm:$0xf]
  %v59 = vld [vmem:[%s1 + $0x98] sm:$0xf]
  %v60 = vld [vmem:[%s1 + $0x9c] sm:$0xf]
  %v61 = vld [vmem:[%s1 + $0xa0] sm:$0xf]
  %v62 = vld [vmem:[%s1 + $0xa4] sm:$0xf]
  %v63 = vld [vmem:[%s1 + $0xa8] sm:$0xf]
  %v64 = vld [vmem:[%s1 + $0xac] sm:$0xf]
  %v65 = vld [vmem:[%s1 + $0xb0] sm:$0xf]
  %v66 = vld [vmem:[%s1 + $0xb4] sm:$0xf]
  %v67 = vld [vmem:[%s1 + $0xb8] sm:$0xf]
  %v68 = vld [vmem:[%s1 + $0xbc] sm:$0xf]
  %v69 = vld [vmem:[%s1 + $0xc0] sm:$0xf]
  %v70 = vld [vmem:[%s1 + $0xc4] sm:$0xf]
  %v71 = vld [vmem:[%s1 + $0xc8] sm:$0xf]
  %v72 = vld [vmem:[%s1 + $0xcc] sm:$0xf]
  %v73 = vld [vmem:[%s1 + $0xd0] sm:$0xf]
  %v74 = vld [vmem:[%s1 + $0xd4] sm:$0xf]
  %v75 = vld [vmem:[%s1 + $0xd8] sm:$0xf]
  %v76 = vld [vmem:[%s1 + $0xdc] sm:$0xf]
  %v77 = vld [vmem:[%s1 + $0xe0] sm:$0xf]
  %v78 = vld [vmem:[%s1 + $0xe4] sm:$0xf]
  %v79 = vld [vmem:[%s1 + $0xe8] sm:$0xf]
  %v80 = vld [vmem:[%s1 + $0xec] sm:$0xf]
  %v81 = vld [vmem:[%s1 + $0xf0] sm:$0xf]
  %v82 = vld [vmem:[%s1 + $0xf4] sm:$0xf]
  %v83 = vld [vmem:[%s1 + $0xf8] sm:$0xf]
  %v84 = vld [vmem:[%s1 + $0xfc] sm:$0xf]
  %v87 = vunpack.c.l.b16 %v19
  %v88 = vunpack.c.h.b16 %v19
  %v89 = vunpack.c.l.b16 %v20
  %v90 = vunpack.c.h.b16 %v20
  %v91 = vpack.c.b16 %v87, %v87
  %v92 = vpack.c.b16 %v88, %v88
  %v93 = vpack.c.b16 %v89, %v89
  %v94 = vpack.c.b16 %v90, %v90
  %v163 = vunpack.c.l.b16 %v21
  %v164 = vunpack.c.l.b16 %v22
  %v165 = vunpack.c.l.b16 %v23
  %v166 = vunpack.c.l.b16 %v24
  %v167 = vunpack.c.l.b16 %v25
  %v168 = vunpack.c.l.b16 %v26
  %v169 = vunpack.c.l.b16 %v27
  %v170 = vunpack.c.l.b16 %v28
  %v171 = vunpack.c.l.b16 %v29
  %v172 = vunpack.c.l.b16 %v30
  %v173 = vunpack.c.l.b16 %v31
  %v174 = vunpack.c.l.b16 %v32
  %v175 = vunpack.c.l.b16 %v33
  %v176 = vunpack.c.l.b16 %v34
  %v177 = vunpack.c.l.b16 %v35
  %v178 = vunpack.c.l.b16 %v36
  %v179 = vunpack.c.l.b16 %v37
  %v180 = vunpack.c.l.b16 %v38
  %v181 = vunpack.c.l.b16 %v39
  %v182 = vunpack.c.l.b16 %v40
  %v183 = vunpack.c.l.b16 %v41
  %v184 = vunpack.c.l.b16 %v42
  %v185 = vunpack.c.l.b16 %v43
  %v186 = vunpack.c.l.b16 %v44
  %v187 = vunpack.c.l.b16 %v45
  %v188 = vunpack.c.l.b16 %v46
  %v189 = vunpack.c.l.b16 %v47
  %v190 = vunpack.c.l.b16 %v48
  %v191 = vunpack.c.l.b16 %v49
  %v192 = vunpack.c.l.b16 %v50
  %v193 = vunpack.c.l.b16 %v51
  %v194 = vunpack.c.l.b16 %v52
  %v195 = vunpack.c.l.b16 %v53
  %v196 = vunpack.c.l.b16 %v54
  %v197 = vunpack.c.l.b16 %v55
  %v198 = vunpack.c.l.b16 %v56
  %v199 = vunpack.c.l.b16 %v57
  %v200 = vunpack.c.l.b16 %v58
  %v201 = vunpack.c.l.b16 %v59
  %v202 = vunpack.c.l.b16 %v60
  %v203 = vunpack.c.l.b16 %v61
  %v204 = vunpack.c.l.b16 %v62
  %v205 = vunpack.c.l.b16 %v63
  %v206 = vunpack.c.l.b16 %v64
  %v207 = vunpack.c.l.b16 %v65
  %v208 = vunpack.c.l.b16 %v66
  %v209 = vunpack.c.l.b16 %v67
  %v210 = vunpack.c.l.b16 %v68
  %v211 = vunpack.c.l.b16 %v69
  %v212 = vunpack.c.l.b16 %v70
  %v213 = vunpack.c.l.b16 %v71
  %v214 = vunpack.c.l.b16 %v72
  %v215 = vunpack.c.l.b16 %v73
  %v216 = vunpack.c.l.b16 %v74
  %v217 = vunpack.c.l.b16 %v75
  %v218 = vunpack.c.l.b16 %v76
  %v219 = vunpack.c.l.b16 %v77
  %v220 = vunpack.c.l.b16 %v78
  %v221 = vunpack.c.l.b16 %v79
  %v222 = vunpack.c.l.b16 %v80
  %v223 = vunpack.c.l.b16 %v81
  %v224 = vunpack.c.l.b16 %v82
  %v225 = vunpack.c.l.b16 %v83
  %v226 = vunpack.c.l.b16 %v84
  %v227 = vpack.c.b16 %v164, %v163
  %v228 = vpack.c.b16 %v166, %v165
  %v229 = vpack.c.b16 %v168, %v167
  %v230 = vpack.c.b16 %v170, %v169
  %v231 = vpack.c.b16 %v172, %v171
  %v232 = vpack.c.b16 %v174, %v173
  %v233 = vpack.c.b16 %v176, %v175
  %v234 = vpack.c.b16 %v178, %v177
  %v235 = vpack.c.b16 %v180, %v179
  %v236 = vpack.c.b16 %v182, %v181
  %v237 = vpack.c.b16 %v184, %v183
  %v238 = vpack.c.b16 %v186, %v185
  %v239 = vpack.c.b16 %v188, %v187
  %v240 = vpack.c.b16 %v190, %v189
  %v241 = vpack.c.b16 %v192, %v191
  %v242 = vpack.c.b16 %v194, %v193
  %v243 = vpack.c.b16 %v196, %v195
  %v244 = vpack.c.b16 %v198, %v197
  %v245 = vpack.c.b16 %v200, %v199
  %v246 = vpack.c.b16 %v202, %v201
  %v247 = vpack.c.b16 %v204, %v203
  %v248 = vpack.c.b16 %v206, %v205
  %v249 = vpack.c.b16 %v208, %v207
  %v250 = vpack.c.b16 %v210, %v209
  %v251 = vpack.c.b16 %v212, %v211
  %v252 = vpack.c.b16 %v214, %v213
  %v253 = vpack.c.b16 %v216, %v215
  %v254 = vpack.c.b16 %v218, %v217
  %v255 = vpack.c.b16 %v220, %v219
  %v256 = vpack.c.b16 %v222, %v221
  %v257 = vpack.c.b16 %v224, %v223
  %v258 = vpack.c.b16 %v226, %v225
  %291 = vmatprep.subr.bf16.mxu0 0
  %292 = vmatpush1.bf16.msra.mxu0 %v234
  %293 = vmatprep.subr.bf16.mxu0 0
  %294 = vmatpush1.bf16.msra.mxu0 %v233
  %295 = vmatprep.subr.bf16.mxu0 0
  %296 = vmatpush1.bf16.msra.mxu0 %v232
  %297 = vmatprep.subr.bf16.mxu0 0
  %298 = vmatpush1.bf16.msra.mxu0 %v231
  %299 = vmatprep.subr.bf16.mxu0 0
  %300 = vmatpush1.bf16.msra.mxu0 %v230
  %301 = vmatprep.subr.bf16.mxu0 0
  %302 = vmatpush1.bf16.msra.mxu0 %v229
  %303 = vmatprep.subr.bf16.mxu0 0
  %304 = vmatpush1.bf16.msra.mxu0 %v228
  %305 = vmatprep.subr.bf16.mxu0 0
  %306 = vmatpush1.bf16.msra.mxu0 %v227
  %307 = vmatprep.subr.bf16.mxu0 0
  %308 = vmatpush2.bf16.msra.mxu0 %v242
  %309 = vmatprep.subr.bf16.mxu0 0
  %310 = vmatpush2.bf16.msra.mxu0 %v241
  %311 = vmatprep.subr.bf16.mxu0 0
  %312 = vmatpush2.bf16.msra.mxu0 %v240
  %313 = vmatprep.subr.bf16.mxu0 0
  %314 = vmatpush2.bf16.msra.mxu0 %v239
  %315 = vmatprep.subr.bf16.mxu0 0
  %316 = vmatpush2.bf16.msra.mxu0 %v238
  %317 = vmatprep.subr.bf16.mxu0 0
  %318 = vmatpush2.bf16.msra.mxu0 %v237
  %319 = vmatprep.subr.bf16.mxu0 0
  %320 = vmatpush2.bf16.msra.mxu0 %v236
  %321 = vmatprep.subr.bf16.mxu0 0
  %322 = vmatpush2.bf16.msra.mxu0 %v235
  %323 = vmatprep.mubr.bf16.mxu0 %v92
  %324 = vmatmul.mubr.bf16.gmra.mxu0 %v91
  %v325 = vpop.f32.mrf.mxu0
  %v326 = vadd.f32 0.0, %v325
  %v327 = vpop.f32.mrf.mxu0
  %v328 = vpop.f32.mrf.mxu0
  %v329 = vpop.f32.mrf.mxu0
  %330 = vdwg.mxu0
  %331 = vmatprep.subr.bf16.mxu0 0
  %332 = vmatpush1.bf16.msra.mxu0 %v250
  %333 = vmatprep.subr.bf16.mxu0 0
  %334 = vmatpush1.bf16.msra.mxu0 %v249
  %335 = vmatprep.subr.bf16.mxu0 0
  %336 = vmatpush1.bf16.msra.mxu0 %v248
  %337 = vmatprep.subr.bf16.mxu0 0
  %338 = vmatpush1.bf16.msra.mxu0 %v247
  %339 = vmatprep.subr.bf16.mxu0 0
  %340 = vmatpush1.bf16.msra.mxu0 %v246
  %341 = vmatprep.subr.bf16.mxu0 0
  %342 = vmatpush1.bf16.msra.mxu0 %v245
  %343 = vmatprep.subr.bf16.mxu0 0
  %344 = vmatpush1.bf16.msra.mxu0 %v244
  %345 = vmatprep.subr.bf16.mxu0 0
  %346 = vmatpush1.bf16.msra.mxu0 %v243
  %347 = vmatprep.subr.bf16.mxu0 0
  %348 = vmatpush2.bf16.msra.mxu0 %v258
  %349 = vmatprep.subr.bf16.mxu0 0
  %350 = vmatpush2.bf16.msra.mxu0 %v257
  %351 = vmatprep.subr.bf16.mxu0 0
  %352 = vmatpush2.bf16.msra.mxu0 %v256
  %353 = vmatprep.subr.bf16.mxu0 0
  %354 = vmatpush2.bf16.msra.mxu0 %v255
  %355 = vmatprep.subr.bf16.mxu0 0
  %356 = vmatpush2.bf16.msra.mxu0 %v254
  %357 = vmatprep.subr.bf16.mxu0 0
  %358 = vmatpush2.bf16.msra.mxu0 %v253
  %359 = vmatprep.subr.bf16.mxu0 0
  %360 = vmatpush2.bf16.msra.mxu0 %v252
  %361 = vmatprep.subr.bf16.mxu0 0
  %362 = vmatpush2.bf16.msra.mxu0 %v251
  %363 = vmatprep.mubr.bf16.mxu0 %v94
  %364 = vmatmul.mubr.bf16.gmra.mxu0 %v93
  %v365 = vpop.f32.mrf.mxu0
  %v366 = vadd.f32 %v326, %v365
  %v367 = vpop.f32.mrf.mxu0
  %v368 = vpop.f32.mrf.mxu0
  %v369 = vpop.f32.mrf.mxu0
  %370 = vdwg.mxu0
  %vm371 = vcmask 523264
  %372 = vst.msk [vmem:[%s2] sm:$0xff] %vm371, %v366
  // Predicated region
  $region10: #{_lambda_.31} parent=0 // pred_check
    _
  $region11: #{_lambda_.31} parent=0 // pred_check_branch
    %374 = sbr.rel (0) target = $region13
  $region12: #{_lambda_.31} parent=0 // pred_region
    _
  $region13: #{_lambda_.31} parent=0 // pred_fallthru
    _
  // Predicated region
  $region14: #{_lambda_.31} parent=0 // pred_check
    _
  $region15: #{_lambda_.31} parent=0 // pred_check_branch
    %376 = sbr.rel (0) target = $region17
  $region16: #{_lambda_.31} parent=0 // pred_region
    _
  $region17: #{_lambda_.31} parent=0 // pred_fallthru
    _

// kernel: _lambda_.33
$region0: #{_lambda_.33}
  #allocation0 [shape = 'u32[]', space=smem, size = 0x4, offset = 0x4, fixed_abs, tag = 'smem constant byte address 0x4 - core index']
  #allocation1 [shape = 'u32[144,128]{1,0:T(1,128)}', space=vmem, size = 0x12000, scoped, tag = 'internal scratch']
  %s0 = inlined_call_operand.vmem [shape: f32[4,128], index: 0, kind: input, shape index: {}]
  %s1 = inlined_call_operand.vmem [shape: f32[1,128], index: 1, kind: input, shape index: {}]
  %s2 = inlined_call_operand.vmem [shape: f32[1,128], index: 2, kind: input, shape index: {}]
  %s3 = inlined_call_operand.vmem [shape: f32[4,128], index: 3, kind: output, shape index: {}]
  %s4 = sld [smem:[#allocation0]]
  $region22: #{_lambda_.33} parent=0
    _
  %s6 = ssub.s32 1, %s4
  %s7 = scalar_select 0, %s6, %s4
  // Predicated region
  $region2: #{_lambda_.33} parent=0 // pred_check
    _
  $region3: #{_lambda_.33} parent=0 // pred_check_branch
    %9 = sbr.rel (0) target = $region5
  $region4: #{_lambda_.33} parent=0 // pred_region
    _
  $region5: #{_lambda_.33} parent=0 // pred_fallthru
    _
  // Predicated region
  $region6: #{_lambda_.33} parent=0 // pred_check
    _
  $region7: #{_lambda_.33} parent=0 // pred_check_branch
    %11 = sbr.rel (0) target = $region9
  $region8: #{_lambda_.33} parent=0 // pred_region
    _
  $region9: #{_lambda_.33} parent=0 // pred_fallthru
    _
  // Predicated region
  $region10: #{_lambda_.33} parent=0 // pred_check
    _
  $region11: #{_lambda_.33} parent=0 // pred_check_branch
    %13 = sbr.rel (0) target = $region13
  $region12: #{_lambda_.33} parent=0 // pred_region
    _
  $region13: #{_lambda_.33} parent=0 // pred_fallthru
    _
  %v14 = vld [vmem:[%s0] sm:$0xf]
  %v15 = vld [vmem:[%s1] sm:$0x1]
  %v17 = vlaneseq
  %v18 = vshrl.u32 %v17, 7
  %v19 = vsub.s32 0, %v18
  %v20 = vrot.slane %v15, %v19
  %v22 = vmul.f32 %v14, %v20
  %v23 = vld [vmem:[%s2] sm:$0x1]
  %v25 = vlaneseq
  %v26 = vshrl.u32 %v25, 7
  %v27 = vsub.s32 0, %v26
  %v28 = vrot.slane %v23, %v27
  %v30 = vadd.f32 %v22, %v28
  %31 = vst [vmem:[%s3] sm:$0xf] %v30
  // Predicated region
  $region14: #{_lambda_.33} parent=0 // pred_check
    _
  $region15: #{_lambda_.33} parent=0 // pred_check_branch
    %33 = sbr.rel (0) target = $region17
  $region16: #{_lambda_.33} parent=0 // pred_region
    _
  $region17: #{_lambda_.33} parent=0 // pred_fallthru
    _
  // Predicated region
  $region18: #{_lambda_.33} parent=0 // pred_check
    _
  $region19: #{_lambda_.33} parent=0 // pred_check_branch
    %35 = sbr.rel (0) target = $region21
  $region20: #{_lambda_.33} parent=0 // pred_region
    _
  $region21: #{_lambda_.33} parent=0 // pred_fallthru
    _

// kernel: _lambda_.34
$region0: #{_lambda_.34}
  #allocation0 [shape = 'u32[]', space=smem, size = 0x4, offset = 0x4, fixed_abs, tag = 'smem constant byte address 0x4 - core index']
  #allocation1 [shape = 'u32[144,128]{1,0:T(1,128)}', space=vmem, size = 0x12000, scoped, tag = 'internal scratch']
  %s0 = inlined_call_operand.vmem [shape: bf16[8,1024], index: 0, kind: input, shape index: {}]
  %s1 = inlined_call_operand.vmem [shape: bf16[1024,64], index: 1, kind: input, shape index: {}]
  %s2 = inlined_call_operand.vmem [shape: f32[8,64], index: 2, kind: output, shape index: {}]
  %s3 = sld [smem:[#allocation0]]
  $region18: #{_lambda_.34} parent=0
    _
  %s5 = ssub.s32 1, %s3
  %s6 = scalar_select 0, %s5, %s3
  // Predicated region
  $region2: #{_lambda_.34} parent=0 // pred_check
    _
  $region3: #{_lambda_.34} parent=0 // pred_check_branch
    %8 = sbr.rel (0) target = $region5
  $region4: #{_lambda_.34} parent=0 // pred_region
    _
  $region5: #{_lambda_.34} parent=0 // pred_fallthru
    _
  // Predicated region
  $region6: #{_lambda_.34} parent=0 // pred_check
    _
  $region7: #{_lambda_.34} parent=0 // pred_check_branch
    %10 = sbr.rel (0) target = $region9
  $region8: #{_lambda_.34} parent=0 // pred_region
    _
  $region9: #{_lambda_.34} parent=0 // pred_fallthru
    _
  %v13 = vld [vmem:[%s0] sm:$0xff]
  %v14 = vld [vmem:[%s0 + $0x8] sm:$0xff]
  %v15 = vld [vmem:[%s0 + $0x10] sm:$0xff]
  %v16 = vld [vmem:[%s0 + $0x18] sm:$0xff]
  %vm17 = vcmp.gt.bf16.partialorder %v13, 0
  %vm18 = vcmp.gt.bf16.partialorder %v14, 0
  %vm19 = vcmp.gt.bf16.partialorder %v15, 0
  %vm20 = vcmp.gt.bf16.partialorder %v16, 0
  %v21 = vmul.bf16 %v13, 1045249613
  %v22 = vmul.bf16 %v14, 1045249613
  %v23 = vmul.bf16 %v15, 1045249613
  %v24 = vmul.bf16 %v16, 1045249613
  %v25 = vsel %vm17, %v13, %v21
  %v26 = vsel %vm18, %v14, %v22
  %v27 = vsel %vm19, %v15, %v23
  %v28 = vsel %vm20, %v16, %v24
  %v29 = vld [vmem:[%s1] sm:$0xf]
  %v30 = vld [vmem:[%s1 + $0x4] sm:$0xf]
  %v31 = vld [vmem:[%s1 + $0x8] sm:$0xf]
  %v32 = vld [vmem:[%s1 + $0xc] sm:$0xf]
  %v33 = vld [vmem:[%s1 + $0x10] sm:$0xf]
  %v34 = vld [vmem:[%s1 + $0x14] sm:$0xf]
  %v35 = vld [vmem:[%s1 + $0x18] sm:$0xf]
  %v36 = vld [vmem:[%s1 + $0x1c] sm:$0xf]
  %v37 = vld [vmem:[%s1 + $0x20] sm:$0xf]
  %v38 = vld [vmem:[%s1 + $0x24] sm:$0xf]
  %v39 = vld [vmem:[%s1 + $0x28] sm:$0xf]
  %v40 = vld [vmem:[%s1 + $0x2c] sm:$0xf]
  %v41 = vld [vmem:[%s1 + $0x30] sm:$0xf]
  %v42 = vld [vmem:[%s1 + $0x34] sm:$0xf]
  %v43 = vld [vmem:[%s1 + $0x38] sm:$0xf]
  %v44 = vld [vmem:[%s1 + $0x3c] sm:$0xf]
  %v45 = vld [vmem:[%s1 + $0x40] sm:$0xf]
  %v46 = vld [vmem:[%s1 + $0x44] sm:$0xf]
  %v47 = vld [vmem:[%s1 + $0x48] sm:$0xf]
  %v48 = vld [vmem:[%s1 + $0x4c] sm:$0xf]
  %v49 = vld [vmem:[%s1 + $0x50] sm:$0xf]
  %v50 = vld [vmem:[%s1 + $0x54] sm:$0xf]
  %v51 = vld [vmem:[%s1 + $0x58] sm:$0xf]
  %v52 = vld [vmem:[%s1 + $0x5c] sm:$0xf]
  %v53 = vld [vmem:[%s1 + $0x60] sm:$0xf]
  %v54 = vld [vmem:[%s1 + $0x64] sm:$0xf]
  %v55 = vld [vmem:[%s1 + $0x68] sm:$0xf]
  %v56 = vld [vmem:[%s1 + $0x6c] sm:$0xf]
  %v57 = vld [vmem:[%s1 + $0x70] sm:$0xf]
  %v58 = vld [vmem:[%s1 + $0x74] sm:$0xf]
  %v59 = vld [vmem:[%s1 + $0x78] sm:$0xf]
  %v60 = vld [vmem:[%s1 + $0x7c] sm:$0xf]
  %v61 = vld [vmem:[%s1 + $0x80] sm:$0xf]
  %v62 = vld [vmem:[%s1 + $0x84] sm:$0xf]
  %v63 = vld [vmem:[%s1 + $0x88] sm:$0xf]
  %v64 = vld [vmem:[%s1 + $0x8c] sm:$0xf]
  %v65 = vld [vmem:[%s1 + $0x90] sm:$0xf]
  %v66 = vld [vmem:[%s1 + $0x94] sm:$0xf]
  %v67 = vld [vmem:[%s1 + $0x98] sm:$0xf]
  %v68 = vld [vmem:[%s1 + $0x9c] sm:$0xf]
  %v69 = vld [vmem:[%s1 + $0xa0] sm:$0xf]
  %v70 = vld [vmem:[%s1 + $0xa4] sm:$0xf]
  %v71 = vld [vmem:[%s1 + $0xa8] sm:$0xf]
  %v72 = vld [vmem:[%s1 + $0xac] sm:$0xf]
  %v73 = vld [vmem:[%s1 + $0xb0] sm:$0xf]
  %v74 = vld [vmem:[%s1 + $0xb4] sm:$0xf]
  %v75 = vld [vmem:[%s1 + $0xb8] sm:$0xf]
  %v76 = vld [vmem:[%s1 + $0xbc] sm:$0xf]
  %v77 = vld [vmem:[%s1 + $0xc0] sm:$0xf]
  %v78 = vld [vmem:[%s1 + $0xc4] sm:$0xf]
  %v79 = vld [vmem:[%s1 + $0xc8] sm:$0xf]
  %v80 = vld [vmem:[%s1 + $0xcc] sm:$0xf]
  %v81 = vld [vmem:[%s1 + $0xd0] sm:$0xf]
  %v82 = vld [vmem:[%s1 + $0xd4] sm:$0xf]
  %v83 = vld [vmem:[%s1 + $0xd8] sm:$0xf]
  %v84 = vld [vmem:[%s1 + $0xdc] sm:$0xf]
  %v85 = vld [vmem:[%s1 + $0xe0] sm:$0xf]
  %v86 = vld [vmem:[%s1 + $0xe4] sm:$0xf]
  %v87 = vld [vmem:[%s1 + $0xe8] sm:$0xf]
  %v88 = vld [vmem:[%s1 + $0xec] sm:$0xf]
  %v89 = vld [vmem:[%s1 + $0xf0] sm:$0xf]
  %v90 = vld [vmem:[%s1 + $0xf4] sm:$0xf]
  %v91 = vld [vmem:[%s1 + $0xf8] sm:$0xf]
  %v92 = vld [vmem:[%s1 + $0xfc] sm:$0xf]
  %v93 = vld [vmem:[%s1 + $0x100] sm:$0xf]
  %v94 = vld [vmem:[%s1 + $0x104] sm:$0xf]
  %v95 = vld [vmem:[%s1 + $0x108] sm:$0xf]
  %v96 = vld [vmem:[%s1 + $0x10c] sm:$0xf]
  %v97 = vld [vmem:[%s1 + $0x110] sm:$0xf]
  %v98 = vld [vmem:[%s1 + $0x114] sm:$0xf]
  %v99 = vld [vmem:[%s1 + $0x118] sm:$0xf]
  %v100 = vld [vmem:[%s1 + $0x11c] sm:$0xf]
  %v101 = vld [vmem:[%s1 + $0x120] sm:$0xf]
  %v102 = vld [vmem:[%s1 + $0x124] sm:$0xf]
  %v103 = vld [vmem:[%s1 + $0x128] sm:$0xf]
  %v104 = vld [vmem:[%s1 + $0x12c] sm:$0xf]
  %v105 = vld [vmem:[%s1 + $0x130] sm:$0xf]
  %v106 = vld [vmem:[%s1 + $0x134] sm:$0xf]
  %v107 = vld [vmem:[%s1 + $0x138] sm:$0xf]
  %v108 = vld [vmem:[%s1 + $0x13c] sm:$0xf]
  %v109 = vld [vmem:[%s1 + $0x140] sm:$0xf]
  %v110 = vld [vmem:[%s1 + $0x144] sm:$0xf]
  %v111 = vld [vmem:[%s1 + $0x148] sm:$0xf]
  %v112 = vld [vmem:[%s1 + $0x14c] sm:$0xf]
  %v113 = vld [vmem:[%s1 + $0x150] sm:$0xf]
  %v114 = vld [vmem:[%s1 + $0x154] sm:$0xf]
  %v115 = vld [vmem:[%s1 + $0x158] sm:$0xf]
  %v116 = vld [vmem:[%s1 + $0x15c] sm:$0xf]
  %v117 = vld [vmem:[%s1 + $0x160] sm:$0xf]
  %v118 = vld [vmem:[%s1 + $0x164] sm:$0xf]
  %v119 = vld [vmem:[%s1 + $0x168] sm:$0xf]
  %v120 = vld [vmem:[%s1 + $0x16c] sm:$0xf]
  %v121 = vld [vmem:[%s1 + $0x170] sm:$0xf]
  %v122 = vld [vmem:[%s1 + $0x174] sm:$0xf]
  %v123 = vld [vmem:[%s1 + $0x178] sm:$0xf]
  %v124 = vld [vmem:[%s1 + $0x17c] sm:$0xf]
  %v125 = vld [vmem:[%s1 + $0x180] sm:$0xf]
  %v126 = vld [vmem:[%s1 + $0x184] sm:$0xf]
  %v127 = vld [vmem:[%s1 + $0x188] sm:$0xf]
  %v128 = vld [vmem:[%s1 + $0x18c] sm:$0xf]
  %v129 = vld [vmem:[%s1 + $0x190] sm:$0xf]
  %v130 = vld [vmem:[%s1 + $0x194] sm:$0xf]
  %v131 = vld [vmem:[%s1 + $0x198] sm:$0xf]
  %v132 = vld [vmem:[%s1 + $0x19c] sm:$0xf]
  %v133 = vld [vmem:[%s1 + $0x1a0] sm:$0xf]
  %v134 = vld [vmem:[%s1 + $0x1a4] sm:$0xf]
  %v135 = vld [vmem:[%s1 + $0x1a8] sm:$0xf]
  %v136 = vld [vmem:[%s1 + $0x1ac] sm:$0xf]
  %v137 = vld [vmem:[%s1 + $0x1b0] sm:$0xf]
  %v138 = vld [vmem:[%s1 + $0x1b4] sm:$0xf]
  %v139 = vld [vmem:[%s1 + $0x1b8] sm:$0xf]
  %v140 = vld [vmem:[%s1 + $0x1bc] sm:$0xf]
  %v141 = vld [vmem:[%s1 + $0x1c0] sm:$0xf]
  %v142 = vld [vmem:[%s1 + $0x1c4] sm:$0xf]
  %v143 = vld [vmem:[%s1 + $0x1c8] sm:$0xf]
  %v144 = vld [vmem:[%s1 + $0x1cc] sm:$0xf]
  %v145 = vld [vmem:[%s1 + $0x1d0] sm:$0xf]
  %v146 = vld [vmem:[%s1 + $0x1d4] sm:$0xf]
  %v147 = vld [vmem:[%s1 + $0x1d8] sm:$0xf]
  %v148 = vld [vmem:[%s1 + $0x1dc] sm:$0xf]
  %v149 = vld [vmem:[%s1 + $0x1e0] sm:$0xf]
  %v150 = vld [vmem:[%s1 + $0x1e4] sm:$0xf]
  %v151 = vld [vmem:[%s1 + $0x1e8] sm:$0xf]
  %v152 = vld [vmem:[%s1 + $0x1ec] sm:$0xf]
  %v153 = vld [vmem:[%s1 + $0x1f0] sm:$0xf]
  %v154 = vld [vmem:[%s1 + $0x1f4] sm:$0xf]
  %v155 = vld [vmem:[%s1 + $0x1f8] sm:$0xf]
  %v156 = vld [vmem:[%s1 + $0x1fc] sm:$0xf]
  %v161 = vunpack.c.l.b16 %v25
  %v162 = vunpack.c.h.b16 %v25
  %v163 = vunpack.c.l.b16 %v26
  %v164 = vunpack.c.h.b16 %v26
  %v165 = vunpack.c.l.b16 %v27
  %v166 = vunpack.c.h.b16 %v27
  %v167 = vunpack.c.l.b16 %v28
  %v168 = vunpack.c.h.b16 %v28
  %v169 = vpack.c.b16 %v161, %v161
  %v170 = vpack.c.b16 %v162, %v162
  %v171 = vpack.c.b16 %v163, %v163
  %v172 = vpack.c.b16 %v164, %v164
  %v173 = vpack.c.b16 %v165, %v165
  %v174 = vpack.c.b16 %v166, %v166
  %v175 = vpack.c.b16 %v167, %v167
  %v176 = vpack.c.b16 %v168, %v168
  %v313 = vunpack.c.l.b16 %v29
  %v314 = vunpack.c.l.b16 %v30
  %v315 = vunpack.c.l.b16 %v31
  %v316 = vunpack.c.l.b16 %v32
  %v317 = vunpack.c.l.b16 %v33
  %v318 = vunpack.c.l.b16 %v34
  %v319 = vunpack.c.l.b16 %v35
  %v320 = vunpack.c.l.b16 %v36
  %v321 = vunpack.c.l.b16 %v37
  %v322 = vunpack.c.l.b16 %v38
  %v323 = vunpack.c.l.b16 %v39
  %v324 = vunpack.c.l.b16 %v40
  %v325 = vunpack.c.l.b16 %v41
  %v326 = vunpack.c.l.b16 %v42
  %v327 = vunpack.c.l.b16 %v43
  %v328 = vunpack.c.l.b16 %v44
  %v329 = vunpack.c.l.b16 %v45
  %v330 = vunpack.c.l.b16 %v46
  %v331 = vunpack.c.l.b16 %v47
  %v332 = vunpack.c.l.b16 %v48
  %v333 = vunpack.c.l.b16 %v49
  %v334 = vunpack.c.l.b16 %v50
  %v335 = vunpack.c.l.b16 %v51
  %v336 = vunpack.c.l.b16 %v52
  %v337 = vunpack.c.l.b16 %v53
  %v338 = vunpack.c.l.b16 %v54
  %v339 = vunpack.c.l.b16 %v55
  %v340 = vunpack.c.l.b16 %v56
  %v341 = vunpack.c.l.b16 %v57
  %v342 = vunpack.c.l.b16 %v58
  %v343 = vunpack.c.l.b16 %v59
  %v344 = vunpack.c.l.b16 %v60
  %v345 = vunpack.c.l.b16 %v61
  %v346 = vunpack.c.l.b16 %v62
  %v347 = vunpack.c.l.b16 %v63
  %v348 = vunpack.c.l.b16 %v64
  %v349 = vunpack.c.l.b16 %v65
  %v350 = vunpack.c.l.b16 %v66
  %v351 = vunpack.c.l.b16 %v67
  %v352 = vunpack.c.l.b16 %v68
  %v353 = vunpack.c.l.b16 %v69
  %v354 = vunpack.c.l.b16 %v70
  %v355 = vunpack.c.l.b16 %v71
  %v356 = vunpack.c.l.b16 %v72
  %v357 = vunpack.c.l.b16 %v73
  %v358 = vunpack.c.l.b16 %v74
  %v359 = vunpack.c.l.b16 %v75
  %v360 = vunpack.c.l.b16 %v76
  %v361 = vunpack.c.l.b16 %v77
  %v362 = vunpack.c.l.b16 %v78
  %v363 = vunpack.c.l.b16 %v79
  %v364 = vunpack.c.l.b16 %v80
  %v365 = vunpack.c.l.b16 %v81
  %v366 = vunpack.c.l.b16 %v82
  %v367 = vunpack.c.l.b16 %v83
  %v368 = vunpack.c.l.b16 %v84
  %v369 = vunpack.c.l.b16 %v85
  %v370 = vunpack.c.l.b16 %v86
  %v371 = vunpack.c.l.b16 %v87
  %v372 = vunpack.c.l.b16 %v88
  %v373 = vunpack.c.l.b16 %v89
  %v374 = vunpack.c.l.b16 %v90
  %v375 = vunpack.c.l.b16 %v91
  %v376 = vunpack.c.l.b16 %v92
  %v377 = vunpack.c.l.b16 %v93
  %v378 = vunpack.c.l.b16 %v94
  %v379 = vunpack.c.l.b16 %v95
  %v380 = vunpack.c.l.b16 %v96
  %v381 = vunpack.c.l.b16 %v97
  %v382 = vunpack.c.l.b16 %v98
  %v383 = vunpack.c.l.b16 %v99
  %v384 = vunpack.c.l.b16 %v100
  %v385 = vunpack.c.l.b16 %v101
  %v386 = vunpack.c.l.b16 %v102
  %v387 = vunpack.c.l.b16 %v103
  %v388 = vunpack.c.l.b16 %v104
  %v389 = vunpack.c.l.b16 %v105
  %v390 = vunpack.c.l.b16 %v106
  %v391 = vunpack.c.l.b16 %v107
  %v392 = vunpack.c.l.b16 %v108
  %v393 = vunpack.c.l.b16 %v109
  %v394 = vunpack.c.l.b16 %v110
  %v395 = vunpack.c.l.b16 %v111
  %v396 = vunpack.c.l.b16 %v112
  %v397 = vunpack.c.l.b16 %v113
  %v398 = vunpack.c.l.b16 %v114
  %v399 = vunpack.c.l.b16 %v115
  %v400 = vunpack.c.l.b16 %v116
  %v401 = vunpack.c.l.b16 %v117
  %v402 = vunpack.c.l.b16 %v118
  %v403 = vunpack.c.l.b16 %v119
  %v404 = vunpack.c.l.b16 %v120
  %v405 = vunpack.c.l.b16 %v121
  %v406 = vunpack.c.l.b16 %v122
  %v407 = vunpack.c.l.b16 %v123
  %v408 = vunpack.c.l.b16 %v124
  %v409 = vunpack.c.l.b16 %v125
  %v410 = vunpack.c.l.b16 %v126
  %v411 = vunpack.c.l.b16 %v127
  %v412 = vunpack.c.l.b16 %v128
  %v413 = vunpack.c.l.b16 %v129
  %v414 = vunpack.c.l.b16 %v130
  %v415 = vunpack.c.l.b16 %v131
  %v416 = vunpack.c.l.b16 %v132
  %v417 = vunpack.c.l.b16 %v133
  %v418 = vunpack.c.l.b16 %v134
  %v419 = vunpack.c.l.b16 %v135
  %v420 = vunpack.c.l.b16 %v136
  %v421 = vunpack.c.l.b16 %v137
  %v422 = vunpack.c.l.b16 %v138
  %v423 = vunpack.c.l.b16 %v139
  %v424 = vunpack.c.l.b16 %v140
  %v425 = vunpack.c.l.b16 %v141
  %v426 = vunpack.c.l.b16 %v142
  %v427 = vunpack.c.l.b16 %v143
  %v428 = vunpack.c.l.b16 %v144
  %v429 = vunpack.c.l.b16 %v145
  %v430 = vunpack.c.l.b16 %v146
  %v431 = vunpack.c.l.b16 %v147
  %v432 = vunpack.c.l.b16 %v148
  %v433 = vunpack.c.l.b16 %v149
  %v434 = vunpack.c.l.b16 %v150
  %v435 = vunpack.c.l.b16 %v151
  %v436 = vunpack.c.l.b16 %v152
  %v437 = vunpack.c.l.b16 %v153
  %v438 = vunpack.c.l.b16 %v154
  %v439 = vunpack.c.l.b16 %v155
  %v440 = vunpack.c.l.b16 %v156
  %v441 = vpack.c.b16 %v314, %v313
  %v442 = vpack.c.b16 %v316, %v315
  %v443 = vpack.c.b16 %v318, %v317
  %v444 = vpack.c.b16 %v320, %v319
  %v445 = vpack.c.b16 %v322, %v321
  %v446 = vpack.c.b16 %v324, %v323
  %v447 = vpack.c.b16 %v326, %v325
  %v448 = vpack.c.b16 %v328, %v327
  %v449 = vpack.c.b16 %v330, %v329
  %v450 = vpack.c.b16 %v332, %v331
  %v451 = vpack.c.b16 %v334, %v333
  %v452 = vpack.c.b16 %v336, %v335
  %v453 = vpack.c.b16 %v338, %v337
  %v454 = vpack.c.b16 %v340, %v339
  %v455 = vpack.c.b16 %v342, %v341
  %v456 = vpack.c.b16 %v344, %v343
  %v457 = vpack.c.b16 %v346, %v345
  %v458 = vpack.c.b16 %v348, %v347
  %v459 = vpack.c.b16 %v350, %v349
  %v460 = vpack.c.b16 %v352, %v351
  %v461 = vpack.c.b16 %v354, %v353
  %v462 = vpack.c.b16 %v356, %v355
  %v463 = vpack.c.b16 %v358, %v357
  %v464 = vpack.c.b16 %v360, %v359
  %v465 = vpack.c.b16 %v362, %v361
  %v466 = vpack.c.b16 %v364, %v363
  %v467 = vpack.c.b16 %v366, %v365
  %v468 = vpack.c.b16 %v368, %v367
  %v469 = vpack.c.b16 %v370, %v369
  %v470 = vpack.c.b16 %v372, %v371
  %v471 = vpack.c.b16 %v374, %v373
  %v472 = vpack.c.b16 %v376, %v375
  %v473 = vpack.c.b16 %v378, %v377
  %v474 = vpack.c.b16 %v380, %v379
  %v475 = vpack.c.b16 %v382, %v381
  %v476 = vpack.c.b16 %v384, %v383
  %v477 = vpack.c.b16 %v386, %v385
  %v478 = vpack.c.b16 %v388, %v387
  %v479 = vpack.c.b16 %v390, %v389
  %v480 = vpack.c.b16 %v392, %v391
  %v481 = vpack.c.b16 %v394, %v393
  %v482 = vpack.c.b16 %v396, %v395
  %v483 = vpack.c.b16 %v398, %v397
  %v484 = vpack.c.b16 %v400, %v399
  %v485 = vpack.c.b16 %v402, %v401
  %v486 = vpack.c.b16 %v404, %v403
  %v487 = vpack.c.b16 %v406, %v405
  %v488 = vpack.c.b16 %v408, %v407
  %v489 = vpack.c.b16 %v410, %v409
  %v490 = vpack.c.b16 %v412, %v411
  %v491 = vpack.c.b16 %v414, %v413
  %v492 = vpack.c.b16 %v416, %v415
  %v493 = vpack.c.b16 %v418, %v417
  %v494 = vpack.c.b16 %v420, %v419
  %v495 = vpack.c.b16 %v422, %v421
  %v496 = vpack.c.b16 %v424, %v423
  %v497 = vpack.c.b16 %v426, %v425
  %v498 = vpack.c.b16 %v428, %v427
  %v499 = vpack.c.b16 %v430, %v429
  %v500 = vpack.c.b16 %v432, %v431
  %v501 = vpack.c.b16 %v434, %v433
  %v502 = vpack.c.b16 %v436, %v435
  %v503 = vpack.c.b16 %v438, %v437
  %v504 = vpack.c.b16 %v440, %v439
  %569 = vmatprep.subr.bf16.mxu0 0
  %570 = vmatpush1.bf16.msra.mxu0 %v448
  %571 = vmatprep.subr.bf16.mxu0 0
  %572 = vmatpush1.bf16.msra.mxu0 %v447
  %573 = vmatprep.subr.bf16.mxu0 0
  %574 = vmatpush1.bf16.msra.mxu0 %v446
  %575 = vmatprep.subr.bf16.mxu0 0
  %576 = vmatpush1.bf16.msra.mxu0 %v445
  %577 = vmatprep.subr.bf16.mxu0 0
  %578 = vmatpush1.bf16.msra.mxu0 %v444
  %579 = vmatprep.subr.bf16.mxu0 0
  %580 = vmatpush1.bf16.msra.mxu0 %v443
  %581 = vmatprep.subr.bf16.mxu0 0
  %582 = vmatpush1.bf16.msra.mxu0 %v442
  %583 = vmatprep.subr.bf16.mxu0 0
  %584 = vmatpush1.bf16.msra.mxu0 %v441
  %585 = vmatprep.subr.bf16.mxu0 0
  %586 = vmatpush2.bf16.msra.mxu0 %v456
  %587 = vmatprep.subr.bf16.mxu0 0
  %588 = vmatpush2.bf16.msra.mxu0 %v455
  %589 = vmatprep.subr.bf16.mxu0 0
  %590 = vmatpush2.bf16.msra.mxu0 %v454
  %591 = vmatprep.subr.bf16.mxu0 0
  %592 = vmatpush2.bf16.msra.mxu0 %v453
  %593 = vmatprep.subr.bf16.mxu0 0
  %594 = vmatpush2.bf16.msra.mxu0 %v452
  %595 = vmatprep.subr.bf16.mxu0 0
  %596 = vmatpush2.bf16.msra.mxu0 %v451
  %597 = vmatprep.subr.bf16.mxu0 0
  %598 = vmatpush2.bf16.msra.mxu0 %v450
  %599 = vmatprep.subr.bf16.mxu0 0
  %600 = vmatpush2.bf16.msra.mxu0 %v449
  %601 = vmatprep.mubr.bf16.mxu0 %v170
  %602 = vmatmul.mubr.bf16.gmra.mxu0 %v169
  %v603 = vpop.f32.mrf.mxu0
  %v604 = vadd.f32 0.0, %v603
  %v605 = vpop.f32.mrf.mxu0
  %v606 = vpop.f32.mrf.mxu0
  %v607 = vpop.f32.mrf.mxu0
  %608 = vdwg.mxu0
  %609 = vmatprep.subr.bf16.mxu0 0
  %610 = vmatpush1.bf16.msra.mxu0 %v464
  %611 = vmatprep.subr.bf16.mxu0 0
  %612 = vmatpush1.bf16.msra.mxu0 %v463
  %613 = vmatprep.subr.bf16.mxu0 0
  %614 = vmatpush1.bf16.msra.mxu0 %v462
  %615 = vmatprep.subr.bf16.mxu0 0
  %616 = vmatpush1.bf16.msra.mxu0 %v461
  %617 = vmatprep.subr.bf16.mxu0 0
  %618 = vmatpush1.bf16.msra.mxu0 %v460
  %619 = vmatprep.subr.bf16.mxu0 0
  %620 = vmatpush1.bf16.msra.mxu0 %v459
  %621 = vmatprep.subr.bf16.mxu0 0
  %622 = vmatpush1.bf16.msra.mxu0 %v458
  %623 = vmatprep.subr.bf16.mxu0 0
  %624 = vmatpush1.bf16.msra.mxu0 %v457
  %625 = vmatprep.subr.bf16.mxu0 0
  %626 = vmatpush2.bf16.msra.mxu0 %v472
  %627 = vmatprep.subr.bf16.mxu0 0
  %628 = vmatpush2.bf16.msra.mxu0 %v471
  %629 = vmatprep.subr.bf16.mxu0 0
  %630 = vmatpush2.bf16.msra.mxu0 %v470
  %631 = vmatprep.subr.bf16.mxu0 0
  %632 = vmatpush2.bf16.msra.mxu0 %v469
  %633 = vmatprep.subr.bf16.mxu0 0
  %634 = vmatpush2.bf16.msra.mxu0 %v468
  %635 = vmatprep.subr.bf16.mxu0 0
  %636 = vmatpush2.bf16.msra.mxu0 %v467
  %637 = vmatprep.subr.bf16.mxu0 0
  %638 = vmatpush2.bf16.msra.mxu0 %v466
  %639 = vmatprep.subr.bf16.mxu0 0
  %640 = vmatpush2.bf16.msra.mxu0 %v465
  %641 = vmatprep.mubr.bf16.mxu0 %v172
  %642 = vmatmul.mubr.bf16.gmra.mxu0 %v171
  %v643 = vpop.f32.mrf.mxu0
  %v644 = vadd.f32 %v604, %v643
  %v645 = vpop.f32.mrf.mxu0
  %v646 = vpop.f32.mrf.mxu0
  %v647 = vpop.f32.mrf.mxu0
  %648 = vdwg.mxu0
  %649 = vmatprep.subr.bf16.mxu0 0
  %650 = vmatpush1.bf16.msra.mxu0 %v480
  %651 = vmatprep.subr.bf16.mxu0 0
  %652 = vmatpush1.bf16.msra.mxu0 %v479
  %653 = vmatprep.subr.bf16.mxu0 0
  %654 = vmatpush1.bf16.msra.mxu0 %v478
  %655 = vmatprep.subr.bf16.mxu0 0
  %656 = vmatpush1.bf16.msra.mxu0 %v477
  %657 = vmatprep.subr.bf16.mxu0 0
  %658 = vmatpush1.bf16.msra.mxu0 %v476
  %659 = vmatprep.subr.bf16.mxu0 0
  %660 = vmatpush1.bf16.msra.mxu0 %v475
  %661 = vmatprep.subr.bf16.mxu0 0
  %662 = vmatpush1.bf16.msra.mxu0 %v474
  %663 = vmatprep.subr.bf16.mxu0 0
  %664 = vmatpush1.bf16.msra.mxu0 %v473
  %665 = vmatprep.subr.bf16.mxu0 0
  %666 = vmatpush2.bf16.msra.mxu0 %v488
  %667 = vmatprep.subr.bf16.mxu0 0
  %668 = vmatpush2.bf16.msra.mxu0 %v487
  %669 = vmatprep.subr.bf16.mxu0 0
  %670 = vmatpush2.bf16.msra.mxu0 %v486
  %671 = vmatprep.subr.bf16.mxu0 0
  %672 = vmatpush2.bf16.msra.mxu0 %v485
  %673 = vmatprep.subr.bf16.mxu0 0
  %674 = vmatpush2.bf16.msra.mxu0 %v484
  %675 = vmatprep.subr.bf16.mxu0 0
  %676 = vmatpush2.bf16.msra.mxu0 %v483
  %677 = vmatprep.subr.bf16.mxu0 0
  %678 = vmatpush2.bf16.msra.mxu0 %v482
  %679 = vmatprep.subr.bf16.mxu0 0
  %680 = vmatpush2.bf16.msra.mxu0 %v481
  %681 = vmatprep.mubr.bf16.mxu0 %v174
  %682 = vmatmul.mubr.bf16.gmra.mxu0 %v173
  %v683 = vpop.f32.mrf.mxu0
  %v684 = vadd.f32 %v644, %v683
  %v685 = vpop.f32.mrf.mxu0
  %v686 = vpop.f32.mrf.mxu0
  %v687 = vpop.f32.mrf.mxu0
  %688 = vdwg.mxu0
  %689 = vmatprep.subr.bf16.mxu0 0
  %690 = vmatpush1.bf16.msra.mxu0 %v496
  %691 = vmatprep.subr.bf16.mxu0 0
  %692 = vmatpush1.bf16.msra.mxu0 %v495
  %693 = vmatprep.subr.bf16.mxu0 0
  %694 = vmatpush1.bf16.msra.mxu0 %v494
  %695 = vmatprep.subr.bf16.mxu0 0
  %696 = vmatpush1.bf16.msra.mxu0 %v493
  %697 = vmatprep.subr.bf16.mxu0 0
  %698 = vmatpush1.bf16.msra.mxu0 %v492
  %699 = vmatprep.subr.bf16.mxu0 0
  %700 = vmatpush1.bf16.msra.mxu0 %v491
  %701 = vmatprep.subr.bf16.mxu0 0
  %702 = vmatpush1.bf16.msra.mxu0 %v490
  %703 = vmatprep.subr.bf16.mxu0 0
  %704 = vmatpush1.bf16.msra.mxu0 %v489
  %705 = vmatprep.subr.bf16.mxu0 0
  %706 = vmatpush2.bf16.msra.mxu0 %v504
  %707 = vmatprep.subr.bf16.mxu0 0
  %708 = vmatpush2.bf16.msra.mxu0 %v503
  %709 = vmatprep.subr.bf16.mxu0 0
  %710 = vmatpush2.bf16.msra.mxu0 %v502
  %711 = vmatprep.subr.bf16.mxu0 0
  %712 = vmatpush2.bf16.msra.mxu0 %v501
  %713 = vmatprep.subr.bf16.mxu0 0
  %714 = vmatpush2.bf16.msra.mxu0 %v500
  %715 = vmatprep.subr.bf16.mxu0 0
  %716 = vmatpush2.bf16.msra.mxu0 %v499
  %717 = vmatprep.subr.bf16.mxu0 0
  %718 = vmatpush2.bf16.msra.mxu0 %v498
  %719 = vmatprep.subr.bf16.mxu0 0
  %720 = vmatpush2.bf16.msra.mxu0 %v497
  %721 = vmatprep.mubr.bf16.mxu0 %v176
  %722 = vmatmul.mubr.bf16.gmra.mxu0 %v175
  %v723 = vpop.f32.mrf.mxu0
  %v724 = vadd.f32 %v684, %v723
  %v725 = vpop.f32.mrf.mxu0
  %v726 = vpop.f32.mrf.mxu0
  %v727 = vpop.f32.mrf.mxu0
  %728 = vdwg.mxu0
  %vm729 = vcmask 523264
  %730 = vst.msk [vmem:[%s2] sm:$0xff] %vm729, %v724
  // Predicated region
  $region10: #{_lambda_.34} parent=0 // pred_check
    _
  $region11: #{_lambda_.34} parent=0 // pred_check_branch
    %732 = sbr.rel (0) target = $region13
  $region12: #{_lambda_.34} parent=0 // pred_region
    _
  $region13: #{_lambda_.34} parent=0 // pred_fallthru
    _
  // Predicated region
  $region14: #{_lambda_.34} parent=0 // pred_check
    _
  $region15: #{_lambda_.34} parent=0 // pred_check_branch
    %734 = sbr.rel (0) target = $region17
  $region16: #{_lambda_.34} parent=0 // pred_region
    _
  $region17: #{_lambda_.34} parent=0 // pred_fallthru
    _

// kernel: _lambda_.35
$region0: #{_lambda_.35}
  #allocation0 [shape = 'u32[]', space=smem, size = 0x4, offset = 0x4, fixed_abs, tag = 'smem constant byte address 0x4 - core index']
  #allocation1 [shape = 'u32[144,128]{1,0:T(1,128)}', space=vmem, size = 0x12000, scoped, tag = 'internal scratch']
  %s0 = inlined_call_operand.vmem [shape: bf16[8,576], index: 0, kind: input, shape index: {}]
  %s1 = inlined_call_operand.vmem [shape: bf16[576,256], index: 1, kind: input, shape index: {}]
  %s2 = inlined_call_operand.vmem [shape: f32[8,256], index: 2, kind: output, shape index: {}]
  %s3 = sld [smem:[#allocation0]]
  $region18: #{_lambda_.35} parent=0
    _
  %s5 = ssub.s32 1, %s3
  %s6 = scalar_select 0, %s5, %s3
  // Predicated region
  $region2: #{_lambda_.35} parent=0 // pred_check
    _
  $region3: #{_lambda_.35} parent=0 // pred_check_branch
    %8 = sbr.rel (0) target = $region5
  $region4: #{_lambda_.35} parent=0 // pred_region
    _
  $region5: #{_lambda_.35} parent=0 // pred_fallthru
    _
  // Predicated region
  $region6: #{_lambda_.35} parent=0 // pred_check
    _
  $region7: #{_lambda_.35} parent=0 // pred_check_branch
    %10 = sbr.rel (0) target = $region9
  $region8: #{_lambda_.35} parent=0 // pred_region
    _
  $region9: #{_lambda_.35} parent=0 // pred_fallthru
    _
  %v12 = vld [vmem:[%s0] sm:$0xff]
  %v13 = vld [vmem:[%s0 + $0x8] sm:$0xff]
  %v14 = vld [vmem:[%s0 + $0x10] sm:$0xf]
  %v15 = vmax.bf16 %v12, 0
  %v16 = vmax.bf16 %v13, 0
  %v17 = vmax.bf16 %v14, 0
  %v18 = vld [vmem:[%s1] sm:$0xff]
  %v19 = vld [vmem:[%s1 + $0x8] sm:$0xff]
  %v20 = vld [vmem:[%s1 + $0x10] sm:$0xff]
  %v21 = vld [vmem:[%s1 + $0x18] sm:$0xff]
  %v22 = vld [vmem:[%s1 + $0x20] sm:$0xff]
  %v23 = vld [vmem:[%s1 + $0x28] sm:$0xff]
  %v24 = vld [vmem:[%s1 + $0x30] sm:$0xff]
  %v25 = vld [vmem:[%s1 + $0x38] sm:$0xff]
  %v26 = vld [vmem:[%s1 + $0x40] sm:$0xff]
  %v27 = vld [vmem:[%s1 + $0x48] sm:$0xff]
  %v28 = vld [vmem:[%s1 + $0x50] sm:$0xff]
  %v29 = vld [vmem:[%s1 + $0x58] sm:$0xff]
  %v30 = vld [vmem:[%s1 + $0x60] sm:$0xff]
  %v31 = vld [vmem:[%s1 + $0x68] sm:$0xff]
  %v32 = vld [vmem:[%s1 + $0x70] sm:$0xff]
  %v33 = vld [vmem:[%s1 + $0x78] sm:$0xff]
  %v34 = vld [vmem:[%s1 + $0x80] sm:$0xff]
  %v35 = vld [vmem:[%s1 + $0x88] sm:$0xff]
  %v36 = vld [vmem:[%s1 + $0x90] sm:$0xff]
  %v37 = vld [vmem:[%s1 + $0x98] sm:$0xff]
  %v38 = vld [vmem:[%s1 + $0xa0] sm:$0xff]
  %v39 = vld [vmem:[%s1 + $0xa8] sm:$0xff]
  %v40 = vld [vmem:[%s1 + $0xb0] sm:$0xff]
  %v41 = vld [vmem:[%s1 + $0xb8] sm:$0xff]
  %v42 = vld [vmem:[%s1 + $0xc0] sm:$0xff]
  %v43 = vld [vmem:[%s1 + $0xc8] sm:$0xff]
  %v44 = vld [vmem:[%s1 + $0xd0] sm:$0xff]
  %v45 = vld [vmem:[%s1 + $0xd8] sm:$0xff]
  %v46 = vld [vmem:[%s1 + $0xe0] sm:$0xff]
  %v47 = vld [vmem:[%s1 + $0xe8] sm:$0xff]
  %v48 = vld [vmem:[%s1 + $0xf0] sm:$0xff]
  %v49 = vld [vmem:[%s1 + $0xf8] sm:$0xff]
  %v50 = vld [vmem:[%s1 + $0x100] sm:$0xff]
  %v51 = vld [vmem:[%s1 + $0x108] sm:$0xff]
  %v52 = vld [vmem:[%s1 + $0x110] sm:$0xff]
  %v53 = vld [vmem:[%s1 + $0x118] sm:$0xff]
  %v54 = vld [vmem:[%s1 + $0x120] sm:$0xff]
  %v55 = vld [vmem:[%s1 + $0x128] sm:$0xff]
  %v56 = vld [vmem:[%s1 + $0x130] sm:$0xff]
  %v57 = vld [vmem:[%s1 + $0x138] sm:$0xff]
  %v58 = vld [vmem:[%s1 + $0x140] sm:$0xff]
  %v59 = vld [vmem:[%s1 + $0x148] sm:$0xff]
  %v60 = vld [vmem:[%s1 + $0x150] sm:$0xff]
  %v61 = vld [vmem:[%s1 + $0x158] sm:$0xff]
  %v62 = vld [vmem:[%s1 + $0x160] sm:$0xff]
  %v63 = vld [vmem:[%s1 + $0x168] sm:$0xff]
  %v64 = vld [vmem:[%s1 + $0x170] sm:$0xff]
  %v65 = vld [vmem:[%s1 + $0x178] sm:$0xff]
  %v66 = vld [vmem:[%s1 + $0x180] sm:$0xff]
  %v67 = vld [vmem:[%s1 + $0x188] sm:$0xff]
  %v68 = vld [vmem:[%s1 + $0x190] sm:$0xff]
  %v69 = vld [vmem:[%s1 + $0x198] sm:$0xff]
  %v70 = vld [vmem:[%s1 + $0x1a0] sm:$0xff]
  %v71 = vld [vmem:[%s1 + $0x1a8] sm:$0xff]
  %v72 = vld [vmem:[%s1 + $0x1b0] sm:$0xff]
  %v73 = vld [vmem:[%s1 + $0x1b8] sm:$0xff]
  %v74 = vld [vmem:[%s1 + $0x1c0] sm:$0xff]
  %v75 = vld [vmem:[%s1 + $0x1c8] sm:$0xff]
  %v76 = vld [vmem:[%s1 + $0x1d0] sm:$0xff]
  %v77 = vld [vmem:[%s1 + $0x1d8] sm:$0xff]
  %v78 = vld [vmem:[%s1 + $0x1e0] sm:$0xff]
  %v79 = vld [vmem:[%s1 + $0x1e8] sm:$0xff]
  %v80 = vld [vmem:[%s1 + $0x1f0] sm:$0xff]
  %v81 = vld [vmem:[%s1 + $0x1f8] sm:$0xff]
  %v82 = vld [vmem:[%s1 + $0x200] sm:$0xff]
  %v83 = vld [vmem:[%s1 + $0x208] sm:$0xff]
  %v84 = vld [vmem:[%s1 + $0x210] sm:$0xff]
  %v85 = vld [vmem:[%s1 + $0x218] sm:$0xff]
  %v86 = vld [vmem:[%s1 + $0x220] sm:$0xff]
  %v87 = vld [vmem:[%s1 + $0x228] sm:$0xff]
  %v88 = vld [vmem:[%s1 + $0x230] sm:$0xff]
  %v89 = vld [vmem:[%s1 + $0x238] sm:$0xff]
  %v93 = vunpack.c.l.b16 %v15
  %v94 = vunpack.c.h.b16 %v15
  %v95 = vunpack.c.l.b16 %v16
  %v96 = vunpack.c.h.b16 %v16
  %v97 = vunpack.c.l.b16 %v17
  %v98 = vpack.c.b16 %v93, %v93
  %v99 = vpack.c.b16 %v94, %v94
  %v100 = vpack.c.b16 %v95, %v95
  %v101 = vpack.c.b16 %v96, %v96
  %v102 = vpack.c.b16 %v97, %v97
  %v179 = vunpack.c.l.b16 %v18
  %v180 = vunpack.c.h.b16 %v18
  %v181 = vunpack.c.l.b16 %v19
  %v182 = vunpack.c.h.b16 %v19
  %v183 = vunpack.c.l.b16 %v20
  %v184 = vunpack.c.h.b16 %v20
  %v185 = vunpack.c.l.b16 %v21
  %v186 = vunpack.c.h.b16 %v21
  %v187 = vunpack.c.l.b16 %v22
  %v188 = vunpack.c.h.b16 %v22
  %v189 = vunpack.c.l.b16 %v23
  %v190 = vunpack.c.h.b16 %v23
  %v191 = vunpack.c.l.b16 %v24
  %v192 = vunpack.c.h.b16 %v24
  %v193 = vunpack.c.l.b16 %v25
  %v194 = vunpack.c.h.b16 %v25
  %v195 = vunpack.c.l.b16 %v26
  %v196 = vunpack.c.h.b16 %v26
  %v197 = vunpack.c.l.b16 %v27
  %v198 = vunpack.c.h.b16 %v27
  %v199 = vunpack.c.l.b16 %v28
  %v200 = vunpack.c.h.b16 %v28
  %v201 = vunpack.c.l.b16 %v29
  %v202 = vunpack.c.h.b16 %v29
  %v203 = vunpack.c.l.b16 %v30
  %v204 = vunpack.c.h.b16 %v30
  %v205 = vunpack.c.l.b16 %v31
  %v206 = vunpack.c.h.b16 %v31
  %v207 = vunpack.c.l.b16 %v32
  %v208 = vunpack.c.h.b16 %v32
  %v209 = vunpack.c.l.b16 %v33
  %v210 = vunpack.c.h.b16 %v33
  %v211 = vunpack.c.l.b16 %v34
  %v212 = vunpack.c.h.b16 %v34
  %v213 = vunpack.c.l.b16 %v35
  %v214 = vunpack.c.h.b16 %v35
  %v215 = vunpack.c.l.b16 %v36
  %v216 = vunpack.c.h.b16 %v36
  %v217 = vunpack.c.l.b16 %v37
  %v218 = vunpack.c.h.b16 %v37
  %v219 = vunpack.c.l.b16 %v38
  %v220 = vunpack.c.h.b16 %v38
  %v221 = vunpack.c.l.b16 %v39
  %v222 = vunpack.c.h.b16 %v39
  %v223 = vunpack.c.l.b16 %v40
  %v224 = vunpack.c.h.b16 %v40
  %v225 = vunpack.c.l.b16 %v41
  %v226 = vunpack.c.h.b16 %v41
  %v227 = vunpack.c.l.b16 %v42
  %v228 = vunpack.c.h.b16 %v42
  %v229 = vunpack.c.l.b16 %v43
  %v230 = vunpack.c.h.b16 %v43
  %v231 = vunpack.c.l.b16 %v44
  %v232 = vunpack.c.h.b16 %v44
  %v233 = vunpack.c.l.b16 %v45
  %v234 = vunpack.c.h.b16 %v45
  %v235 = vunpack.c.l.b16 %v46
  %v236 = vunpack.c.h.b16 %v46
  %v237 = vunpack.c.l.b16 %v47
  %v238 = vunpack.c.h.b16 %v47
  %v239 = vunpack.c.l.b16 %v48
  %v240 = vunpack.c.h.b16 %v48
  %v241 = vunpack.c.l.b16 %v49
  %v242 = vunpack.c.h.b16 %v49
  %v243 = vunpack.c.l.b16 %v50
  %v244 = vunpack.c.h.b16 %v50
  %v245 = vunpack.c.l.b16 %v51
  %v246 = vunpack.c.h.b16 %v51
  %v247 = vunpack.c.l.b16 %v52
  %v248 = vunpack.c.h.b16 %v52
  %v249 = vunpack.c.l.b16 %v53
  %v250 = vunpack.c.h.b16 %v53
  %v251 = vunpack.c.l.b16 %v54
  %v252 = vunpack.c.h.b16 %v54
  %v253 = vunpack.c.l.b16 %v55
  %v254 = vunpack.c.h.b16 %v55
  %v255 = vunpack.c.l.b16 %v56
  %v256 = vunpack.c.h.b16 %v56
  %v257 = vunpack.c.l.b16 %v57
  %v258 = vunpack.c.h.b16 %v57
  %v259 = vunpack.c.l.b16 %v58
  %v260 = vunpack.c.h.b16 %v58
  %v261 = vunpack.c.l.b16 %v59
  %v262 = vunpack.c.h.b16 %v59
  %v263 = vunpack.c.l.b16 %v60
  %v264 = vunpack.c.h.b16 %v60
  %v265 = vunpack.c.l.b16 %v61
  %v266 = vunpack.c.h.b16 %v61
  %v267 = vunpack.c.l.b16 %v62
  %v268 = vunpack.c.h.b16 %v62
  %v269 = vunpack.c.l.b16 %v63
  %v270 = vunpack.c.h.b16 %v63
  %v271 = vunpack.c.l.b16 %v64
  %v272 = vunpack.c.h.b16 %v64
  %v273 = vunpack.c.l.b16 %v65
  %v274 = vunpack.c.h.b16 %v65
  %v275 = vunpack.c.l.b16 %v66
  %v276 = vunpack.c.h.b16 %v66
  %v277 = vunpack.c.l.b16 %v67
  %v278 = vunpack.c.h.b16 %v67
  %v279 = vunpack.c.l.b16 %v68
  %v280 = vunpack.c.h.b16 %v68
  %v281 = vunpack.c.l.b16 %v69
  %v282 = vunpack.c.h.b16 %v69
  %v283 = vunpack.c.l.b16 %v70
  %v284 = vunpack.c.h.b16 %v70
  %v285 = vunpack.c.l.b16 %v71
  %v286 = vunpack.c.h.b16 %v71
  %v287 = vunpack.c.l.b16 %v72
  %v288 = vunpack.c.h.b16 %v72
  %v289 = vunpack.c.l.b16 %v73
  %v290 = vunpack.c.h.b16 %v73
  %v291 = vunpack.c.l.b16 %v74
  %v292 = vunpack.c.h.b16 %v74
  %v293 = vunpack.c.l.b16 %v75
  %v294 = vunpack.c.h.b16 %v75
  %v295 = vunpack.c.l.b16 %v76
  %v296 = vunpack.c.h.b16 %v76
  %v297 = vunpack.c.l.b16 %v77
  %v298 = vunpack.c.h.b16 %v77
  %v299 = vunpack.c.l.b16 %v78
  %v300 = vunpack.c.h.b16 %v78
  %v301 = vunpack.c.l.b16 %v79
  %v302 = vunpack.c.h.b16 %v79
  %v303 = vunpack.c.l.b16 %v80
  %v304 = vunpack.c.h.b16 %v80
  %v305 = vunpack.c.l.b16 %v81
  %v306 = vunpack.c.h.b16 %v81
  %v307 = vunpack.c.l.b16 %v82
  %v308 = vunpack.c.h.b16 %v82
  %v309 = vunpack.c.l.b16 %v83
  %v310 = vunpack.c.h.b16 %v83
  %v311 = vunpack.c.l.b16 %v84
  %v312 = vunpack.c.h.b16 %v84
  %v313 = vunpack.c.l.b16 %v85
  %v314 = vunpack.c.h.b16 %v85
  %v315 = vunpack.c.l.b16 %v86
  %v316 = vunpack.c.h.b16 %v86
  %v317 = vunpack.c.l.b16 %v87
  %v318 = vunpack.c.h.b16 %v87
  %v319 = vunpack.c.l.b16 %v88
  %v320 = vunpack.c.h.b16 %v88
  %v321 = vunpack.c.l.b16 %v89
  %v322 = vunpack.c.h.b16 %v89
  %v323 = vpack.c.b16 %v181, %v179
  %v324 = vpack.c.b16 %v182, %v180
  %v325 = vpack.c.b16 %v185, %v183
  %v326 = vpack.c.b16 %v186, %v184
  %v327 = vpack.c.b16 %v189, %v187
  %v328 = vpack.c.b16 %v190, %v188
  %v329 = vpack.c.b16 %v193, %v191
  %v330 = vpack.c.b16 %v194, %v192
  %v331 = vpack.c.b16 %v197, %v195
  %v332 = vpack.c.b16 %v198, %v196
  %v333 = vpack.c.b16 %v201, %v199
  %v334 = vpack.c.b16 %v202, %v200
  %v335 = vpack.c.b16 %v205, %v203
  %v336 = vpack.c.b16 %v206, %v204
  %v337 = vpack.c.b16 %v209, %v207
  %v338 = vpack.c.b16 %v210, %v208
  %v339 = vpack.c.b16 %v213, %v211
  %v340 = vpack.c.b16 %v214, %v212
  %v341 = vpack.c.b16 %v217, %v215
  %v342 = vpack.c.b16 %v218, %v216
  %v343 = vpack.c.b16 %v221, %v219
  %v344 = vpack.c.b16 %v222, %v220
  %v345 = vpack.c.b16 %v225, %v223
  %v346 = vpack.c.b16 %v226, %v224
  %v347 = vpack.c.b16 %v229, %v227
  %v348 = vpack.c.b16 %v230, %v228
  %v349 = vpack.c.b16 %v233, %v231
  %v350 = vpack.c.b16 %v234, %v232
  %v351 = vpack.c.b16 %v237, %v235
  %v352 = vpack.c.b16 %v238, %v236
  %v353 = vpack.c.b16 %v241, %v239
  %v354 = vpack.c.b16 %v242, %v240
  %v355 = vpack.c.b16 %v245, %v243
  %v356 = vpack.c.b16 %v246, %v244
  %v357 = vpack.c.b16 %v249, %v247
  %v358 = vpack.c.b16 %v250, %v248
  %v359 = vpack.c.b16 %v253, %v251
  %v360 = vpack.c.b16 %v254, %v252
  %v361 = vpack.c.b16 %v257, %v255
  %v362 = vpack.c.b16 %v258, %v256
  %v363 = vpack.c.b16 %v261, %v259
  %v364 = vpack.c.b16 %v262, %v260
  %v365 = vpack.c.b16 %v265, %v263
  %v366 = vpack.c.b16 %v266, %v264
  %v367 = vpack.c.b16 %v269, %v267
  %v368 = vpack.c.b16 %v270, %v268
  %v369 = vpack.c.b16 %v273, %v271
  %v370 = vpack.c.b16 %v274, %v272
  %v371 = vpack.c.b16 %v277, %v275
  %v372 = vpack.c.b16 %v278, %v276
  %v373 = vpack.c.b16 %v281, %v279
  %v374 = vpack.c.b16 %v282, %v280
  %v375 = vpack.c.b16 %v285, %v283
  %v376 = vpack.c.b16 %v286, %v284
  %v377 = vpack.c.b16 %v289, %v287
  %v378 = vpack.c.b16 %v290, %v288
  %v379 = vpack.c.b16 %v293, %v291
  %v380 = vpack.c.b16 %v294, %v292
  %v381 = vpack.c.b16 %v297, %v295
  %v382 = vpack.c.b16 %v298, %v296
  %v383 = vpack.c.b16 %v301, %v299
  %v384 = vpack.c.b16 %v302, %v300
  %v385 = vpack.c.b16 %v305, %v303
  %v386 = vpack.c.b16 %v306, %v304
  %v387 = vpack.c.b16 %v309, %v307
  %v388 = vpack.c.b16 %v310, %v308
  %v389 = vpack.c.b16 %v313, %v311
  %v390 = vpack.c.b16 %v314, %v312
  %v391 = vpack.c.b16 %v317, %v315
  %v392 = vpack.c.b16 %v318, %v316
  %v393 = vpack.c.b16 %v321, %v319
  %v394 = vpack.c.b16 %v322, %v320
  %vm467 = vcmask 523264
  %v469 = vsel %vm467, %v102, 0
  %471 = vmatprep.subr.bf16.mxu0 %v338
  %472 = vmatpush1.bf16.msra.mxu0 %v337
  %473 = vmatprep.subr.bf16.mxu0 %v336
  %474 = vmatpush1.bf16.msra.mxu0 %v335
  %475 = vmatprep.subr.bf16.mxu0 %v334
  %476 = vmatpush1.bf16.msra.mxu0 %v333
  %477 = vmatprep.subr.bf16.mxu0 %v332
  %478 = vmatpush1.bf16.msra.mxu0 %v331
  %479 = vmatprep.subr.bf16.mxu0 %v330
  %480 = vmatpush1.bf16.msra.mxu0 %v329
  %481 = vmatprep.subr.bf16.mxu0 %v328
  %482 = vmatpush1.bf16.msra.mxu0 %v327
  %483 = vmatprep.subr.bf16.mxu0 %v326
  %484 = vmatpush1.bf16.msra.mxu0 %v325
  %485 = vmatprep.subr.bf16.mxu0 %v324
  %486 = vmatpush1.bf16.msra.mxu0 %v323
  %487 = vmatprep.subr.bf16.mxu0 %v354
  %488 = vmatpush2.bf16.msra.mxu0 %v353
  %489 = vmatprep.subr.bf16.mxu0 %v352
  %490 = vmatpush2.bf16.msra.mxu0 %v351
  %491 = vmatprep.subr.bf16.mxu0 %v350
  %492 = vmatpush2.bf16.msra.mxu0 %v349
  %493 = vmatprep.subr.bf16.mxu0 %v348
  %494 = vmatpush2.bf16.msra.mxu0 %v347
  %495 = vmatprep.subr.bf16.mxu0 %v346
  %496 = vmatpush2.bf16.msra.mxu0 %v345
  %497 = vmatprep.subr.bf16.mxu0 %v344
  %498 = vmatpush2.bf16.msra.mxu0 %v343
  %499 = vmatprep.subr.bf16.mxu0 %v342
  %500 = vmatpush2.bf16.msra.mxu0 %v341
  %501 = vmatprep.subr.bf16.mxu0 %v340
  %502 = vmatpush2.bf16.msra.mxu0 %v339
  %503 = vmatprep.mubr.bf16.mxu0 %v99
  %504 = vmatmul.mubr.bf16.gmra.mxu0 %v98
  %v505 = vpop.f32.mrf.mxu0
  %v506 = vadd.f32 0.0, %v505
  %v507 = vpop.f32.mrf.mxu0
  %v508 = vadd.f32 0.0, %v507
  %v509 = vpop.f32.mrf.mxu0
  %v510 = vpop.f32.mrf.mxu0
  %511 = vdwg.mxu0
  %512 = vmatprep.subr.bf16.mxu0 %v370
  %513 = vmatpush1.bf16.msra.mxu0 %v369
  %514 = vmatprep.subr.bf16.mxu0 %v368
  %515 = vmatpush1.bf16.msra.mxu0 %v367
  %516 = vmatprep.subr.bf16.mxu0 %v366
  %517 = vmatpush1.bf16.msra.mxu0 %v365
  %518 = vmatprep.subr.bf16.mxu0 %v364
  %519 = vmatpush1.bf16.msra.mxu0 %v363
  %520 = vmatprep.subr.bf16.mxu0 %v362
  %521 = vmatpush1.bf16.msra.mxu0 %v361
  %522 = vmatprep.subr.bf16.mxu0 %v360
  %523 = vmatpush1.bf16.msra.mxu0 %v359
  %524 = vmatprep.subr.bf16.mxu0 %v358
  %525 = vmatpush1.bf16.msra.mxu0 %v357
  %526 = vmatprep.subr.bf16.mxu0 %v356
  %527 = vmatpush1.bf16.msra.mxu0 %v355
  %528 = vmatprep.subr.bf16.mxu0 %v386
  %529 = vmatpush2.bf16.msra.mxu0 %v385
  %530 = vmatprep.subr.bf16.mxu0 %v384
  %531 = vmatpush2.bf16.msra.mxu0 %v383
  %532 = vmatprep.subr.bf16.mxu0 %v382
  %533 = vmatpush2.bf16.msra.mxu0 %v381
  %534 = vmatprep.subr.bf16.mxu0 %v380
  %535 = vmatpush2.bf16.msra.mxu0 %v379
  %536 = vmatprep.subr.bf16.mxu0 %v378
  %537 = vmatpush2.bf16.msra.mxu0 %v377
  %538 = vmatprep.subr.bf16.mxu0 %v376
  %539 = vmatpush2.bf16.msra.mxu0 %v375
  %540 = vmatprep.subr.bf16.mxu0 %v374
  %541 = vmatpush2.bf16.msra.mxu0 %v373
  %542 = vmatprep.subr.bf16.mxu0 %v372
  %543 = vmatpush2.bf16.msra.mxu0 %v371
  %544 = vmatprep.mubr.bf16.mxu0 %v101
  %545 = vmatmul.mubr.bf16.gmra.mxu0 %v100
  %v546 = vpop.f32.mrf.mxu0
  %v547 = vadd.f32 %v506, %v546
  %v548 = vpop.f32.mrf.mxu0
  %v549 = vadd.f32 %v508, %v548
  %v550 = vpop.f32.mrf.mxu0
  %v551 = vpop.f32.mrf.mxu0
  %552 = vdwg.mxu0
  %553 = vmatprep.subr.bf16.mxu0 0
  %554 = vmatpush1.bf16.msra.mxu0 0
  %555 = vmatprep.subr.bf16.mxu0 0
  %556 = vmatpush1.bf16.msra.mxu0 0
  %557 = vmatprep.subr.bf16.mxu0 0
  %558 = vmatpush1.bf16.msra.mxu0 0
  %559 = vmatprep.subr.bf16.mxu0 0
  %560 = vmatpush1.bf16.msra.mxu0 0
  %561 = vmatprep.subr.bf16.mxu0 %v394
  %562 = vmatpush1.bf16.msra.mxu0 %v393
  %563 = vmatprep.subr.bf16.mxu0 %v392
  %564 = vmatpush1.bf16.msra.mxu0 %v391
  %565 = vmatprep.subr.bf16.mxu0 %v390
  %566 = vmatpush1.bf16.msra.mxu0 %v389
  %567 = vmatprep.subr.bf16.mxu0 %v388
  %568 = vmatpush1.bf16.msra.mxu0 %v387
  %569 = vmatprep.subr.bf16.mxu0 0
  %570 = vmatpush2.bf16.msra.mxu0 0
  %571 = vmatprep.subr.bf16.mxu0 0
  %572 = vmatpush2.bf16.msra.mxu0 0
  %573 = vmatprep.subr.bf16.mxu0 0
  %574 = vmatpush2.bf16.msra.mxu0 0
  %575 = vmatprep.subr.bf16.mxu0 0
  %576 = vmatpush2.bf16.msra.mxu0 0
  %577 = vmatprep.subr.bf16.mxu0 0
  %578 = vmatpush2.bf16.msra.mxu0 0
  %579 = vmatprep.subr.bf16.mxu0 0
  %580 = vmatpush2.bf16.msra.mxu0 0
  %581 = vmatprep.subr.bf16.mxu0 0
  %582 = vmatpush2.bf16.msra.mxu0 0
  %583 = vmatprep.subr.bf16.mxu0 0
  %584 = vmatpush2.bf16.msra.mxu0 0
  %585 = vmatprep.mubr.bf16.mxu0 0
  %586 = vmatmul.mubr.bf16.gmra.mxu0 %v469
  %v587 = vpop.f32.mrf.mxu0
  %v588 = vadd.f32 %v547, %v587
  %v589 = vpop.f32.mrf.mxu0
  %v590 = vadd.f32 %v549, %v589
  %v591 = vpop.f32.mrf.mxu0
  %v592 = vpop.f32.mrf.mxu0
  %593 = vdwg.mxu0
  %594 = vst [vmem:[%s2] sm:$0xff] %v588
  %595 = vst [vmem:[%s2 + $0x8] sm:$0xff] %v590
  // Predicated region
  $region10: #{_lambda_.35} parent=0 // pred_check
    _
  $region11: #{_lambda_.35} parent=0 // pred_check_branch
    %597 = sbr.rel (0) target = $region13
  $region12: #{_lambda_.35} parent=0 // pred_region
    _
  $region13: #{_lambda_.35} parent=0 // pred_fallthru
    _
  // Predicated region
  $region14: #{_lambda_.35} parent=0 // pred_check
    _
  $region15: #{_lambda_.35} parent=0 // pred_check_branch
    %599 = sbr.rel (0) target = $region17
  $region16: #{_lambda_.35} parent=0 // pred_region
    _
  $region17: #{_lambda_.35} parent=0 // pred_fallthru
    _

// kernel: _lambda_.38
$region0: #{_lambda_.38}
  #allocation0 [shape = 'u32[]', space=smem, size = 0x4, offset = 0x4, fixed_abs, tag = 'smem constant byte address 0x4 - core index']
  #allocation1 [shape = 'u32[144,128]{1,0:T(1,128)}', space=vmem, size = 0x12000, scoped, tag = 'internal scratch']
  #allocation2 [shape = 'f32[8,128]{1,0:T(8,128)}', space=vmem, size = 0x1000, scoped, tag = 'scratch operand']
  %s0 = inlined_call_operand.vmem [shape: bf16[8,1536], index: 0, kind: input, shape index: {}]
  %s1 = inlined_call_operand.vmem [shape: bf16[1536,128], index: 1, kind: input, shape index: {}]
  %s2 = inlined_call_operand.vmem [shape: f32[8,128], index: 2, kind: output, shape index: {}]
  %s3 = sld [smem:[#allocation0]]
  $region49: #{_lambda_.38} parent=0
    _
  %s5 = ssub.s32 1, %s3
  %s6 = scalar_select 0, %s5, %s3
  loop: start=0, step=1, limit=5
  $region2: #{_lambda_.38} parent=0 // loop_pre_header
    _
  $region3: #{_lambda_.38} parent=0 // loop_header
    %s8 = sphi 0, %s12
    %p9 = scmp.ge.s32.totalorder %s8, 5
    %s15 = sphi 0, %s34
    %s16 = sphi 0, %s30
    %s17 = sphi 0, %s26
    %s18 = sphi 0, %s15
    %s19 = sphi 0, %s16
    %s20 = sphi 0, %s17
    %s21 = sphi 0, %s18
    %s22 = sphi 0, %s19
    %s23 = sphi 0, %s20
    %s39 = sphi 0, %s41
    %s42 = sphi 0, %s39
    %s43 = sphi 0, %s42
    %s59 = sphi 0, %s43
    %s67 = sphi 0, %s69
    %s70 = sphi 0, %s67
    %s71 = sphi 0, %s70
    %s87 = sphi 0, %s71
    %s95 = sphi 0, %s97
    %s98 = sphi 0, %s95
    %s99 = sphi 0, %s98
    %s115 = sphi 0, %s99
  $region4: #{_lambda_.38} parent=0 // loop_header_branch
    %11 = sbr.rel (%p9) target = $region8
  $region5: #{_lambda_.38} parent=0 // loop_body
    %s13 = ssub.s32 %s8, 1
    %s14 = ssub.s32 %s8, 2
    %s24 = sadd.s32 1, %s17
    %p25 = scmp.ge.s32.totalorder %s24, 3
    %s26 = scalar_select %p25, 0, %s24
    %s27 = sadd.s32 1, %s16
    %s28 = scalar_select %p25, %s27, %s16
    %p29 = scmp.ge.s32.totalorder %s28, 1
    %s30 = scalar_select %p29, 0, %s28
    %s31 = sadd.s32 1, %s15
    %s32 = scalar_select %p29, %s31, %s15
    %p33 = scmp.ge.s32.totalorder %s32, 1
    %s34 = scalar_select %p33, 0, %s32
    %s35 = ssub.s32 %s15, %s34
    %s36 = ssub.s32 %s17, %s26
    %s37 = sor.u32 %s35, %s36
    %p38 = scmp.eq.s32.totalorder %s37, 0
    %s40 = sadd.s32 %s39, 1
    %s41 = scalar_select %p38, %s39, %s40
    %p44 = pneg %p38
    %p45 = scmp.eq.s32.totalorder %s8, 2
    %p46 = por %p44, %p45
    %p47 = scmp.ne.s32.totalorder %s39, %s42
    %p48 = scmp.eq.s32.totalorder %s8, 0
    %p49 = por %p47, %p48
    %p50 = scmp.ne.s32.totalorder %s39, %s42
    %p51 = scmp.eq.s32.totalorder %s13, 2
    %p52 = por %p50, %p51
    %p53 = scmp.ne.s32.totalorder %s42, %s43
    %p54 = scmp.eq.s32.totalorder %s13, 0
    %p55 = por %p53, %p54
    %p56 = scmp.ne.s32.totalorder %s42, %s43
    %p57 = scmp.eq.s32.totalorder %s14, 2
    %p58 = por %p56, %p57
    %p60 = scmp.ne.s32.totalorder %s43, %s59
    %p61 = scmp.eq.s32.totalorder %s14, 0
    %p62 = por %p60, %p61
    %s63 = ssub.s32 %s17, %s26
    %s64 = ssub.s32 %s16, %s30
    %s65 = sor.u32 %s63, %s64
    %p66 = scmp.eq.s32.totalorder %s65, 0
    %s68 = sadd.s32 %s67, 1
    %s69 = scalar_select %p66, %s67, %s68
    %p72 = pneg %p66
    %p73 = scmp.eq.s32.totalorder %s8, 2
    %p74 = por %p72, %p73
    %p75 = scmp.ne.s32.totalorder %s67, %s70
    %p76 = scmp.eq.s32.totalorder %s8, 0
    %p77 = por %p75, %p76
    %p78 = scmp.ne.s32.totalorder %s67, %s70
    %p79 = scmp.eq.s32.totalorder %s13, 2
    %p80 = por %p78, %p79
    %p81 = scmp.ne.s32.totalorder %s70, %s71
    %p82 = scmp.eq.s32.totalorder %s13, 0
    %p83 = por %p81, %p82
    %p84 = scmp.ne.s32.totalorder %s70, %s71
    %p85 = scmp.eq.s32.totalorder %s14, 2
    %p86 = por %p84, %p85
    %p88 = scmp.ne.s32.totalorder %s71, %s87
    %p89 = scmp.eq.s32.totalorder %s14, 0
    %p90 = por %p88, %p89
    %s91 = ssub.s32 %s15, %s34
    %s92 = ssub.s32 %s16, %s30
    %s93 = sor.u32 %s91, %s92
    %p94 = scmp.eq.s32.totalorder %s93, 0
    %s96 = sadd.s32 %s95, 1
    %s97 = scalar_select %p94, %s95, %s96
    %p100 = pneg %p94
    %p101 = scmp.eq.s32.totalorder %s8, 2
    %p102 = por %p100, %p101
    %p103 = scmp.ne.s32.totalorder %s95, %s98
    %p104 = scmp.eq.s32.totalorder %s8, 0
    %p105 = por %p103, %p104
    %p106 = scmp.ne.s32.totalorder %s95, %s98
    %p107 = scmp.eq.s32.totalorder %s13, 2
    %p108 = por %p106, %p107
    %p109 = scmp.ne.s32.totalorder %s98, %s99
    %p110 = scmp.eq.s32.totalorder %s13, 0
    %p111 = por %p109, %p110
    %p112 = scmp.ne.s32.totalorder %s98, %s99
    %p113 = scmp.eq.s32.totalorder %s14, 2
    %p114 = por %p112, %p113
    %p116 = scmp.ne.s32.totalorder %s99, %s115
    %p117 = scmp.eq.s32.totalorder %s14, 0
    %p118 = por %p116, %p117
    %p119 = scmp.le.s32.totalorder 1, %s8
    %p120 = scmp.lt.s32.totalorder %s8, 4
    %p121 = pnand %p119, %p120
    %p122 = pneg %p121
    // Predicated region
    $region9: #{_lambda_.38} parent=5 // pred_check
      _
    $region10: #{_lambda_.38} parent=5 // pred_check_branch
      %124 = sbr.rel (%p121) target = $region12
    $region11: #{_lambda_.38} parent=5 // pred_region
      %s125 = ssub.s32 %s8, 1
    $region12: #{_lambda_.38} parent=5 // pred_fallthru
      _
    %p126 = scmp.lt.s32.totalorder %s8, 3
    // Predicated region
    $region13: #{_lambda_.38} parent=5 // pred_check
      %p127 = pneg %p126
    $region14: #{_lambda_.38} parent=5 // pred_check_branch
      %129 = sbr.rel (%p127) target = $region16
    $region15: #{_lambda_.38} parent=5 // pred_region
      // Predicated region
      $region17: #{_lambda_.38} parent=15 // pred_check
        %p130 = pneg %p49
      $region18: #{_lambda_.38} parent=15 // pred_check_branch
        %132 = sbr.rel (%p130) target = $region20
      $region19: #{_lambda_.38} parent=15 // pred_region
        %s133 = smul.u32 4, %s17
        %p134 = scmp.lt.s32.totalorder %s15, 0
        %s135 = scalar_select %p134, %s15, 0
        %p136 = scmp.lt.s32.totalorder %s133, 11
        %s137 = scalar_select %p136, %s133, 11
        %s138 = smul.addr %s135, 12
        %s139 = sadd.s32 %s137, %s138
        %s140 = smul.addr %s139, 4
        %s141 = scalar_lea.vmem %s0, %s140
        %s142 = smul.u32 4, %s17
      $region20: #{_lambda_.38} parent=15 // pred_fallthru
        _
      // Predicated region
      $region21: #{_lambda_.38} parent=15 // pred_check
        %p143 = pneg %p77
      $region22: #{_lambda_.38} parent=15 // pred_check_branch
        %145 = sbr.rel (%p143) target = $region24
      $region23: #{_lambda_.38} parent=15 // pred_region
        %s146 = smul.u32 64, %s17
        %p147 = scmp.lt.s32.totalorder %s146, 191
        %s148 = scalar_select %p147, %s146, 191
        %p149 = scmp.lt.s32.totalorder %s16, 0
        %s150 = scalar_select %p149, %s16, 0
        %s151 = sadd.s32 %s150, %s148
        %s152 = smul.addr %s151, 4
        %s153 = scalar_lea.vmem %s1, %s152
        %s154 = smul.u32 64, %s17
      $region24: #{_lambda_.38} parent=15 // pred_fallthru
        _
    $region16: #{_lambda_.38} parent=5 // pred_fallthru
      _
    %p155 = scmp.le.s32.totalorder 1, %s8
    %p156 = scmp.lt.s32.totalorder %s8, 4
    %p157 = pnand %p155, %p156
    %p158 = pneg %p157
    // Predicated region
    $region25: #{_lambda_.38} parent=5 // pred_check
      _
    $region26: #{_lambda_.38} parent=5 // pred_check_branch
      %160 = sbr.rel (%p157) target = $region28
    $region27: #{_lambda_.38} parent=5 // pred_region
      %s161 = ssub.s32 %s8, 1
      %s162 = smul.u32 4, %s20
      %p163 = scmp.lt.s32.totalorder %s18, 0
      %s164 = scalar_select %p163, %s18, 0
      %p165 = scmp.lt.s32.totalorder %s162, 11
      %s166 = scalar_select %p165, %s162, 11
      %s167 = smul.addr %s164, 12
      %s168 = sadd.s32 %s166, %s167
      %s169 = smul.addr %s168, 4
      %s170 = scalar_lea.vmem %s0, %s169
      %p171 = pneg %p55
      %p172 = pneg %p52
      %s173 = smul.u32 64, %s20
      %p174 = scmp.lt.s32.totalorder %s173, 191
      %s175 = scalar_select %p174, %s173, 191
      %p176 = scmp.lt.s32.totalorder %s19, 0
      %s177 = scalar_select %p176, %s19, 0
      %s178 = sadd.s32 %s177, %s175
      %s179 = smul.addr %s178, 4
      %s180 = scalar_lea.vmem %s1, %s179
      %p181 = pneg %p83
      %p182 = pneg %p80
      %p183 = pneg %p111
      %p184 = pneg %p108
      %p185 = scmp.lt.s32.totalorder %s18, 0
      %s186 = scalar_select %p185, %s18, 0
      %p187 = scmp.lt.s32.totalorder %s19, 0
      %s188 = scalar_select %p187, %s19, 0
      %s189 = sadd.s32 %s188, %s186
      %s190 = smul.addr %s189, 8
      %s191 = scalar_lea.vmem %s2, %s190
      %s192 = smul.u32 4, %s20
      %p193 = scmp.lt.s32.totalorder %s18, 0
      %s194 = scalar_select %p193, %s18, 0
      %p195 = scmp.lt.s32.totalorder %s192, 11
      %s196 = scalar_select %p195, %s192, 11
      %s197 = smul.addr %s194, 12
      %s198 = sadd.s32 %s196, %s197
      %s199 = smul.addr %s198, 4
      %s200 = scalar_lea.vmem %s0, %s199
      %s201 = smul.u32 4, %s20
      %s202 = smul.u32 64, %s20
      %p203 = scmp.lt.s32.totalorder %s202, 191
      %s204 = scalar_select %p203, %s202, 191
      %p205 = scmp.lt.s32.totalorder %s19, 0
      %s206 = scalar_select %p205, %s19, 0
      %s207 = sadd.s32 %s206, %s204
      %s208 = smul.addr %s207, 4
      %s209 = scalar_lea.vmem %s1, %s208
      %s210 = smul.u32 64, %s20
      %p211 = scmp.lt.s32.totalorder %s18, 0
      %s212 = scalar_select %p211, %s18, 0
      %p213 = scmp.lt.s32.totalorder %s19, 0
      %s214 = scalar_select %p213, %s19, 0
      %s215 = sadd.s32 %s214, %s212
      %s216 = smul.addr %s215, 8
      %s217 = scalar_lea.vmem %s2, %s216
      %p219 = scmp.eq.s32.totalorder %s20, 0
      // Predicated region
      $region29: #{_lambda_.38} parent=27 // pred_check
        %p220 = pneg %p219
      $region30: #{_lambda_.38} parent=27 // pred_check_branch
        %222 = sbr.rel (%p220) target = $region32
      $region31: #{_lambda_.38} parent=27 // pred_region
        %223 = vst [vmem:[#allocation2] sm:$0xff] 0.0
      $region32: #{_lambda_.38} parent=27 // pred_fallthru
        _
      %v224 = vld [vmem:[%s200] sm:$0xff]
      %v225 = vld [vmem:[%s200 + $0x8] sm:$0xff]
      %v226 = vmax.bf16 %v224, 0
      %v227 = vmax.bf16 %v225, 0
      %v228 = vld [vmem:[#allocation2] sm:$0xff]
      %v229 = vld [vmem:[%s209] sm:$0xf]
      %v230 = vld [vmem:[%s209 + $0x4] sm:$0xf]
      %v231 = vld [vmem:[%s209 + $0x8] sm:$0xf]
      %v232 = vld [vmem:[%s209 + $0xc] sm:$0xf]
      %v233 = vld [vmem:[%s209 + $0x10] sm:$0xf]
      %v234 = vld [vmem:[%s209 + $0x14] sm:$0xf]
      %v235 = vld [vmem:[%s209 + $0x18] sm:$0xf]
      %v236 = vld [vmem:[%s209 + $0x1c] sm:$0xf]
      %v237 = vld [vmem:[%s209 + $0x20] sm:$0xf]
      %v238 = vld [vmem:[%s209 + $0x24] sm:$0xf]
      %v239 = vld [vmem:[%s209 + $0x28] sm:$0xf]
      %v240 = vld [vmem:[%s209 + $0x2c] sm:$0xf]
      %v241 = vld [vmem:[%s209 + $0x30] sm:$0xf]
      %v242 = vld [vmem:[%s209 + $0x34] sm:$0xf]
      %v243 = vld [vmem:[%s209 + $0x38] sm:$0xf]
      %v244 = vld [vmem:[%s209 + $0x3c] sm:$0xf]
      %v245 = vld [vmem:[%s209 + $0x40] sm:$0xf]
      %v246 = vld [vmem:[%s209 + $0x44] sm:$0xf]
      %v247 = vld [vmem:[%s209 + $0x48] sm:$0xf]
      %v248 = vld [vmem:[%s209 + $0x4c] sm:$0xf]
      %v249 = vld [vmem:[%s209 + $0x50] sm:$0xf]
      %v250 = vld [vmem:[%s209 + $0x54] sm:$0xf]
      %v251 = vld [vmem:[%s209 + $0x58] sm:$0xf]
      %v252 = vld [vmem:[%s209 + $0x5c] sm:$0xf]
      %v253 = vld [vmem:[%s209 + $0x60] sm:$0xf]
      %v254 = vld [vmem:[%s209 + $0x64] sm:$0xf]
      %v255 = vld [vmem:[%s209 + $0x68] sm:$0xf]
      %v256 = vld [vmem:[%s209 + $0x6c] sm:$0xf]
      %v257 = vld [vmem:[%s209 + $0x70] sm:$0xf]
      %v258 = vld [vmem:[%s209 + $0x74] sm:$0xf]
      %v259 = vld [vmem:[%s209 + $0x78] sm:$0xf]
      %v260 = vld [vmem:[%s209 + $0x7c] sm:$0xf]
      %v261 = vld [vmem:[%s209 + $0x80] sm:$0xf]
      %v262 = vld [vmem:[%s209 + $0x84] sm:$0xf]
      %v263 = vld [vmem:[%s209 + $0x88] sm:$0xf]
      %v264 = vld [vmem:[%s209 + $0x8c] sm:$0xf]
      %v265 = vld [vmem:[%s209 + $0x90] sm:$0xf]
      %v266 = vld [vmem:[%s209 + $0x94] sm:$0xf]
      %v267 = vld [vmem:[%s209 + $0x98] sm:$0xf]
      %v268 = vld [vmem:[%s209 + $0x9c] sm:$0xf]
      %v269 = vld [vmem:[%s209 + $0xa0] sm:$0xf]
      %v270 = vld [vmem:[%s209 + $0xa4] sm:$0xf]
      %v271 = vld [vmem:[%s209 + $0xa8] sm:$0xf]
      %v272 = vld [vmem:[%s209 + $0xac] sm:$0xf]
      %v273 = vld [vmem:[%s209 + $0xb0] sm:$0xf]
      %v274 = vld [vmem:[%s209 + $0xb4] sm:$0xf]
      %v275 = vld [vmem:[%s209 + $0xb8] sm:$0xf]
      %v276 = vld [vmem:[%s209 + $0xbc] sm:$0xf]
      %v277 = vld [vmem:[%s209 + $0xc0] sm:$0xf]
      %v278 = vld [vmem:[%s209 + $0xc4] sm:$0xf]
      %v279 = vld [vmem:[%s209 + $0xc8] sm:$0xf]
      %v280 = vld [vmem:[%s209 + $0xcc] sm:$0xf]
      %v281 = vld [vmem:[%s209 + $0xd0] sm:$0xf]
      %v282 = vld [vmem:[%s209 + $0xd4] sm:$0xf]
      %v283 = vld [vmem:[%s209 + $0xd8] sm:$0xf]
      %v284 = vld [vmem:[%s209 + $0xdc] sm:$0xf]
      %v285 = vld [vmem:[%s209 + $0xe0] sm:$0xf]
      %v286 = vld [vmem:[%s209 + $0xe4] sm:$0xf]
      %v287 = vld [vmem:[%s209 + $0xe8] sm:$0xf]
      %v288 = vld [vmem:[%s209 + $0xec] sm:$0xf]
      %v289 = vld [vmem:[%s209 + $0xf0] sm:$0xf]
      %v290 = vld [vmem:[%s209 + $0xf4] sm:$0xf]
      %v291 = vld [vmem:[%s209 + $0xf8] sm:$0xf]
      %v292 = vld [vmem:[%s209 + $0xfc] sm:$0xf]
      %v295 = vunpack.c.l.b16 %v226
      %v296 = vunpack.c.h.b16 %v226
      %v297 = vunpack.c.l.b16 %v227
      %v298 = vunpack.c.h.b16 %v227
      %v299 = vpack.c.b16 %v295, %v295
      %v300 = vpack.c.b16 %v296, %v296
      %v301 = vpack.c.b16 %v297, %v297
      %v302 = vpack.c.b16 %v298, %v298
      %v371 = vunpack.c.l.b16 %v229
      %v372 = vunpack.c.l.b16 %v230
      %v373 = vunpack.c.l.b16 %v231
      %v374 = vunpack.c.l.b16 %v232
      %v375 = vunpack.c.l.b16 %v233
      %v376 = vunpack.c.l.b16 %v234
      %v377 = vunpack.c.l.b16 %v235
      %v378 = vunpack.c.l.b16 %v236
      %v379 = vunpack.c.l.b16 %v237
      %v380 = vunpack.c.l.b16 %v238
      %v381 = vunpack.c.l.b16 %v239
      %v382 = vunpack.c.l.b16 %v240
      %v383 = vunpack.c.l.b16 %v241
      %v384 = vunpack.c.l.b16 %v242
      %v385 = vunpack.c.l.b16 %v243
      %v386 = vunpack.c.l.b16 %v244
      %v387 = vunpack.c.l.b16 %v245
      %v388 = vunpack.c.l.b16 %v246
      %v389 = vunpack.c.l.b16 %v247
      %v390 = vunpack.c.l.b16 %v248
      %v391 = vunpack.c.l.b16 %v249
      %v392 = vunpack.c.l.b16 %v250
      %v393 = vunpack.c.l.b16 %v251
      %v394 = vunpack.c.l.b16 %v252
      %v395 = vunpack.c.l.b16 %v253
      %v396 = vunpack.c.l.b16 %v254
      %v397 = vunpack.c.l.b16 %v255
      %v398 = vunpack.c.l.b16 %v256
      %v399 = vunpack.c.l.b16 %v257
      %v400 = vunpack.c.l.b16 %v258
      %v401 = vunpack.c.l.b16 %v259
      %v402 = vunpack.c.l.b16 %v260
      %v403 = vunpack.c.l.b16 %v261
      %v404 = vunpack.c.l.b16 %v262
      %v405 = vunpack.c.l.b16 %v263
      %v406 = vunpack.c.l.b16 %v264
      %v407 = vunpack.c.l.b16 %v265
      %v408 = vunpack.c.l.b16 %v266
      %v409 = vunpack.c.l.b16 %v267
      %v410 = vunpack.c.l.b16 %v268
      %v411 = vunpack.c.l.b16 %v269
      %v412 = vunpack.c.l.b16 %v270
      %v413 = vunpack.c.l.b16 %v271
      %v414 = vunpack.c.l.b16 %v272
      %v415 = vunpack.c.l.b16 %v273
      %v416 = vunpack.c.l.b16 %v274
      %v417 = vunpack.c.l.b16 %v275
      %v418 = vunpack.c.l.b16 %v276
      %v419 = vunpack.c.l.b16 %v277
      %v420 = vunpack.c.l.b16 %v278
      %v421 = vunpack.c.l.b16 %v279
      %v422 = vunpack.c.l.b16 %v280
      %v423 = vunpack.c.l.b16 %v281
      %v424 = vunpack.c.l.b16 %v282
      %v425 = vunpack.c.l.b16 %v283
      %v426 = vunpack.c.l.b16 %v284
      %v427 = vunpack.c.l.b16 %v285
      %v428 = vunpack.c.l.b16 %v286
      %v429 = vunpack.c.l.b16 %v287
      %v430 = vunpack.c.l.b16 %v288
      %v431 = vunpack.c.l.b16 %v289
      %v432 = vunpack.c.l.b16 %v290
      %v433 = vunpack.c.l.b16 %v291
      %v434 = vunpack.c.l.b16 %v292
      %v435 = vpack.c.b16 %v372, %v371
      %v436 = vpack.c.b16 %v374, %v373
      %v437 = vpack.c.b16 %v376, %v375
      %v438 = vpack.c.b16 %v378, %v377
      %v439 = vpack.c.b16 %v380, %v379
      %v440 = vpack.c.b16 %v382, %v381
      %v441 = vpack.c.b16 %v384, %v383
      %v442 = vpack.c.b16 %v386, %v385
      %v443 = vpack.c.b16 %v388, %v387
      %v444 = vpack.c.b16 %v390, %v389
      %v445 = vpack.c.b16 %v392, %v391
      %v446 = vpack.c.b16 %v394, %v393
      %v447 = vpack.c.b16 %v396, %v395
      %v448 = vpack.c.b16 %v398, %v397
      %v449 = vpack.c.b16 %v400, %v399
      %v450 = vpack.c.b16 %v402, %v401
      %v451 = vpack.c.b16 %v404, %v403
      %v452 = vpack.c.b16 %v406, %v405
      %v453 = vpack.c.b16 %v408, %v407
      %v454 = vpack.c.b16 %v410, %v409
      %v455 = vpack.c.b16 %v412, %v411
      %v456 = vpack.c.b16 %v414, %v413
      %v457 = vpack.c.b16 %v416, %v415
      %v458 = vpack.c.b16 %v418, %v417
      %v459 = vpack.c.b16 %v420, %v419
      %v460 = vpack.c.b16 %v422, %v421
      %v461 = vpack.c.b16 %v424, %v423
      %v462 = vpack.c.b16 %v426, %v425
      %v463 = vpack.c.b16 %v428, %v427
      %v464 = vpack.c.b16 %v430, %v429
      %v465 = vpack.c.b16 %v432, %v431
      %v466 = vpack.c.b16 %v434, %v433
      %499 = vmatprep.subr.bf16.mxu0 0
      %500 = vmatpush1.bf16.msra.mxu0 %v442
      %501 = vmatprep.subr.bf16.mxu0 0
      %502 = vmatpush1.bf16.msra.mxu0 %v441
      %503 = vmatprep.subr.bf16.mxu0 0
      %504 = vmatpush1.bf16.msra.mxu0 %v440
      %505 = vmatprep.subr.bf16.mxu0 0
      %506 = vmatpush1.bf16.msra.mxu0 %v439
      %507 = vmatprep.subr.bf16.mxu0 0
      %508 = vmatpush1.bf16.msra.mxu0 %v438
      %509 = vmatprep.subr.bf16.mxu0 0
      %510 = vmatpush1.bf16.msra.mxu0 %v437
      %511 = vmatprep.subr.bf16.mxu0 0
      %512 = vmatpush1.bf16.msra.mxu0 %v436
      %513 = vmatprep.subr.bf16.mxu0 0
      %514 = vmatpush1.bf16.msra.mxu0 %v435
      %515 = vmatprep.subr.bf16.mxu0 0
      %516 = vmatpush2.bf16.msra.mxu0 %v450
      %517 = vmatprep.subr.bf16.mxu0 0
      %518 = vmatpush2.bf16.msra.mxu0 %v449
      %519 = vmatprep.subr.bf16.mxu0 0
      %520 = vmatpush2.bf16.msra.mxu0 %v448
      %521 = vmatprep.subr.bf16.mxu0 0
      %522 = vmatpush2.bf16.msra.mxu0 %v447
      %523 = vmatprep.subr.bf16.mxu0 0
      %524 = vmatpush2.bf16.msra.mxu0 %v446
      %525 = vmatprep.subr.bf16.mxu0 0
      %526 = vmatpush2.bf16.msra.mxu0 %v445
      %527 = vmatprep.subr.bf16.mxu0 0
      %528 = vmatpush2.bf16.msra.mxu0 %v444
      %529 = vmatprep.subr.bf16.mxu0 0
      %530 = vmatpush2.bf16.msra.mxu0 %v443
      %531 = vmatprep.mubr.bf16.mxu0 %v300
      %532 = vmatmul.mubr.bf16.gmra.mxu0 %v299
      %v533 = vpop.f32.mrf.mxu0
      %v534 = vadd.f32 0.0, %v533
      %v535 = vpop.f32.mrf.mxu0
      %v536 = vpop.f32.mrf.mxu0
      %v537 = vpop.f32.mrf.mxu0
      %538 = vdwg.mxu0
      %539 = vmatprep.subr.bf16.mxu0 0
      %540 = vmatpush1.bf16.msra.mxu0 %v458
      %541 = vmatprep.subr.bf16.mxu0 0
      %542 = vmatpush1.bf16.msra.mxu0 %v457
      %543 = vmatprep.subr.bf16.mxu0 0
      %544 = vmatpush1.bf16.msra.mxu0 %v456
      %545 = vmatprep.subr.bf16.mxu0 0
      %546 = vmatpush1.bf16.msra.mxu0 %v455
      %547 = vmatprep.subr.bf16.mxu0 0
      %548 = vmatpush1.bf16.msra.mxu0 %v454
      %549 = vmatprep.subr.bf16.mxu0 0
      %550 = vmatpush1.bf16.msra.mxu0 %v453
      %551 = vmatprep.subr.bf16.mxu0 0
      %552 = vmatpush1.bf16.msra.mxu0 %v452
      %553 = vmatprep.subr.bf16.mxu0 0
      %554 = vmatpush1.bf16.msra.mxu0 %v451
      %555 = vmatprep.subr.bf16.mxu0 0
      %556 = vmatpush2.bf16.msra.mxu0 %v466
      %557 = vmatprep.subr.bf16.mxu0 0
      %558 = vmatpush2.bf16.msra.mxu0 %v465
      %559 = vmatprep.subr.bf16.mxu0 0
      %560 = vmatpush2.bf16.msra.mxu0 %v464
      %561 = vmatprep.subr.bf16.mxu0 0
      %562 = vmatpush2.bf16.msra.mxu0 %v463
      %563 = vmatprep.subr.bf16.mxu0 0
      %564 = vmatpush2.bf16.msra.mxu0 %v462
      %565 = vmatprep.subr.bf16.mxu0 0
      %566 = vmatpush2.bf16.msra.mxu0 %v461
      %567 = vmatprep.subr.bf16.mxu0 0
      %568 = vmatpush2.bf16.msra.mxu0 %v460
      %569 = vmatprep.subr.bf16.mxu0 0
      %570 = vmatpush2.bf16.msra.mxu0 %v459
      %571 = vmatprep.mubr.bf16.mxu0 %v302
      %572 = vmatmul.mubr.bf16.gmra.mxu0 %v301
      %v573 = vpop.f32.mrf.mxu0
      %v574 = vadd.f32 %v534, %v573
      %v575 = vpop.f32.mrf.mxu0
      %v576 = vpop.f32.mrf.mxu0
      %v577 = vpop.f32.mrf.mxu0
      %578 = vdwg.mxu0
      %v579 = vadd.f32 %v228, %v574
      %580 = vst [vmem:[#allocation2] sm:$0xff] %v579
      %p581 = scmp.eq.s32.totalorder %s20, 2
      // Predicated region
      $region33: #{_lambda_.38} parent=27 // pred_check
        %p582 = pneg %p581
      $region34: #{_lambda_.38} parent=27 // pred_check_branch
        %584 = sbr.rel (%p582) target = $region36
      $region35: #{_lambda_.38} parent=27 // pred_region
        %v585 = vld [vmem:[#allocation2] sm:$0xff]
        %586 = vst [vmem:[%s217] sm:$0xff] %v585
      $region36: #{_lambda_.38} parent=27 // pred_fallthru
        _
      %p587 = scmp.lt.s32.totalorder %s18, 0
      %s588 = scalar_select %p587, %s18, 0
      %p589 = scmp.lt.s32.totalorder %s19, 0
      %s590 = scalar_select %p589, %s19, 0
      %s591 = sadd.s32 %s590, %s588
      %s592 = smul.addr %s591, 8
      %s593 = scalar_lea.vmem %s2, %s592
      // Predicated region
      $region37: #{_lambda_.38} parent=27 // pred_check
        %p594 = pneg %p108
      $region38: #{_lambda_.38} parent=27 // pred_check_branch
        %596 = sbr.rel (%p594) target = $region40
      $region39: #{_lambda_.38} parent=27 // pred_region
        _
      $region40: #{_lambda_.38} parent=27 // pred_fallthru
        _
      // Predicated region
      $region41: #{_lambda_.38} parent=27 // pred_check
        %p597 = pneg %p108
      $region42: #{_lambda_.38} parent=27 // pred_check_branch
        %599 = sbr.rel (%p597) target = $region44
      $region43: #{_lambda_.38} parent=27 // pred_region
        %p600 = scmp.lt.s32.totalorder %s18, 0
        %s601 = scalar_select %p600, %s18, 0
        %p602 = scmp.lt.s32.totalorder %s19, 0
        %s603 = scalar_select %p602, %s19, 0
        %s604 = sadd.s32 %s603, %s601
        %s605 = smul.addr %s604, 8
        %s606 = scalar_lea.vmem %s2, %s605
      $region44: #{_lambda_.38} parent=27 // pred_fallthru
        _
    $region28: #{_lambda_.38} parent=5 // pred_fallthru
      _
    %p607 = scmp.le.s32.totalorder 2, %s8
    // Predicated region
    $region45: #{_lambda_.38} parent=5 // pred_check
      %p608 = pneg %p607
    $region46: #{_lambda_.38} parent=5 // pred_check_branch
      %610 = sbr.rel (%p608) target = $region48
    $region47: #{_lambda_.38} parent=5 // pred_region
      %s611 = ssub.s32 %s8, 2
    $region48: #{_lambda_.38} parent=5 // pred_fallthru
      _
  $region6: #{_lambda_.38} parent=0 // loop_footer
    %s12 = sadd.s32 1, %s8
  $region7: #{_lambda_.38} parent=0 // loop_footer_branch
    %7 = sbr.rel target = $region3
  $region8: #{_lambda_.38} parent=0 // loop_exit
    _

// kernel: _lambda_.41
$region0: #{_lambda_.41}
  #allocation0 [shape = 'u32[]', space=smem, size = 0x4, offset = 0x4, fixed_abs, tag = 'smem constant byte address 0x4 - core index']
  #allocation1 [shape = 'u32[144,128]{1,0:T(1,128)}', space=vmem, size = 0x12000, scoped, tag = 'internal scratch']
  %s0 = inlined_call_operand.vmem [shape: bf16[32,576], index: 0, kind: input, shape index: {}]
  %s1 = inlined_call_operand.vmem [shape: bf16[576,64], index: 1, kind: input, shape index: {}]
  %s2 = inlined_call_operand.vmem [shape: f32[32,64], index: 2, kind: output, shape index: {}]
  %s3 = sld [smem:[#allocation0]]
  $region18: #{_lambda_.41} parent=0
    _
  %s5 = ssub.s32 1, %s3
  %s6 = scalar_select 0, %s5, %s3
  // Predicated region
  $region2: #{_lambda_.41} parent=0 // pred_check
    _
  $region3: #{_lambda_.41} parent=0 // pred_check_branch
    %8 = sbr.rel (0) target = $region5
  $region4: #{_lambda_.41} parent=0 // pred_region
    _
  $region5: #{_lambda_.41} parent=0 // pred_fallthru
    _
  // Predicated region
  $region6: #{_lambda_.41} parent=0 // pred_check
    _
  $region7: #{_lambda_.41} parent=0 // pred_check_branch
    %10 = sbr.rel (0) target = $region9
  $region8: #{_lambda_.41} parent=0 // pred_region
    _
  $region9: #{_lambda_.41} parent=0 // pred_fallthru
    _
  %v12 = vld [vmem:[%s0] sm:$0xff]
  %v13 = vld [vmem:[%s0 + $0x8] sm:$0xff]
  %v14 = vld [vmem:[%s0 + $0x10] sm:$0xf]
  %v15 = vld [vmem:[%s0 + $0x14] sm:$0xff]
  %v16 = vld [vmem:[%s0 + $0x1c] sm:$0xff]
  %v17 = vld [vmem:[%s0 + $0x24] sm:$0xf]
  %v18 = vld [vmem:[%s0 + $0x28] sm:$0xff]
  %v19 = vld [vmem:[%s0 + $0x30] sm:$0xff]
  %v20 = vld [vmem:[%s0 + $0x38] sm:$0xf]
  %v21 = vld [vmem:[%s0 + $0x3c] sm:$0xff]
  %v22 = vld [vmem:[%s0 + $0x44] sm:$0xff]
  %v23 = vld [vmem:[%s0 + $0x4c] sm:$0xf]
  %v24 = vmax.bf16 %v12, 0
  %v25 = vmax.bf16 %v13, 0
  %v26 = vmax.bf16 %v14, 0
  %v27 = vmax.bf16 %v15, 0
  %v28 = vmax.bf16 %v16, 0
  %v29 = vmax.bf16 %v17, 0
  %v30 = vmax.bf16 %v18, 0
  %v31 = vmax.bf16 %v19, 0
  %v32 = vmax.bf16 %v20, 0
  %v33 = vmax.bf16 %v21, 0
  %v34 = vmax.bf16 %v22, 0
  %v35 = vmax.bf16 %v23, 0
  %v36 = vld [vmem:[%s1] sm:$0xf]
  %v37 = vld [vmem:[%s1 + $0x4] sm:$0xf]
  %v38 = vld [vmem:[%s1 + $0x8] sm:$0xf]
  %v39 = vld [vmem:[%s1 + $0xc] sm:$0xf]
  %v40 = vld [vmem:[%s1 + $0x10] sm:$0xf]
  %v41 = vld [vmem:[%s1 + $0x14] sm:$0xf]
  %v42 = vld [vmem:[%s1 + $0x18] sm:$0xf]
  %v43 = vld [vmem:[%s1 + $0x1c] sm:$0xf]
  %v44 = vld [vmem:[%s1 + $0x20] sm:$0xf]
  %v45 = vld [vmem:[%s1 + $0x24] sm:$0xf]
  %v46 = vld [vmem:[%s1 + $0x28] sm:$0xf]
  %v47 = vld [vmem:[%s1 + $0x2c] sm:$0xf]
  %v48 = vld [vmem:[%s1 + $0x30] sm:$0xf]
  %v49 = vld [vmem:[%s1 + $0x34] sm:$0xf]
  %v50 = vld [vmem:[%s1 + $0x38] sm:$0xf]
  %v51 = vld [vmem:[%s1 + $0x3c] sm:$0xf]
  %v52 = vld [vmem:[%s1 + $0x40] sm:$0xf]
  %v53 = vld [vmem:[%s1 + $0x44] sm:$0xf]
  %v54 = vld [vmem:[%s1 + $0x48] sm:$0xf]
  %v55 = vld [vmem:[%s1 + $0x4c] sm:$0xf]
  %v56 = vld [vmem:[%s1 + $0x50] sm:$0xf]
  %v57 = vld [vmem:[%s1 + $0x54] sm:$0xf]
  %v58 = vld [vmem:[%s1 + $0x58] sm:$0xf]
  %v59 = vld [vmem:[%s1 + $0x5c] sm:$0xf]
  %v60 = vld [vmem:[%s1 + $0x60] sm:$0xf]
  %v61 = vld [vmem:[%s1 + $0x64] sm:$0xf]
  %v62 = vld [vmem:[%s1 + $0x68] sm:$0xf]
  %v63 = vld [vmem:[%s1 + $0x6c] sm:$0xf]
  %v64 = vld [vmem:[%s1 + $0x70] sm:$0xf]
  %v65 = vld [vmem:[%s1 + $0x74] sm:$0xf]
  %v66 = vld [vmem:[%s1 + $0x78] sm:$0xf]
  %v67 = vld [vmem:[%s1 + $0x7c] sm:$0xf]
  %v68 = vld [vmem:[%s1 + $0x80] sm:$0xf]
  %v69 = vld [vmem:[%s1 + $0x84] sm:$0xf]
  %v70 = vld [vmem:[%s1 + $0x88] sm:$0xf]
  %v71 = vld [vmem:[%s1 + $0x8c] sm:$0xf]
  %v72 = vld [vmem:[%s1 + $0x90] sm:$0xf]
  %v73 = vld [vmem:[%s1 + $0x94] sm:$0xf]
  %v74 = vld [vmem:[%s1 + $0x98] sm:$0xf]
  %v75 = vld [vmem:[%s1 + $0x9c] sm:$0xf]
  %v76 = vld [vmem:[%s1 + $0xa0] sm:$0xf]
  %v77 = vld [vmem:[%s1 + $0xa4] sm:$0xf]
  %v78 = vld [vmem:[%s1 + $0xa8] sm:$0xf]
  %v79 = vld [vmem:[%s1 + $0xac] sm:$0xf]
  %v80 = vld [vmem:[%s1 + $0xb0] sm:$0xf]
  %v81 = vld [vmem:[%s1 + $0xb4] sm:$0xf]
  %v82 = vld [vmem:[%s1 + $0xb8] sm:$0xf]
  %v83 = vld [vmem:[%s1 + $0xbc] sm:$0xf]
  %v84 = vld [vmem:[%s1 + $0xc0] sm:$0xf]
  %v85 = vld [vmem:[%s1 + $0xc4] sm:$0xf]
  %v86 = vld [vmem:[%s1 + $0xc8] sm:$0xf]
  %v87 = vld [vmem:[%s1 + $0xcc] sm:$0xf]
  %v88 = vld [vmem:[%s1 + $0xd0] sm:$0xf]
  %v89 = vld [vmem:[%s1 + $0xd4] sm:$0xf]
  %v90 = vld [vmem:[%s1 + $0xd8] sm:$0xf]
  %v91 = vld [vmem:[%s1 + $0xdc] sm:$0xf]
  %v92 = vld [vmem:[%s1 + $0xe0] sm:$0xf]
  %v93 = vld [vmem:[%s1 + $0xe4] sm:$0xf]
  %v94 = vld [vmem:[%s1 + $0xe8] sm:$0xf]
  %v95 = vld [vmem:[%s1 + $0xec] sm:$0xf]
  %v96 = vld [vmem:[%s1 + $0xf0] sm:$0xf]
  %v97 = vld [vmem:[%s1 + $0xf4] sm:$0xf]
  %v98 = vld [vmem:[%s1 + $0xf8] sm:$0xf]
  %v99 = vld [vmem:[%s1 + $0xfc] sm:$0xf]
  %v100 = vld [vmem:[%s1 + $0x100] sm:$0xf]
  %v101 = vld [vmem:[%s1 + $0x104] sm:$0xf]
  %v102 = vld [vmem:[%s1 + $0x108] sm:$0xf]
  %v103 = vld [vmem:[%s1 + $0x10c] sm:$0xf]
  %v104 = vld [vmem:[%s1 + $0x110] sm:$0xf]
  %v105 = vld [vmem:[%s1 + $0x114] sm:$0xf]
  %v106 = vld [vmem:[%s1 + $0x118] sm:$0xf]
  %v107 = vld [vmem:[%s1 + $0x11c] sm:$0xf]
  %v120 = vunpack.c.l.b16 %v24
  %v121 = vunpack.c.h.b16 %v24
  %v122 = vunpack.c.l.b16 %v25
  %v123 = vunpack.c.h.b16 %v25
  %v124 = vunpack.c.l.b16 %v26
  %v125 = vunpack.c.l.b16 %v27
  %v126 = vunpack.c.h.b16 %v27
  %v127 = vunpack.c.l.b16 %v28
  %v128 = vunpack.c.h.b16 %v28
  %v129 = vunpack.c.l.b16 %v29
  %v130 = vunpack.c.l.b16 %v30
  %v131 = vunpack.c.h.b16 %v30
  %v132 = vunpack.c.l.b16 %v31
  %v133 = vunpack.c.h.b16 %v31
  %v134 = vunpack.c.l.b16 %v32
  %v135 = vunpack.c.l.b16 %v33
  %v136 = vunpack.c.h.b16 %v33
  %v137 = vunpack.c.l.b16 %v34
  %v138 = vunpack.c.h.b16 %v34
  %v139 = vunpack.c.l.b16 %v35
  %v140 = vpack.c.b16 %v125, %v120
  %v141 = vpack.c.b16 %v126, %v121
  %v142 = vpack.c.b16 %v127, %v122
  %v143 = vpack.c.b16 %v128, %v123
  %v144 = vpack.c.b16 %v129, %v124
  %v145 = vpack.c.b16 %v135, %v130
  %v146 = vpack.c.b16 %v136, %v131
  %v147 = vpack.c.b16 %v137, %v132
  %v148 = vpack.c.b16 %v138, %v133
  %v149 = vpack.c.b16 %v139, %v134
  %v230 = vunpack.c.l.b16 %v36
  %v231 = vunpack.c.l.b16 %v37
  %v232 = vunpack.c.l.b16 %v38
  %v233 = vunpack.c.l.b16 %v39
  %v234 = vunpack.c.l.b16 %v40
  %v235 = vunpack.c.l.b16 %v41
  %v236 = vunpack.c.l.b16 %v42
  %v237 = vunpack.c.l.b16 %v43
  %v238 = vunpack.c.l.b16 %v44
  %v239 = vunpack.c.l.b16 %v45
  %v240 = vunpack.c.l.b16 %v46
  %v241 = vunpack.c.l.b16 %v47
  %v242 = vunpack.c.l.b16 %v48
  %v243 = vunpack.c.l.b16 %v49
  %v244 = vunpack.c.l.b16 %v50
  %v245 = vunpack.c.l.b16 %v51
  %v246 = vunpack.c.l.b16 %v52
  %v247 = vunpack.c.l.b16 %v53
  %v248 = vunpack.c.l.b16 %v54
  %v249 = vunpack.c.l.b16 %v55
  %v250 = vunpack.c.l.b16 %v56
  %v251 = vunpack.c.l.b16 %v57
  %v252 = vunpack.c.l.b16 %v58
  %v253 = vunpack.c.l.b16 %v59
  %v254 = vunpack.c.l.b16 %v60
  %v255 = vunpack.c.l.b16 %v61
  %v256 = vunpack.c.l.b16 %v62
  %v257 = vunpack.c.l.b16 %v63
  %v258 = vunpack.c.l.b16 %v64
  %v259 = vunpack.c.l.b16 %v65
  %v260 = vunpack.c.l.b16 %v66
  %v261 = vunpack.c.l.b16 %v67
  %v262 = vunpack.c.l.b16 %v68
  %v263 = vunpack.c.l.b16 %v69
  %v264 = vunpack.c.l.b16 %v70
  %v265 = vunpack.c.l.b16 %v71
  %v266 = vunpack.c.l.b16 %v72
  %v267 = vunpack.c.l.b16 %v73
  %v268 = vunpack.c.l.b16 %v74
  %v269 = vunpack.c.l.b16 %v75
  %v270 = vunpack.c.l.b16 %v76
  %v271 = vunpack.c.l.b16 %v77
  %v272 = vunpack.c.l.b16 %v78
  %v273 = vunpack.c.l.b16 %v79
  %v274 = vunpack.c.l.b16 %v80
  %v275 = vunpack.c.l.b16 %v81
  %v276 = vunpack.c.l.b16 %v82
  %v277 = vunpack.c.l.b16 %v83
  %v278 = vunpack.c.l.b16 %v84
  %v279 = vunpack.c.l.b16 %v85
  %v280 = vunpack.c.l.b16 %v86
  %v281 = vunpack.c.l.b16 %v87
  %v282 = vunpack.c.l.b16 %v88
  %v283 = vunpack.c.l.b16 %v89
  %v284 = vunpack.c.l.b16 %v90
  %v285 = vunpack.c.l.b16 %v91
  %v286 = vunpack.c.l.b16 %v92
  %v287 = vunpack.c.l.b16 %v93
  %v288 = vunpack.c.l.b16 %v94
  %v289 = vunpack.c.l.b16 %v95
  %v290 = vunpack.c.l.b16 %v96
  %v291 = vunpack.c.l.b16 %v97
  %v292 = vunpack.c.l.b16 %v98
  %v293 = vunpack.c.l.b16 %v99
  %v294 = vunpack.c.l.b16 %v100
  %v295 = vunpack.c.l.b16 %v101
  %v296 = vunpack.c.l.b16 %v102
  %v297 = vunpack.c.l.b16 %v103
  %v298 = vunpack.c.l.b16 %v104
  %v299 = vunpack.c.l.b16 %v105
  %v300 = vunpack.c.l.b16 %v106
  %v301 = vunpack.c.l.b16 %v107
  %v302 = vpack.c.b16 %v231, %v230
  %v303 = vpack.c.b16 %v233, %v232
  %v304 = vpack.c.b16 %v235, %v234
  %v305 = vpack.c.b16 %v237, %v236
  %v306 = vpack.c.b16 %v239, %v238
  %v307 = vpack.c.b16 %v241, %v240
  %v308 = vpack.c.b16 %v243, %v242
  %v309 = vpack.c.b16 %v245, %v244
  %v310 = vpack.c.b16 %v247, %v246
  %v311 = vpack.c.b16 %v249, %v248
  %v312 = vpack.c.b16 %v251, %v250
  %v313 = vpack.c.b16 %v253, %v252
  %v314 = vpack.c.b16 %v255, %v254
  %v315 = vpack.c.b16 %v257, %v256
  %v316 = vpack.c.b16 %v259, %v258
  %v317 = vpack.c.b16 %v261, %v260
  %v318 = vpack.c.b16 %v263, %v262
  %v319 = vpack.c.b16 %v265, %v264
  %v320 = vpack.c.b16 %v267, %v266
  %v321 = vpack.c.b16 %v269, %v268
  %v322 = vpack.c.b16 %v271, %v270
  %v323 = vpack.c.b16 %v273, %v272
  %v324 = vpack.c.b16 %v275, %v274
  %v325 = vpack.c.b16 %v277, %v276
  %v326 = vpack.c.b16 %v279, %v278
  %v327 = vpack.c.b16 %v281, %v280
  %v328 = vpack.c.b16 %v283, %v282
  %v329 = vpack.c.b16 %v285, %v284
  %v330 = vpack.c.b16 %v287, %v286
  %v331 = vpack.c.b16 %v289, %v288
  %v332 = vpack.c.b16 %v291, %v290
  %v333 = vpack.c.b16 %v293, %v292
  %v334 = vpack.c.b16 %v295, %v294
  %v335 = vpack.c.b16 %v297, %v296
  %v336 = vpack.c.b16 %v299, %v298
  %v337 = vpack.c.b16 %v301, %v300
  %vm374 = vcmask 523264
  %v376 = vsel %vm374, %v144, 0
  %v379 = vsel %vm374, %v149, 0
  %381 = vmatprep.subr.bf16.mxu0 0
  %382 = vmatpush1.bf16.msra.mxu0 %v309
  %383 = vmatprep.subr.bf16.mxu0 0
  %384 = vmatpush1.bf16.msra.mxu0 %v308
  %385 = vmatprep.subr.bf16.mxu0 0
  %386 = vmatpush1.bf16.msra.mxu0 %v307
  %387 = vmatprep.subr.bf16.mxu0 0
  %388 = vmatpush1.bf16.msra.mxu0 %v306
  %389 = vmatprep.subr.bf16.mxu0 0
  %390 = vmatpush1.bf16.msra.mxu0 %v305
  %391 = vmatprep.subr.bf16.mxu0 0
  %392 = vmatpush1.bf16.msra.mxu0 %v304
  %393 = vmatprep.subr.bf16.mxu0 0
  %394 = vmatpush1.bf16.msra.mxu0 %v303
  %395 = vmatprep.subr.bf16.mxu0 0
  %396 = vmatpush1.bf16.msra.mxu0 %v302
  %397 = vmatprep.subr.bf16.mxu0 0
  %398 = vmatpush2.bf16.msra.mxu0 %v317
  %399 = vmatprep.subr.bf16.mxu0 0
  %400 = vmatpush2.bf16.msra.mxu0 %v316
  %401 = vmatprep.subr.bf16.mxu0 0
  %402 = vmatpush2.bf16.msra.mxu0 %v315
  %403 = vmatprep.subr.bf16.mxu0 0
  %404 = vmatpush2.bf16.msra.mxu0 %v314
  %405 = vmatprep.subr.bf16.mxu0 0
  %406 = vmatpush2.bf16.msra.mxu0 %v313
  %407 = vmatprep.subr.bf16.mxu0 0
  %408 = vmatpush2.bf16.msra.mxu0 %v312
  %409 = vmatprep.subr.bf16.mxu0 0
  %410 = vmatpush2.bf16.msra.mxu0 %v311
  %411 = vmatprep.subr.bf16.mxu0 0
  %412 = vmatpush2.bf16.msra.mxu0 %v310
  %413 = vmatprep.mubr.bf16.mxu0 %v141
  %414 = vmatmul.mubr.bf16.gmra.mxu0 %v140
  %v415 = vpop.f32.mrf.mxu0
  %v416 = vadd.f32 0.0, %v415
  %v417 = vpop.f32.mrf.mxu0
  %v418 = vpop.f32.mrf.mxu0
  %v419 = vadd.f32 0.0, %v418
  %v420 = vpop.f32.mrf.mxu0
  %421 = vmatprep.mubr.bf16.mxu0 %v146
  %422 = vmatmul.mubr.bf16.gmra.mxu0 %v145
  %v423 = vpop.f32.mrf.mxu0
  %v424 = vadd.f32 0.0, %v423
  %v425 = vpop.f32.mrf.mxu0
  %v426 = vpop.f32.mrf.mxu0
  %v427 = vadd.f32 0.0, %v426
  %v428 = vpop.f32.mrf.mxu0
  %429 = vdwg.mxu0
  %430 = vmatprep.subr.bf16.mxu0 0
  %431 = vmatpush1.bf16.msra.mxu0 %v325
  %432 = vmatprep.subr.bf16.mxu0 0
  %433 = vmatpush1.bf16.msra.mxu0 %v324
  %434 = vmatprep.subr.bf16.mxu0 0
  %435 = vmatpush1.bf16.msra.mxu0 %v323
  %436 = vmatprep.subr.bf16.mxu0 0
  %437 = vmatpush1.bf16.msra.mxu0 %v322
  %438 = vmatprep.subr.bf16.mxu0 0
  %439 = vmatpush1.bf16.msra.mxu0 %v321
  %440 = vmatprep.subr.bf16.mxu0 0
  %441 = vmatpush1.bf16.msra.mxu0 %v320
  %442 = vmatprep.subr.bf16.mxu0 0
  %443 = vmatpush1.bf16.msra.mxu0 %v319
  %444 = vmatprep.subr.bf16.mxu0 0
  %445 = vmatpush1.bf16.msra.mxu0 %v318
  %446 = vmatprep.subr.bf16.mxu0 0
  %447 = vmatpush2.bf16.msra.mxu0 %v333
  %448 = vmatprep.subr.bf16.mxu0 0
  %449 = vmatpush2.bf16.msra.mxu0 %v332
  %450 = vmatprep.subr.bf16.mxu0 0
  %451 = vmatpush2.bf16.msra.mxu0 %v331
  %452 = vmatprep.subr.bf16.mxu0 0
  %453 = vmatpush2.bf16.msra.mxu0 %v330
  %454 = vmatprep.subr.bf16.mxu0 0
  %455 = vmatpush2.bf16.msra.mxu0 %v329
  %456 = vmatprep.subr.bf16.mxu0 0
  %457 = vmatpush2.bf16.msra.mxu0 %v328
  %458 = vmatprep.subr.bf16.mxu0 0
  %459 = vmatpush2.bf16.msra.mxu0 %v327
  %460 = vmatprep.subr.bf16.mxu0 0
  %461 = vmatpush2.bf16.msra.mxu0 %v326
  %462 = vmatprep.mubr.bf16.mxu0 %v143
  %463 = vmatmul.mubr.bf16.gmra.mxu0 %v142
  %v464 = vpop.f32.mrf.mxu0
  %v465 = vadd.f32 %v416, %v464
  %v466 = vpop.f32.mrf.mxu0
  %v467 = vpop.f32.mrf.mxu0
  %v468 = vadd.f32 %v419, %v467
  %v469 = vpop.f32.mrf.mxu0
  %470 = vmatprep.mubr.bf16.mxu0 %v148
  %471 = vmatmul.mubr.bf16.gmra.mxu0 %v147
  %v472 = vpop.f32.mrf.mxu0
  %v473 = vadd.f32 %v424, %v472
  %v474 = vpop.f32.mrf.mxu0
  %v475 = vpop.f32.mrf.mxu0
  %v476 = vadd.f32 %v427, %v475
  %v477 = vpop.f32.mrf.mxu0
  %478 = vdwg.mxu0
  %479 = vmatprep.subr.bf16.mxu0 0
  %480 = vmatpush1.bf16.msra.mxu0 0
  %481 = vmatprep.subr.bf16.mxu0 0
  %482 = vmatpush1.bf16.msra.mxu0 0
  %483 = vmatprep.subr.bf16.mxu0 0
  %484 = vmatpush1.bf16.msra.mxu0 0
  %485 = vmatprep.subr.bf16.mxu0 0
  %486 = vmatpush1.bf16.msra.mxu0 0
  %487 = vmatprep.subr.bf16.mxu0 0
  %488 = vmatpush1.bf16.msra.mxu0 %v337
  %489 = vmatprep.subr.bf16.mxu0 0
  %490 = vmatpush1.bf16.msra.mxu0 %v336
  %491 = vmatprep.subr.bf16.mxu0 0
  %492 = vmatpush1.bf16.msra.mxu0 %v335
  %493 = vmatprep.subr.bf16.mxu0 0
  %494 = vmatpush1.bf16.msra.mxu0 %v334
  %495 = vmatprep.subr.bf16.mxu0 0
  %496 = vmatpush2.bf16.msra.mxu0 0
  %497 = vmatprep.subr.bf16.mxu0 0
  %498 = vmatpush2.bf16.msra.mxu0 0
  %499 = vmatprep.subr.bf16.mxu0 0
  %500 = vmatpush2.bf16.msra.mxu0 0
  %501 = vmatprep.subr.bf16.mxu0 0
  %502 = vmatpush2.bf16.msra.mxu0 0
  %503 = vmatprep.subr.bf16.mxu0 0
  %504 = vmatpush2.bf16.msra.mxu0 0
  %505 = vmatprep.subr.bf16.mxu0 0
  %506 = vmatpush2.bf16.msra.mxu0 0
  %507 = vmatprep.subr.bf16.mxu0 0
  %508 = vmatpush2.bf16.msra.mxu0 0
  %509 = vmatprep.subr.bf16.mxu0 0
  %510 = vmatpush2.bf16.msra.mxu0 0
  %511 = vmatprep.mubr.bf16.mxu0 0
  %512 = vmatmul.mubr.bf16.gmra.mxu0 %v376
  %v513 = vpop.f32.mrf.mxu0
  %v514 = vadd.f32 %v465, %v513
  %v515 = vpop.f32.mrf.mxu0
  %v516 = vpop.f32.mrf.mxu0
  %v517 = vadd.f32 %v468, %v516
  %v518 = vpop.f32.mrf.mxu0
  %519 = vmatprep.mubr.bf16.mxu0 0
  %520 = vmatmul.mubr.bf16.gmra.mxu0 %v379
  %v521 = vpop.f32.mrf.mxu0
  %v522 = vadd.f32 %v473, %v521
  %v523 = vpop.f32.mrf.mxu0
  %v524 = vpop.f32.mrf.mxu0
  %v525 = vadd.f32 %v476, %v524
  %v526 = vpop.f32.mrf.mxu0
  %527 = vdwg.mxu0
  %528 = vst.msk [vmem:[%s2] sm:$0xff] %vm374, %v514
  %529 = vst.msk [vmem:[%s2 + $0x8] sm:$0xff] %vm374, %v517
  %530 = vst.msk [vmem:[%s2 + $0x10] sm:$0xff] %vm374, %v522
  %531 = vst.msk [vmem:[%s2 + $0x18] sm:$0xff] %vm374, %v525
  // Predicated region
  $region10: #{_lambda_.41} parent=0 // pred_check
    _
  $region11: #{_lambda_.41} parent=0 // pred_check_branch
    %533 = sbr.rel (0) target = $region13
  $region12: #{_lambda_.41} parent=0 // pred_region
    _
  $region13: #{_lambda_.41} parent=0 // pred_fallthru
    _
  // Predicated region
  $region14: #{_lambda_.41} parent=0 // pred_check
    _
  $region15: #{_lambda_.41} parent=0 // pred_check_branch
    %535 = sbr.rel (0) target = $region17
  $region16: #{_lambda_.41} parent=0 // pred_region
    _
  $region17: #{_lambda_.41} parent=0 // pred_fallthru
    _

// kernel: _lambda_.44
$region0: #{_lambda_.44}
  #allocation0 [shape = 'u32[]', space=smem, size = 0x4, offset = 0x4, fixed_abs, tag = 'smem constant byte address 0x4 - core index']
  #allocation1 [shape = 'u32[144,128]{1,0:T(1,128)}', space=vmem, size = 0x12000, scoped, tag = 'internal scratch']
  %s0 = inlined_call_operand.vmem [shape: bf16[128,288], index: 0, kind: input, shape index: {}]
  %s1 = inlined_call_operand.vmem [shape: bf16[288,32], index: 1, kind: input, shape index: {}]
  %s2 = inlined_call_operand.vmem [shape: f32[128,32], index: 2, kind: output, shape index: {}]
  %s3 = sld [smem:[#allocation0]]
  $region18: #{_lambda_.44} parent=0
    _
  %s5 = ssub.s32 1, %s3
  %s6 = scalar_select 0, %s5, %s3
  // Predicated region
  $region2: #{_lambda_.44} parent=0 // pred_check
    _
  $region3: #{_lambda_.44} parent=0 // pred_check_branch
    %8 = sbr.rel (0) target = $region5
  $region4: #{_lambda_.44} parent=0 // pred_region
    _
  $region5: #{_lambda_.44} parent=0 // pred_fallthru
    _
  // Predicated region
  $region6: #{_lambda_.44} parent=0 // pred_check
    _
  $region7: #{_lambda_.44} parent=0 // pred_check_branch
    %10 = sbr.rel (0) target = $region9
  $region8: #{_lambda_.44} parent=0 // pred_region
    _
  $region9: #{_lambda_.44} parent=0 // pred_fallthru
    _
  %v12 = vld [vmem:[%s0] sm:$0xff]
  %v13 = vld [vmem:[%s0 + $0x8] sm:$0xf]
  %v14 = vld [vmem:[%s0 + $0xc] sm:$0xff]
  %v15 = vld [vmem:[%s0 + $0x14] sm:$0xf]
  %v16 = vld [vmem:[%s0 + $0x18] sm:$0xff]
  %v17 = vld [vmem:[%s0 + $0x20] sm:$0xf]
  %v18 = vld [vmem:[%s0 + $0x24] sm:$0xff]
  %v19 = vld [vmem:[%s0 + $0x2c] sm:$0xf]
  %v20 = vld [vmem:[%s0 + $0x30] sm:$0xff]
  %v21 = vld [vmem:[%s0 + $0x38] sm:$0xf]
  %v22 = vld [vmem:[%s0 + $0x3c] sm:$0xff]
  %v23 = vld [vmem:[%s0 + $0x44] sm:$0xf]
  %v24 = vld [vmem:[%s0 + $0x48] sm:$0xff]
  %v25 = vld [vmem:[%s0 + $0x50] sm:$0xf]
  %v26 = vld [vmem:[%s0 + $0x54] sm:$0xff]
  %v27 = vld [vmem:[%s0 + $0x5c] sm:$0xf]
  %v28 = vld [vmem:[%s0 + $0x60] sm:$0xff]
  %v29 = vld [vmem:[%s0 + $0x68] sm:$0xf]
  %v30 = vld [vmem:[%s0 + $0x6c] sm:$0xff]
  %v31 = vld [vmem:[%s0 + $0x74] sm:$0xf]
  %v32 = vld [vmem:[%s0 + $0x78] sm:$0xff]
  %v33 = vld [vmem:[%s0 + $0x80] sm:$0xf]
  %v34 = vld [vmem:[%s0 + $0x84] sm:$0xff]
  %v35 = vld [vmem:[%s0 + $0x8c] sm:$0xf]
  %v36 = vld [vmem:[%s0 + $0x90] sm:$0xff]
  %v37 = vld [vmem:[%s0 + $0x98] sm:$0xf]
  %v38 = vld [vmem:[%s0 + $0x9c] sm:$0xff]
  %v39 = vld [vmem:[%s0 + $0xa4] sm:$0xf]
  %v40 = vld [vmem:[%s0 + $0xa8] sm:$0xff]
  %v41 = vld [vmem:[%s0 + $0xb0] sm:$0xf]
  %v42 = vld [vmem:[%s0 + $0xb4] sm:$0xff]
  %v43 = vld [vmem:[%s0 + $0xbc] sm:$0xf]
  %v44 = vmax.bf16 %v12, 0
  %v45 = vmax.bf16 %v13, 0
  %v46 = vmax.bf16 %v14, 0
  %v47 = vmax.bf16 %v15, 0
  %v48 = vmax.bf16 %v16, 0
  %v49 = vmax.bf16 %v17, 0
  %v50 = vmax.bf16 %v18, 0
  %v51 = vmax.bf16 %v19, 0
  %v52 = vmax.bf16 %v20, 0
  %v53 = vmax.bf16 %v21, 0
  %v54 = vmax.bf16 %v22, 0
  %v55 = vmax.bf16 %v23, 0
  %v56 = vmax.bf16 %v24, 0
  %v57 = vmax.bf16 %v25, 0
  %v58 = vmax.bf16 %v26, 0
  %v59 = vmax.bf16 %v27, 0
  %v60 = vmax.bf16 %v28, 0
  %v61 = vmax.bf16 %v29, 0
  %v62 = vmax.bf16 %v30, 0
  %v63 = vmax.bf16 %v31, 0
  %v64 = vmax.bf16 %v32, 0
  %v65 = vmax.bf16 %v33, 0
  %v66 = vmax.bf16 %v34, 0
  %v67 = vmax.bf16 %v35, 0
  %v68 = vmax.bf16 %v36, 0
  %v69 = vmax.bf16 %v37, 0
  %v70 = vmax.bf16 %v38, 0
  %v71 = vmax.bf16 %v39, 0
  %v72 = vmax.bf16 %v40, 0
  %v73 = vmax.bf16 %v41, 0
  %v74 = vmax.bf16 %v42, 0
  %v75 = vmax.bf16 %v43, 0
  %v76 = vld [vmem:[%s1] sm:$0xf]
  %v77 = vld [vmem:[%s1 + $0x4] sm:$0xf]
  %v78 = vld [vmem:[%s1 + $0x8] sm:$0xf]
  %v79 = vld [vmem:[%s1 + $0xc] sm:$0xf]
  %v80 = vld [vmem:[%s1 + $0x10] sm:$0xf]
  %v81 = vld [vmem:[%s1 + $0x14] sm:$0xf]
  %v82 = vld [vmem:[%s1 + $0x18] sm:$0xf]
  %v83 = vld [vmem:[%s1 + $0x1c] sm:$0xf]
  %v84 = vld [vmem:[%s1 + $0x20] sm:$0xf]
  %v85 = vld [vmem:[%s1 + $0x24] sm:$0xf]
  %v86 = vld [vmem:[%s1 + $0x28] sm:$0xf]
  %v87 = vld [vmem:[%s1 + $0x2c] sm:$0xf]
  %v88 = vld [vmem:[%s1 + $0x30] sm:$0xf]
  %v89 = vld [vmem:[%s1 + $0x34] sm:$0xf]
  %v90 = vld [vmem:[%s1 + $0x38] sm:$0xf]
  %v91 = vld [vmem:[%s1 + $0x3c] sm:$0xf]
  %v92 = vld [vmem:[%s1 + $0x40] sm:$0xf]
  %v93 = vld [vmem:[%s1 + $0x44] sm:$0xf]
  %v94 = vld [vmem:[%s1 + $0x48] sm:$0xf]
  %v95 = vld [vmem:[%s1 + $0x4c] sm:$0xf]
  %v96 = vld [vmem:[%s1 + $0x50] sm:$0xf]
  %v97 = vld [vmem:[%s1 + $0x54] sm:$0xf]
  %v98 = vld [vmem:[%s1 + $0x58] sm:$0xf]
  %v99 = vld [vmem:[%s1 + $0x5c] sm:$0xf]
  %v100 = vld [vmem:[%s1 + $0x60] sm:$0xf]
  %v101 = vld [vmem:[%s1 + $0x64] sm:$0xf]
  %v102 = vld [vmem:[%s1 + $0x68] sm:$0xf]
  %v103 = vld [vmem:[%s1 + $0x6c] sm:$0xf]
  %v104 = vld [vmem:[%s1 + $0x70] sm:$0xf]
  %v105 = vld [vmem:[%s1 + $0x74] sm:$0xf]
  %v106 = vld [vmem:[%s1 + $0x78] sm:$0xf]
  %v107 = vld [vmem:[%s1 + $0x7c] sm:$0xf]
  %v108 = vld [vmem:[%s1 + $0x80] sm:$0xf]
  %v109 = vld [vmem:[%s1 + $0x84] sm:$0xf]
  %v110 = vld [vmem:[%s1 + $0x88] sm:$0xf]
  %v111 = vld [vmem:[%s1 + $0x8c] sm:$0xf]
  %v144 = vunpack.c.l.b16 %v44
  %v145 = vunpack.c.h.b16 %v44
  %v146 = vunpack.c.l.b16 %v45
  %v147 = vunpack.c.l.b16 %v46
  %v148 = vunpack.c.h.b16 %v46
  %v149 = vunpack.c.l.b16 %v47
  %v150 = vunpack.c.l.b16 %v48
  %v151 = vunpack.c.h.b16 %v48
  %v152 = vunpack.c.l.b16 %v49
  %v153 = vunpack.c.l.b16 %v50
  %v154 = vunpack.c.h.b16 %v50
  %v155 = vunpack.c.l.b16 %v51
  %v156 = vunpack.c.l.b16 %v52
  %v157 = vunpack.c.h.b16 %v52
  %v158 = vunpack.c.l.b16 %v53
  %v159 = vunpack.c.l.b16 %v54
  %v160 = vunpack.c.h.b16 %v54
  %v161 = vunpack.c.l.b16 %v55
  %v162 = vunpack.c.l.b16 %v56
  %v163 = vunpack.c.h.b16 %v56
  %v164 = vunpack.c.l.b16 %v57
  %v165 = vunpack.c.l.b16 %v58
  %v166 = vunpack.c.h.b16 %v58
  %v167 = vunpack.c.l.b16 %v59
  %v168 = vunpack.c.l.b16 %v60
  %v169 = vunpack.c.h.b16 %v60
  %v170 = vunpack.c.l.b16 %v61
  %v171 = vunpack.c.l.b16 %v62
  %v172 = vunpack.c.h.b16 %v62
  %v173 = vunpack.c.l.b16 %v63
  %v174 = vunpack.c.l.b16 %v64
  %v175 = vunpack.c.h.b16 %v64
  %v176 = vunpack.c.l.b16 %v65
  %v177 = vunpack.c.l.b16 %v66
  %v178 = vunpack.c.h.b16 %v66
  %v179 = vunpack.c.l.b16 %v67
  %v180 = vunpack.c.l.b16 %v68
  %v181 = vunpack.c.h.b16 %v68
  %v182 = vunpack.c.l.b16 %v69
  %v183 = vunpack.c.l.b16 %v70
  %v184 = vunpack.c.h.b16 %v70
  %v185 = vunpack.c.l.b16 %v71
  %v186 = vunpack.c.l.b16 %v72
  %v187 = vunpack.c.h.b16 %v72
  %v188 = vunpack.c.l.b16 %v73
  %v189 = vunpack.c.l.b16 %v74
  %v190 = vunpack.c.h.b16 %v74
  %v191 = vunpack.c.l.b16 %v75
  %v192 = vpack.c.b16 %v147, %v144
  %v193 = vpack.c.b16 %v148, %v145
  %v194 = vpack.c.b16 %v149, %v146
  %v195 = vpack.c.b16 %v153, %v150
  %v196 = vpack.c.b16 %v154, %v151
  %v197 = vpack.c.b16 %v155, %v152
  %v198 = vpack.c.b16 %v159, %v156
  %v199 = vpack.c.b16 %v160, %v157
  %v200 = vpack.c.b16 %v161, %v158
  %v201 = vpack.c.b16 %v165, %v162
  %v202 = vpack.c.b16 %v166, %v163
  %v203 = vpack.c.b16 %v167, %v164
  %v204 = vpack.c.b16 %v171, %v168
  %v205 = vpack.c.b16 %v172, %v169
  %v206 = vpack.c.b16 %v173, %v170
  %v207 = vpack.c.b16 %v177, %v174
  %v208 = vpack.c.b16 %v178, %v175
  %v209 = vpack.c.b16 %v179, %v176
  %v210 = vpack.c.b16 %v183, %v180
  %v211 = vpack.c.b16 %v184, %v181
  %v212 = vpack.c.b16 %v185, %v182
  %v213 = vpack.c.b16 %v189, %v186
  %v214 = vpack.c.b16 %v190, %v187
  %v215 = vpack.c.b16 %v191, %v188
  %v268 = vunpack.c.l.b16 %v76
  %v269 = vunpack.c.l.b16 %v77
  %v270 = vunpack.c.l.b16 %v78
  %v271 = vunpack.c.l.b16 %v79
  %v272 = vunpack.c.l.b16 %v80
  %v273 = vunpack.c.l.b16 %v81
  %v274 = vunpack.c.l.b16 %v82
  %v275 = vunpack.c.l.b16 %v83
  %v276 = vunpack.c.l.b16 %v84
  %v277 = vunpack.c.l.b16 %v85
  %v278 = vunpack.c.l.b16 %v86
  %v279 = vunpack.c.l.b16 %v87
  %v280 = vunpack.c.l.b16 %v88
  %v281 = vunpack.c.l.b16 %v89
  %v282 = vunpack.c.l.b16 %v90
  %v283 = vunpack.c.l.b16 %v91
  %v284 = vunpack.c.l.b16 %v92
  %v285 = vunpack.c.l.b16 %v93
  %v286 = vunpack.c.l.b16 %v94
  %v287 = vunpack.c.l.b16 %v95
  %v288 = vunpack.c.l.b16 %v96
  %v289 = vunpack.c.l.b16 %v97
  %v290 = vunpack.c.l.b16 %v98
  %v291 = vunpack.c.l.b16 %v99
  %v292 = vunpack.c.l.b16 %v100
  %v293 = vunpack.c.l.b16 %v101
  %v294 = vunpack.c.l.b16 %v102
  %v295 = vunpack.c.l.b16 %v103
  %v296 = vunpack.c.l.b16 %v104
  %v297 = vunpack.c.l.b16 %v105
  %v298 = vunpack.c.l.b16 %v106
  %v299 = vunpack.c.l.b16 %v107
  %v300 = vunpack.c.l.b16 %v108
  %v301 = vunpack.c.l.b16 %v109
  %v302 = vunpack.c.l.b16 %v110
  %v303 = vunpack.c.l.b16 %v111
  %v304 = vpack.c.b16 %v269, %v268
  %v305 = vpack.c.b16 %v271, %v270
  %v306 = vpack.c.b16 %v273, %v272
  %v307 = vpack.c.b16 %v275, %v274
  %v308 = vpack.c.b16 %v277, %v276
  %v309 = vpack.c.b16 %v279, %v278
  %v310 = vpack.c.b16 %v281, %v280
  %v311 = vpack.c.b16 %v283, %v282
  %v312 = vpack.c.b16 %v285, %v284
  %v313 = vpack.c.b16 %v287, %v286
  %v314 = vpack.c.b16 %v289, %v288
  %v315 = vpack.c.b16 %v291, %v290
  %v316 = vpack.c.b16 %v293, %v292
  %v317 = vpack.c.b16 %v295, %v294
  %v318 = vpack.c.b16 %v297, %v296
  %v319 = vpack.c.b16 %v299, %v298
  %v320 = vpack.c.b16 %v301, %v300
  %v321 = vpack.c.b16 %v303, %v302
  %vm340 = vcmask 261120
  %v342 = vsel %vm340, %v194, 0
  %v345 = vsel %vm340, %v197, 0
  %v348 = vsel %vm340, %v200, 0
  %v351 = vsel %vm340, %v203, 0
  %v354 = vsel %vm340, %v206, 0
  %v357 = vsel %vm340, %v209, 0
  %v360 = vsel %vm340, %v212, 0
  %v363 = vsel %vm340, %v215, 0
  %365 = vmatprep.subr.bf16.mxu0 0
  %366 = vmatpush1.bf16.msra.mxu0 %v311
  %367 = vmatprep.subr.bf16.mxu0 0
  %368 = vmatpush1.bf16.msra.mxu0 %v310
  %369 = vmatprep.subr.bf16.mxu0 0
  %370 = vmatpush1.bf16.msra.mxu0 %v309
  %371 = vmatprep.subr.bf16.mxu0 0
  %372 = vmatpush1.bf16.msra.mxu0 %v308
  %373 = vmatprep.subr.bf16.mxu0 0
  %374 = vmatpush1.bf16.msra.mxu0 %v307
  %375 = vmatprep.subr.bf16.mxu0 0
  %376 = vmatpush1.bf16.msra.mxu0 %v306
  %377 = vmatprep.subr.bf16.mxu0 0
  %378 = vmatpush1.bf16.msra.mxu0 %v305
  %379 = vmatprep.subr.bf16.mxu0 0
  %380 = vmatpush1.bf16.msra.mxu0 %v304
  %381 = vmatprep.subr.bf16.mxu0 0
  %382 = vmatpush2.bf16.msra.mxu0 %v319
  %383 = vmatprep.subr.bf16.mxu0 0
  %384 = vmatpush2.bf16.msra.mxu0 %v318
  %385 = vmatprep.subr.bf16.mxu0 0
  %386 = vmatpush2.bf16.msra.mxu0 %v317
  %387 = vmatprep.subr.bf16.mxu0 0
  %388 = vmatpush2.bf16.msra.mxu0 %v316
  %389 = vmatprep.subr.bf16.mxu0 0
  %390 = vmatpush2.bf16.msra.mxu0 %v315
  %391 = vmatprep.subr.bf16.mxu0 0
  %392 = vmatpush2.bf16.msra.mxu0 %v314
  %393 = vmatprep.subr.bf16.mxu0 0
  %394 = vmatpush2.bf16.msra.mxu0 %v313
  %395 = vmatprep.subr.bf16.mxu0 0
  %396 = vmatpush2.bf16.msra.mxu0 %v312
  %397 = vmatprep.mubr.bf16.mxu0 %v193
  %398 = vmatmul.mubr.bf16.gmra.mxu0 %v192
  %v399 = vpop.f32.mrf.mxu0
  %v400 = vadd.f32 0.0, %v399
  %v401 = vpop.f32.mrf.mxu0
  %v402 = vpop.f32.mrf.mxu0
  %v403 = vadd.f32 0.0, %v402
  %v404 = vpop.f32.mrf.mxu0
  %405 = vmatprep.mubr.bf16.mxu0 %v196
  %406 = vmatmul.mubr.bf16.gmra.mxu0 %v195
  %v407 = vpop.f32.mrf.mxu0
  %v408 = vadd.f32 0.0, %v407
  %v409 = vpop.f32.mrf.mxu0
  %v410 = vpop.f32.mrf.mxu0
  %v411 = vadd.f32 0.0, %v410
  %v412 = vpop.f32.mrf.mxu0
  %413 = vmatprep.mubr.bf16.mxu0 %v199
  %414 = vmatmul.mubr.bf16.gmra.mxu0 %v198
  %v415 = vpop.f32.mrf.mxu0
  %v416 = vadd.f32 0.0, %v415
  %v417 = vpop.f32.mrf.mxu0
  %v418 = vpop.f32.mrf.mxu0
  %v419 = vadd.f32 0.0, %v418
  %v420 = vpop.f32.mrf.mxu0
  %421 = vmatprep.mubr.bf16.mxu0 %v202
  %422 = vmatmul.mubr.bf16.gmra.mxu0 %v201
  %v423 = vpop.f32.mrf.mxu0
  %v424 = vadd.f32 0.0, %v423
  %v425 = vpop.f32.mrf.mxu0
  %v426 = vpop.f32.mrf.mxu0
  %v427 = vadd.f32 0.0, %v426
  %v428 = vpop.f32.mrf.mxu0
  %429 = vmatprep.mubr.bf16.mxu0 %v205
  %430 = vmatmul.mubr.bf16.gmra.mxu0 %v204
  %v431 = vpop.f32.mrf.mxu0
  %v432 = vadd.f32 0.0, %v431
  %v433 = vpop.f32.mrf.mxu0
  %v434 = vpop.f32.mrf.mxu0
  %v435 = vadd.f32 0.0, %v434
  %v436 = vpop.f32.mrf.mxu0
  %437 = vmatprep.mubr.bf16.mxu0 %v208
  %438 = vmatmul.mubr.bf16.gmra.mxu0 %v207
  %v439 = vpop.f32.mrf.mxu0
  %v440 = vadd.f32 0.0, %v439
  %v441 = vpop.f32.mrf.mxu0
  %v442 = vpop.f32.mrf.mxu0
  %v443 = vadd.f32 0.0, %v442
  %v444 = vpop.f32.mrf.mxu0
  %445 = vmatprep.mubr.bf16.mxu0 %v211
  %446 = vmatmul.mubr.bf16.gmra.mxu0 %v210
  %v447 = vpop.f32.mrf.mxu0
  %v448 = vadd.f32 0.0, %v447
  %v449 = vpop.f32.mrf.mxu0
  %v450 = vpop.f32.mrf.mxu0
  %v451 = vadd.f32 0.0, %v450
  %v452 = vpop.f32.mrf.mxu0
  %453 = vmatprep.mubr.bf16.mxu0 %v214
  %454 = vmatmul.mubr.bf16.gmra.mxu0 %v213
  %v455 = vpop.f32.mrf.mxu0
  %v456 = vadd.f32 0.0, %v455
  %v457 = vpop.f32.mrf.mxu0
  %v458 = vpop.f32.mrf.mxu0
  %v459 = vadd.f32 0.0, %v458
  %v460 = vpop.f32.mrf.mxu0
  %461 = vdwg.mxu0
  %462 = vmatprep.subr.bf16.mxu0 0
  %463 = vmatpush1.bf16.msra.mxu0 0
  %464 = vmatprep.subr.bf16.mxu0 0
  %465 = vmatpush1.bf16.msra.mxu0 0
  %466 = vmatprep.subr.bf16.mxu0 0
  %467 = vmatpush1.bf16.msra.mxu0 0
  %468 = vmatprep.subr.bf16.mxu0 0
  %469 = vmatpush1.bf16.msra.mxu0 0
  %470 = vmatprep.subr.bf16.mxu0 0
  %471 = vmatpush1.bf16.msra.mxu0 0
  %472 = vmatprep.subr.bf16.mxu0 0
  %473 = vmatpush1.bf16.msra.mxu0 0
  %474 = vmatprep.subr.bf16.mxu0 0
  %475 = vmatpush1.bf16.msra.mxu0 %v321
  %476 = vmatprep.subr.bf16.mxu0 0
  %477 = vmatpush1.bf16.msra.mxu0 %v320
  %478 = vmatprep.subr.bf16.mxu0 0
  %479 = vmatpush2.bf16.msra.mxu0 0
  %480 = vmatprep.subr.bf16.mxu0 0
  %481 = vmatpush2.bf16.msra.mxu0 0
  %482 = vmatprep.subr.bf16.mxu0 0
  %483 = vmatpush2.bf16.msra.mxu0 0
  %484 = vmatprep.subr.bf16.mxu0 0
  %485 = vmatpush2.bf16.msra.mxu0 0
  %486 = vmatprep.subr.bf16.mxu0 0
  %487 = vmatpush2.bf16.msra.mxu0 0
  %488 = vmatprep.subr.bf16.mxu0 0
  %489 = vmatpush2.bf16.msra.mxu0 0
  %490 = vmatprep.subr.bf16.mxu0 0
  %491 = vmatpush2.bf16.msra.mxu0 0
  %492 = vmatprep.subr.bf16.mxu0 0
  %493 = vmatpush2.bf16.msra.mxu0 0
  %494 = vmatprep.mubr.bf16.mxu0 0
  %495 = vmatmul.mubr.bf16.gmra.mxu0 %v342
  %v496 = vpop.f32.mrf.mxu0
  %v497 = vadd.f32 %v400, %v496
  %v498 = vpop.f32.mrf.mxu0
  %v499 = vpop.f32.mrf.mxu0
  %v500 = vadd.f32 %v403, %v499
  %v501 = vpop.f32.mrf.mxu0
  %502 = vmatprep.mubr.bf16.mxu0 0
  %503 = vmatmul.mubr.bf16.gmra.mxu0 %v345
  %v504 = vpop.f32.mrf.mxu0
  %v505 = vadd.f32 %v408, %v504
  %v506 = vpop.f32.mrf.mxu0
  %v507 = vpop.f32.mrf.mxu0
  %v508 = vadd.f32 %v411, %v507
  %v509 = vpop.f32.mrf.mxu0
  %510 = vmatprep.mubr.bf16.mxu0 0
  %511 = vmatmul.mubr.bf16.gmra.mxu0 %v348
  %v512 = vpop.f32.mrf.mxu0
  %v513 = vadd.f32 %v416, %v512
  %v514 = vpop.f32.mrf.mxu0
  %v515 = vpop.f32.mrf.mxu0
  %v516 = vadd.f32 %v419, %v515
  %v517 = vpop.f32.mrf.mxu0
  %518 = vmatprep.mubr.bf16.mxu0 0
  %519 = vmatmul.mubr.bf16.gmra.mxu0 %v351
  %v520 = vpop.f32.mrf.mxu0
  %v521 = vadd.f32 %v424, %v520
  %v522 = vpop.f32.mrf.mxu0
  %v523 = vpop.f32.mrf.mxu0
  %v524 = vadd.f32 %v427, %v523
  %v525 = vpop.f32.mrf.mxu0
  %526 = vmatprep.mubr.bf16.mxu0 0
  %527 = vmatmul.mubr.bf16.gmra.mxu0 %v354
  %v528 = vpop.f32.mrf.mxu0
  %v529 = vadd.f32 %v432, %v528
  %v530 = vpop.f32.mrf.mxu0
  %v531 = vpop.f32.mrf.mxu0
  %v532 = vadd.f32 %v435, %v531
  %v533 = vpop.f32.mrf.mxu0
  %534 = vmatprep.mubr.bf16.mxu0 0
  %535 = vmatmul.mubr.bf16.gmra.mxu0 %v357
  %v536 = vpop.f32.mrf.mxu0
  %v537 = vadd.f32 %v440, %v536
  %v538 = vpop.f32.mrf.mxu0
  %v539 = vpop.f32.mrf.mxu0
  %v540 = vadd.f32 %v443, %v539
  %v541 = vpop.f32.mrf.mxu0
  %542 = vmatprep.mubr.bf16.mxu0 0
  %543 = vmatmul.mubr.bf16.gmra.mxu0 %v360
  %v544 = vpop.f32.mrf.mxu0
  %v545 = vadd.f32 %v448, %v544
  %v546 = vpop.f32.mrf.mxu0
  %v547 = vpop.f32.mrf.mxu0
  %v548 = vadd.f32 %v451, %v547
  %v549 = vpop.f32.mrf.mxu0
  %550 = vmatprep.mubr.bf16.mxu0 0
  %551 = vmatmul.mubr.bf16.gmra.mxu0 %v363
  %v552 = vpop.f32.mrf.mxu0
  %v553 = vadd.f32 %v456, %v552
  %v554 = vpop.f32.mrf.mxu0
  %v555 = vpop.f32.mrf.mxu0
  %v556 = vadd.f32 %v459, %v555
  %v557 = vpop.f32.mrf.mxu0
  %558 = vdwg.mxu0
  %559 = vst.msk [vmem:[%s2] sm:$0xff] %vm340, %v497
  %560 = vst.msk [vmem:[%s2 + $0x8] sm:$0xff] %vm340, %v500
  %561 = vst.msk [vmem:[%s2 + $0x10] sm:$0xff] %vm340, %v505
  %562 = vst.msk [vmem:[%s2 + $0x18] sm:$0xff] %vm340, %v508
  %563 = vst.msk [vmem:[%s2 + $0x20] sm:$0xff] %vm340, %v513
  %564 = vst.msk [vmem:[%s2 + $0x28] sm:$0xff] %vm340, %v516
  %565 = vst.msk [vmem:[%s2 + $0x30] sm:$0xff] %vm340, %v521
  %566 = vst.msk [vmem:[%s2 + $0x38] sm:$0xff] %vm340, %v524
  %567 = vst.msk [vmem:[%s2 + $0x40] sm:$0xff] %vm340, %v529
  %568 = vst.msk [vmem:[%s2 + $0x48] sm:$0xff] %vm340, %v532
  %569 = vst.msk [vmem:[%s2 + $0x50] sm:$0xff] %vm340, %v537
  %570 = vst.msk [vmem:[%s2 + $0x58] sm:$0xff] %vm340, %v540
  %571 = vst.msk [vmem:[%s2 + $0x60] sm:$0xff] %vm340, %v545
  %572 = vst.msk [vmem:[%s2 + $0x68] sm:$0xff] %vm340, %v548
  %573 = vst.msk [vmem:[%s2 + $0x70] sm:$0xff] %vm340, %v553
  %574 = vst.msk [vmem:[%s2 + $0x78] sm:$0xff] %vm340, %v556
  // Predicated region
  $region10: #{_lambda_.44} parent=0 // pred_check
    _
  $region11: #{_lambda_.44} parent=0 // pred_check_branch
    %576 = sbr.rel (0) target = $region13
  $region12: #{_lambda_.44} parent=0 // pred_region
    _
  $region13: #{_lambda_.44} parent=0 // pred_fallthru
    _
  // Predicated region
  $region14: #{_lambda_.44} parent=0 // pred_check
    _
  $region15: #{_lambda_.44} parent=0 // pred_check_branch
    %578 = sbr.rel (0) target = $region17
  $region16: #{_lambda_.44} parent=0 // pred_region
    _
  $region17: #{_lambda_.44} parent=0 // pred_fallthru
    _

// kernel: _lambda_.45
$region0: #{_lambda_.45}
  #allocation0 [shape = 'u32[]', space=smem, size = 0x4, offset = 0x4, fixed_abs, tag = 'smem constant byte address 0x4 - core index']
  #allocation1 [shape = 'u32[144,128]{1,0:T(1,128)}', space=vmem, size = 0x12000, scoped, tag = 'internal scratch']
  %s0 = inlined_call_operand.vmem [shape: f32[32,128], index: 0, kind: input, shape index: {}]
  %s1 = inlined_call_operand.vmem [shape: f32[1,128], index: 1, kind: output, shape index: {0}]
  %s2 = inlined_call_operand.vmem [shape: f32[1,128], index: 2, kind: output, shape index: {1}]
  %3 = xla_tuple %s1, %s2
  %s4 = sld [smem:[#allocation0]]
  $region26: #{_lambda_.45} parent=0
    _
  %s6 = ssub.s32 1, %s4
  %s7 = scalar_select 0, %s6, %s4
  // Predicated region
  $region2: #{_lambda_.45} parent=0 // pred_check
    _
  $region3: #{_lambda_.45} parent=0 // pred_check_branch
    %9 = sbr.rel (0) target = $region5
  $region4: #{_lambda_.45} parent=0 // pred_region
    _
  $region5: #{_lambda_.45} parent=0 // pred_fallthru
    _
  %p10 = scmp.eq.s32.totalorder 0, 0
  // Predicated region
  $region6: #{_lambda_.45} parent=0 // pred_check
    %p11 = pneg %p10
  $region7: #{_lambda_.45} parent=0 // pred_check_branch
    %13 = sbr.rel (%p11) target = $region9
  $region8: #{_lambda_.45} parent=0 // pred_region
    %14 = vst [vmem:[%s1] sm:$0x1] 0.0
    %15 = vst [vmem:[%s2] sm:$0x1] 0.0
  $region9: #{_lambda_.45} parent=0 // pred_fallthru
    _
  %v16 = vld [vmem:[%s0] sm:$0xff]
  %v17 = vld [vmem:[%s0 + $0x8] sm:$0xff]
  %v18 = vld [vmem:[%s0 + $0x10] sm:$0xff]
  %v19 = vld [vmem:[%s0 + $0x18] sm:$0xff]
  %v20 = vld [vmem:[%s1] sm:$0x1]
  %v21 = vadd.f32 %v16, %v17
  %v22 = vadd.f32 %v21, %v18
  %v23 = vadd.f32 %v22, %v19
  %v24 = vrot.slane %v23, 4
  %v25 = vadd.f32 %v23, %v24
  %v26 = vrot.slane %v25, 2
  %v27 = vadd.f32 %v25, %v26
  %v28 = vrot.slane %v27, 1
  %v29 = vadd.f32 %v27, %v28
  %v30 = vadd.f32 %v20, %v29
  %31 = vst [vmem:[%s1] sm:$0x1] %v30
  %v32 = vld [vmem:[%s2] sm:$0x1]
  %v33 = vmul.f32 %v16, %v16
  %v34 = vmul.f32 %v17, %v17
  %v35 = vmul.f32 %v18, %v18
  %v36 = vmul.f32 %v19, %v19
  %v37 = vadd.f32 %v33, %v34
  %v38 = vadd.f32 %v37, %v35
  %v39 = vadd.f32 %v38, %v36
  %v40 = vrot.slane %v39, 4
  %v41 = vadd.f32 %v39, %v40
  %v42 = vrot.slane %v41, 2
  %v43 = vadd.f32 %v41, %v42
  %v44 = vrot.slane %v43, 1
  %v45 = vadd.f32 %v43, %v44
  %v46 = vadd.f32 %v32, %v45
  %47 = vst [vmem:[%s2] sm:$0x1] %v46
  // Predicated region
  $region10: #{_lambda_.45} parent=0 // pred_check
    _
  $region11: #{_lambda_.45} parent=0 // pred_check_branch
    %49 = sbr.rel (0) target = $region13
  $region12: #{_lambda_.45} parent=0 // pred_region
    _
  $region13: #{_lambda_.45} parent=0 // pred_fallthru
    _
  // Predicated region
  $region14: #{_lambda_.45} parent=0 // pred_check
    _
  $region15: #{_lambda_.45} parent=0 // pred_check_branch
    %51 = sbr.rel (0) target = $region17
  $region16: #{_lambda_.45} parent=0 // pred_region
    _
  $region17: #{_lambda_.45} parent=0 // pred_fallthru
    _
  // Predicated region
  $region18: #{_lambda_.45} parent=0 // pred_check
    _
  $region19: #{_lambda_.45} parent=0 // pred_check_branch
    %53 = sbr.rel (0) target = $region21
  $region20: #{_lambda_.45} parent=0 // pred_region
    _
  $region21: #{_lambda_.45} parent=0 // pred_fallthru
    _
  // Predicated region
  $region22: #{_lambda_.45} parent=0 // pred_check
    _
  $region23: #{_lambda_.45} parent=0 // pred_check_branch
    %55 = sbr.rel (0) target = $region25
  $region24: #{_lambda_.45} parent=0 // pred_region
    _
  $region25: #{_lambda_.45} parent=0 // pred_fallthru
    _

// kernel: tile.133
$region0: #{tile.133}
  #allocation0 [shape = 's32[1]{0}', space=sflag, size = 0x4, scoped, tag = 'scoped memory for tile.133']
  %s0 = inlined_call_operand.vmem [shape: f32[8], index: 0, kind: input, shape index: {}]
  %s1 = inlined_call_operand.vmem [shape: f32[16,8], index: 1, kind: output, shape index: {}]
  // Predicated region
  $region2: #{tile.133} parent=0 // pred_check
    _
  $region3: #{tile.133} parent=0 // pred_check_branch
    %3 = sbr.rel (0) target = $region5
  $region4: #{tile.133} parent=0 // pred_region
    _
  $region5: #{tile.133} parent=0 // pred_fallthru
    _
  %v4 = vld [vmem:[%s0] ss:$0 sm:$0xff]
  %5 = vst [vmem:[%s1] sm:$0xff] %v4
  %s6 = scalar_lea.vmem %s1, 8
  %7 = vst [vmem:[%s6] sm:$0xff] %v4

// kernel: tile.134
$region0: #{tile.134}
  %s0 = inlined_call_operand.vmem [shape: f32[16,8], index: 0, kind: input, shape index: {}]
  %s1 = inlined_call_operand.vmem [shape: f32[1,128], index: 1, kind: output, shape index: {}]
  $region1: #{tile.134} parent=0
    #allocation0 [shape = 'u8[4096]{0}', space=vmem, size = 0x1000, scoped, tag = 'scoped mem for output reshape']
    %v2 = vld [vmem:[%s0] sm:$0x1]
    %vm3 = vcmask 64512
    %4 = vst.msk [vmem:[#allocation0] sm:$0x1] %vm3, %v2
    %s5 = scalar_lea.vmem %s0, 15
    %v6 = vld [vmem:[%s5] sm:$0x1]
    %7 = vrot.lane.b32.xlu0 %v6, 120
    %v8 = vpop.permute.xlu0 %7
    %vm9 = vcmask 1048512
    %10 = vst.msk [vmem:[#allocation0] sm:$0x1] %vm9, %v8
    %s11 = scalar_lea.vmem %s0, 14
    %v12 = vld [vmem:[%s11] sm:$0x1]
    %13 = vrot.lane.b32.xlu0 %v12, 112
    %v14 = vpop.permute.xlu0 %13
    %vm15 = vcmask 982912
    %16 = vst.msk [vmem:[#allocation0] sm:$0x1] %vm15, %v14
    %s17 = scalar_lea.vmem %s0, 13
    %v18 = vld [vmem:[%s17] sm:$0x1]
    %19 = vrot.lane.b32.xlu0 %v18, 104
    %v20 = vpop.permute.xlu0 %19
    %vm21 = vcmask 917312
    %22 = vst.msk [vmem:[#allocation0] sm:$0x1] %vm21, %v20
    %s23 = scalar_lea.vmem %s0, 12
    %v24 = vld [vmem:[%s23] sm:$0x1]
    %25 = vrot.lane.b32.xlu0 %v24, 96
    %v26 = vpop.permute.xlu0 %25
    %vm27 = vcmask 851712
    %28 = vst.msk [vmem:[#allocation0] sm:$0x1] %vm27, %v26
    %s29 = scalar_lea.vmem %s0, 11
    %v30 = vld [vmem:[%s29] sm:$0x1]
    %31 = vrot.lane.b32.xlu0 %v30, 88
    %v32 = vpop.permute.xlu0 %31
    %vm33 = vcmask 786112
    %34 = vst.msk [vmem:[#allocation0] sm:$0x1] %vm33, %v32
    %s35 = scalar_lea.vmem %s0, 10
    %v36 = vld [vmem:[%s35] sm:$0x1]
    %37 = vrot.lane.b32.xlu0 %v36, 80
    %v38 = vpop.permute.xlu0 %37
    %vm39 = vcmask 720512
    %40 = vst.msk [vmem:[#allocation0] sm:$0x1] %vm39, %v38
    %s41 = scalar_lea.vmem %s0, 9
    %v42 = vld [vmem:[%s41] sm:$0x1]
    %43 = vrot.lane.b32.xlu0 %v42, 72
    %v44 = vpop.permute.xlu0 %43
    %vm45 = vcmask 654912
    %46 = vst.msk [vmem:[#allocation0] sm:$0x1] %vm45, %v44
    %s47 = scalar_lea.vmem %s0, 8
    %v48 = vld [vmem:[%s47] sm:$0x1]
    %49 = vrot.lane.b32.xlu0 %v48, 64
    %v50 = vpop.permute.xlu0 %49
    %vm51 = vcmask 589312
    %52 = vst.msk [vmem:[#allocation0] sm:$0x1] %vm51, %v50
    %s53 = scalar_lea.vmem %s0, 7
    %v54 = vld [vmem:[%s53] sm:$0x1]
    %55 = vrot.lane.b32.xlu0 %v54, 56
    %v56 = vpop.permute.xlu0 %55
    %vm57 = vcmask 523712
    %58 = vst.msk [vmem:[#allocation0] sm:$0x1] %vm57, %v56
    %s59 = scalar_lea.vmem %s0, 6
    %v60 = vld [vmem:[%s59] sm:$0x1]
    %61 = vrot.lane.b32.xlu0 %v60, 48
    %v62 = vpop.permute.xlu0 %61
    %vm63 = vcmask 458112
    %64 = vst.msk [vmem:[#allocation0] sm:$0x1] %vm63, %v62
    %s65 = scalar_lea.vmem %s0, 5
    %v66 = vld [vmem:[%s65] sm:$0x1]
    %67 = vrot.lane.b32.xlu0 %v66, 40
    %v68 = vpop.permute.xlu0 %67
    %vm69 = vcmask 392512
    %70 = vst.msk [vmem:[#allocation0] sm:$0x1] %vm69, %v68
    %s71 = scalar_lea.vmem %s0, 4
    %v72 = vld [vmem:[%s71] sm:$0x1]
    %73 = vrot.lane.b32.xlu0 %v72, 32
    %v74 = vpop.permute.xlu0 %73
    %vm75 = vcmask 326912
    %76 = vst.msk [vmem:[#allocation0] sm:$0x1] %vm75, %v74
    %s77 = scalar_lea.vmem %s0, 3
    %v78 = vld [vmem:[%s77] sm:$0x1]
    %79 = vrot.lane.b32.xlu0 %v78, 24
    %v80 = vpop.permute.xlu0 %79
    %vm81 = vcmask 261312
    %82 = vst.msk [vmem:[#allocation0] sm:$0x1] %vm81, %v80
    %s83 = scalar_lea.vmem %s0, 2
    %v84 = vld [vmem:[%s83] sm:$0x1]
    %85 = vrot.lane.b32.xlu0 %v84, 16
    %v86 = vpop.permute.xlu0 %85
    %vm87 = vcmask 195712
    %88 = vst.msk [vmem:[#allocation0] sm:$0x1] %vm87, %v86
    %s89 = scalar_lea.vmem %s0, 1
    %v90 = vld [vmem:[%s89] sm:$0x1]
    %91 = vrot.lane.b32.xlu0 %v90, 8
    %v92 = vpop.permute.xlu0 %91
    %vm93 = vcmask 130112
    %94 = vst.msk [vmem:[#allocation0] sm:$0x1] %vm93, %v92
    %s96 = sshll.u32 1, 1
    %s97 = ssub.s32 %s96, 1
    %v99 = vld [vmem:[#allocation0] sm:%s97]
    %s100 = sshll.u32 1, 1
    %s101 = ssub.s32 %s100, 1
    %102 = vst [vmem:[%s1] sm:%s101] %v99

// kernel: _lambda_.46
$region0: #{_lambda_.46}
  #allocation0 [shape = 'u32[]', space=smem, size = 0x4, offset = 0x4, fixed_abs, tag = 'smem constant byte address 0x4 - core index']
  #allocation1 [shape = 'u32[144,128]{1,0:T(1,128)}', space=vmem, size = 0x12000, scoped, tag = 'internal scratch']
  %s0 = inlined_call_operand.vmem [shape: f32[32,128], index: 0, kind: input, shape index: {}]
  %s1 = inlined_call_operand.vmem [shape: f32[1,128], index: 1, kind: input, shape index: {}]
  %s2 = inlined_call_operand.vmem [shape: f32[1,128], index: 2, kind: input, shape index: {}]
  %s3 = inlined_call_operand.vmem [shape: f32[32,128], index: 3, kind: output, shape index: {}]
  %s4 = sld [smem:[#allocation0]]
  $region22: #{_lambda_.46} parent=0
    _
  %s6 = ssub.s32 1, %s4
  %s7 = scalar_select 0, %s6, %s4
  // Predicated region
  $region2: #{_lambda_.46} parent=0 // pred_check
    _
  $region3: #{_lambda_.46} parent=0 // pred_check_branch
    %9 = sbr.rel (0) target = $region5
  $region4: #{_lambda_.46} parent=0 // pred_region
    _
  $region5: #{_lambda_.46} parent=0 // pred_fallthru
    _
  // Predicated region
  $region6: #{_lambda_.46} parent=0 // pred_check
    _
  $region7: #{_lambda_.46} parent=0 // pred_check_branch
    %11 = sbr.rel (0) target = $region9
  $region8: #{_lambda_.46} parent=0 // pred_region
    _
  $region9: #{_lambda_.46} parent=0 // pred_fallthru
    _
  // Predicated region
  $region10: #{_lambda_.46} parent=0 // pred_check
    _
  $region11: #{_lambda_.46} parent=0 // pred_check_branch
    %13 = sbr.rel (0) target = $region13
  $region12: #{_lambda_.46} parent=0 // pred_region
    _
  $region13: #{_lambda_.46} parent=0 // pred_fallthru
    _
  %v14 = vld [vmem:[%s0] sm:$0xff]
  %v15 = vld [vmem:[%s0 + $0x8] sm:$0xff]
  %v16 = vld [vmem:[%s0 + $0x10] sm:$0xff]
  %v17 = vld [vmem:[%s0 + $0x18] sm:$0xff]
  %v18 = vld [vmem:[%s1] sm:$0x1]
  %v20 = vlaneseq
  %v21 = vshrl.u32 %v20, 7
  %v22 = vsub.s32 0, %v21
  %v23 = vrot.slane %v18, %v22
  %v25 = vmul.f32 %v14, %v23
  %v26 = vmul.f32 %v15, %v23
  %v27 = vmul.f32 %v16, %v23
  %v28 = vmul.f32 %v17, %v23
  %v29 = vld [vmem:[%s2] sm:$0x1]
  %v31 = vlaneseq
  %v32 = vshrl.u32 %v31, 7
  %v33 = vsub.s32 0, %v32
  %v34 = vrot.slane %v29, %v33
  %v36 = vadd.f32 %v25, %v34
  %v37 = vadd.f32 %v26, %v34
  %v38 = vadd.f32 %v27, %v34
  %v39 = vadd.f32 %v28, %v34
  %40 = vst [vmem:[%s3] sm:$0xff] %v36
  %41 = vst [vmem:[%s3 + $0x8] sm:$0xff] %v37
  %42 = vst [vmem:[%s3 + $0x10] sm:$0xff] %v38
  %43 = vst [vmem:[%s3 + $0x18] sm:$0xff] %v39
  // Predicated region
  $region14: #{_lambda_.46} parent=0 // pred_check
    _
  $region15: #{_lambda_.46} parent=0 // pred_check_branch
    %45 = sbr.rel (0) target = $region17
  $region16: #{_lambda_.46} parent=0 // pred_region
    _
  $region17: #{_lambda_.46} parent=0 // pred_fallthru
    _
  // Predicated region
  $region18: #{_lambda_.46} parent=0 // pred_check
    _
  $region19: #{_lambda_.46} parent=0 // pred_check_branch
    %47 = sbr.rel (0) target = $region21
  $region20: #{_lambda_.46} parent=0 // pred_region
    _
  $region21: #{_lambda_.46} parent=0 // pred_fallthru
    _

// kernel: _lambda_.47
$region0: #{_lambda_.47}
  #allocation0 [shape = 'u32[]', space=smem, size = 0x4, offset = 0x4, fixed_abs, tag = 'smem constant byte address 0x4 - core index']
  #allocation1 [shape = 'u32[144,128]{1,0:T(1,128)}', space=vmem, size = 0x12000, scoped, tag = 'internal scratch']
  %s0 = inlined_call_operand.vmem [shape: bf16[512,144], index: 0, kind: input, shape index: {}]
  %s1 = inlined_call_operand.vmem [shape: bf16[144,12], index: 1, kind: input, shape index: {}]
  %s2 = inlined_call_operand.vmem [shape: f32[1,12], index: 2, kind: input, shape index: {}]
  %s3 = inlined_call_operand.vmem [shape: f32[512,12], index: 3, kind: output, shape index: {}]
  %s4 = sld [smem:[#allocation0]]
  $region45: #{_lambda_.47} parent=0
    _
  %s6 = ssub.s32 1, %s4
  %s7 = scalar_select 0, %s6, %s4
  loop: start=0, step=1, limit=4
  $region2: #{_lambda_.47} parent=0 // loop_pre_header
    _
  $region3: #{_lambda_.47} parent=0 // loop_header
    %s9 = sphi 0, %s13
    %p10 = scmp.ge.s32.totalorder %s9, 4
    %s16 = sphi 0, %s28
    %s17 = sphi 0, %s24
    %s18 = sphi 0, %s16
    %s19 = sphi 0, %s17
    %s20 = sphi 0, %s18
    %s21 = sphi 0, %s19
    %s31 = sphi 0, %s33
    %s34 = sphi 0, %s31
    %s35 = sphi 0, %s34
    %s51 = sphi 0, %s35
    %s57 = sphi 0, %s59
    %s60 = sphi 0, %s57
    %s61 = sphi 0, %s60
    %s77 = sphi 0, %s61
    %s83 = sphi 0, %s85
    %s86 = sphi 0, %s83
    %s87 = sphi 0, %s86
    %s103 = sphi 0, %s87
    %s111 = sphi 0, %s113
    %s114 = sphi 0, %s111
    %s115 = sphi 0, %s114
    %s131 = sphi 0, %s115
  $region4: #{_lambda_.47} parent=0 // loop_header_branch
    %12 = sbr.rel (%p10) target = $region8
  $region5: #{_lambda_.47} parent=0 // loop_body
    %s14 = ssub.s32 %s9, 1
    %s15 = ssub.s32 %s9, 2
    %s22 = sadd.s32 1, %s17
    %p23 = scmp.ge.s32.totalorder %s22, 1
    %s24 = scalar_select %p23, 0, %s22
    %s25 = sadd.s32 1, %s16
    %s26 = scalar_select %p23, %s25, %s16
    %p27 = scmp.ge.s32.totalorder %s26, 2
    %s28 = scalar_select %p27, 0, %s26
    %s29 = ssub.s32 %s16, %s28
    %p30 = scmp.eq.s32.totalorder %s29, 0
    %s32 = sadd.s32 %s31, 1
    %s33 = scalar_select %p30, %s31, %s32
    %p36 = pneg %p30
    %p37 = scmp.eq.s32.totalorder %s9, 1
    %p38 = por %p36, %p37
    %p39 = scmp.ne.s32.totalorder %s31, %s34
    %p40 = scmp.eq.s32.totalorder %s9, 0
    %p41 = por %p39, %p40
    %p42 = scmp.ne.s32.totalorder %s31, %s34
    %p43 = scmp.eq.s32.totalorder %s14, 1
    %p44 = por %p42, %p43
    %p45 = scmp.ne.s32.totalorder %s34, %s35
    %p46 = scmp.eq.s32.totalorder %s14, 0
    %p47 = por %p45, %p46
    %p48 = scmp.ne.s32.totalorder %s34, %s35
    %p49 = scmp.eq.s32.totalorder %s15, 1
    %p50 = por %p48, %p49
    %p52 = scmp.ne.s32.totalorder %s35, %s51
    %p53 = scmp.eq.s32.totalorder %s15, 0
    %p54 = por %p52, %p53
    %s55 = ssub.s32 %s17, %s24
    %p56 = scmp.eq.s32.totalorder %s55, 0
    %s58 = sadd.s32 %s57, 1
    %s59 = scalar_select %p56, %s57, %s58
    %p62 = pneg %p56
    %p63 = scmp.eq.s32.totalorder %s9, 1
    %p64 = por %p62, %p63
    %p65 = scmp.ne.s32.totalorder %s57, %s60
    %p66 = scmp.eq.s32.totalorder %s9, 0
    %p67 = por %p65, %p66
    %p68 = scmp.ne.s32.totalorder %s57, %s60
    %p69 = scmp.eq.s32.totalorder %s14, 1
    %p70 = por %p68, %p69
    %p71 = scmp.ne.s32.totalorder %s60, %s61
    %p72 = scmp.eq.s32.totalorder %s14, 0
    %p73 = por %p71, %p72
    %p74 = scmp.ne.s32.totalorder %s60, %s61
    %p75 = scmp.eq.s32.totalorder %s15, 1
    %p76 = por %p74, %p75
    %p78 = scmp.ne.s32.totalorder %s61, %s77
    %p79 = scmp.eq.s32.totalorder %s15, 0
    %p80 = por %p78, %p79
    %s81 = ssub.s32 %s17, %s24
    %p82 = scmp.eq.s32.totalorder %s81, 0
    %s84 = sadd.s32 %s83, 1
    %s85 = scalar_select %p82, %s83, %s84
    %p88 = pneg %p82
    %p89 = scmp.eq.s32.totalorder %s9, 1
    %p90 = por %p88, %p89
    %p91 = scmp.ne.s32.totalorder %s83, %s86
    %p92 = scmp.eq.s32.totalorder %s9, 0
    %p93 = por %p91, %p92
    %p94 = scmp.ne.s32.totalorder %s83, %s86
    %p95 = scmp.eq.s32.totalorder %s14, 1
    %p96 = por %p94, %p95
    %p97 = scmp.ne.s32.totalorder %s86, %s87
    %p98 = scmp.eq.s32.totalorder %s14, 0
    %p99 = por %p97, %p98
    %p100 = scmp.ne.s32.totalorder %s86, %s87
    %p101 = scmp.eq.s32.totalorder %s15, 1
    %p102 = por %p100, %p101
    %p104 = scmp.ne.s32.totalorder %s87, %s103
    %p105 = scmp.eq.s32.totalorder %s15, 0
    %p106 = por %p104, %p105
    %s107 = ssub.s32 %s16, %s28
    %s108 = ssub.s32 %s17, %s24
    %s109 = sor.u32 %s107, %s108
    %p110 = scmp.eq.s32.totalorder %s109, 0
    %s112 = sadd.s32 %s111, 1
    %s113 = scalar_select %p110, %s111, %s112
    %p116 = pneg %p110
    %p117 = scmp.eq.s32.totalorder %s9, 1
    %p118 = por %p116, %p117
    %p119 = scmp.ne.s32.totalorder %s111, %s114
    %p120 = scmp.eq.s32.totalorder %s9, 0
    %p121 = por %p119, %p120
    %p122 = scmp.ne.s32.totalorder %s111, %s114
    %p123 = scmp.eq.s32.totalorder %s14, 1
    %p124 = por %p122, %p123
    %p125 = scmp.ne.s32.totalorder %s114, %s115
    %p126 = scmp.eq.s32.totalorder %s14, 0
    %p127 = por %p125, %p126
    %p128 = scmp.ne.s32.totalorder %s114, %s115
    %p129 = scmp.eq.s32.totalorder %s15, 1
    %p130 = por %p128, %p129
    %p132 = scmp.ne.s32.totalorder %s115, %s131
    %p133 = scmp.eq.s32.totalorder %s15, 0
    %p134 = por %p132, %p133
    %p135 = scmp.le.s32.totalorder 1, %s9
    %p136 = scmp.lt.s32.totalorder %s9, 3
    %p137 = pnand %p135, %p136
    %p138 = pneg %p137
    // Predicated region
    $region9: #{_lambda_.47} parent=5 // pred_check
      _
    $region10: #{_lambda_.47} parent=5 // pred_check_branch
      %140 = sbr.rel (%p137) target = $region12
    $region11: #{_lambda_.47} parent=5 // pred_region
      %s141 = ssub.s32 %s9, 1
      // Predicated region
      $region13: #{_lambda_.47} parent=11 // pred_check
        %p142 = pneg %p73
      $region14: #{_lambda_.47} parent=11 // pred_check_branch
        %144 = sbr.rel (%p142) target = $region16
      $region15: #{_lambda_.47} parent=11 // pred_region
        %p145 = scmp.lt.s32.totalorder %s19, 0
        %s146 = scalar_select %p145, %s19, 0
        %s147 = smul.addr %s146, 4
        %s148 = scalar_lea.vmem %s1, %s147
      $region16: #{_lambda_.47} parent=11 // pred_fallthru
        _
      // Predicated region
      $region17: #{_lambda_.47} parent=11 // pred_check
        %p149 = pneg %p99
      $region18: #{_lambda_.47} parent=11 // pred_check_branch
        %151 = sbr.rel (%p149) target = $region20
      $region19: #{_lambda_.47} parent=11 // pred_region
        %p152 = scmp.lt.s32.totalorder %s19, 0
        %s153 = scalar_select %p152, %s19, 0
        %s154 = scalar_lea.vmem %s2, %s153
      $region20: #{_lambda_.47} parent=11 // pred_fallthru
        _
    $region12: #{_lambda_.47} parent=5 // pred_fallthru
      _
    %p155 = scmp.lt.s32.totalorder %s9, 2
    // Predicated region
    $region21: #{_lambda_.47} parent=5 // pred_check
      %p156 = pneg %p155
    $region22: #{_lambda_.47} parent=5 // pred_check_branch
      %158 = sbr.rel (%p156) target = $region24
    $region23: #{_lambda_.47} parent=5 // pred_region
      // Predicated region
      $region25: #{_lambda_.47} parent=23 // pred_check
        %p159 = pneg %p41
      $region26: #{_lambda_.47} parent=23 // pred_check_branch
        %161 = sbr.rel (%p159) target = $region28
      $region27: #{_lambda_.47} parent=23 // pred_region
        %s162 = smul.u32 32, %s16
        %p163 = scmp.lt.s32.totalorder %s162, 63
        %s164 = scalar_select %p163, %s162, 63
        %s165 = smul.addr %s164, 2
        %s166 = smul.addr %s165, 4
        %s167 = scalar_lea.vmem %s0, %s166
        %s168 = smul.u32 32, %s16
      $region28: #{_lambda_.47} parent=23 // pred_fallthru
        _
    $region24: #{_lambda_.47} parent=5 // pred_fallthru
      _
    %p169 = scmp.le.s32.totalorder 1, %s9
    %p170 = scmp.lt.s32.totalorder %s9, 3
    %p171 = pnand %p169, %p170
    %p172 = pneg %p171
    // Predicated region
    $region29: #{_lambda_.47} parent=5 // pred_check
      _
    $region30: #{_lambda_.47} parent=5 // pred_check_branch
      %174 = sbr.rel (%p171) target = $region32
    $region31: #{_lambda_.47} parent=5 // pred_region
      %s175 = ssub.s32 %s9, 1
      %s176 = smul.u32 32, %s18
      %p177 = scmp.lt.s32.totalorder %s176, 63
      %s178 = scalar_select %p177, %s176, 63
      %s179 = smul.addr %s178, 2
      %s180 = smul.addr %s179, 4
      %s181 = scalar_lea.vmem %s0, %s180
      %p182 = pneg %p47
      %p183 = pneg %p44
      %p184 = scmp.lt.s32.totalorder %s19, 0
      %s185 = scalar_select %p184, %s19, 0
      %s186 = smul.addr %s185, 4
      %s187 = scalar_lea.vmem %s1, %s186
      %p188 = pneg %p73
      %p189 = pneg %p70
      %p190 = scmp.lt.s32.totalorder %s19, 0
      %s191 = scalar_select %p190, %s19, 0
      %s192 = scalar_lea.vmem %s2, %s191
      %p193 = pneg %p99
      %p194 = pneg %p96
      %p195 = pneg %p127
      %p196 = pneg %p124
      %s197 = smul.u32 32, %s18
      %p198 = scmp.lt.s32.totalorder %s197, 63
      %s199 = scalar_select %p198, %s197, 63
      %p200 = scmp.lt.s32.totalorder %s19, 0
      %s201 = scalar_select %p200, %s19, 0
      %s202 = sadd.s32 %s201, %s199
      %s203 = smul.addr %s202, 8
      %s204 = scalar_lea.vmem %s3, %s203
      %s205 = smul.u32 32, %s18
      %p206 = scmp.lt.s32.totalorder %s205, 63
      %s207 = scalar_select %p206, %s205, 63
      %s208 = smul.addr %s207, 2
      %s209 = smul.addr %s208, 4
      %s210 = scalar_lea.vmem %s0, %s209
      %s211 = smul.u32 32, %s18
      %p212 = scmp.lt.s32.totalorder %s19, 0
      %s213 = scalar_select %p212, %s19, 0
      %s214 = smul.addr %s213, 4
      %s215 = scalar_lea.vmem %s1, %s214
      %p216 = scmp.lt.s32.totalorder %s19, 0
      %s217 = scalar_select %p216, %s19, 0
      %s218 = scalar_lea.vmem %s2, %s217
      %s219 = smul.u32 32, %s18
      %p220 = scmp.lt.s32.totalorder %s219, 63
      %s221 = scalar_select %p220, %s219, 63
      %p222 = scmp.lt.s32.totalorder %s19, 0
      %s223 = scalar_select %p222, %s19, 0
      %s224 = sadd.s32 %s223, %s221
      %s225 = smul.addr %s224, 8
      %s226 = scalar_lea.vmem %s3, %s225
      %s227 = smul.u32 32, %s18
      %v229 = vld [vmem:[%s210] sm:$0xff]
      %v230 = vld [vmem:[%s210 + $0x8] sm:$0xff]
      %v231 = vld [vmem:[%s210 + $0x10] sm:$0xff]
      %v232 = vld [vmem:[%s210 + $0x18] sm:$0xff]
      %v233 = vld [vmem:[%s210 + $0x20] sm:$0xff]
      %v234 = vld [vmem:[%s210 + $0x28] sm:$0xff]
      %v235 = vld [vmem:[%s210 + $0x30] sm:$0xff]
      %v236 = vld [vmem:[%s210 + $0x38] sm:$0xff]
      %v237 = vld [vmem:[%s210 + $0x40] sm:$0xff]
      %v238 = vld [vmem:[%s210 + $0x48] sm:$0xff]
      %v239 = vld [vmem:[%s210 + $0x50] sm:$0xff]
      %v240 = vld [vmem:[%s210 + $0x58] sm:$0xff]
      %v241 = vld [vmem:[%s210 + $0x60] sm:$0xff]
      %v242 = vld [vmem:[%s210 + $0x68] sm:$0xff]
      %v243 = vld [vmem:[%s210 + $0x70] sm:$0xff]
      %v244 = vld [vmem:[%s210 + $0x78] sm:$0xff]
      %v245 = vld [vmem:[%s210 + $0x80] sm:$0xff]
      %v246 = vld [vmem:[%s210 + $0x88] sm:$0xff]
      %v247 = vld [vmem:[%s210 + $0x90] sm:$0xff]
      %v248 = vld [vmem:[%s210 + $0x98] sm:$0xff]
      %v249 = vld [vmem:[%s210 + $0xa0] sm:$0xff]
      %v250 = vld [vmem:[%s210 + $0xa8] sm:$0xff]
      %v251 = vld [vmem:[%s210 + $0xb0] sm:$0xff]
      %v252 = vld [vmem:[%s210 + $0xb8] sm:$0xff]
      %v253 = vld [vmem:[%s210 + $0xc0] sm:$0xff]
      %v254 = vld [vmem:[%s210 + $0xc8] sm:$0xff]
      %v255 = vld [vmem:[%s210 + $0xd0] sm:$0xff]
      %v256 = vld [vmem:[%s210 + $0xd8] sm:$0xff]
      %v257 = vld [vmem:[%s210 + $0xe0] sm:$0xff]
      %v258 = vld [vmem:[%s210 + $0xe8] sm:$0xff]
      %v259 = vld [vmem:[%s210 + $0xf0] sm:$0xff]
      %v260 = vld [vmem:[%s210 + $0xf8] sm:$0xff]
      %v261 = vmax.bf16 %v229, 0
      %v262 = vmax.bf16 %v230, 0
      %v263 = vmax.bf16 %v231, 0
      %v264 = vmax.bf16 %v232, 0
      %v265 = vmax.bf16 %v233, 0
      %v266 = vmax.bf16 %v234, 0
      %v267 = vmax.bf16 %v235, 0
      %v268 = vmax.bf16 %v236, 0
      %v269 = vmax.bf16 %v237, 0
      %v270 = vmax.bf16 %v238, 0
      %v271 = vmax.bf16 %v239, 0
      %v272 = vmax.bf16 %v240, 0
      %v273 = vmax.bf16 %v241, 0
      %v274 = vmax.bf16 %v242, 0
      %v275 = vmax.bf16 %v243, 0
      %v276 = vmax.bf16 %v244, 0
      %v277 = vmax.bf16 %v245, 0
      %v278 = vmax.bf16 %v246, 0
      %v279 = vmax.bf16 %v247, 0
      %v280 = vmax.bf16 %v248, 0
      %v281 = vmax.bf16 %v249, 0
      %v282 = vmax.bf16 %v250, 0
      %v283 = vmax.bf16 %v251, 0
      %v284 = vmax.bf16 %v252, 0
      %v285 = vmax.bf16 %v253, 0
      %v286 = vmax.bf16 %v254, 0
      %v287 = vmax.bf16 %v255, 0
      %v288 = vmax.bf16 %v256, 0
      %v289 = vmax.bf16 %v257, 0
      %v290 = vmax.bf16 %v258, 0
      %v291 = vmax.bf16 %v259, 0
      %v292 = vmax.bf16 %v260, 0
      %v293 = vld [vmem:[%s215] sm:$0xf]
      %v294 = vld [vmem:[%s215 + $0x4] sm:$0xf]
      %v295 = vld [vmem:[%s215 + $0x8] sm:$0xf]
      %v296 = vld [vmem:[%s215 + $0xc] sm:$0xf]
      %v297 = vld [vmem:[%s215 + $0x10] sm:$0xf]
      %v298 = vld [vmem:[%s215 + $0x14] sm:$0xf]
      %v299 = vld [vmem:[%s215 + $0x18] sm:$0xf]
      %v300 = vld [vmem:[%s215 + $0x1c] sm:$0xf]
      %v301 = vld [vmem:[%s215 + $0x20] sm:$0xf]
      %v302 = vld [vmem:[%s215 + $0x24] sm:$0xf]
      %v303 = vld [vmem:[%s215 + $0x28] sm:$0xf]
      %v304 = vld [vmem:[%s215 + $0x2c] sm:$0xf]
      %v305 = vld [vmem:[%s215 + $0x30] sm:$0xf]
      %v306 = vld [vmem:[%s215 + $0x34] sm:$0xf]
      %v307 = vld [vmem:[%s215 + $0x38] sm:$0xf]
      %v308 = vld [vmem:[%s215 + $0x3c] sm:$0xf]
      %v309 = vld [vmem:[%s215 + $0x40] sm:$0xf]
      %v310 = vld [vmem:[%s215 + $0x44] sm:$0xf]
      %v311 = vld [vmem:[%s218] sm:$0x1]
      %v313 = vlaneseq
      %v314 = vshrl.u32 %v313, 7
      %v315 = vsub.s32 0, %v314
      %v316 = vrot.slane %v311, %v315
      %v350 = vunpack.c.l.b16 %v261
      %v351 = vunpack.c.h.b16 %v261
      %v352 = vunpack.c.l.b16 %v262
      %v353 = vunpack.c.h.b16 %v262
      %v354 = vunpack.c.l.b16 %v263
      %v355 = vunpack.c.h.b16 %v263
      %v356 = vunpack.c.l.b16 %v264
      %v357 = vunpack.c.h.b16 %v264
      %v358 = vunpack.c.l.b16 %v265
      %v359 = vunpack.c.h.b16 %v265
      %v360 = vunpack.c.l.b16 %v266
      %v361 = vunpack.c.h.b16 %v266
      %v362 = vunpack.c.l.b16 %v267
      %v363 = vunpack.c.h.b16 %v267
      %v364 = vunpack.c.l.b16 %v268
      %v365 = vunpack.c.h.b16 %v268
      %v366 = vunpack.c.l.b16 %v269
      %v367 = vunpack.c.h.b16 %v269
      %v368 = vunpack.c.l.b16 %v270
      %v369 = vunpack.c.h.b16 %v270
      %v370 = vunpack.c.l.b16 %v271
      %v371 = vunpack.c.h.b16 %v271
      %v372 = vunpack.c.l.b16 %v272
      %v373 = vunpack.c.h.b16 %v272
      %v374 = vunpack.c.l.b16 %v273
      %v375 = vunpack.c.h.b16 %v273
      %v376 = vunpack.c.l.b16 %v274
      %v377 = vunpack.c.h.b16 %v274
      %v378 = vunpack.c.l.b16 %v275
      %v379 = vunpack.c.h.b16 %v275
      %v380 = vunpack.c.l.b16 %v276
      %v381 = vunpack.c.h.b16 %v276
      %v382 = vunpack.c.l.b16 %v277
      %v383 = vunpack.c.h.b16 %v277
      %v384 = vunpack.c.l.b16 %v278
      %v385 = vunpack.c.h.b16 %v278
      %v386 = vunpack.c.l.b16 %v279
      %v387 = vunpack.c.h.b16 %v279
      %v388 = vunpack.c.l.b16 %v280
      %v389 = vunpack.c.h.b16 %v280
      %v390 = vunpack.c.l.b16 %v281
      %v391 = vunpack.c.h.b16 %v281
      %v392 = vunpack.c.l.b16 %v282
      %v393 = vunpack.c.h.b16 %v282
      %v394 = vunpack.c.l.b16 %v283
      %v395 = vunpack.c.h.b16 %v283
      %v396 = vunpack.c.l.b16 %v284
      %v397 = vunpack.c.h.b16 %v284
      %v398 = vunpack.c.l.b16 %v285
      %v399 = vunpack.c.h.b16 %v285
      %v400 = vunpack.c.l.b16 %v286
      %v401 = vunpack.c.h.b16 %v286
      %v402 = vunpack.c.l.b16 %v287
      %v403 = vunpack.c.h.b16 %v287
      %v404 = vunpack.c.l.b16 %v288
      %v405 = vunpack.c.h.b16 %v288
      %v406 = vunpack.c.l.b16 %v289
      %v407 = vunpack.c.h.b16 %v289
      %v408 = vunpack.c.l.b16 %v290
      %v409 = vunpack.c.h.b16 %v290
      %v410 = vunpack.c.l.b16 %v291
      %v411 = vunpack.c.h.b16 %v291
      %v412 = vunpack.c.l.b16 %v292
      %v413 = vunpack.c.h.b16 %v292
      %v414 = vpack.c.b16 %v352, %v350
      %v415 = vpack.c.b16 %v353, %v351
      %v416 = vpack.c.b16 %v356, %v354
      %v417 = vpack.c.b16 %v357, %v355
      %v418 = vpack.c.b16 %v360, %v358
      %v419 = vpack.c.b16 %v361, %v359
      %v420 = vpack.c.b16 %v364, %v362
      %v421 = vpack.c.b16 %v365, %v363
      %v422 = vpack.c.b16 %v368, %v366
      %v423 = vpack.c.b16 %v369, %v367
      %v424 = vpack.c.b16 %v372, %v370
      %v425 = vpack.c.b16 %v373, %v371
      %v426 = vpack.c.b16 %v376, %v374
      %v427 = vpack.c.b16 %v377, %v375
      %v428 = vpack.c.b16 %v380, %v378
      %v429 = vpack.c.b16 %v381, %v379
      %v430 = vpack.c.b16 %v384, %v382
      %v431 = vpack.c.b16 %v385, %v383
      %v432 = vpack.c.b16 %v388, %v386
      %v433 = vpack.c.b16 %v389, %v387
      %v434 = vpack.c.b16 %v392, %v390
      %v435 = vpack.c.b16 %v393, %v391
      %v436 = vpack.c.b16 %v396, %v394
      %v437 = vpack.c.b16 %v397, %v395
      %v438 = vpack.c.b16 %v400, %v398
      %v439 = vpack.c.b16 %v401, %v399
      %v440 = vpack.c.b16 %v404, %v402
      %v441 = vpack.c.b16 %v405, %v403
      %v442 = vpack.c.b16 %v408, %v406
      %v443 = vpack.c.b16 %v409, %v407
      %v444 = vpack.c.b16 %v412, %v410
      %v445 = vpack.c.b16 %v413, %v411
      %v480 = vunpack.c.l.b16 %v293
      %v481 = vunpack.c.l.b16 %v294
      %v482 = vunpack.c.l.b16 %v295
      %v483 = vunpack.c.l.b16 %v296
      %v484 = vunpack.c.l.b16 %v297
      %v485 = vunpack.c.l.b16 %v298
      %v486 = vunpack.c.l.b16 %v299
      %v487 = vunpack.c.l.b16 %v300
      %v488 = vunpack.c.l.b16 %v301
      %v489 = vunpack.c.l.b16 %v302
      %v490 = vunpack.c.l.b16 %v303
      %v491 = vunpack.c.l.b16 %v304
      %v492 = vunpack.c.l.b16 %v305
      %v493 = vunpack.c.l.b16 %v306
      %v494 = vunpack.c.l.b16 %v307
      %v495 = vunpack.c.l.b16 %v308
      %v496 = vunpack.c.l.b16 %v309
      %v497 = vunpack.c.l.b16 %v310
      %v498 = vpack.c.b16 %v481, %v480
      %v499 = vpack.c.b16 %v483, %v482
      %v500 = vpack.c.b16 %v485, %v484
      %v501 = vpack.c.b16 %v487, %v486
      %v502 = vpack.c.b16 %v489, %v488
      %v503 = vpack.c.b16 %v491, %v490
      %v504 = vpack.c.b16 %v493, %v492
      %v505 = vpack.c.b16 %v495, %v494
      %v506 = vpack.c.b16 %v497, %v496
      %vm516 = vcmask 130048
      %v518 = vsel %vm516, %v415, 0
      %v521 = vsel %vm516, %v417, 0
      %v524 = vsel %vm516, %v419, 0
      %v527 = vsel %vm516, %v421, 0
      %v530 = vsel %vm516, %v423, 0
      %v533 = vsel %vm516, %v425, 0
      %v536 = vsel %vm516, %v427, 0
      %v539 = vsel %vm516, %v429, 0
      %v542 = vsel %vm516, %v431, 0
      %v545 = vsel %vm516, %v433, 0
      %v548 = vsel %vm516, %v435, 0
      %v551 = vsel %vm516, %v437, 0
      %v554 = vsel %vm516, %v439, 0
      %v557 = vsel %vm516, %v441, 0
      %v560 = vsel %vm516, %v443, 0
      %v563 = vsel %vm516, %v445, 0
      %565 = vmatprep.subr.bf16.mxu0 0
      %566 = vmatpush1.bf16.msra.mxu0 %v505
      %567 = vmatprep.subr.bf16.mxu0 0
      %568 = vmatpush1.bf16.msra.mxu0 %v504
      %569 = vmatprep.subr.bf16.mxu0 0
      %570 = vmatpush1.bf16.msra.mxu0 %v503
      %571 = vmatprep.subr.bf16.mxu0 0
      %572 = vmatpush1.bf16.msra.mxu0 %v502
      %573 = vmatprep.subr.bf16.mxu0 0
      %574 = vmatpush1.bf16.msra.mxu0 %v501
      %575 = vmatprep.subr.bf16.mxu0 0
      %576 = vmatpush1.bf16.msra.mxu0 %v500
      %577 = vmatprep.subr.bf16.mxu0 0
      %578 = vmatpush1.bf16.msra.mxu0 %v499
      %579 = vmatprep.subr.bf16.mxu0 0
      %580 = vmatpush1.bf16.msra.mxu0 %v498
      %581 = vmatprep.subr.bf16.mxu0 0
      %582 = vmatpush2.bf16.msra.mxu0 0
      %583 = vmatprep.subr.bf16.mxu0 0
      %584 = vmatpush2.bf16.msra.mxu0 0
      %585 = vmatprep.subr.bf16.mxu0 0
      %586 = vmatpush2.bf16.msra.mxu0 0
      %587 = vmatprep.subr.bf16.mxu0 0
      %588 = vmatpush2.bf16.msra.mxu0 0
      %589 = vmatprep.subr.bf16.mxu0 0
      %590 = vmatpush2.bf16.msra.mxu0 0
      %591 = vmatprep.subr.bf16.mxu0 0
      %592 = vmatpush2.bf16.msra.mxu0 0
      %593 = vmatprep.subr.bf16.mxu0 0
      %594 = vmatpush2.bf16.msra.mxu0 0
      %595 = vmatprep.subr.bf16.mxu0 0
      %596 = vmatpush2.bf16.msra.mxu0 %v506
      %597 = vmatprep.mubr.bf16.mxu0 %v518
      %598 = vmatmul.mubr.bf16.gmra.mxu0 %v414
      %v599 = vpop.f32.mrf.mxu0
      %v600 = vadd.f32 %v316, %v599
      %v601 = vpop.f32.mrf.mxu0
      %v602 = vpop.f32.mrf.mxu0
      %v603 = vadd.f32 %v316, %v602
      %v604 = vpop.f32.mrf.mxu0
      %605 = vmatprep.mubr.bf16.mxu0 %v521
      %606 = vmatmul.mubr.bf16.gmra.mxu0 %v416
      %v607 = vpop.f32.mrf.mxu0
      %v608 = vadd.f32 %v316, %v607
      %v609 = vpop.f32.mrf.mxu0
      %v610 = vpop.f32.mrf.mxu0
      %v611 = vadd.f32 %v316, %v610
      %v612 = vpop.f32.mrf.mxu0
      %613 = vmatprep.mubr.bf16.mxu0 %v524
      %614 = vmatmul.mubr.bf16.gmra.mxu0 %v418
      %v615 = vpop.f32.mrf.mxu0
      %v616 = vadd.f32 %v316, %v615
      %v617 = vpop.f32.mrf.mxu0
      %v618 = vpop.f32.mrf.mxu0
      %v619 = vadd.f32 %v316, %v618
      %v620 = vpop.f32.mrf.mxu0
      %621 = vmatprep.mubr.bf16.mxu0 %v527
      %622 = vmatmul.mubr.bf16.gmra.mxu0 %v420
      %v623 = vpop.f32.mrf.mxu0
      %v624 = vadd.f32 %v316, %v623
      %v625 = vpop.f32.mrf.mxu0
      %v626 = vpop.f32.mrf.mxu0
      %v627 = vadd.f32 %v316, %v626
      %v628 = vpop.f32.mrf.mxu0
      %629 = vmatprep.mubr.bf16.mxu0 %v530
      %630 = vmatmul.mubr.bf16.gmra.mxu0 %v422
      %v631 = vpop.f32.mrf.mxu0
      %v632 = vadd.f32 %v316, %v631
      %v633 = vpop.f32.mrf.mxu0
      %v634 = vpop.f32.mrf.mxu0
      %v635 = vadd.f32 %v316, %v634
      %v636 = vpop.f32.mrf.mxu0
      %637 = vmatprep.mubr.bf16.mxu0 %v533
      %638 = vmatmul.mubr.bf16.gmra.mxu0 %v424
      %v639 = vpop.f32.mrf.mxu0
      %v640 = vadd.f32 %v316, %v639
      %v641 = vpop.f32.mrf.mxu0
      %v642 = vpop.f32.mrf.mxu0
      %v643 = vadd.f32 %v316, %v642
      %v644 = vpop.f32.mrf.mxu0
      %645 = vmatprep.mubr.bf16.mxu0 %v536
      %646 = vmatmul.mubr.bf16.gmra.mxu0 %v426
      %v647 = vpop.f32.mrf.mxu0
      %v648 = vadd.f32 %v316, %v647
      %v649 = vpop.f32.mrf.mxu0
      %v650 = vpop.f32.mrf.mxu0
      %v651 = vadd.f32 %v316, %v650
      %v652 = vpop.f32.mrf.mxu0
      %653 = vmatprep.mubr.bf16.mxu0 %v539
      %654 = vmatmul.mubr.bf16.gmra.mxu0 %v428
      %v655 = vpop.f32.mrf.mxu0
      %v656 = vadd.f32 %v316, %v655
      %v657 = vpop.f32.mrf.mxu0
      %v658 = vpop.f32.mrf.mxu0
      %v659 = vadd.f32 %v316, %v658
      %v660 = vpop.f32.mrf.mxu0
      %661 = vmatprep.mubr.bf16.mxu0 %v542
      %662 = vmatmul.mubr.bf16.gmra.mxu0 %v430
      %v663 = vpop.f32.mrf.mxu0
      %v664 = vadd.f32 %v316, %v663
      %v665 = vpop.f32.mrf.mxu0
      %v666 = vpop.f32.mrf.mxu0
      %v667 = vadd.f32 %v316, %v666
      %v668 = vpop.f32.mrf.mxu0
      %669 = vmatprep.mubr.bf16.mxu0 %v545
      %670 = vmatmul.mubr.bf16.gmra.mxu0 %v432
      %v671 = vpop.f32.mrf.mxu0
      %v672 = vadd.f32 %v316, %v671
      %v673 = vpop.f32.mrf.mxu0
      %v674 = vpop.f32.mrf.mxu0
      %v675 = vadd.f32 %v316, %v674
      %v676 = vpop.f32.mrf.mxu0
      %677 = vmatprep.mubr.bf16.mxu0 %v548
      %678 = vmatmul.mubr.bf16.gmra.mxu0 %v434
      %v679 = vpop.f32.mrf.mxu0
      %v680 = vadd.f32 %v316, %v679
      %v681 = vpop.f32.mrf.mxu0
      %v682 = vpop.f32.mrf.mxu0
      %v683 = vadd.f32 %v316, %v682
      %v684 = vpop.f32.mrf.mxu0
      %685 = vmatprep.mubr.bf16.mxu0 %v551
      %686 = vmatmul.mubr.bf16.gmra.mxu0 %v436
      %v687 = vpop.f32.mrf.mxu0
      %v688 = vadd.f32 %v316, %v687
      %v689 = vpop.f32.mrf.mxu0
      %v690 = vpop.f32.mrf.mxu0
      %v691 = vadd.f32 %v316, %v690
      %v692 = vpop.f32.mrf.mxu0
      %693 = vmatprep.mubr.bf16.mxu0 %v554
      %694 = vmatmul.mubr.bf16.gmra.mxu0 %v438
      %v695 = vpop.f32.mrf.mxu0
      %v696 = vadd.f32 %v316, %v695
      %v697 = vpop.f32.mrf.mxu0
      %v698 = vpop.f32.mrf.mxu0
      %v699 = vadd.f32 %v316, %v698
      %v700 = vpop.f32.mrf.mxu0
      %701 = vmatprep.mubr.bf16.mxu0 %v557
      %702 = vmatmul.mubr.bf16.gmra.mxu0 %v440
      %v703 = vpop.f32.mrf.mxu0
      %v704 = vadd.f32 %v316, %v703
      %v705 = vpop.f32.mrf.mxu0
      %v706 = vpop.f32.mrf.mxu0
      %v707 = vadd.f32 %v316, %v706
      %v708 = vpop.f32.mrf.mxu0
      %709 = vmatprep.mubr.bf16.mxu0 %v560
      %710 = vmatmul.mubr.bf16.gmra.mxu0 %v442
      %v711 = vpop.f32.mrf.mxu0
      %v712 = vadd.f32 %v316, %v711
      %v713 = vpop.f32.mrf.mxu0
      %v714 = vpop.f32.mrf.mxu0
      %v715 = vadd.f32 %v316, %v714
      %v716 = vpop.f32.mrf.mxu0
      %717 = vmatprep.mubr.bf16.mxu0 %v563
      %718 = vmatmul.mubr.bf16.gmra.mxu0 %v444
      %v719 = vpop.f32.mrf.mxu0
      %v720 = vadd.f32 %v316, %v719
      %v721 = vpop.f32.mrf.mxu0
      %v722 = vpop.f32.mrf.mxu0
      %v723 = vadd.f32 %v316, %v722
      %v724 = vpop.f32.mrf.mxu0
      %725 = vdwg.mxu0
      %v726 = vtanh.pop %v600
      %v727 = vtanh.pop %v603
      %v728 = vtanh.pop %v608
      %v729 = vtanh.pop %v611
      %v730 = vtanh.pop %v616
      %v731 = vtanh.pop %v619
      %v732 = vtanh.pop %v624
      %v733 = vtanh.pop %v627
      %v734 = vtanh.pop %v632
      %v735 = vtanh.pop %v635
      %v736 = vtanh.pop %v640
      %v737 = vtanh.pop %v643
      %v738 = vtanh.pop %v648
      %v739 = vtanh.pop %v651
      %v740 = vtanh.pop %v656
      %v741 = vtanh.pop %v659
      %v742 = vtanh.pop %v664
      %v743 = vtanh.pop %v667
      %v744 = vtanh.pop %v672
      %v745 = vtanh.pop %v675
      %v746 = vtanh.pop %v680
      %v747 = vtanh.pop %v683
      %v748 = vtanh.pop %v688
      %v749 = vtanh.pop %v691
      %v750 = vtanh.pop %v696
      %v751 = vtanh.pop %v699
      %v752 = vtanh.pop %v704
      %v753 = vtanh.pop %v707
      %v754 = vtanh.pop %v712
      %v755 = vtanh.pop %v715
      %v756 = vtanh.pop %v720
      %v757 = vtanh.pop %v723
      %vm758 = vcmask 97280
      %759 = vst.msk [vmem:[%s226] sm:$0xff] %vm758, %v726
      %760 = vst.msk [vmem:[%s226 + $0x8] sm:$0xff] %vm758, %v727
      %761 = vst.msk [vmem:[%s226 + $0x10] sm:$0xff] %vm758, %v728
      %762 = vst.msk [vmem:[%s226 + $0x18] sm:$0xff] %vm758, %v729
      %763 = vst.msk [vmem:[%s226 + $0x20] sm:$0xff] %vm758, %v730
      %764 = vst.msk [vmem:[%s226 + $0x28] sm:$0xff] %vm758, %v731
      %765 = vst.msk [vmem:[%s226 + $0x30] sm:$0xff] %vm758, %v732
      %766 = vst.msk [vmem:[%s226 + $0x38] sm:$0xff] %vm758, %v733
      %767 = vst.msk [vmem:[%s226 + $0x40] sm:$0xff] %vm758, %v734
      %768 = vst.msk [vmem:[%s226 + $0x48] sm:$0xff] %vm758, %v735
      %769 = vst.msk [vmem:[%s226 + $0x50] sm:$0xff] %vm758, %v736
      %770 = vst.msk [vmem:[%s226 + $0x58] sm:$0xff] %vm758, %v737
      %771 = vst.msk [vmem:[%s226 + $0x60] sm:$0xff] %vm758, %v738
      %772 = vst.msk [vmem:[%s226 + $0x68] sm:$0xff] %vm758, %v739
      %773 = vst.msk [vmem:[%s226 + $0x70] sm:$0xff] %vm758, %v740
      %774 = vst.msk [vmem:[%s226 + $0x78] sm:$0xff] %vm758, %v741
      %775 = vst.msk [vmem:[%s226 + $0x80] sm:$0xff] %vm758, %v742
      %776 = vst.msk [vmem:[%s226 + $0x88] sm:$0xff] %vm758, %v743
      %777 = vst.msk [vmem:[%s226 + $0x90] sm:$0xff] %vm758, %v744
      %778 = vst.msk [vmem:[%s226 + $0x98] sm:$0xff] %vm758, %v745
      %779 = vst.msk [vmem:[%s226 + $0xa0] sm:$0xff] %vm758, %v746
      %780 = vst.msk [vmem:[%s226 + $0xa8] sm:$0xff] %vm758, %v747
      %781 = vst.msk [vmem:[%s226 + $0xb0] sm:$0xff] %vm758, %v748
      %782 = vst.msk [vmem:[%s226 + $0xb8] sm:$0xff] %vm758, %v749
      %783 = vst.msk [vmem:[%s226 + $0xc0] sm:$0xff] %vm758, %v750
      %784 = vst.msk [vmem:[%s226 + $0xc8] sm:$0xff] %vm758, %v751
      %785 = vst.msk [vmem:[%s226 + $0xd0] sm:$0xff] %vm758, %v752
      %786 = vst.msk [vmem:[%s226 + $0xd8] sm:$0xff] %vm758, %v753
      %787 = vst.msk [vmem:[%s226 + $0xe0] sm:$0xff] %vm758, %v754
      %788 = vst.msk [vmem:[%s226 + $0xe8] sm:$0xff] %vm758, %v755
      %789 = vst.msk [vmem:[%s226 + $0xf0] sm:$0xff] %vm758, %v756
      %790 = vst.msk [vmem:[%s226 + $0xf8] sm:$0xff] %vm758, %v757
      %s791 = smul.u32 32, %s18
      %p792 = scmp.lt.s32.totalorder %s791, 63
      %s793 = scalar_select %p792, %s791, 63
      %p794 = scmp.lt.s32.totalorder %s19, 0
      %s795 = scalar_select %p794, %s19, 0
      %s796 = sadd.s32 %s795, %s793
      %s797 = smul.addr %s796, 8
      %s798 = scalar_lea.vmem %s3, %s797
      // Predicated region
      $region33: #{_lambda_.47} parent=31 // pred_check
        %p799 = pneg %p124
      $region34: #{_lambda_.47} parent=31 // pred_check_branch
        %801 = sbr.rel (%p799) target = $region36
      $region35: #{_lambda_.47} parent=31 // pred_region
        %s802 = smul.u32 32, %s18
      $region36: #{_lambda_.47} parent=31 // pred_fallthru
        _
    $region32: #{_lambda_.47} parent=5 // pred_fallthru
      _
    %p803 = scmp.le.s32.totalorder 2, %s9
    // Predicated region
    $region37: #{_lambda_.47} parent=5 // pred_check
      %p804 = pneg %p803
    $region38: #{_lambda_.47} parent=5 // pred_check_branch
      %806 = sbr.rel (%p804) target = $region40
    $region39: #{_lambda_.47} parent=5 // pred_region
      %s807 = ssub.s32 %s9, 2
      // Predicated region
      $region41: #{_lambda_.47} parent=39 // pred_check
        %p808 = pneg %p130
      $region42: #{_lambda_.47} parent=39 // pred_check_branch
        %810 = sbr.rel (%p808) target = $region44
      $region43: #{_lambda_.47} parent=39 // pred_region
        %s811 = smul.u32 32, %s20
        %p812 = scmp.lt.s32.totalorder %s811, 63
        %s813 = scalar_select %p812, %s811, 63
        %p814 = scmp.lt.s32.totalorder %s21, 0
        %s815 = scalar_select %p814, %s21, 0
        %s816 = sadd.s32 %s815, %s813
        %s817 = smul.addr %s816, 8
        %s818 = scalar_lea.vmem %s3, %s817
      $region44: #{_lambda_.47} parent=39 // pred_fallthru
        _
    $region40: #{_lambda_.47} parent=5 // pred_fallthru
      _
  $region6: #{_lambda_.47} parent=0 // loop_footer
    %s13 = sadd.s32 1, %s9
  $region7: #{_lambda_.47} parent=0 // loop_footer_branch
    %8 = sbr.rel target = $region3
  $region8: #{_lambda_.47} parent=0 // loop_exit
    _

</llo_original>
